<compile_context>
chip_gen: v6e
topology: v6e:2x2x1
jax: 0.10.0
libtpu: 0.0.40
codegen_flags: <defaults>
</compile_context>

<pallas_src>
import math
from functools import partial

import jax
import jax.numpy as jnp
from jax.experimental import pallas as pl
from jax.experimental.pallas import tpu as pltpu


# ----------------------------------------------------------------------------
# Parameter construction (deterministic, synthetic; mirrors the nn.Module init)
# ----------------------------------------------------------------------------

def init_linear(key, din, dout):
    k1, k2 = jax.random.split(key)
    bound = 1.0 / math.sqrt(din)
    W = jax.random.uniform(k1, (din, dout), jnp.float32, -bound, bound)
    b = jax.random.uniform(k2, (1, dout), jnp.float32, -bound, bound)
    return {"W": W, "b": b}


def init_mlp2(key, din, dh, dout):
    k1, k2 = jax.random.split(key)
    l1 = init_linear(k1, din, dh)
    l2 = init_linear(k2, dh, dout)
    return {"W1": l1["W"], "b1": l1["b"], "W2": l2["W"], "b2": l2["b"]}


def init_layernorm(dim):
    return {"gamma": jnp.ones((1, dim), jnp.float32),
            "beta": jnp.zeros((1, dim), jnp.float32)}


def init_knowformer_layer(key, num_relation, num_qk_layer, num_v_layer,
                          hidden_dim):
    D, R = hidden_dim, num_relation
    keys = jax.random.split(key, 16 + 3 * (num_qk_layer + num_v_layer))
    it = iter(keys)
    params = {
        "fc_qk_z": init_linear(next(it), D, D * R),
        "fc_qk_x": init_mlp2(next(it), D + 1, D, D),
        "fc_v_x": init_mlp2(next(it), 2 * D, D, D),
        "fc_to_qk": init_linear(next(it), D, 2 * D),
        "ffn": init_mlp2(next(it), D, D, D),
        "attn_norm": init_layernorm(D),
        "norm": init_layernorm(D),
        "qk_layers": [],
        "v_layers": [],
    }
    for _ in range(num_qk_layer):
        params["qk_layers"].append({
            "mlp_out": init_mlp2(next(it), D, D, D),
            "alpha": jax.random.normal(next(it), (1, D), jnp.float32),
            "norm": init_layernorm(D),
        })
    for _ in range(num_v_layer):
        params["v_layers"].append({
            "fc_z": init_linear(next(it), D, D * R),
            "fc_out": init_mlp2(next(it), D, D, D),
            "beta": jax.random.normal(next(it), (1, D), jnp.float32),
            "norm": init_layernorm(D),
        })
    return params


def vec_row_names(num_qk_layer, num_v_layer):
    """Fixed ordering of the packed (1, D) constant vectors."""
    names = ["qkx_w1n", "qkx_b1", "qkx_b2", "vx_w1h", "vx_b1", "vx_b2"]
    for l in range(num_qk_layer):
        names += [f"qkl_alpha_{l}", f"qkl_b1_{l}", f"qkl_b2_{l}",
                  f"qkl_g_{l}", f"qkl_be_{l}"]
    for l in range(num_v_layer):
        names += [f"vl_beta_{l}", f"vl_b1_{l}", f"vl_b2_{l}",
                  f"vl_g_{l}", f"vl_be_{l}"]
    names += ["ffn_b1", "ffn_b2", "an_g", "an_b", "n_g", "n_b"]
    return names


def prepare_params(params, num_relation, hidden_dim, num_heads,
                   num_qk_layer, num_v_layer):
    """One-time layout prep (done outside the steady-state forward)."""
    R, D = num_relation, hidden_dim
    dh = D // num_heads
    p, rows = {}, {}

    # fc_qk_z kept lane-dense in its original (D, R*D) layout (single wide
    # matmul; relation r lives in columns [r*D, (r+1)*D)).
    p["qkz_W"] = params["fc_qk_z"]["W"]
    p["qkz_b"] = params["fc_qk_z"]["b"]

    # fc_qk_x: W1 is (D+1, D): data rows + a single noise row (rank-1 fold).
    W1 = params["fc_qk_x"]["W1"]
    p["qkx_W1a"] = W1[:D]
    rows["qkx_w1n"] = W1[D:D + 1]
    rows["qkx_b1"] = params["fc_qk_x"]["b1"]
    p["qkx_W2"] = params["fc_qk_x"]["W2"]
    rows["qkx_b2"] = params["fc_qk_x"]["b2"]

    # fc_v_x: W1 is (2D, D). The one-hot half contributes the column-sum of
    # W1[D:] added to row h_index only (that row of the concat is all ones).
    W1v = params["fc_v_x"]["W1"]
    p["vx_W1a"] = W1v[:D]
    rows["vx_w1h"] = jnp.sum(W1v[D:], axis=0, keepdims=True)
    rows["vx_b1"] = params["fc_v_x"]["b1"]
    p["vx_W2"] = params["fc_v_x"]["W2"]
    rows["vx_b2"] = params["fc_v_x"]["b2"]

    # qk layers (matrices stacked over layer index; vectors go to the blob).
    qkl = params["qk_layers"]
    p["qkl_W1"] = jnp.stack([l["mlp_out"]["W1"] for l in qkl])
    p["qkl_W2"] = jnp.stack([l["mlp_out"]["W2"] for l in qkl])
    for i, l in enumerate(qkl):
        rows[f"qkl_alpha_{i}"] = l["alpha"]
        rows[f"qkl_b1_{i}"] = l["mlp_out"]["b1"]
        rows[f"qkl_b2_{i}"] = l["mlp_out"]["b2"]
        rows[f"qkl_g_{i}"] = l["norm"]["gamma"]
        rows[f"qkl_be_{i}"] = l["norm"]["beta"]

    # v layers (fc_z kept lane-dense (D, R*D), stacked over layer index).
    vl = params["v_layers"]
    p["vl_zW"] = jnp.stack([l["fc_z"]["W"] for l in vl])     # (Lv, D, R*D)
    p["vl_zb"] = jnp.stack([l["fc_z"]["b"] for l in vl])     # (Lv, 1, R*D)
    p["vl_W1"] = jnp.stack([l["fc_out"]["W1"] for l in vl])
    p["vl_W2"] = jnp.stack([l["fc_out"]["W2"] for l in vl])
    for i, l in enumerate(vl):
        rows[f"vl_beta_{i}"] = l["beta"]
        rows[f"vl_b1_{i}"] = l["fc_out"]["b1"]
        rows[f"vl_b2_{i}"] = l["fc_out"]["b2"]
        rows[f"vl_g_{i}"] = l["norm"]["gamma"]
        rows[f"vl_be_{i}"] = l["norm"]["beta"]

    # fc_to_qk kept merged (D, 2D): q = cols[:D], k = cols[D:] == chunk(2, -1).
    p["toqk_W"] = params["fc_to_qk"]["W"]
    p["toqk_b"] = params["fc_to_qk"]["b"]

    # FFN + norms
    p["ffn_W1"] = params["ffn"]["W1"]
    p["ffn_W2"] = params["ffn"]["W2"]
    rows["ffn_b1"] = params["ffn"]["b1"]
    rows["ffn_b2"] = params["ffn"]["b2"]
    rows["an_g"] = params["attn_norm"]["gamma"]
    rows["an_b"] = params["attn_norm"]["beta"]
    rows["n_g"] = params["norm"]["gamma"]
    rows["n_b"] = params["norm"]["beta"]

    # Block-diagonal head masks, built ONCE here (constants for the kernel).
    hid = jnp.arange(D, dtype=jnp.int32) // dh
    p["mbd"] = (hid[:, None] == hid[None, :]).astype(jnp.float32)        # (D, D)
    hid2 = jnp.arange(2 * D, dtype=jnp.int32) // dh
    p["mbd2"] = (hid2[:, None] == hid2[None, :]).astype(jnp.float32)     # (2D, 2D)

    # Pack all the (1, D) vectors into a single (K, D) blob.
    order = vec_row_names(num_qk_layer, num_v_layer)
    p["vecs"] = jnp.concatenate([rows[n] for n in order], axis=0)
    return p


def build_adjacency(edge_index, num_relation, num_nodes):
    """edge_index:(E,3) rows are [head, relation, tail].
    Dense relational adjacency A[r,i,j] = #edges (head=i, rel=r, tail=j).
    Static graph data -> built once, OUTSIDE the jitted forward."""
    A = jnp.zeros((num_relation, num_nodes, num_nodes), jnp.float32)
    A = A.at[edge_index[:, 1], edge_index[:, 0], edge_index[:, 2]].add(1.0)
    return A                                                   # (R, V, V)


# ----------------------------------------------------------------------------
# Pure-JAX reference (direct port of the torch module, per-head attention)
# ----------------------------------------------------------------------------

def knowformer_layer_reference(params, h_index, r_index, x, z, a_rel, noise, *,
                               num_relation, num_heads):
    B, V, D = x.shape
    R, H = num_relation, num_heads
    dh = D // H

    def linear(p, t):
        return t @ p["W"] + p["b"]

    def mlp2(p, t):
        h = jnp.maximum(t @ p["W1"] + p["b1"], 0.0)
        return h @ p["W2"] + p["b2"]

    def layernorm(p, t):
        mu = t.mean(-1, keepdims=True)
        var = ((t - mu) ** 2).mean(-1, keepdims=True)
        return (t - mu) / jnp.sqrt(var + 1e-5) * p["gamma"] + p["beta"]

    def rspmm(x_b, z_b):     # x_b:(V,D)  z_b:(R,D)
        return jnp.einsum("rij,jd,rd->id", a_rel, x_b, z_b)

    qk_z = linear(params["fc_qk_z"], z).reshape(B, R, D)
    qk_x = mlp2(params["fc_qk_x"], jnp.concatenate([x, noise], axis=-1))
    for lp in params["qk_layers"]:
        out = jax.vmap(rspmm)(qk_x, qk_z)
        shortcut = qk_x
        t = mlp2(lp["mlp_out"], out + lp["alpha"] * qk_x)
        t = layernorm(lp["norm"], t)
        qk_x = t + shortcut

    onehot3 = jnp.zeros((B, V, D), jnp.float32).at[
        jnp.arange(B), h_index].set(1.0)
    v_x = mlp2(params["fc_v_x"], jnp.concatenate([x, onehot3], axis=-1))
    for lp in params["v_layers"]:
        vz = linear(lp["fc_z"], z).reshape(B, R, D)
        out = jax.vmap(rspmm)(v_x, vz)
        shortcut = v_x
        t = mlp2(lp["fc_out"], out + lp["beta"] * v_x)
        t = layernorm(lp["norm"], t)
        v_x = t + shortcut

    qk = linear(params["fc_to_qk"], qk_x)
    q, k, v = qk[..., :D], qk[..., D:], v_x

    def split(t):
        return t.reshape(B, V, H, dh).transpose(0, 2, 1, 3)

    q, k, v = split(q), split(k), split(v)
    normf = lambda t: t / jnp.maximum(
        jnp.sqrt(jnp.sum(t * t, axis=-1, keepdims=True)), 1e-12)
    q, k = normf(q), normf(k)
    add_w = ((r_index == 2) | (r_index == 3)).astype(jnp.float32) * (0.333 - 1.0)
    kw = k + k * add_w[:, None, None, None]
    kvs = jnp.einsum("bhvd,bhvD->bhdD", kw, v)
    num = jnp.einsum("bhvd,bhdD->bhvD", q, kvs)
    num = num + v.sum(axis=2, keepdims=True) + v * V
    den = jnp.einsum("bhvd,bhd->bhv", q, kw.sum(axis=2)) + 2.0 * V
    attn = (num / den[..., None]).transpose(0, 2, 1, 3).reshape(B, V, D)

    xr = x + attn
    xr = layernorm(params["attn_norm"], xr)
    xr = xr + mlp2(params["ffn"], xr)
    xr = layernorm(params["norm"], xr)
    return xr


# ----------------------------------------------------------------------------
# Fused forward pass (one pallas_call, grid=(B,))
# ----------------------------------------------------------------------------

def knowformer_layer_forward(prep, h_index, r_index, x, z, a_rows, noise, *,
                             num_relation, num_heads, num_qk_layer,
                             num_v_layer, single_buffer_constants=True):
    B, V, D = x.shape
    R = num_relation
    assert D % num_heads == 0
    Lqk, Lv = num_qk_layer, num_v_layer
    Vf = float(V)

    vec_idx = {n: i for i, n in enumerate(vec_row_names(Lqk, Lv))}

    z3 = z.reshape(B, 1, D)

    names = [
        "a_rows", "x", "z", "noise",
        "vecs", "mbd", "mbd2",
        "qkz_W", "qkz_b",
        "qkx_W1a", "qkx_W2",
        "vx_W1a", "vx_W2",
        "qkl_W1", "qkl_W2",
        "vl_zW", "vl_zb", "vl_W1", "vl_W2",
        "toqk_W", "toqk_b",
        "ffn_W1", "ffn_W2",
    ]
    arrays = dict(a_rows=a_rows, x=x, z=z3, noise=noise, **prep)
    batched = {"x", "z", "noise"}        # sliced per grid step

    inputs = [arrays[n] for n in names]

    def make_spec(n):
        a = arrays[n]
        nd = a.ndim
        if n in batched:
            return pl.BlockSpec((1,) + a.shape[1:],
                                lambda b, *_: (b,) + (0,) * (nd - 1))
        # constant operands: full-array block, resident across grid steps;
        # single-buffer them (index never changes) to halve their VMEM cost.
        if single_buffer_constants:
            return pl.BlockSpec(a.shape, lambda b, *_: (0,) * nd,
                                pipeline_mode=pl.Buffered(1))
        return pl.BlockSpec(a.shape, lambda b, *_: (0,) * nd)

    def _layernorm(t, g, be):
        mu = jnp.mean(t, axis=-1, keepdims=True)
        tc = t - mu
        var = jnp.mean(tc * tc, axis=-1, keepdims=True)
        return tc * jax.lax.rsqrt(var + 1e-5) * g + be

    def _mlp2(t, w1, b1, w2, b2):
        h = jnp.dot(t, w1, preferred_element_type=jnp.float32) + b1
        h = jnp.maximum(h, 0.0)
        return jnp.dot(h, w2, preferred_element_type=jnp.float32) + b2

    def kernel(h_ref, r_ref, *refs):
        rd = dict(zip(names, refs[:len(names)]))
        o_ref = refs[len(names)]
        b = pl.program_id(0)

        h_idx = h_ref[b]
        r_idx = r_ref[b]
        # edge-type weighting: k scaled by 0.333 when r_index in {2, 3}
        kscale = jnp.where(jnp.logical_or(r_idx == 2, r_idx == 3),
                           jnp.float32(0.333), jnp.float32(1.0))

        a_rv = rd["a_rows"][...]          # (R*V, V), relations stacked on rows
        xv = rd["x"][0]                   # (V, D)
        zb = rd["z"][0]                   # (1, D)
        nz = rd["noise"][0]               # (V, 1)
        vecs = rd["vecs"][...]            # (K, D) packed bias/scale rows
        mbd = rd["mbd"][...]              # (D, D)   block-diag head mask
        mbd2 = rd["mbd2"][...]            # (2D, 2D) block-diag head mask (q|k)

        def vrow(name):
            i = vec_idx[name]
            return vecs[i:i + 1, :]

        def rspmm(xcur, z_row):
            # sum_r (A_r @ (x * z_r)) == sum_r (A_r @ x) * z_r  (z_r scales
            # the column axis) -> ONE big matmul + VPU scale-sum over R.
            y = jnp.dot(a_rv, xcur, preferred_element_type=jnp.float32)  # (R*V,D)
            acc = y[0:V] * z_row[:, 0:D]
            for r in range(1, R):
                acc = acc + y[r * V:(r + 1) * V] * z_row[:, r * D:(r + 1) * D]
            return acc

        # ---- qk branch ------------------------------------------------------
        # single wide (1,D)@(D,R*D) matmul for all relation z-vectors
        qk_zrow = (jnp.dot(zb, rd["qkz_W"][...],
                           preferred_element_type=jnp.float32)
                   + rd["qkz_b"][...])                              # (1, R*D)

        # fc_qk_x with the noise column folded in as a rank-1 term
        h1 = (jnp.dot(xv, rd["qkx_W1a"][...],
                      preferred_element_type=jnp.float32)
              + nz * vrow("qkx_w1n") + vrow("qkx_b1"))
        h1 = jnp.maximum(h1, 0.0)
        qk_x = (jnp.dot(h1, rd["qkx_W2"][...],
                        preferred_element_type=jnp.float32) + vrow("qkx_b2"))

        # TODO(synk): switch to lax.fori_loop over stacked weights if the
        # layer count grows beyond 1-2 (keeps vreg/VMEM pressure constant).
        for l in range(Lqk):
            out = rspmm(qk_x, qk_zrow)
            shortcut = qk_x
            t = out + vrow(f"qkl_alpha_{l}") * qk_x
            t = _mlp2(t, rd["qkl_W1"][l], vrow(f"qkl_b1_{l}"),
                      rd["qkl_W2"][l], vrow(f"qkl_b2_{l}"))
            t = _layernorm(t, vrow(f"qkl_g_{l}"), vrow(f"qkl_be_{l}"))
            qk_x = t + shortcut

        # ---- v branch -------------------------------------------------------
        rows = jax.lax.broadcasted_iota(jnp.int32, (V, 1), 0)
        onehot = (rows == h_idx).astype(jnp.float32)                # (V, 1)
        h1 = (jnp.dot(xv, rd["vx_W1a"][...],
                      preferred_element_type=jnp.float32)
              + onehot * vrow("vx_w1h") + vrow("vx_b1"))
        h1 = jnp.maximum(h1, 0.0)
        v_x = (jnp.dot(h1, rd["vx_W2"][...],
                       preferred_element_type=jnp.float32) + vrow("vx_b2"))

        for l in range(Lv):
            v_zrow = (jnp.dot(zb, rd["vl_zW"][l],
                              preferred_element_type=jnp.float32)
                      + rd["vl_zb"][l])                             # (1, R*D)
            out = rspmm(v_x, v_zrow)
            shortcut = v_x
            t = out + vrow(f"vl_beta_{l}") * v_x
            t = _mlp2(t, rd["vl_W1"][l], vrow(f"vl_b1_{l}"),
                      rd["vl_W2"][l], vrow(f"vl_b2_{l}"))
            t = _layernorm(t, vrow(f"vl_g_{l}"), vrow(f"vl_be_{l}"))
            v_x = t + shortcut

        # ---- linear (kernelized) attention, all heads lane-dense ------------
        # q and k projected together: one (V,D)@(D,2D) matmul (== chunk(2,-1))
        qk_cat = (jnp.dot(qk_x, rd["toqk_W"][...],
                          preferred_element_type=jnp.float32)
                  + rd["toqk_b"][...])                              # (V, 2D)
        # per-head F.normalize for q AND k in one block-diag mask matmul
        sq = jnp.dot(qk_cat * qk_cat, mbd2,
                     preferred_element_type=jnp.float32)            # (V, 2D)
        qk_n = qk_cat / jnp.maximum(jnp.sqrt(sq), 1e-12)
        qn = qk_n[:, :D]
        kw = qk_n[:, D:] * kscale
        v = v_x

        # kvs and the per-dim k-sum from ONE matmul (append a ones column)
        v_aug = jnp.concatenate([v, jnp.ones((V, 1), jnp.float32)], axis=1)
        kvs_aug = jax.lax.dot_general(kw, v_aug, (((0,), (0,)), ((), ())),
                                      preferred_element_type=jnp.float32)
        kvs = kvs_aug[:, :D]                                        # (D, D)
        ksum_col = kvs_aug[:, D:D + 1]                              # (D, 1)

        # numerator and denominator from ONE (V,D)@(D,2D) matmul
        rhs = jnp.concatenate([kvs * mbd, mbd * ksum_col], axis=1)  # (D, 2D)
        numden = jnp.dot(qn, rhs, preferred_element_type=jnp.float32)
        num = numden[:, :D] + jnp.sum(v, axis=0, keepdims=True) + v * Vf
        den = numden[:, D:] + 2.0 * Vf                              # >= V > 0
        attn_out = num * pl.reciprocal(den, approx=True)

        # ---- epilogue: residual + attn_norm + FFN + norm --------------------
        xa = xv + attn_out
        xa = _layernorm(xa, vrow("an_g"), vrow("an_b"))
        # TODO(synk): F.dropout inside the FFN is identity here (eval mode).
        ffn_out = _mlp2(xa, rd["ffn_W1"][...], vrow("ffn_b1"),
                        rd["ffn_W2"][...], vrow("ffn_b2"))
        xo = xa + ffn_out
        xo = _layernorm(xo, vrow("n_g"), vrow("n_b"))
        o_ref[0] = xo

    # VMEM budget: resident constants (x buffer count) + per-step batched
    # slabs (double-buffered in & out) + headroom for activations/temps.
    const_bytes = sum(int(arrays[n].size) * arrays[n].dtype.itemsize
                      for n in names if n not in batched)
    step_bytes = (sum(int(arrays[n].size) * arrays[n].dtype.itemsize // B
                      for n in batched) + V * D * 4)
    nbuf = 1 if single_buffer_constants else 2
    vmem_limit = int(min(64 << 20,
                         nbuf * const_bytes + 4 * step_bytes + (8 << 20)))

    grid_spec = pltpu.PrefetchScalarGridSpec(
        num_scalar_prefetch=2,
        grid=(B,),
        in_specs=[make_spec(n) for n in names],
        out_specs=pl.BlockSpec((1, V, D), lambda b, *_: (b, 0, 0)),
    )
    return pl.pallas_call(
        kernel,
        out_shape=jax.ShapeDtypeStruct((B, V, D), jnp.float32),
        grid_spec=grid_spec,
        compiler_params=pltpu.CompilerParams(
            # TODO(synk): on v7x, megacore-splitting over B duplicates the
            # resident constants per TensorCore; at production sizes shard a
            # destination-row axis instead.
            dimension_semantics=("parallel",),
            vmem_limit_bytes=vmem_limit),
    )(h_index.astype(jnp.int32), r_index.astype(jnp.int32), *inputs)


# ----------------------------------------------------------------------------
# Main
# ----------------------------------------------------------------------------

if __name__ == "__main__":
    B, V, D = 2, 16, 32          # batch, num_nodes, hidden_dim
    R, H = 4, 2                  # num_relation, num_heads
    NUM_QK_LAYER, NUM_V_LAYER = 1, 1
    E = 40                       # number of graph edges

    root = jax.random.PRNGKey(0)
    kp, kx, kz, kh, kr, ke1, ke2, ke3, kn = jax.random.split(root, 9)

    params = init_knowformer_layer(kp, R, NUM_QK_LAYER, NUM_V_LAYER, D)
    prep = prepare_params(params, R, D, H, NUM_QK_LAYER, NUM_V_LAYER)

    x = jax.random.normal(kx, (B, V, D), jnp.float32)
    z = jax.random.normal(kz, (B, D), jnp.float32)
    h_index = jax.random.randint(kh, (B,), 0, V)
    r_index = jax.random.randint(kr, (B,), 0, R)
    edge_index = jnp.stack([jax.random.randint(ke1, (E,), 0, V),   # head
                            jax.random.randint(ke2, (E,), 0, R),   # relation
                            jax.random.randint(ke3, (E,), 0, V)],  # tail
                           axis=1)
    noise = jax.random.normal(kn, (B, V, 1), jnp.float32) * 4.0    # .normal_(0,4)

    # static graph data: dense relational adjacency built ONCE, outside jit;
    # pre-laid out with relations stacked along ROWS for the commuted rspmm.
    a_rel = build_adjacency(edge_index, R, V)                      # (R, V, V)
    a_rows = a_rel.reshape(R * V, V)                               # (R*V, V)

    def run(single_buffer):
        fwd = jax.jit(partial(knowformer_layer_forward,
                              num_relation=R, num_heads=H,
                              num_qk_layer=NUM_QK_LAYER,
                              num_v_layer=NUM_V_LAYER,
                              single_buffer_constants=single_buffer))
        o = fwd(prep, h_index, r_index, x, z, a_rows, noise)
        jax.block_until_ready(o)
        return o

    try:
        out = run(True)                 # single-buffered constant operands
    except Exception:
        out = run(False)                # fall back to default buffering

    assert out.shape == (B, V, D)
    assert bool(jnp.all(jnp.isfinite(out)))

    # Tolerance-asserted pure-JAX reference (covers the algebraic rewrites and
    # the approx reciprocal).
    ref = knowformer_layer_reference(params, h_index, r_index, x, z, a_rel,
                                     noise, num_relation=R, num_heads=H)
    max_err = float(jnp.max(jnp.abs(out - ref)))
    assert max_err < 5e-2, f"kernel/reference mismatch: max abs err {max_err}"
    print("KERNEL_OK")
</pallas_src>

<mosaic_0001>
module attributes {stable_mosaic.version = 11 : i64} {
  func.func @kernel(%arg0: i32, %arg1: memref<2xi32, #tpu.memory_space<smem>>, %arg2: memref<2xi32, #tpu.memory_space<smem>>, %arg3: memref<64x16xf32, #tpu.memory_space<vmem>>, %arg4: memref<1x16x32xf32, #tpu.memory_space<vmem>>, %arg5: memref<1x1x32xf32, #tpu.memory_space<vmem>>, %arg6: memref<1x16x1xf32, #tpu.memory_space<vmem>>, %arg7: memref<22x32xf32, #tpu.memory_space<vmem>>, %arg8: memref<32x32xf32, #tpu.memory_space<vmem>>, %arg9: memref<64x64xf32, #tpu.memory_space<vmem>>, %arg10: memref<32x128xf32, #tpu.memory_space<vmem>>, %arg11: memref<1x128xf32, #tpu.memory_space<vmem>>, %arg12: memref<32x32xf32, #tpu.memory_space<vmem>>, %arg13: memref<32x32xf32, #tpu.memory_space<vmem>>, %arg14: memref<32x32xf32, #tpu.memory_space<vmem>>, %arg15: memref<32x32xf32, #tpu.memory_space<vmem>>, %arg16: memref<1x32x32xf32, #tpu.memory_space<vmem>>, %arg17: memref<1x32x32xf32, #tpu.memory_space<vmem>>, %arg18: memref<1x32x128xf32, #tpu.memory_space<vmem>>, %arg19: memref<1x1x128xf32, #tpu.memory_space<vmem>>, %arg20: memref<1x32x32xf32, #tpu.memory_space<vmem>>, %arg21: memref<1x32x32xf32, #tpu.memory_space<vmem>>, %arg22: memref<32x64xf32, #tpu.memory_space<vmem>>, %arg23: memref<1x64xf32, #tpu.memory_space<vmem>>, %arg24: memref<32x32xf32, #tpu.memory_space<vmem>>, %arg25: memref<32x32xf32, #tpu.memory_space<vmem>>, %arg26: memref<1x16x32xf32, #tpu.memory_space<vmem>>) attributes {dimension_semantics = [#tpu.dimension_semantics<parallel>], iteration_bounds = array<i64: 2>, scalar_prefetch = 2 : i64, scratch_operands = 0 : i64, tpu.core_type = #tpu.core_type<tc>, window_params = [{pipeline_mode = #tpu.pipeline_mode<synchronous>, transform_indices = @transform_0, window_bounds = array<i64: 64, 16>}, {transform_indices = @transform_1, window_bounds = array<i64: 1, 16, 32>}, {transform_indices = @transform_2, window_bounds = array<i64: 1, 1, 32>}, {transform_indices = @transform_3, window_bounds = array<i64: 1, 16, 1>}, {pipeline_mode = #tpu.pipeline_mode<synchronous>, transform_indices = @transform_4, window_bounds = array<i64: 22, 32>}, {pipeline_mode = #tpu.pipeline_mode<synchronous>, transform_indices = @transform_5, window_bounds = array<i64: 32, 32>}, {pipeline_mode = #tpu.pipeline_mode<synchronous>, transform_indices = @transform_6, window_bounds = array<i64: 64, 64>}, {pipeline_mode = #tpu.pipeline_mode<synchronous>, transform_indices = @transform_7, window_bounds = array<i64: 32, 128>}, {pipeline_mode = #tpu.pipeline_mode<synchronous>, transform_indices = @transform_8, window_bounds = array<i64: 1, 128>}, {pipeline_mode = #tpu.pipeline_mode<synchronous>, transform_indices = @transform_9, window_bounds = array<i64: 32, 32>}, {pipeline_mode = #tpu.pipeline_mode<synchronous>, transform_indices = @transform_10, window_bounds = array<i64: 32, 32>}, {pipeline_mode = #tpu.pipeline_mode<synchronous>, transform_indices = @transform_11, window_bounds = array<i64: 32, 32>}, {pipeline_mode = #tpu.pipeline_mode<synchronous>, transform_indices = @transform_12, window_bounds = array<i64: 32, 32>}, {pipeline_mode = #tpu.pipeline_mode<synchronous>, transform_indices = @transform_13, window_bounds = array<i64: 1, 32, 32>}, {pipeline_mode = #tpu.pipeline_mode<synchronous>, transform_indices = @transform_14, window_bounds = array<i64: 1, 32, 32>}, {pipeline_mode = #tpu.pipeline_mode<synchronous>, transform_indices = @transform_15, window_bounds = array<i64: 1, 32, 128>}, {pipeline_mode = #tpu.pipeline_mode<synchronous>, transform_indices = @transform_16, window_bounds = array<i64: 1, 1, 128>}, {pipeline_mode = #tpu.pipeline_mode<synchronous>, transform_indices = @transform_17, window_bounds = array<i64: 1, 32, 32>}, {pipeline_mode = #tpu.pipeline_mode<synchronous>, transform_indices = @transform_18, window_bounds = array<i64: 1, 32, 32>}, {pipeline_mode = #tpu.pipeline_mode<synchronous>, transform_indices = @transform_19, window_bounds = array<i64: 32, 64>}, {pipeline_mode = #tpu.pipeline_mode<synchronous>, transform_indices = @transform_20, window_bounds = array<i64: 1, 64>}, {pipeline_mode = #tpu.pipeline_mode<synchronous>, transform_indices = @transform_21, window_bounds = array<i64: 32, 32>}, {pipeline_mode = #tpu.pipeline_mode<synchronous>, transform_indices = @transform_22, window_bounds = array<i64: 32, 32>}, {transform_indices = @transform_23, window_bounds = array<i64: 1, 16, 32>}]} {
    %0 = arith.index_cast %arg0 : i32 to index
    %1 = memref.load %arg1[%0] : memref<2xi32, #tpu.memory_space<smem>>
    %2 = arith.index_cast %arg0 : i32 to index
    %3 = memref.load %arg2[%2] : memref<2xi32, #tpu.memory_space<smem>>
    %c2_i32 = arith.constant 2 : i32
    %4 = arith.cmpi eq, %3, %c2_i32 : i32
    %c3_i32 = arith.constant 3 : i32
    %5 = arith.cmpi eq, %3, %c3_i32 : i32
    %6 = arith.ori %4, %5 : i1
    %cst = arith.constant 3.330000e-01 : f32
    %cst_0 = arith.constant 1.000000e+00 : f32
    %7 = arith.select %6, %cst, %cst_0 : f32
    %c0 = arith.constant 0 : index
    %c0_1 = arith.constant 0 : index
    %8 = vector.load %arg3[%c0, %c0_1] : memref<64x16xf32, #tpu.memory_space<vmem>>, vector<64x16xf32>
    %c0_2 = arith.constant 0 : index
    %c0_3 = arith.constant 0 : index
    %c0_4 = arith.constant 0 : index
    %9 = vector.load %arg4[%c0_2, %c0_3, %c0_4] : memref<1x16x32xf32, #tpu.memory_space<vmem>>, vector<1x16x32xf32>
    %10 = vector.shape_cast %9 : vector<1x16x32xf32> to vector<16x32xf32>
    %c0_5 = arith.constant 0 : index
    %c0_6 = arith.constant 0 : index
    %c0_7 = arith.constant 0 : index
    %11 = vector.load %arg5[%c0_5, %c0_6, %c0_7] : memref<1x1x32xf32, #tpu.memory_space<vmem>>, vector<1x1x32xf32>
    %12 = vector.shape_cast %11 : vector<1x1x32xf32> to vector<1x32xf32>
    %c0_8 = arith.constant 0 : index
    %c0_9 = arith.constant 0 : index
    %c0_10 = arith.constant 0 : index
    %13 = vector.load %arg6[%c0_8, %c0_9, %c0_10] : memref<1x16x1xf32, #tpu.memory_space<vmem>>, vector<1x16x1xf32>
    %14 = vector.shape_cast %13 : vector<1x16x1xf32> to vector<16x1xf32>
    %c0_11 = arith.constant 0 : index
    %c0_12 = arith.constant 0 : index
    %15 = vector.load %arg7[%c0_11, %c0_12] : memref<22x32xf32, #tpu.memory_space<vmem>>, vector<22x32xf32>
    %c0_13 = arith.constant 0 : index
    %c0_14 = arith.constant 0 : index
    %16 = vector.load %arg8[%c0_13, %c0_14] : memref<32x32xf32, #tpu.memory_space<vmem>>, vector<32x32xf32>
    %c0_15 = arith.constant 0 : index
    %c0_16 = arith.constant 0 : index
    %17 = vector.load %arg9[%c0_15, %c0_16] : memref<64x64xf32, #tpu.memory_space<vmem>>, vector<64x64xf32>
    %c0_17 = arith.constant 0 : index
    %c0_18 = arith.constant 0 : index
    %18 = vector.load %arg10[%c0_17, %c0_18] : memref<32x128xf32, #tpu.memory_space<vmem>>, vector<32x128xf32>
    %cst_19 = arith.constant dense<0.000000e+00> : vector<1x128xf32>
    %19 = tpu.matmul %12, %18, %cst_19 {dimension_numbers = #tpu.dot_dimension_numbers<[1], [0], [0], [1], [0, 0, 1, 1], [], []>} : vector<1x32xf32>, vector<32x128xf32>, vector<1x128xf32> -> vector<1x128xf32>
    %c0_20 = arith.constant 0 : index
    %c0_21 = arith.constant 0 : index
    %20 = vector.load %arg11[%c0_20, %c0_21] : memref<1x128xf32, #tpu.memory_space<vmem>>, vector<1x128xf32>
    %21 = arith.addf %19, %20 : vector<1x128xf32>
    %c0_22 = arith.constant 0 : index
    %c0_23 = arith.constant 0 : index
    %22 = vector.load %arg12[%c0_22, %c0_23] : memref<32x32xf32, #tpu.memory_space<vmem>>, vector<32x32xf32>
    %cst_24 = arith.constant dense<0.000000e+00> : vector<16x32xf32>
    %23 = tpu.matmul %10, %22, %cst_24 {dimension_numbers = #tpu.dot_dimension_numbers<[1], [0], [0], [1], [0, 0, 1, 1], [], []>} : vector<16x32xf32>, vector<32x32xf32>, vector<16x32xf32> -> vector<16x32xf32>
    %24 = vector.extract_strided_slice %15 {offsets = [0, 0], sizes = [1, 32], strides = [1, 1]} : vector<22x32xf32> to vector<1x32xf32>
    %25 = vector.broadcast %14 : vector<16x1xf32> to vector<16x32xf32>
    %26 = vector.broadcast %24 : vector<1x32xf32> to vector<16x32xf32>
    %27 = arith.mulf %25, %26 : vector<16x32xf32>
    %28 = arith.addf %23, %27 : vector<16x32xf32>
    %29 = vector.extract_strided_slice %15 {offsets = [1, 0], sizes = [1, 32], strides = [1, 1]} : vector<22x32xf32> to vector<1x32xf32>
    %30 = vector.broadcast %29 : vector<1x32xf32> to vector<16x32xf32>
    %31 = arith.addf %28, %30 : vector<16x32xf32>
    %cst_25 = arith.constant 0.000000e+00 : f32
    %32 = vector.broadcast %cst_25 : f32 to vector<16x32xf32>
    %33 = arith.maximumf %31, %32 : vector<16x32xf32>
    %c0_26 = arith.constant 0 : index
    %c0_27 = arith.constant 0 : index
    %34 = vector.load %arg13[%c0_26, %c0_27] : memref<32x32xf32, #tpu.memory_space<vmem>>, vector<32x32xf32>
    %cst_28 = arith.constant dense<0.000000e+00> : vector<16x32xf32>
    %35 = tpu.matmul %33, %34, %cst_28 {dimension_numbers = #tpu.dot_dimension_numbers<[1], [0], [0], [1], [0, 0, 1, 1], [], []>} : vector<16x32xf32>, vector<32x32xf32>, vector<16x32xf32> -> vector<16x32xf32>
    %36 = vector.extract_strided_slice %15 {offsets = [2, 0], sizes = [1, 32], strides = [1, 1]} : vector<22x32xf32> to vector<1x32xf32>
    %37 = vector.broadcast %36 : vector<1x32xf32> to vector<16x32xf32>
    %38 = arith.addf %35, %37 : vector<16x32xf32>
    %cst_29 = arith.constant dense<0.000000e+00> : vector<64x32xf32>
    %39 = tpu.matmul %8, %38, %cst_29 {dimension_numbers = #tpu.dot_dimension_numbers<[1], [0], [0], [1], [0, 0, 1, 1], [], []>} : vector<64x16xf32>, vector<16x32xf32>, vector<64x32xf32> -> vector<64x32xf32>
    %40 = vector.extract_strided_slice %39 {offsets = [0, 0], sizes = [16, 32], strides = [1, 1]} : vector<64x32xf32> to vector<16x32xf32>
    %41 = vector.extract_strided_slice %21 {offsets = [0, 0], sizes = [1, 32], strides = [1, 1]} : vector<1x128xf32> to vector<1x32xf32>
    %42 = vector.broadcast %41 : vector<1x32xf32> to vector<16x32xf32>
    %43 = arith.mulf %40, %42 : vector<16x32xf32>
    %44 = vector.extract_strided_slice %39 {offsets = [16, 0], sizes = [16, 32], strides = [1, 1]} : vector<64x32xf32> to vector<16x32xf32>
    %45 = vector.extract_strided_slice %21 {offsets = [0, 32], sizes = [1, 32], strides = [1, 1]} : vector<1x128xf32> to vector<1x32xf32>
    %46 = vector.broadcast %45 : vector<1x32xf32> to vector<16x32xf32>
    %47 = arith.mulf %44, %46 : vector<16x32xf32>
    %48 = arith.addf %43, %47 : vector<16x32xf32>
    %49 = vector.extract_strided_slice %39 {offsets = [32, 0], sizes = [16, 32], strides = [1, 1]} : vector<64x32xf32> to vector<16x32xf32>
    %50 = vector.extract_strided_slice %21 {offsets = [0, 64], sizes = [1, 32], strides = [1, 1]} : vector<1x128xf32> to vector<1x32xf32>
    %51 = vector.broadcast %50 : vector<1x32xf32> to vector<16x32xf32>
    %52 = arith.mulf %49, %51 : vector<16x32xf32>
    %53 = arith.addf %48, %52 : vector<16x32xf32>
    %54 = vector.extract_strided_slice %39 {offsets = [48, 0], sizes = [16, 32], strides = [1, 1]} : vector<64x32xf32> to vector<16x32xf32>
    %55 = vector.extract_strided_slice %21 {offsets = [0, 96], sizes = [1, 32], strides = [1, 1]} : vector<1x128xf32> to vector<1x32xf32>
    %56 = vector.broadcast %55 : vector<1x32xf32> to vector<16x32xf32>
    %57 = arith.mulf %54, %56 : vector<16x32xf32>
    %58 = arith.addf %53, %57 : vector<16x32xf32>
    %59 = vector.extract_strided_slice %15 {offsets = [6, 0], sizes = [1, 32], strides = [1, 1]} : vector<22x32xf32> to vector<1x32xf32>
    %60 = vector.broadcast %59 : vector<1x32xf32> to vector<16x32xf32>
    %61 = arith.mulf %60, %38 : vector<16x32xf32>
    %62 = arith.addf %58, %61 : vector<16x32xf32>
    %c0_30 = arith.constant 0 : index
    %c0_31 = arith.constant 0 : index
    %c0_32 = arith.constant 0 : index
    %63 = vector.load %arg16[%c0_30, %c0_31, %c0_32] : memref<1x32x32xf32, #tpu.memory_space<vmem>>, vector<1x32x32xf32>
    %64 = vector.shape_cast %63 : vector<1x32x32xf32> to vector<32x32xf32>
    %65 = vector.extract_strided_slice %15 {offsets = [7, 0], sizes = [1, 32], strides = [1, 1]} : vector<22x32xf32> to vector<1x32xf32>
    %c0_33 = arith.constant 0 : index
    %c0_34 = arith.constant 0 : index
    %c0_35 = arith.constant 0 : index
    %66 = vector.load %arg17[%c0_33, %c0_34, %c0_35] : memref<1x32x32xf32, #tpu.memory_space<vmem>>, vector<1x32x32xf32>
    %67 = vector.shape_cast %66 : vector<1x32x32xf32> to vector<32x32xf32>
    %68 = vector.extract_strided_slice %15 {offsets = [8, 0], sizes = [1, 32], strides = [1, 1]} : vector<22x32xf32> to vector<1x32xf32>
    %cst_36 = arith.constant dense<0.000000e+00> : vector<16x32xf32>
    %69 = tpu.matmul %62, %64, %cst_36 {dimension_numbers = #tpu.dot_dimension_numbers<[1], [0], [0], [1], [0, 0, 1, 1], [], []>} : vector<16x32xf32>, vector<32x32xf32>, vector<16x32xf32> -> vector<16x32xf32>
    %70 = vector.broadcast %65 : vector<1x32xf32> to vector<16x32xf32>
    %71 = arith.addf %69, %70 : vector<16x32xf32>
    %cst_37 = arith.constant 0.000000e+00 : f32
    %72 = vector.broadcast %cst_37 : f32 to vector<16x32xf32>
    %73 = arith.maximumf %71, %72 : vector<16x32xf32>
    %cst_38 = arith.constant dense<0.000000e+00> : vector<16x32xf32>
    %74 = tpu.matmul %73, %67, %cst_38 {dimension_numbers = #tpu.dot_dimension_numbers<[1], [0], [0], [1], [0, 0, 1, 1], [], []>} : vector<16x32xf32>, vector<32x32xf32>, vector<16x32xf32> -> vector<16x32xf32>
    %75 = vector.broadcast %68 : vector<1x32xf32> to vector<16x32xf32>
    %76 = arith.addf %74, %75 : vector<16x32xf32>
    %77 = vector.extract_strided_slice %15 {offsets = [9, 0], sizes = [1, 32], strides = [1, 1]} : vector<22x32xf32> to vector<1x32xf32>
    %78 = vector.extract_strided_slice %15 {offsets = [10, 0], sizes = [1, 32], strides = [1, 1]} : vector<22x32xf32> to vector<1x32xf32>
    %cst_39 = arith.constant dense<0.000000e+00> : vector<16xf32>
    %79 = vector.multi_reduction <add>, %76, %cst_39 [1] : vector<16x32xf32> to vector<16xf32>
    %80 = vector.shape_cast %79 : vector<16xf32> to vector<16x1xf32>
    %cst_40 = arith.constant 3.200000e+01 : f32
    %81 = vector.broadcast %cst_40 : f32 to vector<16x1xf32>
    %82 = arith.divf %80, %81 : vector<16x1xf32>
    %83 = vector.broadcast %82 : vector<16x1xf32> to vector<16x32xf32>
    %84 = arith.subf %76, %83 : vector<16x32xf32>
    %85 = arith.mulf %84, %84 : vector<16x32xf32>
    %cst_41 = arith.constant dense<0.000000e+00> : vector<16xf32>
    %86 = vector.multi_reduction <add>, %85, %cst_41 [1] : vector<16x32xf32> to vector<16xf32>
    %87 = vector.shape_cast %86 : vector<16xf32> to vector<16x1xf32>
    %cst_42 = arith.constant 3.200000e+01 : f32
    %88 = vector.broadcast %cst_42 : f32 to vector<16x1xf32>
    %89 = arith.divf %87, %88 : vector<16x1xf32>
    %cst_43 = arith.constant 9.99999974E-6 : f32
    %90 = vector.broadcast %cst_43 : f32 to vector<16x1xf32>
    %91 = arith.addf %89, %90 : vector<16x1xf32>
    %92 = math.rsqrt %91 : vector<16x1xf32>
    %93 = vector.broadcast %92 : vector<16x1xf32> to vector<16x32xf32>
    %94 = arith.mulf %84, %93 : vector<16x32xf32>
    %95 = vector.broadcast %77 : vector<1x32xf32> to vector<16x32xf32>
    %96 = arith.mulf %94, %95 : vector<16x32xf32>
    %97 = vector.broadcast %78 : vector<1x32xf32> to vector<16x32xf32>
    %98 = arith.addf %96, %97 : vector<16x32xf32>
    %99 = arith.addf %98, %38 : vector<16x32xf32>
    %100 = tpu.iota {dimensions = array<i32: 0>} : vector<16x1xi32>
    %101 = vector.broadcast %1 : i32 to vector<16x1xi32>
    %102 = arith.cmpi eq, %100, %101 : vector<16x1xi32>
    %103 = arith.extui %102 : vector<16x1xi1> to vector<16x1xi32>
    %104 = arith.sitofp %103 : vector<16x1xi32> to vector<16x1xf32>
    %c0_44 = arith.constant 0 : index
    %c0_45 = arith.constant 0 : index
    %105 = vector.load %arg14[%c0_44, %c0_45] : memref<32x32xf32, #tpu.memory_space<vmem>>, vector<32x32xf32>
    %cst_46 = arith.constant dense<0.000000e+00> : vector<16x32xf32>
    %106 = tpu.matmul %10, %105, %cst_46 {dimension_numbers = #tpu.dot_dimension_numbers<[1], [0], [0], [1], [0, 0, 1, 1], [], []>} : vector<16x32xf32>, vector<32x32xf32>, vector<16x32xf32> -> vector<16x32xf32>
    %107 = vector.extract_strided_slice %15 {offsets = [3, 0], sizes = [1, 32], strides = [1, 1]} : vector<22x32xf32> to vector<1x32xf32>
    %108 = vector.broadcast %104 : vector<16x1xf32> to vector<16x32xf32>
    %109 = vector.broadcast %107 : vector<1x32xf32> to vector<16x32xf32>
    %110 = arith.mulf %108, %109 : vector<16x32xf32>
    %111 = arith.addf %106, %110 : vector<16x32xf32>
    %112 = vector.extract_strided_slice %15 {offsets = [4, 0], sizes = [1, 32], strides = [1, 1]} : vector<22x32xf32> to vector<1x32xf32>
    %113 = vector.broadcast %112 : vector<1x32xf32> to vector<16x32xf32>
    %114 = arith.addf %111, %113 : vector<16x32xf32>
    %cst_47 = arith.constant 0.000000e+00 : f32
    %115 = vector.broadcast %cst_47 : f32 to vector<16x32xf32>
    %116 = arith.maximumf %114, %115 : vector<16x32xf32>
    %c0_48 = arith.constant 0 : index
    %c0_49 = arith.constant 0 : index
    %117 = vector.load %arg15[%c0_48, %c0_49] : memref<32x32xf32, #tpu.memory_space<vmem>>, vector<32x32xf32>
    %cst_50 = arith.constant dense<0.000000e+00> : vector<16x32xf32>
    %118 = tpu.matmul %116, %117, %cst_50 {dimension_numbers = #tpu.dot_dimension_numbers<[1], [0], [0], [1], [0, 0, 1, 1], [], []>} : vector<16x32xf32>, vector<32x32xf32>, vector<16x32xf32> -> vector<16x32xf32>
    %119 = vector.extract_strided_slice %15 {offsets = [5, 0], sizes = [1, 32], strides = [1, 1]} : vector<22x32xf32> to vector<1x32xf32>
    %120 = vector.broadcast %119 : vector<1x32xf32> to vector<16x32xf32>
    %121 = arith.addf %118, %120 : vector<16x32xf32>
    %c0_51 = arith.constant 0 : index
    %c0_52 = arith.constant 0 : index
    %c0_53 = arith.constant 0 : index
    %122 = vector.load %arg18[%c0_51, %c0_52, %c0_53] : memref<1x32x128xf32, #tpu.memory_space<vmem>>, vector<1x32x128xf32>
    %123 = vector.shape_cast %122 : vector<1x32x128xf32> to vector<32x128xf32>
    %cst_54 = arith.constant dense<0.000000e+00> : vector<1x128xf32>
    %124 = tpu.matmul %12, %123, %cst_54 {dimension_numbers = #tpu.dot_dimension_numbers<[1], [0], [0], [1], [0, 0, 1, 1], [], []>} : vector<1x32xf32>, vector<32x128xf32>, vector<1x128xf32> -> vector<1x128xf32>
    %c0_55 = arith.constant 0 : index
    %c0_56 = arith.constant 0 : index
    %c0_57 = arith.constant 0 : index
    %125 = vector.load %arg19[%c0_55, %c0_56, %c0_57] : memref<1x1x128xf32, #tpu.memory_space<vmem>>, vector<1x1x128xf32>
    %126 = vector.shape_cast %125 : vector<1x1x128xf32> to vector<1x128xf32>
    %127 = arith.addf %124, %126 : vector<1x128xf32>
    %cst_58 = arith.constant dense<0.000000e+00> : vector<64x32xf32>
    %128 = tpu.matmul %8, %121, %cst_58 {dimension_numbers = #tpu.dot_dimension_numbers<[1], [0], [0], [1], [0, 0, 1, 1], [], []>} : vector<64x16xf32>, vector<16x32xf32>, vector<64x32xf32> -> vector<64x32xf32>
    %129 = vector.extract_strided_slice %128 {offsets = [0, 0], sizes = [16, 32], strides = [1, 1]} : vector<64x32xf32> to vector<16x32xf32>
    %130 = vector.extract_strided_slice %127 {offsets = [0, 0], sizes = [1, 32], strides = [1, 1]} : vector<1x128xf32> to vector<1x32xf32>
    %131 = vector.broadcast %130 : vector<1x32xf32> to vector<16x32xf32>
    %132 = arith.mulf %129, %131 : vector<16x32xf32>
    %133 = vector.extract_strided_slice %128 {offsets = [16, 0], sizes = [16, 32], strides = [1, 1]} : vector<64x32xf32> to vector<16x32xf32>
    %134 = vector.extract_strided_slice %127 {offsets = [0, 32], sizes = [1, 32], strides = [1, 1]} : vector<1x128xf32> to vector<1x32xf32>
    %135 = vector.broadcast %134 : vector<1x32xf32> to vector<16x32xf32>
    %136 = arith.mulf %133, %135 : vector<16x32xf32>
    %137 = arith.addf %132, %136 : vector<16x32xf32>
    %138 = vector.extract_strided_slice %128 {offsets = [32, 0], sizes = [16, 32], strides = [1, 1]} : vector<64x32xf32> to vector<16x32xf32>
    %139 = vector.extract_strided_slice %127 {offsets = [0, 64], sizes = [1, 32], strides = [1, 1]} : vector<1x128xf32> to vector<1x32xf32>
    %140 = vector.broadcast %139 : vector<1x32xf32> to vector<16x32xf32>
    %141 = arith.mulf %138, %140 : vector<16x32xf32>
    %142 = arith.addf %137, %141 : vector<16x32xf32>
    %143 = vector.extract_strided_slice %128 {offsets = [48, 0], sizes = [16, 32], strides = [1, 1]} : vector<64x32xf32> to vector<16x32xf32>
    %144 = vector.extract_strided_slice %127 {offsets = [0, 96], sizes = [1, 32], strides = [1, 1]} : vector<1x128xf32> to vector<1x32xf32>
    %145 = vector.broadcast %144 : vector<1x32xf32> to vector<16x32xf32>
    %146 = arith.mulf %143, %145 : vector<16x32xf32>
    %147 = arith.addf %142, %146 : vector<16x32xf32>
    %148 = vector.extract_strided_slice %15 {offsets = [11, 0], sizes = [1, 32], strides = [1, 1]} : vector<22x32xf32> to vector<1x32xf32>
    %149 = vector.broadcast %148 : vector<1x32xf32> to vector<16x32xf32>
    %150 = arith.mulf %149, %121 : vector<16x32xf32>
    %151 = arith.addf %147, %150 : vector<16x32xf32>
    %c0_59 = arith.constant 0 : index
    %c0_60 = arith.constant 0 : index
    %c0_61 = arith.constant 0 : index
    %152 = vector.load %arg20[%c0_59, %c0_60, %c0_61] : memref<1x32x32xf32, #tpu.memory_space<vmem>>, vector<1x32x32xf32>
    %153 = vector.shape_cast %152 : vector<1x32x32xf32> to vector<32x32xf32>
    %154 = vector.extract_strided_slice %15 {offsets = [12, 0], sizes = [1, 32], strides = [1, 1]} : vector<22x32xf32> to vector<1x32xf32>
    %c0_62 = arith.constant 0 : index
    %c0_63 = arith.constant 0 : index
    %c0_64 = arith.constant 0 : index
    %155 = vector.load %arg21[%c0_62, %c0_63, %c0_64] : memref<1x32x32xf32, #tpu.memory_space<vmem>>, vector<1x32x32xf32>
    %156 = vector.shape_cast %155 : vector<1x32x32xf32> to vector<32x32xf32>
    %157 = vector.extract_strided_slice %15 {offsets = [13, 0], sizes = [1, 32], strides = [1, 1]} : vector<22x32xf32> to vector<1x32xf32>
    %cst_65 = arith.constant dense<0.000000e+00> : vector<16x32xf32>
    %158 = tpu.matmul %151, %153, %cst_65 {dimension_numbers = #tpu.dot_dimension_numbers<[1], [0], [0], [1], [0, 0, 1, 1], [], []>} : vector<16x32xf32>, vector<32x32xf32>, vector<16x32xf32> -> vector<16x32xf32>
    %159 = vector.broadcast %154 : vector<1x32xf32> to vector<16x32xf32>
    %160 = arith.addf %158, %159 : vector<16x32xf32>
    %cst_66 = arith.constant 0.000000e+00 : f32
    %161 = vector.broadcast %cst_66 : f32 to vector<16x32xf32>
    %162 = arith.maximumf %160, %161 : vector<16x32xf32>
    %cst_67 = arith.constant dense<0.000000e+00> : vector<16x32xf32>
    %163 = tpu.matmul %162, %156, %cst_67 {dimension_numbers = #tpu.dot_dimension_numbers<[1], [0], [0], [1], [0, 0, 1, 1], [], []>} : vector<16x32xf32>, vector<32x32xf32>, vector<16x32xf32> -> vector<16x32xf32>
    %164 = vector.broadcast %157 : vector<1x32xf32> to vector<16x32xf32>
    %165 = arith.addf %163, %164 : vector<16x32xf32>
    %166 = vector.extract_strided_slice %15 {offsets = [14, 0], sizes = [1, 32], strides = [1, 1]} : vector<22x32xf32> to vector<1x32xf32>
    %167 = vector.extract_strided_slice %15 {offsets = [15, 0], sizes = [1, 32], strides = [1, 1]} : vector<22x32xf32> to vector<1x32xf32>
    %cst_68 = arith.constant dense<0.000000e+00> : vector<16xf32>
    %168 = vector.multi_reduction <add>, %165, %cst_68 [1] : vector<16x32xf32> to vector<16xf32>
    %169 = vector.shape_cast %168 : vector<16xf32> to vector<16x1xf32>
    %cst_69 = arith.constant 3.200000e+01 : f32
    %170 = vector.broadcast %cst_69 : f32 to vector<16x1xf32>
    %171 = arith.divf %169, %170 : vector<16x1xf32>
    %172 = vector.broadcast %171 : vector<16x1xf32> to vector<16x32xf32>
    %173 = arith.subf %165, %172 : vector<16x32xf32>
    %174 = arith.mulf %173, %173 : vector<16x32xf32>
    %cst_70 = arith.constant dense<0.000000e+00> : vector<16xf32>
    %175 = vector.multi_reduction <add>, %174, %cst_70 [1] : vector<16x32xf32> to vector<16xf32>
    %176 = vector.shape_cast %175 : vector<16xf32> to vector<16x1xf32>
    %cst_71 = arith.constant 3.200000e+01 : f32
    %177 = vector.broadcast %cst_71 : f32 to vector<16x1xf32>
    %178 = arith.divf %176, %177 : vector<16x1xf32>
    %cst_72 = arith.constant 9.99999974E-6 : f32
    %179 = vector.broadcast %cst_72 : f32 to vector<16x1xf32>
    %180 = arith.addf %178, %179 : vector<16x1xf32>
    %181 = math.rsqrt %180 : vector<16x1xf32>
    %182 = vector.broadcast %181 : vector<16x1xf32> to vector<16x32xf32>
    %183 = arith.mulf %173, %182 : vector<16x32xf32>
    %184 = vector.broadcast %166 : vector<1x32xf32> to vector<16x32xf32>
    %185 = arith.mulf %183, %184 : vector<16x32xf32>
    %186 = vector.broadcast %167 : vector<1x32xf32> to vector<16x32xf32>
    %187 = arith.addf %185, %186 : vector<16x32xf32>
    %188 = arith.addf %187, %121 : vector<16x32xf32>
    %c0_73 = arith.constant 0 : index
    %c0_74 = arith.constant 0 : index
    %189 = vector.load %arg22[%c0_73, %c0_74] : memref<32x64xf32, #tpu.memory_space<vmem>>, vector<32x64xf32>
    %cst_75 = arith.constant dense<0.000000e+00> : vector<16x64xf32>
    %190 = tpu.matmul %99, %189, %cst_75 {dimension_numbers = #tpu.dot_dimension_numbers<[1], [0], [0], [1], [0, 0, 1, 1], [], []>} : vector<16x32xf32>, vector<32x64xf32>, vector<16x64xf32> -> vector<16x64xf32>
    %c0_76 = arith.constant 0 : index
    %c0_77 = arith.constant 0 : index
    %191 = vector.load %arg23[%c0_76, %c0_77] : memref<1x64xf32, #tpu.memory_space<vmem>>, vector<1x64xf32>
    %192 = vector.broadcast %191 : vector<1x64xf32> to vector<16x64xf32>
    %193 = arith.addf %190, %192 : vector<16x64xf32>
    %194 = arith.mulf %193, %193 : vector<16x64xf32>
    %cst_78 = arith.constant dense<0.000000e+00> : vector<16x64xf32>
    %195 = tpu.matmul %194, %17, %cst_78 {dimension_numbers = #tpu.dot_dimension_numbers<[1], [0], [0], [1], [0, 0, 1, 1], [], []>} : vector<16x64xf32>, vector<64x64xf32>, vector<16x64xf32> -> vector<16x64xf32>
    %196 = math.sqrt %195 : vector<16x64xf32>
    %cst_79 = arith.constant 9.99999996E-13 : f32
    %197 = vector.broadcast %cst_79 : f32 to vector<16x64xf32>
    %198 = arith.maximumf %196, %197 : vector<16x64xf32>
    %199 = arith.divf %193, %198 : vector<16x64xf32>
    %200 = vector.extract_strided_slice %199 {offsets = [0, 0], sizes = [16, 32], strides = [1, 1]} : vector<16x64xf32> to vector<16x32xf32>
    %201 = vector.extract_strided_slice %199 {offsets = [0, 32], sizes = [16, 32], strides = [1, 1]} : vector<16x64xf32> to vector<16x32xf32>
    %202 = vector.broadcast %7 : f32 to vector<16x32xf32>
    %203 = arith.mulf %201, %202 : vector<16x32xf32>
    %cst_80 = arith.constant 1.000000e+00 : f32
    %204 = vector.broadcast %cst_80 : f32 to vector<16x1xf32>
    %205 = tpu.concatenate %188, %204 in 1 : vector<16x32xf32>, vector<16x1xf32> -> vector<16x33xf32>
    %cst_81 = arith.constant dense<0.000000e+00> : vector<32x33xf32>
    %206 = tpu.matmul %203, %205, %cst_81 {dimension_numbers = #tpu.dot_dimension_numbers<[0], [0], [1], [1], [0, 1, 1, 1], [], []>} : vector<16x32xf32>, vector<16x33xf32>, vector<32x33xf32> -> vector<32x33xf32>
    %207 = vector.extract_strided_slice %206 {offsets = [0, 0], sizes = [32, 32], strides = [1, 1]} : vector<32x33xf32> to vector<32x32xf32>
    %208 = vector.extract_strided_slice %206 {offsets = [0, 32], sizes = [32, 1], strides = [1, 1]} : vector<32x33xf32> to vector<32x1xf32>
    %209 = arith.mulf %207, %16 : vector<32x32xf32>
    %210 = vector.broadcast %208 : vector<32x1xf32> to vector<32x32xf32>
    %211 = arith.mulf %16, %210 : vector<32x32xf32>
    %212 = tpu.concatenate %209, %211 in 1 : vector<32x32xf32>, vector<32x32xf32> -> vector<32x64xf32>
    %cst_82 = arith.constant dense<0.000000e+00> : vector<16x64xf32>
    %213 = tpu.matmul %200, %212, %cst_82 {dimension_numbers = #tpu.dot_dimension_numbers<[1], [0], [0], [1], [0, 0, 1, 1], [], []>} : vector<16x32xf32>, vector<32x64xf32>, vector<16x64xf32> -> vector<16x64xf32>
    %214 = vector.extract_strided_slice %213 {offsets = [0, 0], sizes = [16, 32], strides = [1, 1]} : vector<16x64xf32> to vector<16x32xf32>
    %cst_83 = arith.constant dense<0.000000e+00> : vector<32xf32>
    %215 = vector.multi_reduction <add>, %188, %cst_83 [0] : vector<16x32xf32> to vector<32xf32>
    %216 = vector.shape_cast %215 : vector<32xf32> to vector<1x32xf32>
    %217 = vector.broadcast %216 : vector<1x32xf32> to vector<16x32xf32>
    %218 = arith.addf %214, %217 : vector<16x32xf32>
    %cst_84 = arith.constant 1.600000e+01 : f32
    %219 = vector.broadcast %cst_84 : f32 to vector<16x32xf32>
    %220 = arith.mulf %188, %219 : vector<16x32xf32>
    %221 = arith.addf %218, %220 : vector<16x32xf32>
    %222 = vector.extract_strided_slice %213 {offsets = [0, 32], sizes = [16, 32], strides = [1, 1]} : vector<16x64xf32> to vector<16x32xf32>
    %cst_85 = arith.constant 3.200000e+01 : f32
    %223 = vector.broadcast %cst_85 : f32 to vector<16x32xf32>
    %224 = arith.addf %222, %223 : vector<16x32xf32>
    %225 = tpu.reciprocal %224 {approx = true} : vector<16x32xf32> -> vector<16x32xf32>
    %226 = arith.mulf %221, %225 : vector<16x32xf32>
    %227 = arith.addf %10, %226 : vector<16x32xf32>
    %228 = vector.extract_strided_slice %15 {offsets = [18, 0], sizes = [1, 32], strides = [1, 1]} : vector<22x32xf32> to vector<1x32xf32>
    %229 = vector.extract_strided_slice %15 {offsets = [19, 0], sizes = [1, 32], strides = [1, 1]} : vector<22x32xf32> to vector<1x32xf32>
    %cst_86 = arith.constant dense<0.000000e+00> : vector<16xf32>
    %230 = vector.multi_reduction <add>, %227, %cst_86 [1] : vector<16x32xf32> to vector<16xf32>
    %231 = vector.shape_cast %230 : vector<16xf32> to vector<16x1xf32>
    %cst_87 = arith.constant 3.200000e+01 : f32
    %232 = vector.broadcast %cst_87 : f32 to vector<16x1xf32>
    %233 = arith.divf %231, %232 : vector<16x1xf32>
    %234 = vector.broadcast %233 : vector<16x1xf32> to vector<16x32xf32>
    %235 = arith.subf %227, %234 : vector<16x32xf32>
    %236 = arith.mulf %235, %235 : vector<16x32xf32>
    %cst_88 = arith.constant dense<0.000000e+00> : vector<16xf32>
    %237 = vector.multi_reduction <add>, %236, %cst_88 [1] : vector<16x32xf32> to vector<16xf32>
    %238 = vector.shape_cast %237 : vector<16xf32> to vector<16x1xf32>
    %cst_89 = arith.constant 3.200000e+01 : f32
    %239 = vector.broadcast %cst_89 : f32 to vector<16x1xf32>
    %240 = arith.divf %238, %239 : vector<16x1xf32>
    %cst_90 = arith.constant 9.99999974E-6 : f32
    %241 = vector.broadcast %cst_90 : f32 to vector<16x1xf32>
    %242 = arith.addf %240, %241 : vector<16x1xf32>
    %243 = math.rsqrt %242 : vector<16x1xf32>
    %244 = vector.broadcast %243 : vector<16x1xf32> to vector<16x32xf32>
    %245 = arith.mulf %235, %244 : vector<16x32xf32>
    %246 = vector.broadcast %228 : vector<1x32xf32> to vector<16x32xf32>
    %247 = arith.mulf %245, %246 : vector<16x32xf32>
    %248 = vector.broadcast %229 : vector<1x32xf32> to vector<16x32xf32>
    %249 = arith.addf %247, %248 : vector<16x32xf32>
    %c0_91 = arith.constant 0 : index
    %c0_92 = arith.constant 0 : index
    %250 = vector.load %arg24[%c0_91, %c0_92] : memref<32x32xf32, #tpu.memory_space<vmem>>, vector<32x32xf32>
    %251 = vector.extract_strided_slice %15 {offsets = [16, 0], sizes = [1, 32], strides = [1, 1]} : vector<22x32xf32> to vector<1x32xf32>
    %c0_93 = arith.constant 0 : index
    %c0_94 = arith.constant 0 : index
    %252 = vector.load %arg25[%c0_93, %c0_94] : memref<32x32xf32, #tpu.memory_space<vmem>>, vector<32x32xf32>
    %253 = vector.extract_strided_slice %15 {offsets = [17, 0], sizes = [1, 32], strides = [1, 1]} : vector<22x32xf32> to vector<1x32xf32>
    %cst_95 = arith.constant dense<0.000000e+00> : vector<16x32xf32>
    %254 = tpu.matmul %249, %250, %cst_95 {dimension_numbers = #tpu.dot_dimension_numbers<[1], [0], [0], [1], [0, 0, 1, 1], [], []>} : vector<16x32xf32>, vector<32x32xf32>, vector<16x32xf32> -> vector<16x32xf32>
    %255 = vector.broadcast %251 : vector<1x32xf32> to vector<16x32xf32>
    %256 = arith.addf %254, %255 : vector<16x32xf32>
    %cst_96 = arith.constant 0.000000e+00 : f32
    %257 = vector.broadcast %cst_96 : f32 to vector<16x32xf32>
    %258 = arith.maximumf %256, %257 : vector<16x32xf32>
    %cst_97 = arith.constant dense<0.000000e+00> : vector<16x32xf32>
    %259 = tpu.matmul %258, %252, %cst_97 {dimension_numbers = #tpu.dot_dimension_numbers<[1], [0], [0], [1], [0, 0, 1, 1], [], []>} : vector<16x32xf32>, vector<32x32xf32>, vector<16x32xf32> -> vector<16x32xf32>
    %260 = vector.broadcast %253 : vector<1x32xf32> to vector<16x32xf32>
    %261 = arith.addf %259, %260 : vector<16x32xf32>
    %262 = arith.addf %249, %261 : vector<16x32xf32>
    %263 = vector.extract_strided_slice %15 {offsets = [20, 0], sizes = [1, 32], strides = [1, 1]} : vector<22x32xf32> to vector<1x32xf32>
    %264 = vector.extract_strided_slice %15 {offsets = [21, 0], sizes = [1, 32], strides = [1, 1]} : vector<22x32xf32> to vector<1x32xf32>
    %cst_98 = arith.constant dense<0.000000e+00> : vector<16xf32>
    %265 = vector.multi_reduction <add>, %262, %cst_98 [1] : vector<16x32xf32> to vector<16xf32>
    %266 = vector.shape_cast %265 : vector<16xf32> to vector<16x1xf32>
    %cst_99 = arith.constant 3.200000e+01 : f32
    %267 = vector.broadcast %cst_99 : f32 to vector<16x1xf32>
    %268 = arith.divf %266, %267 : vector<16x1xf32>
    %269 = vector.broadcast %268 : vector<16x1xf32> to vector<16x32xf32>
    %270 = arith.subf %262, %269 : vector<16x32xf32>
    %271 = arith.mulf %270, %270 : vector<16x32xf32>
    %cst_100 = arith.constant dense<0.000000e+00> : vector<16xf32>
    %272 = vector.multi_reduction <add>, %271, %cst_100 [1] : vector<16x32xf32> to vector<16xf32>
    %273 = vector.shape_cast %272 : vector<16xf32> to vector<16x1xf32>
    %cst_101 = arith.constant 3.200000e+01 : f32
    %274 = vector.broadcast %cst_101 : f32 to vector<16x1xf32>
    %275 = arith.divf %273, %274 : vector<16x1xf32>
    %cst_102 = arith.constant 9.99999974E-6 : f32
    %276 = vector.broadcast %cst_102 : f32 to vector<16x1xf32>
    %277 = arith.addf %275, %276 : vector<16x1xf32>
    %278 = math.rsqrt %277 : vector<16x1xf32>
    %279 = vector.broadcast %278 : vector<16x1xf32> to vector<16x32xf32>
    %280 = arith.mulf %270, %279 : vector<16x32xf32>
    %281 = vector.broadcast %263 : vector<1x32xf32> to vector<16x32xf32>
    %282 = arith.mulf %280, %281 : vector<16x32xf32>
    %283 = vector.broadcast %264 : vector<1x32xf32> to vector<16x32xf32>
    %284 = arith.addf %282, %283 : vector<16x32xf32>
    %c0_103 = arith.constant 0 : index
    %c0_104 = arith.constant 0 : index
    %c0_105 = arith.constant 0 : index
    %285 = vector.load %arg26[%c0_103, %c0_104, %c0_105] : memref<1x16x32xf32, #tpu.memory_space<vmem>>, vector<1x16x32xf32>
    %286 = vector.shape_cast %285 : vector<1x16x32xf32> to vector<16x32xf32>
    %287 = vector.shape_cast %284 : vector<16x32xf32> to vector<1x16x32xf32>
    tpu.vector_store %arg26[%c0_103, %c0_104, %c0_105], %287 {strides = array<i32>} : memref<1x16x32xf32, #tpu.memory_space<vmem>>, vector<1x16x32xf32>,
    return
  }
  func.func @transform_0(%arg0: i32, %arg1: memref<2xi32, #tpu.memory_space<smem>>, %arg2: memref<2xi32, #tpu.memory_space<smem>>) -> (i32, i32) {
    %c0_i32 = arith.constant 0 : i32
    %c0_i32_0 = arith.constant 0 : i32
    %c0_i32_1 = arith.constant 0 : i32
    return %c0_i32, %c0_i32_0 : i32, i32
  }
  func.func @transform_1(%arg0: i32, %arg1: memref<2xi32, #tpu.memory_space<smem>>, %arg2: memref<2xi32, #tpu.memory_space<smem>>) -> (i32, i32, i32) {
    %c0_i32 = arith.constant 0 : i32
    %c0_i32_0 = arith.constant 0 : i32
    %c0_i32_1 = arith.constant 0 : i32
    return %arg0, %c0_i32, %c0_i32_0 : i32, i32, i32
  }
  func.func @transform_2(%arg0: i32, %arg1: memref<2xi32, #tpu.memory_space<smem>>, %arg2: memref<2xi32, #tpu.memory_space<smem>>) -> (i32, i32, i32) {
    %c0_i32 = arith.constant 0 : i32
    %c0_i32_0 = arith.constant 0 : i32
    %c0_i32_1 = arith.constant 0 : i32
    return %arg0, %c0_i32, %c0_i32_0 : i32, i32, i32
  }
  func.func @transform_3(%arg0: i32, %arg1: memref<2xi32, #tpu.memory_space<smem>>, %arg2: memref<2xi32, #tpu.memory_space<smem>>) -> (i32, i32, i32) {
    %c0_i32 = arith.constant 0 : i32
    %c0_i32_0 = arith.constant 0 : i32
    %c0_i32_1 = arith.constant 0 : i32
    return %arg0, %c0_i32, %c0_i32_0 : i32, i32, i32
  }
  func.func @transform_4(%arg0: i32, %arg1: memref<2xi32, #tpu.memory_space<smem>>, %arg2: memref<2xi32, #tpu.memory_space<smem>>) -> (i32, i32) {
    %c0_i32 = arith.constant 0 : i32
    %c0_i32_0 = arith.constant 0 : i32
    %c0_i32_1 = arith.constant 0 : i32
    return %c0_i32, %c0_i32_0 : i32, i32
  }
  func.func @transform_5(%arg0: i32, %arg1: memref<2xi32, #tpu.memory_space<smem>>, %arg2: memref<2xi32, #tpu.memory_space<smem>>) -> (i32, i32) {
    %c0_i32 = arith.constant 0 : i32
    %c0_i32_0 = arith.constant 0 : i32
    %c0_i32_1 = arith.constant 0 : i32
    return %c0_i32, %c0_i32_0 : i32, i32
  }
  func.func @transform_6(%arg0: i32, %arg1: memref<2xi32, #tpu.memory_space<smem>>, %arg2: memref<2xi32, #tpu.memory_space<smem>>) -> (i32, i32) {
    %c0_i32 = arith.constant 0 : i32
    %c0_i32_0 = arith.constant 0 : i32
    %c0_i32_1 = arith.constant 0 : i32
    return %c0_i32, %c0_i32_0 : i32, i32
  }
  func.func @transform_7(%arg0: i32, %arg1: memref<2xi32, #tpu.memory_space<smem>>, %arg2: memref<2xi32, #tpu.memory_space<smem>>) -> (i32, i32) {
    %c0_i32 = arith.constant 0 : i32
    %c0_i32_0 = arith.constant 0 : i32
    %c0_i32_1 = arith.constant 0 : i32
    return %c0_i32, %c0_i32_0 : i32, i32
  }
  func.func @transform_8(%arg0: i32, %arg1: memref<2xi32, #tpu.memory_space<smem>>, %arg2: memref<2xi32, #tpu.memory_space<smem>>) -> (i32, i32) {
    %c0_i32 = arith.constant 0 : i32
    %c0_i32_0 = arith.constant 0 : i32
    %c0_i32_1 = arith.constant 0 : i32
    return %c0_i32, %c0_i32_0 : i32, i32
  }
  func.func @transform_9(%arg0: i32, %arg1: memref<2xi32, #tpu.memory_space<smem>>, %arg2: memref<2xi32, #tpu.memory_space<smem>>) -> (i32, i32) {
    %c0_i32 = arith.constant 0 : i32
    %c0_i32_0 = arith.constant 0 : i32
    %c0_i32_1 = arith.constant 0 : i32
    return %c0_i32, %c0_i32_0 : i32, i32
  }
  func.func @transform_10(%arg0: i32, %arg1: memref<2xi32, #tpu.memory_space<smem>>, %arg2: memref<2xi32, #tpu.memory_space<smem>>) -> (i32, i32) {
    %c0_i32 = arith.constant 0 : i32
    %c0_i32_0 = arith.constant 0 : i32
    %c0_i32_1 = arith.constant 0 : i32
    return %c0_i32, %c0_i32_0 : i32, i32
  }
  func.func @transform_11(%arg0: i32, %arg1: memref<2xi32, #tpu.memory_space<smem>>, %arg2: memref<2xi32, #tpu.memory_space<smem>>) -> (i32, i32) {
    %c0_i32 = arith.constant 0 : i32
    %c0_i32_0 = arith.constant 0 : i32
    %c0_i32_1 = arith.constant 0 : i32
    return %c0_i32, %c0_i32_0 : i32, i32
  }
  func.func @transform_12(%arg0: i32, %arg1: memref<2xi32, #tpu.memory_space<smem>>, %arg2: memref<2xi32, #tpu.memory_space<smem>>) -> (i32, i32) {
    %c0_i32 = arith.constant 0 : i32
    %c0_i32_0 = arith.constant 0 : i32
    %c0_i32_1 = arith.constant 0 : i32
    return %c0_i32, %c0_i32_0 : i32, i32
  }
  func.func @transform_13(%arg0: i32, %arg1: memref<2xi32, #tpu.memory_space<smem>>, %arg2: memref<2xi32, #tpu.memory_space<smem>>) -> (i32, i32, i32) {
    %c0_i32 = arith.constant 0 : i32
    %c0_i32_0 = arith.constant 0 : i32
    %c0_i32_1 = arith.constant 0 : i32
    %c0_i32_2 = arith.constant 0 : i32
    return %c0_i32, %c0_i32_0, %c0_i32_1 : i32, i32, i32
  }
  func.func @transform_14(%arg0: i32, %arg1: memref<2xi32, #tpu.memory_space<smem>>, %arg2: memref<2xi32, #tpu.memory_space<smem>>) -> (i32, i32, i32) {
    %c0_i32 = arith.constant 0 : i32
    %c0_i32_0 = arith.constant 0 : i32
    %c0_i32_1 = arith.constant 0 : i32
    %c0_i32_2 = arith.constant 0 : i32
    return %c0_i32, %c0_i32_0, %c0_i32_1 : i32, i32, i32
  }
  func.func @transform_15(%arg0: i32, %arg1: memref<2xi32, #tpu.memory_space<smem>>, %arg2: memref<2xi32, #tpu.memory_space<smem>>) -> (i32, i32, i32) {
    %c0_i32 = arith.constant 0 : i32
    %c0_i32_0 = arith.constant 0 : i32
    %c0_i32_1 = arith.constant 0 : i32
    %c0_i32_2 = arith.constant 0 : i32
    return %c0_i32, %c0_i32_0, %c0_i32_1 : i32, i32, i32
  }
  func.func @transform_16(%arg0: i32, %arg1: memref<2xi32, #tpu.memory_space<smem>>, %arg2: memref<2xi32, #tpu.memory_space<smem>>) -> (i32, i32, i32) {
    %c0_i32 = arith.constant 0 : i32
    %c0_i32_0 = arith.constant 0 : i32
    %c0_i32_1 = arith.constant 0 : i32
    %c0_i32_2 = arith.constant 0 : i32
    return %c0_i32, %c0_i32_0, %c0_i32_1 : i32, i32, i32
  }
  func.func @transform_17(%arg0: i32, %arg1: memref<2xi32, #tpu.memory_space<smem>>, %arg2: memref<2xi32, #tpu.memory_space<smem>>) -> (i32, i32, i32) {
    %c0_i32 = arith.constant 0 : i32
    %c0_i32_0 = arith.constant 0 : i32
    %c0_i32_1 = arith.constant 0 : i32
    %c0_i32_2 = arith.constant 0 : i32
    return %c0_i32, %c0_i32_0, %c0_i32_1 : i32, i32, i32
  }
  func.func @transform_18(%arg0: i32, %arg1: memref<2xi32, #tpu.memory_space<smem>>, %arg2: memref<2xi32, #tpu.memory_space<smem>>) -> (i32, i32, i32) {
    %c0_i32 = arith.constant 0 : i32
    %c0_i32_0 = arith.constant 0 : i32
    %c0_i32_1 = arith.constant 0 : i32
    %c0_i32_2 = arith.constant 0 : i32
    return %c0_i32, %c0_i32_0, %c0_i32_1 : i32, i32, i32
  }
  func.func @transform_19(%arg0: i32, %arg1: memref<2xi32, #tpu.memory_space<smem>>, %arg2: memref<2xi32, #tpu.memory_space<smem>>) -> (i32, i32) {
    %c0_i32 = arith.constant 0 : i32
    %c0_i32_0 = arith.constant 0 : i32
    %c0_i32_1 = arith.constant 0 : i32
    return %c0_i32, %c0_i32_0 : i32, i32
  }
  func.func @transform_20(%arg0: i32, %arg1: memref<2xi32, #tpu.memory_space<smem>>, %arg2: memref<2xi32, #tpu.memory_space<smem>>) -> (i32, i32) {
    %c0_i32 = arith.constant 0 : i32
    %c0_i32_0 = arith.constant 0 : i32
    %c0_i32_1 = arith.constant 0 : i32
    return %c0_i32, %c0_i32_0 : i32, i32
  }
  func.func @transform_21(%arg0: i32, %arg1: memref<2xi32, #tpu.memory_space<smem>>, %arg2: memref<2xi32, #tpu.memory_space<smem>>) -> (i32, i32) {
    %c0_i32 = arith.constant 0 : i32
    %c0_i32_0 = arith.constant 0 : i32
    %c0_i32_1 = arith.constant 0 : i32
    return %c0_i32, %c0_i32_0 : i32, i32
  }
  func.func @transform_22(%arg0: i32, %arg1: memref<2xi32, #tpu.memory_space<smem>>, %arg2: memref<2xi32, #tpu.memory_space<smem>>) -> (i32, i32) {
    %c0_i32 = arith.constant 0 : i32
    %c0_i32_0 = arith.constant 0 : i32
    %c0_i32_1 = arith.constant 0 : i32
    return %c0_i32, %c0_i32_0 : i32, i32
  }
  func.func @transform_23(%arg0: i32, %arg1: memref<2xi32, #tpu.memory_space<smem>>, %arg2: memref<2xi32, #tpu.memory_space<smem>>) -> (i32, i32, i32) {
    %c0_i32 = arith.constant 0 : i32
    %c0_i32_0 = arith.constant 0 : i32
    %c0_i32_1 = arith.constant 0 : i32
    return %arg0, %c0_i32, %c0_i32_0 : i32, i32, i32
  }
}

module attributes {stable_mosaic.version = 11 : i64} {
  func.func @kernel(%arg0: i32, %arg1: memref<2xi32, #tpu.memory_space<smem>>, %arg2: memref<2xi32, #tpu.memory_space<smem>>, %arg3: memref<64x16xf32, #tpu.memory_space<vmem>>, %arg4: memref<1x16x32xf32, #tpu.memory_space<vmem>>, %arg5: memref<1x1x32xf32, #tpu.memory_space<vmem>>, %arg6: memref<1x16x1xf32, #tpu.memory_space<vmem>>, %arg7: memref<22x32xf32, #tpu.memory_space<vmem>>, %arg8: memref<32x32xf32, #tpu.memory_space<vmem>>, %arg9: memref<64x64xf32, #tpu.memory_space<vmem>>, %arg10: memref<32x128xf32, #tpu.memory_space<vmem>>, %arg11: memref<1x128xf32, #tpu.memory_space<vmem>>, %arg12: memref<32x32xf32, #tpu.memory_space<vmem>>, %arg13: memref<32x32xf32, #tpu.memory_space<vmem>>, %arg14: memref<32x32xf32, #tpu.memory_space<vmem>>, %arg15: memref<32x32xf32, #tpu.memory_space<vmem>>, %arg16: memref<1x32x32xf32, #tpu.memory_space<vmem>>, %arg17: memref<1x32x32xf32, #tpu.memory_space<vmem>>, %arg18: memref<1x32x128xf32, #tpu.memory_space<vmem>>, %arg19: memref<1x1x128xf32, #tpu.memory_space<vmem>>, %arg20: memref<1x32x32xf32, #tpu.memory_space<vmem>>, %arg21: memref<1x32x32xf32, #tpu.memory_space<vmem>>, %arg22: memref<32x64xf32, #tpu.memory_space<vmem>>, %arg23: memref<1x64xf32, #tpu.memory_space<vmem>>, %arg24: memref<32x32xf32, #tpu.memory_space<vmem>>, %arg25: memref<32x32xf32, #tpu.memory_space<vmem>>, %arg26: memref<1x16x32xf32, #tpu.memory_space<vmem>>) attributes {dimension_semantics = [#tpu.dimension_semantics<parallel>], iteration_bounds = array<i64: 2>, scalar_prefetch = 2 : i64, scratch_operands = 0 : i64, tpu.core_type = #tpu.core_type<tc>, window_params = [{pipeline_mode = #tpu.pipeline_mode<synchronous>, transform_indices = @transform_0, window_bounds = array<i64: 64, 16>}, {transform_indices = @transform_1, window_bounds = array<i64: 1, 16, 32>}, {transform_indices = @transform_2, window_bounds = array<i64: 1, 1, 32>}, {transform_indices = @transform_3, window_bounds = array<i64: 1, 16, 1>}, {pipeline_mode = #tpu.pipeline_mode<synchronous>, transform_indices = @transform_4, window_bounds = array<i64: 22, 32>}, {pipeline_mode = #tpu.pipeline_mode<synchronous>, transform_indices = @transform_5, window_bounds = array<i64: 32, 32>}, {pipeline_mode = #tpu.pipeline_mode<synchronous>, transform_indices = @transform_6, window_bounds = array<i64: 64, 64>}, {pipeline_mode = #tpu.pipeline_mode<synchronous>, transform_indices = @transform_7, window_bounds = array<i64: 32, 128>}, {pipeline_mode = #tpu.pipeline_mode<synchronous>, transform_indices = @transform_8, window_bounds = array<i64: 1, 128>}, {pipeline_mode = #tpu.pipeline_mode<synchronous>, transform_indices = @transform_9, window_bounds = array<i64: 32, 32>}, {pipeline_mode = #tpu.pipeline_mode<synchronous>, transform_indices = @transform_10, window_bounds = array<i64: 32, 32>}, {pipeline_mode = #tpu.pipeline_mode<synchronous>, transform_indices = @transform_11, window_bounds = array<i64: 32, 32>}, {pipeline_mode = #tpu.pipeline_mode<synchronous>, transform_indices = @transform_12, window_bounds = array<i64: 32, 32>}, {pipeline_mode = #tpu.pipeline_mode<synchronous>, transform_indices = @transform_13, window_bounds = array<i64: 1, 32, 32>}, {pipeline_mode = #tpu.pipeline_mode<synchronous>, transform_indices = @transform_14, window_bounds = array<i64: 1, 32, 32>}, {pipeline_mode = #tpu.pipeline_mode<synchronous>, transform_indices = @transform_15, window_bounds = array<i64: 1, 32, 128>}, {pipeline_mode = #tpu.pipeline_mode<synchronous>, transform_indices = @transform_16, window_bounds = array<i64: 1, 1, 128>}, {pipeline_mode = #tpu.pipeline_mode<synchronous>, transform_indices = @transform_17, window_bounds = array<i64: 1, 32, 32>}, {pipeline_mode = #tpu.pipeline_mode<synchronous>, transform_indices = @transform_18, window_bounds = array<i64: 1, 32, 32>}, {pipeline_mode = #tpu.pipeline_mode<synchronous>, transform_indices = @transform_19, window_bounds = array<i64: 32, 64>}, {pipeline_mode = #tpu.pipeline_mode<synchronous>, transform_indices = @transform_20, window_bounds = array<i64: 1, 64>}, {pipeline_mode = #tpu.pipeline_mode<synchronous>, transform_indices = @transform_21, window_bounds = array<i64: 32, 32>}, {pipeline_mode = #tpu.pipeline_mode<synchronous>, transform_indices = @transform_22, window_bounds = array<i64: 32, 32>}, {transform_indices = @transform_23, window_bounds = array<i64: 1, 16, 32>}]} {
    %0 = arith.index_cast %arg0 : i32 to index
    %1 = memref.load %arg1[%0] : memref<2xi32, #tpu.memory_space<smem>>
    %2 = arith.index_cast %arg0 : i32 to index
    %3 = memref.load %arg2[%2] : memref<2xi32, #tpu.memory_space<smem>>
    %c2_i32 = arith.constant 2 : i32
    %4 = arith.cmpi eq, %3, %c2_i32 : i32
    %c3_i32 = arith.constant 3 : i32
    %5 = arith.cmpi eq, %3, %c3_i32 : i32
    %6 = arith.ori %4, %5 : i1
    %cst = arith.constant 3.330000e-01 : f32
    %cst_0 = arith.constant 1.000000e+00 : f32
    %7 = arith.select %6, %cst, %cst_0 : f32
    %c0 = arith.constant 0 : index
    %c0_1 = arith.constant 0 : index
    %8 = vector.load %arg3[%c0, %c0_1] : memref<64x16xf32, #tpu.memory_space<vmem>>, vector<64x16xf32>
    %c0_2 = arith.constant 0 : index
    %c0_3 = arith.constant 0 : index
    %c0_4 = arith.constant 0 : index
    %9 = vector.load %arg4[%c0_2, %c0_3, %c0_4] : memref<1x16x32xf32, #tpu.memory_space<vmem>>, vector<1x16x32xf32>
    %10 = vector.shape_cast %9 : vector<1x16x32xf32> to vector<16x32xf32>
    %c0_5 = arith.constant 0 : index
    %c0_6 = arith.constant 0 : index
    %c0_7 = arith.constant 0 : index
    %11 = vector.load %arg5[%c0_5, %c0_6, %c0_7] : memref<1x1x32xf32, #tpu.memory_space<vmem>>, vector<1x1x32xf32>
    %12 = vector.shape_cast %11 : vector<1x1x32xf32> to vector<1x32xf32>
    %c0_8 = arith.constant 0 : index
    %c0_9 = arith.constant 0 : index
    %c0_10 = arith.constant 0 : index
    %13 = vector.load %arg6[%c0_8, %c0_9, %c0_10] : memref<1x16x1xf32, #tpu.memory_space<vmem>>, vector<1x16x1xf32>
    %14 = vector.shape_cast %13 : vector<1x16x1xf32> to vector<16x1xf32>
    %c0_11 = arith.constant 0 : index
    %c0_12 = arith.constant 0 : index
    %15 = vector.load %arg7[%c0_11, %c0_12] : memref<22x32xf32, #tpu.memory_space<vmem>>, vector<22x32xf32>
    %c0_13 = arith.constant 0 : index
    %c0_14 = arith.constant 0 : index
    %16 = vector.load %arg8[%c0_13, %c0_14] : memref<32x32xf32, #tpu.memory_space<vmem>>, vector<32x32xf32>
    %c0_15 = arith.constant 0 : index
    %c0_16 = arith.constant 0 : index
    %17 = vector.load %arg9[%c0_15, %c0_16] : memref<64x64xf32, #tpu.memory_space<vmem>>, vector<64x64xf32>
    %c0_17 = arith.constant 0 : index
    %c0_18 = arith.constant 0 : index
    %18 = vector.load %arg10[%c0_17, %c0_18] : memref<32x128xf32, #tpu.memory_space<vmem>>, vector<32x128xf32>
    %cst_19 = arith.constant dense<0.000000e+00> : vector<1x128xf32>
    %19 = tpu.matmul %12, %18, %cst_19 {dimension_numbers = #tpu.dot_dimension_numbers<[1], [0], [0], [1], [0, 0, 1, 1], [], []>} : vector<1x32xf32>, vector<32x128xf32>, vector<1x128xf32> -> vector<1x128xf32>
    %c0_20 = arith.constant 0 : index
    %c0_21 = arith.constant 0 : index
    %20 = vector.load %arg11[%c0_20, %c0_21] : memref<1x128xf32, #tpu.memory_space<vmem>>, vector<1x128xf32>
    %21 = arith.addf %19, %20 : vector<1x128xf32>
    %c0_22 = arith.constant 0 : index
    %c0_23 = arith.constant 0 : index
    %22 = vector.load %arg12[%c0_22, %c0_23] : memref<32x32xf32, #tpu.memory_space<vmem>>, vector<32x32xf32>
    %cst_24 = arith.constant dense<0.000000e+00> : vector<16x32xf32>
    %23 = tpu.matmul %10, %22, %cst_24 {dimension_numbers = #tpu.dot_dimension_numbers<[1], [0], [0], [1], [0, 0, 1, 1], [], []>} : vector<16x32xf32>, vector<32x32xf32>, vector<16x32xf32> -> vector<16x32xf32>
    %24 = vector.extract_strided_slice %15 {offsets = [0, 0], sizes = [1, 32], strides = [1, 1]} : vector<22x32xf32> to vector<1x32xf32>
    %25 = vector.broadcast %14 : vector<16x1xf32> to vector<16x32xf32>
    %26 = vector.broadcast %24 : vector<1x32xf32> to vector<16x32xf32>
    %27 = arith.mulf %25, %26 : vector<16x32xf32>
    %28 = arith.addf %23, %27 : vector<16x32xf32>
    %29 = vector.extract_strided_slice %15 {offsets = [1, 0], sizes = [1, 32], strides = [1, 1]} : vector<22x32xf32> to vector<1x32xf32>
    %30 = vector.broadcast %29 : vector<1x32xf32> to vector<16x32xf32>
    %31 = arith.addf %28, %30 : vector<16x32xf32>
    %cst_25 = arith.constant 0.000000e+00 : f32
    %32 = vector.broadcast %cst_25 : f32 to vector<16x32xf32>
    %33 = arith.maximumf %31, %32 : vector<16x32xf32>
    %c0_26 = arith.constant 0 : index
    %c0_27 = arith.constant 0 : index
    %34 = vector.load %arg13[%c0_26, %c0_27] : memref<32x32xf32, #tpu.memory_space<vmem>>, vector<32x32xf32>
    %cst_28 = arith.constant dense<0.000000e+00> : vector<16x32xf32>
    %35 = tpu.matmul %33, %34, %cst_28 {dimension_numbers = #tpu.dot_dimension_numbers<[1], [0], [0], [1], [0, 0, 1, 1], [], []>} : vector<16x32xf32>, vector<32x32xf32>, vector<16x32xf32> -> vector<16x32xf32>
    %36 = vector.extract_strided_slice %15 {offsets = [2, 0], sizes = [1, 32], strides = [1, 1]} : vector<22x32xf32> to vector<1x32xf32>
    %37 = vector.broadcast %36 : vector<1x32xf32> to vector<16x32xf32>
    %38 = arith.addf %35, %37 : vector<16x32xf32>
    %cst_29 = arith.constant dense<0.000000e+00> : vector<64x32xf32>
    %39 = tpu.matmul %8, %38, %cst_29 {dimension_numbers = #tpu.dot_dimension_numbers<[1], [0], [0], [1], [0, 0, 1, 1], [], []>} : vector<64x16xf32>, vector<16x32xf32>, vector<64x32xf32> -> vector<64x32xf32>
    %40 = vector.extract_strided_slice %39 {offsets = [0, 0], sizes = [16, 32], strides = [1, 1]} : vector<64x32xf32> to vector<16x32xf32>
    %41 = vector.extract_strided_slice %21 {offsets = [0, 0], sizes = [1, 32], strides = [1, 1]} : vector<1x128xf32> to vector<1x32xf32>
    %42 = vector.broadcast %41 : vector<1x32xf32> to vector<16x32xf32>
    %43 = arith.mulf %40, %42 : vector<16x32xf32>
    %44 = vector.extract_strided_slice %39 {offsets = [16, 0], sizes = [16, 32], strides = [1, 1]} : vector<64x32xf32> to vector<16x32xf32>
    %45 = vector.extract_strided_slice %21 {offsets = [0, 32], sizes = [1, 32], strides = [1, 1]} : vector<1x128xf32> to vector<1x32xf32>
    %46 = vector.broadcast %45 : vector<1x32xf32> to vector<16x32xf32>
    %47 = arith.mulf %44, %46 : vector<16x32xf32>
    %48 = arith.addf %43, %47 : vector<16x32xf32>
    %49 = vector.extract_strided_slice %39 {offsets = [32, 0], sizes = [16, 32], strides = [1, 1]} : vector<64x32xf32> to vector<16x32xf32>
    %50 = vector.extract_strided_slice %21 {offsets = [0, 64], sizes = [1, 32], strides = [1, 1]} : vector<1x128xf32> to vector<1x32xf32>
    %51 = vector.broadcast %50 : vector<1x32xf32> to vector<16x32xf32>
    %52 = arith.mulf %49, %51 : vector<16x32xf32>
    %53 = arith.addf %48, %52 : vector<16x32xf32>
    %54 = vector.extract_strided_slice %39 {offsets = [48, 0], sizes = [16, 32], strides = [1, 1]} : vector<64x32xf32> to vector<16x32xf32>
    %55 = vector.extract_strided_slice %21 {offsets = [0, 96], sizes = [1, 32], strides = [1, 1]} : vector<1x128xf32> to vector<1x32xf32>
    %56 = vector.broadcast %55 : vector<1x32xf32> to vector<16x32xf32>
    %57 = arith.mulf %54, %56 : vector<16x32xf32>
    %58 = arith.addf %53, %57 : vector<16x32xf32>
    %59 = vector.extract_strided_slice %15 {offsets = [6, 0], sizes = [1, 32], strides = [1, 1]} : vector<22x32xf32> to vector<1x32xf32>
    %60 = vector.broadcast %59 : vector<1x32xf32> to vector<16x32xf32>
    %61 = arith.mulf %60, %38 : vector<16x32xf32>
    %62 = arith.addf %58, %61 : vector<16x32xf32>
    %c0_30 = arith.constant 0 : index
    %c0_31 = arith.constant 0 : index
    %c0_32 = arith.constant 0 : index
    %63 = vector.load %arg16[%c0_30, %c0_31, %c0_32] : memref<1x32x32xf32, #tpu.memory_space<vmem>>, vector<1x32x32xf32>
    %64 = vector.shape_cast %63 : vector<1x32x32xf32> to vector<32x32xf32>
    %65 = vector.extract_strided_slice %15 {offsets = [7, 0], sizes = [1, 32], strides = [1, 1]} : vector<22x32xf32> to vector<1x32xf32>
    %c0_33 = arith.constant 0 : index
    %c0_34 = arith.constant 0 : index
    %c0_35 = arith.constant 0 : index
    %66 = vector.load %arg17[%c0_33, %c0_34, %c0_35] : memref<1x32x32xf32, #tpu.memory_space<vmem>>, vector<1x32x32xf32>
    %67 = vector.shape_cast %66 : vector<1x32x32xf32> to vector<32x32xf32>
    %68 = vector.extract_strided_slice %15 {offsets = [8, 0], sizes = [1, 32], strides = [1, 1]} : vector<22x32xf32> to vector<1x32xf32>
    %cst_36 = arith.constant dense<0.000000e+00> : vector<16x32xf32>
    %69 = tpu.matmul %62, %64, %cst_36 {dimension_numbers = #tpu.dot_dimension_numbers<[1], [0], [0], [1], [0, 0, 1, 1], [], []>} : vector<16x32xf32>, vector<32x32xf32>, vector<16x32xf32> -> vector<16x32xf32>
    %70 = vector.broadcast %65 : vector<1x32xf32> to vector<16x32xf32>
    %71 = arith.addf %69, %70 : vector<16x32xf32>
    %cst_37 = arith.constant 0.000000e+00 : f32
    %72 = vector.broadcast %cst_37 : f32 to vector<16x32xf32>
    %73 = arith.maximumf %71, %72 : vector<16x32xf32>
    %cst_38 = arith.constant dense<0.000000e+00> : vector<16x32xf32>
    %74 = tpu.matmul %73, %67, %cst_38 {dimension_numbers = #tpu.dot_dimension_numbers<[1], [0], [0], [1], [0, 0, 1, 1], [], []>} : vector<16x32xf32>, vector<32x32xf32>, vector<16x32xf32> -> vector<16x32xf32>
    %75 = vector.broadcast %68 : vector<1x32xf32> to vector<16x32xf32>
    %76 = arith.addf %74, %75 : vector<16x32xf32>
    %77 = vector.extract_strided_slice %15 {offsets = [9, 0], sizes = [1, 32], strides = [1, 1]} : vector<22x32xf32> to vector<1x32xf32>
    %78 = vector.extract_strided_slice %15 {offsets = [10, 0], sizes = [1, 32], strides = [1, 1]} : vector<22x32xf32> to vector<1x32xf32>
    %cst_39 = arith.constant dense<0.000000e+00> : vector<16xf32>
    %79 = vector.multi_reduction <add>, %76, %cst_39 [1] : vector<16x32xf32> to vector<16xf32>
    %80 = vector.shape_cast %79 : vector<16xf32> to vector<16x1xf32>
    %cst_40 = arith.constant 3.200000e+01 : f32
    %81 = vector.broadcast %cst_40 : f32 to vector<16x1xf32>
    %82 = arith.divf %80, %81 : vector<16x1xf32>
    %83 = vector.broadcast %82 : vector<16x1xf32> to vector<16x32xf32>
    %84 = arith.subf %76, %83 : vector<16x32xf32>
    %85 = arith.mulf %84, %84 : vector<16x32xf32>
    %cst_41 = arith.constant dense<0.000000e+00> : vector<16xf32>
    %86 = vector.multi_reduction <add>, %85, %cst_41 [1] : vector<16x32xf32> to vector<16xf32>
    %87 = vector.shape_cast %86 : vector<16xf32> to vector<16x1xf32>
    %cst_42 = arith.constant 3.200000e+01 : f32
    %88 = vector.broadcast %cst_42 : f32 to vector<16x1xf32>
    %89 = arith.divf %87, %88 : vector<16x1xf32>
    %cst_43 = arith.constant 9.99999974E-6 : f32
    %90 = vector.broadcast %cst_43 : f32 to vector<16x1xf32>
    %91 = arith.addf %89, %90 : vector<16x1xf32>
    %92 = math.rsqrt %91 : vector<16x1xf32>
    %93 = vector.broadcast %92 : vector<16x1xf32> to vector<16x32xf32>
    %94 = arith.mulf %84, %93 : vector<16x32xf32>
    %95 = vector.broadcast %77 : vector<1x32xf32> to vector<16x32xf32>
    %96 = arith.mulf %94, %95 : vector<16x32xf32>
    %97 = vector.broadcast %78 : vector<1x32xf32> to vector<16x32xf32>
    %98 = arith.addf %96, %97 : vector<16x32xf32>
    %99 = arith.addf %98, %38 : vector<16x32xf32>
    %100 = tpu.iota {dimensions = array<i32: 0>} : vector<16x1xi32>
    %101 = vector.broadcast %1 : i32 to vector<16x1xi32>
    %102 = arith.cmpi eq, %100, %101 : vector<16x1xi32>
    %103 = arith.extui %102 : vector<16x1xi1> to vector<16x1xi32>
    %104 = arith.sitofp %103 : vector<16x1xi32> to vector<16x1xf32>
    %c0_44 = arith.constant 0 : index
    %c0_45 = arith.constant 0 : index
    %105 = vector.load %arg14[%c0_44, %c0_45] : memref<32x32xf32, #tpu.memory_space<vmem>>, vector<32x32xf32>
    %cst_46 = arith.constant dense<0.000000e+00> : vector<16x32xf32>
    %106 = tpu.matmul %10, %105, %cst_46 {dimension_numbers = #tpu.dot_dimension_numbers<[1], [0], [0], [1], [0, 0, 1, 1], [], []>} : vector<16x32xf32>, vector<32x32xf32>, vector<16x32xf32> -> vector<16x32xf32>
    %107 = vector.extract_strided_slice %15 {offsets = [3, 0], sizes = [1, 32], strides = [1, 1]} : vector<22x32xf32> to vector<1x32xf32>
    %108 = vector.broadcast %104 : vector<16x1xf32> to vector<16x32xf32>
    %109 = vector.broadcast %107 : vector<1x32xf32> to vector<16x32xf32>
    %110 = arith.mulf %108, %109 : vector<16x32xf32>
    %111 = arith.addf %106, %110 : vector<16x32xf32>
    %112 = vector.extract_strided_slice %15 {offsets = [4, 0], sizes = [1, 32], strides = [1, 1]} : vector<22x32xf32> to vector<1x32xf32>
    %113 = vector.broadcast %112 : vector<1x32xf32> to vector<16x32xf32>
    %114 = arith.addf %111, %113 : vector<16x32xf32>
    %cst_47 = arith.constant 0.000000e+00 : f32
    %115 = vector.broadcast %cst_47 : f32 to vector<16x32xf32>
    %116 = arith.maximumf %114, %115 : vector<16x32xf32>
    %c0_48 = arith.constant 0 : index
    %c0_49 = arith.constant 0 : index
    %117 = vector.load %arg15[%c0_48, %c0_49] : memref<32x32xf32, #tpu.memory_space<vmem>>, vector<32x32xf32>
    %cst_50 = arith.constant dense<0.000000e+00> : vector<16x32xf32>
    %118 = tpu.matmul %116, %117, %cst_50 {dimension_numbers = #tpu.dot_dimension_numbers<[1], [0], [0], [1], [0, 0, 1, 1], [], []>} : vector<16x32xf32>, vector<32x32xf32>, vector<16x32xf32> -> vector<16x32xf32>
    %119 = vector.extract_strided_slice %15 {offsets = [5, 0], sizes = [1, 32], strides = [1, 1]} : vector<22x32xf32> to vector<1x32xf32>
    %120 = vector.broadcast %119 : vector<1x32xf32> to vector<16x32xf32>
    %121 = arith.addf %118, %120 : vector<16x32xf32>
    %c0_51 = arith.constant 0 : index
    %c0_52 = arith.constant 0 : index
    %c0_53 = arith.constant 0 : index
    %122 = vector.load %arg18[%c0_51, %c0_52, %c0_53] : memref<1x32x128xf32, #tpu.memory_space<vmem>>, vector<1x32x128xf32>
    %123 = vector.shape_cast %122 : vector<1x32x128xf32> to vector<32x128xf32>
    %cst_54 = arith.constant dense<0.000000e+00> : vector<1x128xf32>
    %124 = tpu.matmul %12, %123, %cst_54 {dimension_numbers = #tpu.dot_dimension_numbers<[1], [0], [0], [1], [0, 0, 1, 1], [], []>} : vector<1x32xf32>, vector<32x128xf32>, vector<1x128xf32> -> vector<1x128xf32>
    %c0_55 = arith.constant 0 : index
    %c0_56 = arith.constant 0 : index
    %c0_57 = arith.constant 0 : index
    %125 = vector.load %arg19[%c0_55, %c0_56, %c0_57] : memref<1x1x128xf32, #tpu.memory_space<vmem>>, vector<1x1x128xf32>
    %126 = vector.shape_cast %125 : vector<1x1x128xf32> to vector<1x128xf32>
    %127 = arith.addf %124, %126 : vector<1x128xf32>
    %cst_58 = arith.constant dense<0.000000e+00> : vector<64x32xf32>
    %128 = tpu.matmul %8, %121, %cst_58 {dimension_numbers = #tpu.dot_dimension_numbers<[1], [0], [0], [1], [0, 0, 1, 1], [], []>} : vector<64x16xf32>, vector<16x32xf32>, vector<64x32xf32> -> vector<64x32xf32>
    %129 = vector.extract_strided_slice %128 {offsets = [0, 0], sizes = [16, 32], strides = [1, 1]} : vector<64x32xf32> to vector<16x32xf32>
    %130 = vector.extract_strided_slice %127 {offsets = [0, 0], sizes = [1, 32], strides = [1, 1]} : vector<1x128xf32> to vector<1x32xf32>
    %131 = vector.broadcast %130 : vector<1x32xf32> to vector<16x32xf32>
    %132 = arith.mulf %129, %131 : vector<16x32xf32>
    %133 = vector.extract_strided_slice %128 {offsets = [16, 0], sizes = [16, 32], strides = [1, 1]} : vector<64x32xf32> to vector<16x32xf32>
    %134 = vector.extract_strided_slice %127 {offsets = [0, 32], sizes = [1, 32], strides = [1, 1]} : vector<1x128xf32> to vector<1x32xf32>
    %135 = vector.broadcast %134 : vector<1x32xf32> to vector<16x32xf32>
    %136 = arith.mulf %133, %135 : vector<16x32xf32>
    %137 = arith.addf %132, %136 : vector<16x32xf32>
    %138 = vector.extract_strided_slice %128 {offsets = [32, 0], sizes = [16, 32], strides = [1, 1]} : vector<64x32xf32> to vector<16x32xf32>
    %139 = vector.extract_strided_slice %127 {offsets = [0, 64], sizes = [1, 32], strides = [1, 1]} : vector<1x128xf32> to vector<1x32xf32>
    %140 = vector.broadcast %139 : vector<1x32xf32> to vector<16x32xf32>
    %141 = arith.mulf %138, %140 : vector<16x32xf32>
    %142 = arith.addf %137, %141 : vector<16x32xf32>
    %143 = vector.extract_strided_slice %128 {offsets = [48, 0], sizes = [16, 32], strides = [1, 1]} : vector<64x32xf32> to vector<16x32xf32>
    %144 = vector.extract_strided_slice %127 {offsets = [0, 96], sizes = [1, 32], strides = [1, 1]} : vector<1x128xf32> to vector<1x32xf32>
    %145 = vector.broadcast %144 : vector<1x32xf32> to vector<16x32xf32>
    %146 = arith.mulf %143, %145 : vector<16x32xf32>
    %147 = arith.addf %142, %146 : vector<16x32xf32>
    %148 = vector.extract_strided_slice %15 {offsets = [11, 0], sizes = [1, 32], strides = [1, 1]} : vector<22x32xf32> to vector<1x32xf32>
    %149 = vector.broadcast %148 : vector<1x32xf32> to vector<16x32xf32>
    %150 = arith.mulf %149, %121 : vector<16x32xf32>
    %151 = arith.addf %147, %150 : vector<16x32xf32>
    %c0_59 = arith.constant 0 : index
    %c0_60 = arith.constant 0 : index
    %c0_61 = arith.constant 0 : index
    %152 = vector.load %arg20[%c0_59, %c0_60, %c0_61] : memref<1x32x32xf32, #tpu.memory_space<vmem>>, vector<1x32x32xf32>
    %153 = vector.shape_cast %152 : vector<1x32x32xf32> to vector<32x32xf32>
    %154 = vector.extract_strided_slice %15 {offsets = [12, 0], sizes = [1, 32], strides = [1, 1]} : vector<22x32xf32> to vector<1x32xf32>
    %c0_62 = arith.constant 0 : index
    %c0_63 = arith.constant 0 : index
    %c0_64 = arith.constant 0 : index
    %155 = vector.load %arg21[%c0_62, %c0_63, %c0_64] : memref<1x32x32xf32, #tpu.memory_space<vmem>>, vector<1x32x32xf32>
    %156 = vector.shape_cast %155 : vector<1x32x32xf32> to vector<32x32xf32>
    %157 = vector.extract_strided_slice %15 {offsets = [13, 0], sizes = [1, 32], strides = [1, 1]} : vector<22x32xf32> to vector<1x32xf32>
    %cst_65 = arith.constant dense<0.000000e+00> : vector<16x32xf32>
    %158 = tpu.matmul %151, %153, %cst_65 {dimension_numbers = #tpu.dot_dimension_numbers<[1], [0], [0], [1], [0, 0, 1, 1], [], []>} : vector<16x32xf32>, vector<32x32xf32>, vector<16x32xf32> -> vector<16x32xf32>
    %159 = vector.broadcast %154 : vector<1x32xf32> to vector<16x32xf32>
    %160 = arith.addf %158, %159 : vector<16x32xf32>
    %cst_66 = arith.constant 0.000000e+00 : f32
    %161 = vector.broadcast %cst_66 : f32 to vector<16x32xf32>
    %162 = arith.maximumf %160, %161 : vector<16x32xf32>
    %cst_67 = arith.constant dense<0.000000e+00> : vector<16x32xf32>
    %163 = tpu.matmul %162, %156, %cst_67 {dimension_numbers = #tpu.dot_dimension_numbers<[1], [0], [0], [1], [0, 0, 1, 1], [], []>} : vector<16x32xf32>, vector<32x32xf32>, vector<16x32xf32> -> vector<16x32xf32>
    %164 = vector.broadcast %157 : vector<1x32xf32> to vector<16x32xf32>
    %165 = arith.addf %163, %164 : vector<16x32xf32>
    %166 = vector.extract_strided_slice %15 {offsets = [14, 0], sizes = [1, 32], strides = [1, 1]} : vector<22x32xf32> to vector<1x32xf32>
    %167 = vector.extract_strided_slice %15 {offsets = [15, 0], sizes = [1, 32], strides = [1, 1]} : vector<22x32xf32> to vector<1x32xf32>
    %cst_68 = arith.constant dense<0.000000e+00> : vector<16xf32>
    %168 = vector.multi_reduction <add>, %165, %cst_68 [1] : vector<16x32xf32> to vector<16xf32>
    %169 = vector.shape_cast %168 : vector<16xf32> to vector<16x1xf32>
    %cst_69 = arith.constant 3.200000e+01 : f32
    %170 = vector.broadcast %cst_69 : f32 to vector<16x1xf32>
    %171 = arith.divf %169, %170 : vector<16x1xf32>
    %172 = vector.broadcast %171 : vector<16x1xf32> to vector<16x32xf32>
    %173 = arith.subf %165, %172 : vector<16x32xf32>
    %174 = arith.mulf %173, %173 : vector<16x32xf32>
    %cst_70 = arith.constant dense<0.000000e+00> : vector<16xf32>
    %175 = vector.multi_reduction <add>, %174, %cst_70 [1] : vector<16x32xf32> to vector<16xf32>
    %176 = vector.shape_cast %175 : vector<16xf32> to vector<16x1xf32>
    %cst_71 = arith.constant 3.200000e+01 : f32
    %177 = vector.broadcast %cst_71 : f32 to vector<16x1xf32>
    %178 = arith.divf %176, %177 : vector<16x1xf32>
    %cst_72 = arith.constant 9.99999974E-6 : f32
    %179 = vector.broadcast %cst_72 : f32 to vector<16x1xf32>
    %180 = arith.addf %178, %179 : vector<16x1xf32>
    %181 = math.rsqrt %180 : vector<16x1xf32>
    %182 = vector.broadcast %181 : vector<16x1xf32> to vector<16x32xf32>
    %183 = arith.mulf %173, %182 : vector<16x32xf32>
    %184 = vector.broadcast %166 : vector<1x32xf32> to vector<16x32xf32>
    %185 = arith.mulf %183, %184 : vector<16x32xf32>
    %186 = vector.broadcast %167 : vector<1x32xf32> to vector<16x32xf32>
    %187 = arith.addf %185, %186 : vector<16x32xf32>
    %188 = arith.addf %187, %121 : vector<16x32xf32>
    %c0_73 = arith.constant 0 : index
    %c0_74 = arith.constant 0 : index
    %189 = vector.load %arg22[%c0_73, %c0_74] : memref<32x64xf32, #tpu.memory_space<vmem>>, vector<32x64xf32>
    %cst_75 = arith.constant dense<0.000000e+00> : vector<16x64xf32>
    %190 = tpu.matmul %99, %189, %cst_75 {dimension_numbers = #tpu.dot_dimension_numbers<[1], [0], [0], [1], [0, 0, 1, 1], [], []>} : vector<16x32xf32>, vector<32x64xf32>, vector<16x64xf32> -> vector<16x64xf32>
    %c0_76 = arith.constant 0 : index
    %c0_77 = arith.constant 0 : index
    %191 = vector.load %arg23[%c0_76, %c0_77] : memref<1x64xf32, #tpu.memory_space<vmem>>, vector<1x64xf32>
    %192 = vector.broadcast %191 : vector<1x64xf32> to vector<16x64xf32>
    %193 = arith.addf %190, %192 : vector<16x64xf32>
    %194 = arith.mulf %193, %193 : vector<16x64xf32>
    %cst_78 = arith.constant dense<0.000000e+00> : vector<16x64xf32>
    %195 = tpu.matmul %194, %17, %cst_78 {dimension_numbers = #tpu.dot_dimension_numbers<[1], [0], [0], [1], [0, 0, 1, 1], [], []>} : vector<16x64xf32>, vector<64x64xf32>, vector<16x64xf32> -> vector<16x64xf32>
    %196 = math.sqrt %195 : vector<16x64xf32>
    %cst_79 = arith.constant 9.99999996E-13 : f32
    %197 = vector.broadcast %cst_79 : f32 to vector<16x64xf32>
    %198 = arith.maximumf %196, %197 : vector<16x64xf32>
    %199 = arith.divf %193, %198 : vector<16x64xf32>
    %200 = vector.extract_strided_slice %199 {offsets = [0, 0], sizes = [16, 32], strides = [1, 1]} : vector<16x64xf32> to vector<16x32xf32>
    %201 = vector.extract_strided_slice %199 {offsets = [0, 32], sizes = [16, 32], strides = [1, 1]} : vector<16x64xf32> to vector<16x32xf32>
    %202 = vector.broadcast %7 : f32 to vector<16x32xf32>
    %203 = arith.mulf %201, %202 : vector<16x32xf32>
    %cst_80 = arith.constant 1.000000e+00 : f32
    %204 = vector.broadcast %cst_80 : f32 to vector<16x1xf32>
    %205 = tpu.concatenate %188, %204 in 1 : vector<16x32xf32>, vector<16x1xf32> -> vector<16x33xf32>
    %cst_81 = arith.constant dense<0.000000e+00> : vector<32x33xf32>
    %206 = tpu.matmul %203, %205, %cst_81 {dimension_numbers = #tpu.dot_dimension_numbers<[0], [0], [1], [1], [0, 1, 1, 1], [], []>} : vector<16x32xf32>, vector<16x33xf32>, vector<32x33xf32> -> vector<32x33xf32>
    %207 = vector.extract_strided_slice %206 {offsets = [0, 0], sizes = [32, 32], strides = [1, 1]} : vector<32x33xf32> to vector<32x32xf32>
    %208 = vector.extract_strided_slice %206 {offsets = [0, 32], sizes = [32, 1], strides = [1, 1]} : vector<32x33xf32> to vector<32x1xf32>
    %209 = arith.mulf %207, %16 : vector<32x32xf32>
    %210 = vector.broadcast %208 : vector<32x1xf32> to vector<32x32xf32>
    %211 = arith.mulf %16, %210 : vector<32x32xf32>
    %212 = tpu.concatenate %209, %211 in 1 : vector<32x32xf32>, vector<32x32xf32> -> vector<32x64xf32>
    %cst_82 = arith.constant dense<0.000000e+00> : vector<16x64xf32>
    %213 = tpu.matmul %200, %212, %cst_82 {dimension_numbers = #tpu.dot_dimension_numbers<[1], [0], [0], [1], [0, 0, 1, 1], [], []>} : vector<16x32xf32>, vector<32x64xf32>, vector<16x64xf32> -> vector<16x64xf32>
    %214 = vector.extract_strided_slice %213 {offsets = [0, 0], sizes = [16, 32], strides = [1, 1]} : vector<16x64xf32> to vector<16x32xf32>
    %cst_83 = arith.constant dense<0.000000e+00> : vector<32xf32>
    %215 = vector.multi_reduction <add>, %188, %cst_83 [0] : vector<16x32xf32> to vector<32xf32>
    %216 = vector.shape_cast %215 : vector<32xf32> to vector<1x32xf32>
    %217 = vector.broadcast %216 : vector<1x32xf32> to vector<16x32xf32>
    %218 = arith.addf %214, %217 : vector<16x32xf32>
    %cst_84 = arith.constant 1.600000e+01 : f32
    %219 = vector.broadcast %cst_84 : f32 to vector<16x32xf32>
    %220 = arith.mulf %188, %219 : vector<16x32xf32>
    %221 = arith.addf %218, %220 : vector<16x32xf32>
    %222 = vector.extract_strided_slice %213 {offsets = [0, 32], sizes = [16, 32], strides = [1, 1]} : vector<16x64xf32> to vector<16x32xf32>
    %cst_85 = arith.constant 3.200000e+01 : f32
    %223 = vector.broadcast %cst_85 : f32 to vector<16x32xf32>
    %224 = arith.addf %222, %223 : vector<16x32xf32>
    %225 = tpu.reciprocal %224 {approx = true} : vector<16x32xf32> -> vector<16x32xf32>
    %226 = arith.mulf %221, %225 : vector<16x32xf32>
    %227 = arith.addf %10, %226 : vector<16x32xf32>
    %228 = vector.extract_strided_slice %15 {offsets = [18, 0], sizes = [1, 32], strides = [1, 1]} : vector<22x32xf32> to vector<1x32xf32>
    %229 = vector.extract_strided_slice %15 {offsets = [19, 0], sizes = [1, 32], strides = [1, 1]} : vector<22x32xf32> to vector<1x32xf32>
    %cst_86 = arith.constant dense<0.000000e+00> : vector<16xf32>
    %230 = vector.multi_reduction <add>, %227, %cst_86 [1] : vector<16x32xf32> to vector<16xf32>
    %231 = vector.shape_cast %230 : vector<16xf32> to vector<16x1xf32>
    %cst_87 = arith.constant 3.200000e+01 : f32
    %232 = vector.broadcast %cst_87 : f32 to vector<16x1xf32>
    %233 = arith.divf %231, %232 : vector<16x1xf32>
    %234 = vector.broadcast %233 : vector<16x1xf32> to vector<16x32xf32>
    %235 = arith.subf %227, %234 : vector<16x32xf32>
    %236 = arith.mulf %235, %235 : vector<16x32xf32>
    %cst_88 = arith.constant dense<0.000000e+00> : vector<16xf32>
    %237 = vector.multi_reduction <add>, %236, %cst_88 [1] : vector<16x32xf32> to vector<16xf32>
    %238 = vector.shape_cast %237 : vector<16xf32> to vector<16x1xf32>
    %cst_89 = arith.constant 3.200000e+01 : f32
    %239 = vector.broadcast %cst_89 : f32 to vector<16x1xf32>
    %240 = arith.divf %238, %239 : vector<16x1xf32>
    %cst_90 = arith.constant 9.99999974E-6 : f32
    %241 = vector.broadcast %cst_90 : f32 to vector<16x1xf32>
    %242 = arith.addf %240, %241 : vector<16x1xf32>
    %243 = math.rsqrt %242 : vector<16x1xf32>
    %244 = vector.broadcast %243 : vector<16x1xf32> to vector<16x32xf32>
    %245 = arith.mulf %235, %244 : vector<16x32xf32>
    %246 = vector.broadcast %228 : vector<1x32xf32> to vector<16x32xf32>
    %247 = arith.mulf %245, %246 : vector<16x32xf32>
    %248 = vector.broadcast %229 : vector<1x32xf32> to vector<16x32xf32>
    %249 = arith.addf %247, %248 : vector<16x32xf32>
    %c0_91 = arith.constant 0 : index
    %c0_92 = arith.constant 0 : index
    %250 = vector.load %arg24[%c0_91, %c0_92] : memref<32x32xf32, #tpu.memory_space<vmem>>, vector<32x32xf32>
    %251 = vector.extract_strided_slice %15 {offsets = [16, 0], sizes = [1, 32], strides = [1, 1]} : vector<22x32xf32> to vector<1x32xf32>
    %c0_93 = arith.constant 0 : index
    %c0_94 = arith.constant 0 : index
    %252 = vector.load %arg25[%c0_93, %c0_94] : memref<32x32xf32, #tpu.memory_space<vmem>>, vector<32x32xf32>
    %253 = vector.extract_strided_slice %15 {offsets = [17, 0], sizes = [1, 32], strides = [1, 1]} : vector<22x32xf32> to vector<1x32xf32>
    %cst_95 = arith.constant dense<0.000000e+00> : vector<16x32xf32>
    %254 = tpu.matmul %249, %250, %cst_95 {dimension_numbers = #tpu.dot_dimension_numbers<[1], [0], [0], [1], [0, 0, 1, 1], [], []>} : vector<16x32xf32>, vector<32x32xf32>, vector<16x32xf32> -> vector<16x32xf32>
    %255 = vector.broadcast %251 : vector<1x32xf32> to vector<16x32xf32>
    %256 = arith.addf %254, %255 : vector<16x32xf32>
    %cst_96 = arith.constant 0.000000e+00 : f32
    %257 = vector.broadcast %cst_96 : f32 to vector<16x32xf32>
    %258 = arith.maximumf %256, %257 : vector<16x32xf32>
    %cst_97 = arith.constant dense<0.000000e+00> : vector<16x32xf32>
    %259 = tpu.matmul %258, %252, %cst_97 {dimension_numbers = #tpu.dot_dimension_numbers<[1], [0], [0], [1], [0, 0, 1, 1], [], []>} : vector<16x32xf32>, vector<32x32xf32>, vector<16x32xf32> -> vector<16x32xf32>
    %260 = vector.broadcast %253 : vector<1x32xf32> to vector<16x32xf32>
    %261 = arith.addf %259, %260 : vector<16x32xf32>
    %262 = arith.addf %249, %261 : vector<16x32xf32>
    %263 = vector.extract_strided_slice %15 {offsets = [20, 0], sizes = [1, 32], strides = [1, 1]} : vector<22x32xf32> to vector<1x32xf32>
    %264 = vector.extract_strided_slice %15 {offsets = [21, 0], sizes = [1, 32], strides = [1, 1]} : vector<22x32xf32> to vector<1x32xf32>
    %cst_98 = arith.constant dense<0.000000e+00> : vector<16xf32>
    %265 = vector.multi_reduction <add>, %262, %cst_98 [1] : vector<16x32xf32> to vector<16xf32>
    %266 = vector.shape_cast %265 : vector<16xf32> to vector<16x1xf32>
    %cst_99 = arith.constant 3.200000e+01 : f32
    %267 = vector.broadcast %cst_99 : f32 to vector<16x1xf32>
    %268 = arith.divf %266, %267 : vector<16x1xf32>
    %269 = vector.broadcast %268 : vector<16x1xf32> to vector<16x32xf32>
    %270 = arith.subf %262, %269 : vector<16x32xf32>
    %271 = arith.mulf %270, %270 : vector<16x32xf32>
    %cst_100 = arith.constant dense<0.000000e+00> : vector<16xf32>
    %272 = vector.multi_reduction <add>, %271, %cst_100 [1] : vector<16x32xf32> to vector<16xf32>
    %273 = vector.shape_cast %272 : vector<16xf32> to vector<16x1xf32>
    %cst_101 = arith.constant 3.200000e+01 : f32
    %274 = vector.broadcast %cst_101 : f32 to vector<16x1xf32>
    %275 = arith.divf %273, %274 : vector<16x1xf32>
    %cst_102 = arith.constant 9.99999974E-6 : f32
    %276 = vector.broadcast %cst_102 : f32 to vector<16x1xf32>
    %277 = arith.addf %275, %276 : vector<16x1xf32>
    %278 = math.rsqrt %277 : vector<16x1xf32>
    %279 = vector.broadcast %278 : vector<16x1xf32> to vector<16x32xf32>
    %280 = arith.mulf %270, %279 : vector<16x32xf32>
    %281 = vector.broadcast %263 : vector<1x32xf32> to vector<16x32xf32>
    %282 = arith.mulf %280, %281 : vector<16x32xf32>
    %283 = vector.broadcast %264 : vector<1x32xf32> to vector<16x32xf32>
    %284 = arith.addf %282, %283 : vector<16x32xf32>
    %c0_103 = arith.constant 0 : index
    %c0_104 = arith.constant 0 : index
    %c0_105 = arith.constant 0 : index
    %285 = vector.load %arg26[%c0_103, %c0_104, %c0_105] : memref<1x16x32xf32, #tpu.memory_space<vmem>>, vector<1x16x32xf32>
    %286 = vector.shape_cast %285 : vector<1x16x32xf32> to vector<16x32xf32>
    %287 = vector.shape_cast %284 : vector<16x32xf32> to vector<1x16x32xf32>
    tpu.vector_store %arg26[%c0_103, %c0_104, %c0_105], %287 {strides = array<i32>} : memref<1x16x32xf32, #tpu.memory_space<vmem>>, vector<1x16x32xf32>,
    return
  }
  func.func @transform_0(%arg0: i32, %arg1: memref<2xi32, #tpu.memory_space<smem>>, %arg2: memref<2xi32, #tpu.memory_space<smem>>) -> (i32, i32) {
    %c0_i32 = arith.constant 0 : i32
    %c0_i32_0 = arith.constant 0 : i32
    %c0_i32_1 = arith.constant 0 : i32
    return %c0_i32, %c0_i32_0 : i32, i32
  }
  func.func @transform_1(%arg0: i32, %arg1: memref<2xi32, #tpu.memory_space<smem>>, %arg2: memref<2xi32, #tpu.memory_space<smem>>) -> (i32, i32, i32) {
    %c0_i32 = arith.constant 0 : i32
    %c0_i32_0 = arith.constant 0 : i32
    %c0_i32_1 = arith.constant 0 : i32
    return %arg0, %c0_i32, %c0_i32_0 : i32, i32, i32
  }
  func.func @transform_2(%arg0: i32, %arg1: memref<2xi32, #tpu.memory_space<smem>>, %arg2: memref<2xi32, #tpu.memory_space<smem>>) -> (i32, i32, i32) {
    %c0_i32 = arith.constant 0 : i32
    %c0_i32_0 = arith.constant 0 : i32
    %c0_i32_1 = arith.constant 0 : i32
    return %arg0, %c0_i32, %c0_i32_0 : i32, i32, i32
  }
  func.func @transform_3(%arg0: i32, %arg1: memref<2xi32, #tpu.memory_space<smem>>, %arg2: memref<2xi32, #tpu.memory_space<smem>>) -> (i32, i32, i32) {
    %c0_i32 = arith.constant 0 : i32
    %c0_i32_0 = arith.constant 0 : i32
    %c0_i32_1 = arith.constant 0 : i32
    return %arg0, %c0_i32, %c0_i32_0 : i32, i32, i32
  }
  func.func @transform_4(%arg0: i32, %arg1: memref<2xi32, #tpu.memory_space<smem>>, %arg2: memref<2xi32, #tpu.memory_space<smem>>) -> (i32, i32) {
    %c0_i32 = arith.constant 0 : i32
    %c0_i32_0 = arith.constant 0 : i32
    %c0_i32_1 = arith.constant 0 : i32
    return %c0_i32, %c0_i32_0 : i32, i32
  }
  func.func @transform_5(%arg0: i32, %arg1: memref<2xi32, #tpu.memory_space<smem>>, %arg2: memref<2xi32, #tpu.memory_space<smem>>) -> (i32, i32) {
    %c0_i32 = arith.constant 0 : i32
    %c0_i32_0 = arith.constant 0 : i32
    %c0_i32_1 = arith.constant 0 : i32
    return %c0_i32, %c0_i32_0 : i32, i32
  }
  func.func @transform_6(%arg0: i32, %arg1: memref<2xi32, #tpu.memory_space<smem>>, %arg2: memref<2xi32, #tpu.memory_space<smem>>) -> (i32, i32) {
    %c0_i32 = arith.constant 0 : i32
    %c0_i32_0 = arith.constant 0 : i32
    %c0_i32_1 = arith.constant 0 : i32
    return %c0_i32, %c0_i32_0 : i32, i32
  }
  func.func @transform_7(%arg0: i32, %arg1: memref<2xi32, #tpu.memory_space<smem>>, %arg2: memref<2xi32, #tpu.memory_space<smem>>) -> (i32, i32) {
    %c0_i32 = arith.constant 0 : i32
    %c0_i32_0 = arith.constant 0 : i32
    %c0_i32_1 = arith.constant 0 : i32
    return %c0_i32, %c0_i32_0 : i32, i32
  }
  func.func @transform_8(%arg0: i32, %arg1: memref<2xi32, #tpu.memory_space<smem>>, %arg2: memref<2xi32, #tpu.memory_space<smem>>) -> (i32, i32) {
    %c0_i32 = arith.constant 0 : i32
    %c0_i32_0 = arith.constant 0 : i32
    %c0_i32_1 = arith.constant 0 : i32
    return %c0_i32, %c0_i32_0 : i32, i32
  }
  func.func @transform_9(%arg0: i32, %arg1: memref<2xi32, #tpu.memory_space<smem>>, %arg2: memref<2xi32, #tpu.memory_space<smem>>) -> (i32, i32) {
    %c0_i32 = arith.constant 0 : i32
    %c0_i32_0 = arith.constant 0 : i32
    %c0_i32_1 = arith.constant 0 : i32
    return %c0_i32, %c0_i32_0 : i32, i32
  }
  func.func @transform_10(%arg0: i32, %arg1: memref<2xi32, #tpu.memory_space<smem>>, %arg2: memref<2xi32, #tpu.memory_space<smem>>) -> (i32, i32) {
    %c0_i32 = arith.constant 0 : i32
    %c0_i32_0 = arith.constant 0 : i32
    %c0_i32_1 = arith.constant 0 : i32
    return %c0_i32, %c0_i32_0 : i32, i32
  }
  func.func @transform_11(%arg0: i32, %arg1: memref<2xi32, #tpu.memory_space<smem>>, %arg2: memref<2xi32, #tpu.memory_space<smem>>) -> (i32, i32) {
    %c0_i32 = arith.constant 0 : i32
    %c0_i32_0 = arith.constant 0 : i32
    %c0_i32_1 = arith.constant 0 : i32
    return %c0_i32, %c0_i32_0 : i32, i32
  }
  func.func @transform_12(%arg0: i32, %arg1: memref<2xi32, #tpu.memory_space<smem>>, %arg2: memref<2xi32, #tpu.memory_space<smem>>) -> (i32, i32) {
    %c0_i32 = arith.constant 0 : i32
    %c0_i32_0 = arith.constant 0 : i32
    %c0_i32_1 = arith.constant 0 : i32
    return %c0_i32, %c0_i32_0 : i32, i32
  }
  func.func @transform_13(%arg0: i32, %arg1: memref<2xi32, #tpu.memory_space<smem>>, %arg2: memref<2xi32, #tpu.memory_space<smem>>) -> (i32, i32, i32) {
    %c0_i32 = arith.constant 0 : i32
    %c0_i32_0 = arith.constant 0 : i32
    %c0_i32_1 = arith.constant 0 : i32
    %c0_i32_2 = arith.constant 0 : i32
    return %c0_i32, %c0_i32_0, %c0_i32_1 : i32, i32, i32
  }
  func.func @transform_14(%arg0: i32, %arg1: memref<2xi32, #tpu.memory_space<smem>>, %arg2: memref<2xi32, #tpu.memory_space<smem>>) -> (i32, i32, i32) {
    %c0_i32 = arith.constant 0 : i32
    %c0_i32_0 = arith.constant 0 : i32
    %c0_i32_1 = arith.constant 0 : i32
    %c0_i32_2 = arith.constant 0 : i32
    return %c0_i32, %c0_i32_0, %c0_i32_1 : i32, i32, i32
  }
  func.func @transform_15(%arg0: i32, %arg1: memref<2xi32, #tpu.memory_space<smem>>, %arg2: memref<2xi32, #tpu.memory_space<smem>>) -> (i32, i32, i32) {
    %c0_i32 = arith.constant 0 : i32
    %c0_i32_0 = arith.constant 0 : i32
    %c0_i32_1 = arith.constant 0 : i32
    %c0_i32_2 = arith.constant 0 : i32
    return %c0_i32, %c0_i32_0, %c0_i32_1 : i32, i32, i32
  }
  func.func @transform_16(%arg0: i32, %arg1: memref<2xi32, #tpu.memory_space<smem>>, %arg2: memref<2xi32, #tpu.memory_space<smem>>) -> (i32, i32, i32) {
    %c0_i32 = arith.constant 0 : i32
    %c0_i32_0 = arith.constant 0 : i32
    %c0_i32_1 = arith.constant 0 : i32
    %c0_i32_2 = arith.constant 0 : i32
    return %c0_i32, %c0_i32_0, %c0_i32_1 : i32, i32, i32
  }
  func.func @transform_17(%arg0: i32, %arg1: memref<2xi32, #tpu.memory_space<smem>>, %arg2: memref<2xi32, #tpu.memory_space<smem>>) -> (i32, i32, i32) {
    %c0_i32 = arith.constant 0 : i32
    %c0_i32_0 = arith.constant 0 : i32
    %c0_i32_1 = arith.constant 0 : i32
    %c0_i32_2 = arith.constant 0 : i32
    return %c0_i32, %c0_i32_0, %c0_i32_1 : i32, i32, i32
  }
  func.func @transform_18(%arg0: i32, %arg1: memref<2xi32, #tpu.memory_space<smem>>, %arg2: memref<2xi32, #tpu.memory_space<smem>>) -> (i32, i32, i32) {
    %c0_i32 = arith.constant 0 : i32
    %c0_i32_0 = arith.constant 0 : i32
    %c0_i32_1 = arith.constant 0 : i32
    %c0_i32_2 = arith.constant 0 : i32
    return %c0_i32, %c0_i32_0, %c0_i32_1 : i32, i32, i32
  }
  func.func @transform_19(%arg0: i32, %arg1: memref<2xi32, #tpu.memory_space<smem>>, %arg2: memref<2xi32, #tpu.memory_space<smem>>) -> (i32, i32) {
    %c0_i32 = arith.constant 0 : i32
    %c0_i32_0 = arith.constant 0 : i32
    %c0_i32_1 = arith.constant 0 : i32
    return %c0_i32, %c0_i32_0 : i32, i32
  }
  func.func @transform_20(%arg0: i32, %arg1: memref<2xi32, #tpu.memory_space<smem>>, %arg2: memref<2xi32, #tpu.memory_space<smem>>) -> (i32, i32) {
    %c0_i32 = arith.constant 0 : i32
    %c0_i32_0 = arith.constant 0 : i32
    %c0_i32_1 = arith.constant 0 : i32
    return %c0_i32, %c0_i32_0 : i32, i32
  }
  func.func @transform_21(%arg0: i32, %arg1: memref<2xi32, #tpu.memory_space<smem>>, %arg2: memref<2xi32, #tpu.memory_space<smem>>) -> (i32, i32) {
    %c0_i32 = arith.constant 0 : i32
    %c0_i32_0 = arith.constant 0 : i32
    %c0_i32_1 = arith.constant 0 : i32
    return %c0_i32, %c0_i32_0 : i32, i32
  }
  func.func @transform_22(%arg0: i32, %arg1: memref<2xi32, #tpu.memory_space<smem>>, %arg2: memref<2xi32, #tpu.memory_space<smem>>) -> (i32, i32) {
    %c0_i32 = arith.constant 0 : i32
    %c0_i32_0 = arith.constant 0 : i32
    %c0_i32_1 = arith.constant 0 : i32
    return %c0_i32, %c0_i32_0 : i32, i32
  }
  func.func @transform_23(%arg0: i32, %arg1: memref<2xi32, #tpu.memory_space<smem>>, %arg2: memref<2xi32, #tpu.memory_space<smem>>) -> (i32, i32, i32) {
    %c0_i32 = arith.constant 0 : i32
    %c0_i32_0 = arith.constant 0 : i32
    %c0_i32_1 = arith.constant 0 : i32
    return %arg0, %c0_i32, %c0_i32_0 : i32, i32, i32
  }
}

</mosaic_0001>

<llo_original>
// kernel: knowformer_layer_forward.1
$region0: #{knowformer_layer_forward.1}
  #allocation0 [shape = 'u32[]', space=smem, size = 0x4, offset = 0x4, fixed_abs, tag = 'smem constant byte address 0x4 - core index']
  #allocation1 [shape = 'u32[144,128]{1,0:T(1,128)}', space=vmem, size = 0x12000, scoped, tag = 'internal scratch']
  #allocation2 [shape = 's32[1]{0}', space=sflag, size = 0x4, scoped, tag = 'scoped memory for knowformer_layer_forward.1']
  #allocation3 [shape = 'u8[512]{0}', space=smem, size = 0x200, scoped, tag = 'prefetched SMEM operand 0']
  #allocation4 [shape = 'u8[512]{0}', space=smem, size = 0x200, scoped, tag = 'prefetched SMEM operand 1']
  %s0 = inlined_call_operand.vmem [shape: s32[2], index: 0, kind: input, shape index: {}]
  %s1 = inlined_call_operand.vmem [shape: s32[2], index: 1, kind: input, shape index: {}]
  %s2 = inlined_call_operand.vmem [shape: f32[64,16], index: 2, kind: input, shape index: {}]
  %s3 = inlined_call_operand.vmem [shape: f32[2,16,32], index: 3, kind: input, shape index: {}]
  %s4 = inlined_call_operand.vmem [shape: f32[2,1,32], index: 4, kind: input, shape index: {}]
  %s5 = inlined_call_operand.vmem [shape: f32[2,16,1], index: 5, kind: input, shape index: {}]
  %s6 = inlined_call_operand.hbm [shape: f32[22,32], index: 6, kind: input, shape index: {}]
  %s7 = inlined_call_operand.hbm [shape: f32[32,32], index: 7, kind: input, shape index: {}]
  %s8 = inlined_call_operand.vmem [shape: f32[64,64], index: 8, kind: input, shape index: {}]
  %s9 = inlined_call_operand.vmem [shape: f32[32,128], index: 9, kind: input, shape index: {}]
  %s10 = inlined_call_operand.hbm [shape: f32[1,128], index: 10, kind: input, shape index: {}]
  %s11 = inlined_call_operand.hbm [shape: f32[32,32], index: 11, kind: input, shape index: {}]
  %s12 = inlined_call_operand.hbm [shape: f32[32,32], index: 12, kind: input, shape index: {}]
  %s13 = inlined_call_operand.hbm [shape: f32[32,32], index: 13, kind: input, shape index: {}]
  %s14 = inlined_call_operand.hbm [shape: f32[32,32], index: 14, kind: input, shape index: {}]
  %s15 = inlined_call_operand.hbm [shape: f32[1,32,32], index: 15, kind: input, shape index: {}]
  %s16 = inlined_call_operand.hbm [shape: f32[1,32,32], index: 16, kind: input, shape index: {}]
  %s17 = inlined_call_operand.hbm [shape: f32[1,32,128], index: 17, kind: input, shape index: {}]
  %s18 = inlined_call_operand.hbm [shape: f32[1,1,128], index: 18, kind: input, shape index: {}]
  %s19 = inlined_call_operand.hbm [shape: f32[1,32,32], index: 19, kind: input, shape index: {}]
  %s20 = inlined_call_operand.hbm [shape: f32[1,32,32], index: 20, kind: input, shape index: {}]
  %s21 = inlined_call_operand.hbm [shape: f32[32,64], index: 21, kind: input, shape index: {}]
  %s22 = inlined_call_operand.hbm [shape: f32[1,64], index: 22, kind: input, shape index: {}]
  %s23 = inlined_call_operand.hbm [shape: f32[32,32], index: 23, kind: input, shape index: {}]
  %s24 = inlined_call_operand.hbm [shape: f32[32,32], index: 24, kind: input, shape index: {}]
  %s25 = inlined_call_operand.hbm [shape: f32[2,16,32], index: 25, kind: output, shape index: {}]
  %s26 = sld [smem:[#allocation0]]
  $region193: #{knowformer_layer_forward.1} parent=0
    _
  %s28 = ssub.s32 1, %s26
  %s29 = scalar_select 0, %s28, %s26
  %s30 = sshll.u32 %s0, 4
  %s31 = int_to_ptr.vmem [resolvable:$true] %s30
  %33 = dma.vmem_to_smem %s31, 16, [#allocation3], [#allocation2]
  %s34 = sshll.u32 %s1, 4
  %s35 = int_to_ptr.vmem [resolvable:$true] %s34
  %37 = dma.vmem_to_smem %s35, 16, [#allocation4], [#allocation2]
  %38 = dma.done [#allocation2], 32
  %39 = sfence
  $region1: #{knowformer_layer_forward.1} parent=0
    #allocation5 [shape = 'u8[12288]{0}', space=vmem, size = 0x3000, scoped, tag = 'input window, operand 6, single buffered']
    #allocation6 [shape = 's32[2]{0}', space=sflag, size = 0x8, scoped, tag = 'scoped memory for knowformer_layer_forward.1']
    #allocation7 [shape = 's32[2]{0}', space=sflag, size = 0x8, scoped, tag = 'scoped memory for knowformer_layer_forward.1']
    #allocation8 [shape = 'u8[16384]{0}', space=vmem, size = 0x4000, scoped, tag = 'input window, operand 7, single buffered']
    #allocation9 [shape = 's32[1]{0}', space=sflag, size = 0x4, scoped, tag = 'scoped memory for knowformer_layer_forward.1']
    #allocation10 [shape = 'u8[512]{0}', space=vmem, size = 0x400, scoped, tag = 'input window, operand 10, single buffered']
    #allocation11 [shape = 'u8[16384]{0}', space=vmem, size = 0x4000, scoped, tag = 'input window, operand 11, single buffered']
    #allocation12 [shape = 's32[1]{0}', space=sflag, size = 0x4, scoped, tag = 'scoped memory for knowformer_layer_forward.1']
    #allocation13 [shape = 'u8[16384]{0}', space=vmem, size = 0x4000, scoped, tag = 'input window, operand 12, single buffered']
    #allocation14 [shape = 'u8[16384]{0}', space=vmem, size = 0x4000, scoped, tag = 'input window, operand 13, single buffered']
    #allocation15 [shape = 's32[1]{0}', space=sflag, size = 0x4, scoped, tag = 'scoped memory for knowformer_layer_forward.1']
    #allocation16 [shape = 'u8[16384]{0}', space=vmem, size = 0x4000, scoped, tag = 'input window, operand 14, single buffered']
    #allocation17 [shape = 'u8[16384]{0}', space=vmem, size = 0x4000, scoped, tag = 'input window, operand 15, single buffered']
    #allocation18 [shape = 's32[1]{0}', space=sflag, size = 0x4, scoped, tag = 'scoped memory for knowformer_layer_forward.1']
    #allocation19 [shape = 'u8[16384]{0}', space=vmem, size = 0x4000, scoped, tag = 'input window, operand 16, single buffered']
    #allocation20 [shape = 'u8[16384]{0}', space=vmem, size = 0x4000, scoped, tag = 'input window, operand 17, single buffered']
    #allocation21 [shape = 's32[1]{0}', space=sflag, size = 0x4, scoped, tag = 'scoped memory for knowformer_layer_forward.1']
    #allocation22 [shape = 'u8[512]{0}', space=vmem, size = 0x400, scoped, tag = 'input window, operand 18, single buffered']
    #allocation23 [shape = 'u8[16384]{0}', space=vmem, size = 0x4000, scoped, tag = 'input window, operand 19, single buffered']
    #allocation24 [shape = 's32[1]{0}', space=sflag, size = 0x4, scoped, tag = 'scoped memory for knowformer_layer_forward.1']
    #allocation25 [shape = 'u8[16384]{0}', space=vmem, size = 0x4000, scoped, tag = 'input window, operand 20, single buffered']
    #allocation26 [shape = 'u8[16384]{0}', space=vmem, size = 0x4000, scoped, tag = 'input window, operand 21, single buffered']
    #allocation27 [shape = 's32[1]{0}', space=sflag, size = 0x4, scoped, tag = 'scoped memory for knowformer_layer_forward.1']
    #allocation28 [shape = 'u8[512]{0}', space=vmem, size = 0x400, scoped, tag = 'input window, operand 22, single buffered']
    #allocation29 [shape = 'u8[16384]{0}', space=vmem, size = 0x4000, scoped, tag = 'input window, operand 23, single buffered']
    #allocation30 [shape = 's32[1]{0}', space=sflag, size = 0x4, scoped, tag = 'scoped memory for knowformer_layer_forward.1']
    #allocation31 [shape = 'u8[16384]{0}', space=vmem, size = 0x4000, scoped, tag = 'input window, operand 24, single buffered']
    #allocation32 [shape = 'u8[16384]{0}', space=vmem, size = 0x4000, scoped, tag = 'output window, operand 0']
    %40 = vsyncpa [#allocation6], 0
    %41 = vsyncpa [#allocation9], 0
    %42 = vsyncpa [#allocation12], 0
    %43 = vsyncpa [#allocation15], 0
    %44 = vsyncpa [#allocation18], 0
    %45 = vsyncpa [#allocation21], 0
    %46 = vsyncpa [#allocation24], 0
    %47 = vsyncpa [#allocation27], 0
    %48 = vsyncpa [#allocation30], 0
    %49 = vsyncpa [#allocation7], 0
    %s50 = scalar_lea.sflag [#allocation7], 1
    %51 = vsyncpa %s50, 0
    loop: start=0, step=1, limit=4
    $region2: #{knowformer_layer_forward.1} parent=1 // loop_pre_header
      _
    $region3: #{knowformer_layer_forward.1} parent=1 // loop_header
      %s53 = sphi 0, %s57
      %p54 = scmp.ge.s32.totalorder %s53, 4
      %s61 = sphi 0, %s61
      %s63 = sphi 0, %s61
      %s64 = sphi 0, %s63
      %s78 = sphi 0, %s64
      %s84 = sphi 0, %s86
      %s87 = sphi 0, %s84
      %s88 = sphi 0, %s87
      %s104 = sphi 0, %s88
      %s110 = sphi 0, %s112
      %s113 = sphi 0, %s110
      %s114 = sphi 0, %s113
      %s130 = sphi 0, %s114
      %s136 = sphi 0, %s138
      %s139 = sphi 0, %s136
      %s140 = sphi 0, %s139
      %s156 = sphi 0, %s140
      %s160 = sphi 0, %s160
      %s162 = sphi 0, %s160
      %s163 = sphi 0, %s162
      %s177 = sphi 0, %s163
      %s181 = sphi 0, %s181
      %s183 = sphi 0, %s181
      %s184 = sphi 0, %s183
      %s198 = sphi 0, %s184
      %s202 = sphi 0, %s202
      %s204 = sphi 0, %s202
      %s205 = sphi 0, %s204
      %s219 = sphi 0, %s205
      %s223 = sphi 0, %s223
      %s225 = sphi 0, %s223
      %s226 = sphi 0, %s225
      %s240 = sphi 0, %s226
      %s244 = sphi 0, %s244
      %s246 = sphi 0, %s244
      %s247 = sphi 0, %s246
      %s261 = sphi 0, %s247
      %s265 = sphi 0, %s265
      %s267 = sphi 0, %s265
      %s268 = sphi 0, %s267
      %s282 = sphi 0, %s268
      %s286 = sphi 0, %s286
      %s288 = sphi 0, %s286
      %s289 = sphi 0, %s288
      %s303 = sphi 0, %s289
      %s307 = sphi 0, %s307
      %s309 = sphi 0, %s307
      %s310 = sphi 0, %s309
      %s324 = sphi 0, %s310
      %s328 = sphi 0, %s328
      %s330 = sphi 0, %s328
      %s331 = sphi 0, %s330
      %s345 = sphi 0, %s331
      %s349 = sphi 0, %s349
      %s351 = sphi 0, %s349
      %s352 = sphi 0, %s351
      %s366 = sphi 0, %s352
      %s370 = sphi 0, %s370
      %s372 = sphi 0, %s370
      %s373 = sphi 0, %s372
      %s387 = sphi 0, %s373
      %s391 = sphi 0, %s391
      %s393 = sphi 0, %s391
      %s394 = sphi 0, %s393
      %s408 = sphi 0, %s394
      %s412 = sphi 0, %s412
      %s414 = sphi 0, %s412
      %s415 = sphi 0, %s414
      %s429 = sphi 0, %s415
      %s433 = sphi 0, %s433
      %s435 = sphi 0, %s433
      %s436 = sphi 0, %s435
      %s450 = sphi 0, %s436
      %s454 = sphi 0, %s454
      %s456 = sphi 0, %s454
      %s457 = sphi 0, %s456
      %s471 = sphi 0, %s457
      %s475 = sphi 0, %s475
      %s477 = sphi 0, %s475
      %s478 = sphi 0, %s477
      %s492 = sphi 0, %s478
      %s496 = sphi 0, %s496
      %s498 = sphi 0, %s496
      %s499 = sphi 0, %s498
      %s513 = sphi 0, %s499
      %s517 = sphi 0, %s517
      %s519 = sphi 0, %s517
      %s520 = sphi 0, %s519
      %s534 = sphi 0, %s520
      %s538 = sphi 0, %s538
      %s540 = sphi 0, %s538
      %s541 = sphi 0, %s540
      %s555 = sphi 0, %s541
      %s561 = sphi 0, %s563
      %s564 = sphi 0, %s561
      %s565 = sphi 0, %s564
      %s581 = sphi 0, %s565
    $region4: #{knowformer_layer_forward.1} parent=1 // loop_header_branch
      %56 = sbr.rel (%p54) target = $region8
    $region5: #{knowformer_layer_forward.1} parent=1 // loop_body
      %s58 = ssub.s32 %s53, 1
      %s59 = ssub.s32 %s53, 2
      %s60 = sadd.s32 %s53, 1
      %s62 = sadd.s32 %s61, 1
      %p65 = scmp.eq.s32.totalorder %s53, 1
      %p66 = scmp.ne.s32.totalorder %s61, %s63
      %p67 = scmp.eq.s32.totalorder %s53, 0
      %p68 = por %p66, %p67
      %p69 = scmp.ne.s32.totalorder %s61, %s63
      %p70 = scmp.eq.s32.totalorder %s58, 1
      %p71 = por %p69, %p70
      %p72 = scmp.ne.s32.totalorder %s63, %s64
      %p73 = scmp.eq.s32.totalorder %s58, 0
      %p74 = por %p72, %p73
      %p75 = scmp.ne.s32.totalorder %s63, %s64
      %p76 = scmp.eq.s32.totalorder %s59, 1
      %p77 = por %p75, %p76
      %p79 = scmp.ne.s32.totalorder %s64, %s78
      %p80 = scmp.eq.s32.totalorder %s59, 0
      %p81 = por %p79, %p80
      %s82 = ssub.s32 %s53, %s60
      %p83 = scmp.eq.s32.totalorder %s82, 0
      %s85 = sadd.s32 %s84, 1
      %s86 = scalar_select %p83, %s84, %s85
      %p89 = pneg %p83
      %p90 = scmp.eq.s32.totalorder %s53, 1
      %p91 = por %p89, %p90
      %p92 = scmp.ne.s32.totalorder %s84, %s87
      %p93 = scmp.eq.s32.totalorder %s53, 0
      %p94 = por %p92, %p93
      %p95 = scmp.ne.s32.totalorder %s84, %s87
      %p96 = scmp.eq.s32.totalorder %s58, 1
      %p97 = por %p95, %p96
      %p98 = scmp.ne.s32.totalorder %s87, %s88
      %p99 = scmp.eq.s32.totalorder %s58, 0
      %p100 = por %p98, %p99
      %p101 = scmp.ne.s32.totalorder %s87, %s88
      %p102 = scmp.eq.s32.totalorder %s59, 1
      %p103 = por %p101, %p102
      %p105 = scmp.ne.s32.totalorder %s88, %s104
      %p106 = scmp.eq.s32.totalorder %s59, 0
      %p107 = por %p105, %p106
      %s108 = ssub.s32 %s53, %s60
      %p109 = scmp.eq.s32.totalorder %s108, 0
      %s111 = sadd.s32 %s110, 1
      %s112 = scalar_select %p109, %s110, %s111
      %p115 = pneg %p109
      %p116 = scmp.eq.s32.totalorder %s53, 1
      %p117 = por %p115, %p116
      %p118 = scmp.ne.s32.totalorder %s110, %s113
      %p119 = scmp.eq.s32.totalorder %s53, 0
      %p120 = por %p118, %p119
      %p121 = scmp.ne.s32.totalorder %s110, %s113
      %p122 = scmp.eq.s32.totalorder %s58, 1
      %p123 = por %p121, %p122
      %p124 = scmp.ne.s32.totalorder %s113, %s114
      %p125 = scmp.eq.s32.totalorder %s58, 0
      %p126 = por %p124, %p125
      %p127 = scmp.ne.s32.totalorder %s113, %s114
      %p128 = scmp.eq.s32.totalorder %s59, 1
      %p129 = por %p127, %p128
      %p131 = scmp.ne.s32.totalorder %s114, %s130
      %p132 = scmp.eq.s32.totalorder %s59, 0
      %p133 = por %p131, %p132
      %s134 = ssub.s32 %s53, %s60
      %p135 = scmp.eq.s32.totalorder %s134, 0
      %s137 = sadd.s32 %s136, 1
      %s138 = scalar_select %p135, %s136, %s137
      %p141 = pneg %p135
      %p142 = scmp.eq.s32.totalorder %s53, 1
      %p143 = por %p141, %p142
      %p144 = scmp.ne.s32.totalorder %s136, %s139
      %p145 = scmp.eq.s32.totalorder %s53, 0
      %p146 = por %p144, %p145
      %p147 = scmp.ne.s32.totalorder %s136, %s139
      %p148 = scmp.eq.s32.totalorder %s58, 1
      %p149 = por %p147, %p148
      %p150 = scmp.ne.s32.totalorder %s139, %s140
      %p151 = scmp.eq.s32.totalorder %s58, 0
      %p152 = por %p150, %p151
      %p153 = scmp.ne.s32.totalorder %s139, %s140
      %p154 = scmp.eq.s32.totalorder %s59, 1
      %p155 = por %p153, %p154
      %p157 = scmp.ne.s32.totalorder %s140, %s156
      %p158 = scmp.eq.s32.totalorder %s59, 0
      %p159 = por %p157, %p158
      %s161 = sadd.s32 %s160, 1
      %p164 = scmp.eq.s32.totalorder %s53, 1
      %p165 = scmp.ne.s32.totalorder %s160, %s162
      %p166 = scmp.eq.s32.totalorder %s53, 0
      %p167 = por %p165, %p166
      %p168 = scmp.ne.s32.totalorder %s160, %s162
      %p169 = scmp.eq.s32.totalorder %s58, 1
      %p170 = por %p168, %p169
      %p171 = scmp.ne.s32.totalorder %s162, %s163
      %p172 = scmp.eq.s32.totalorder %s58, 0
      %p173 = por %p171, %p172
      %p174 = scmp.ne.s32.totalorder %s162, %s163
      %p175 = scmp.eq.s32.totalorder %s59, 1
      %p176 = por %p174, %p175
      %p178 = scmp.ne.s32.totalorder %s163, %s177
      %p179 = scmp.eq.s32.totalorder %s59, 0
      %p180 = por %p178, %p179
      %s182 = sadd.s32 %s181, 1
      %p185 = scmp.eq.s32.totalorder %s53, 1
      %p186 = scmp.ne.s32.totalorder %s181, %s183
      %p187 = scmp.eq.s32.totalorder %s53, 0
      %p188 = por %p186, %p187
      %p189 = scmp.ne.s32.totalorder %s181, %s183
      %p190 = scmp.eq.s32.totalorder %s58, 1
      %p191 = por %p189, %p190
      %p192 = scmp.ne.s32.totalorder %s183, %s184
      %p193 = scmp.eq.s32.totalorder %s58, 0
      %p194 = por %p192, %p193
      %p195 = scmp.ne.s32.totalorder %s183, %s184
      %p196 = scmp.eq.s32.totalorder %s59, 1
      %p197 = por %p195, %p196
      %p199 = scmp.ne.s32.totalorder %s184, %s198
      %p200 = scmp.eq.s32.totalorder %s59, 0
      %p201 = por %p199, %p200
      %s203 = sadd.s32 %s202, 1
      %p206 = scmp.eq.s32.totalorder %s53, 1
      %p207 = scmp.ne.s32.totalorder %s202, %s204
      %p208 = scmp.eq.s32.totalorder %s53, 0
      %p209 = por %p207, %p208
      %p210 = scmp.ne.s32.totalorder %s202, %s204
      %p211 = scmp.eq.s32.totalorder %s58, 1
      %p212 = por %p210, %p211
      %p213 = scmp.ne.s32.totalorder %s204, %s205
      %p214 = scmp.eq.s32.totalorder %s58, 0
      %p215 = por %p213, %p214
      %p216 = scmp.ne.s32.totalorder %s204, %s205
      %p217 = scmp.eq.s32.totalorder %s59, 1
      %p218 = por %p216, %p217
      %p220 = scmp.ne.s32.totalorder %s205, %s219
      %p221 = scmp.eq.s32.totalorder %s59, 0
      %p222 = por %p220, %p221
      %s224 = sadd.s32 %s223, 1
      %p227 = scmp.eq.s32.totalorder %s53, 1
      %p228 = scmp.ne.s32.totalorder %s223, %s225
      %p229 = scmp.eq.s32.totalorder %s53, 0
      %p230 = por %p228, %p229
      %p231 = scmp.ne.s32.totalorder %s223, %s225
      %p232 = scmp.eq.s32.totalorder %s58, 1
      %p233 = por %p231, %p232
      %p234 = scmp.ne.s32.totalorder %s225, %s226
      %p235 = scmp.eq.s32.totalorder %s58, 0
      %p236 = por %p234, %p235
      %p237 = scmp.ne.s32.totalorder %s225, %s226
      %p238 = scmp.eq.s32.totalorder %s59, 1
      %p239 = por %p237, %p238
      %p241 = scmp.ne.s32.totalorder %s226, %s240
      %p242 = scmp.eq.s32.totalorder %s59, 0
      %p243 = por %p241, %p242
      %s245 = sadd.s32 %s244, 1
      %p248 = scmp.eq.s32.totalorder %s53, 1
      %p249 = scmp.ne.s32.totalorder %s244, %s246
      %p250 = scmp.eq.s32.totalorder %s53, 0
      %p251 = por %p249, %p250
      %p252 = scmp.ne.s32.totalorder %s244, %s246
      %p253 = scmp.eq.s32.totalorder %s58, 1
      %p254 = por %p252, %p253
      %p255 = scmp.ne.s32.totalorder %s246, %s247
      %p256 = scmp.eq.s32.totalorder %s58, 0
      %p257 = por %p255, %p256
      %p258 = scmp.ne.s32.totalorder %s246, %s247
      %p259 = scmp.eq.s32.totalorder %s59, 1
      %p260 = por %p258, %p259
      %p262 = scmp.ne.s32.totalorder %s247, %s261
      %p263 = scmp.eq.s32.totalorder %s59, 0
      %p264 = por %p262, %p263
      %s266 = sadd.s32 %s265, 1
      %p269 = scmp.eq.s32.totalorder %s53, 1
      %p270 = scmp.ne.s32.totalorder %s265, %s267
      %p271 = scmp.eq.s32.totalorder %s53, 0
      %p272 = por %p270, %p271
      %p273 = scmp.ne.s32.totalorder %s265, %s267
      %p274 = scmp.eq.s32.totalorder %s58, 1
      %p275 = por %p273, %p274
      %p276 = scmp.ne.s32.totalorder %s267, %s268
      %p277 = scmp.eq.s32.totalorder %s58, 0
      %p278 = por %p276, %p277
      %p279 = scmp.ne.s32.totalorder %s267, %s268
      %p280 = scmp.eq.s32.totalorder %s59, 1
      %p281 = por %p279, %p280
      %p283 = scmp.ne.s32.totalorder %s268, %s282
      %p284 = scmp.eq.s32.totalorder %s59, 0
      %p285 = por %p283, %p284
      %s287 = sadd.s32 %s286, 1
      %p290 = scmp.eq.s32.totalorder %s53, 1
      %p291 = scmp.ne.s32.totalorder %s286, %s288
      %p292 = scmp.eq.s32.totalorder %s53, 0
      %p293 = por %p291, %p292
      %p294 = scmp.ne.s32.totalorder %s286, %s288
      %p295 = scmp.eq.s32.totalorder %s58, 1
      %p296 = por %p294, %p295
      %p297 = scmp.ne.s32.totalorder %s288, %s289
      %p298 = scmp.eq.s32.totalorder %s58, 0
      %p299 = por %p297, %p298
      %p300 = scmp.ne.s32.totalorder %s288, %s289
      %p301 = scmp.eq.s32.totalorder %s59, 1
      %p302 = por %p300, %p301
      %p304 = scmp.ne.s32.totalorder %s289, %s303
      %p305 = scmp.eq.s32.totalorder %s59, 0
      %p306 = por %p304, %p305
      %s308 = sadd.s32 %s307, 1
      %p311 = scmp.eq.s32.totalorder %s53, 1
      %p312 = scmp.ne.s32.totalorder %s307, %s309
      %p313 = scmp.eq.s32.totalorder %s53, 0
      %p314 = por %p312, %p313
      %p315 = scmp.ne.s32.totalorder %s307, %s309
      %p316 = scmp.eq.s32.totalorder %s58, 1
      %p317 = por %p315, %p316
      %p318 = scmp.ne.s32.totalorder %s309, %s310
      %p319 = scmp.eq.s32.totalorder %s58, 0
      %p320 = por %p318, %p319
      %p321 = scmp.ne.s32.totalorder %s309, %s310
      %p322 = scmp.eq.s32.totalorder %s59, 1
      %p323 = por %p321, %p322
      %p325 = scmp.ne.s32.totalorder %s310, %s324
      %p326 = scmp.eq.s32.totalorder %s59, 0
      %p327 = por %p325, %p326
      %s329 = sadd.s32 %s328, 1
      %p332 = scmp.eq.s32.totalorder %s53, 1
      %p333 = scmp.ne.s32.totalorder %s328, %s330
      %p334 = scmp.eq.s32.totalorder %s53, 0
      %p335 = por %p333, %p334
      %p336 = scmp.ne.s32.totalorder %s328, %s330
      %p337 = scmp.eq.s32.totalorder %s58, 1
      %p338 = por %p336, %p337
      %p339 = scmp.ne.s32.totalorder %s330, %s331
      %p340 = scmp.eq.s32.totalorder %s58, 0
      %p341 = por %p339, %p340
      %p342 = scmp.ne.s32.totalorder %s330, %s331
      %p343 = scmp.eq.s32.totalorder %s59, 1
      %p344 = por %p342, %p343
      %p346 = scmp.ne.s32.totalorder %s331, %s345
      %p347 = scmp.eq.s32.totalorder %s59, 0
      %p348 = por %p346, %p347
      %s350 = sadd.s32 %s349, 1
      %p353 = scmp.eq.s32.totalorder %s53, 1
      %p354 = scmp.ne.s32.totalorder %s349, %s351
      %p355 = scmp.eq.s32.totalorder %s53, 0
      %p356 = por %p354, %p355
      %p357 = scmp.ne.s32.totalorder %s349, %s351
      %p358 = scmp.eq.s32.totalorder %s58, 1
      %p359 = por %p357, %p358
      %p360 = scmp.ne.s32.totalorder %s351, %s352
      %p361 = scmp.eq.s32.totalorder %s58, 0
      %p362 = por %p360, %p361
      %p363 = scmp.ne.s32.totalorder %s351, %s352
      %p364 = scmp.eq.s32.totalorder %s59, 1
      %p365 = por %p363, %p364
      %p367 = scmp.ne.s32.totalorder %s352, %s366
      %p368 = scmp.eq.s32.totalorder %s59, 0
      %p369 = por %p367, %p368
      %s371 = sadd.s32 %s370, 1
      %p374 = scmp.eq.s32.totalorder %s53, 1
      %p375 = scmp.ne.s32.totalorder %s370, %s372
      %p376 = scmp.eq.s32.totalorder %s53, 0
      %p377 = por %p375, %p376
      %p378 = scmp.ne.s32.totalorder %s370, %s372
      %p379 = scmp.eq.s32.totalorder %s58, 1
      %p380 = por %p378, %p379
      %p381 = scmp.ne.s32.totalorder %s372, %s373
      %p382 = scmp.eq.s32.totalorder %s58, 0
      %p383 = por %p381, %p382
      %p384 = scmp.ne.s32.totalorder %s372, %s373
      %p385 = scmp.eq.s32.totalorder %s59, 1
      %p386 = por %p384, %p385
      %p388 = scmp.ne.s32.totalorder %s373, %s387
      %p389 = scmp.eq.s32.totalorder %s59, 0
      %p390 = por %p388, %p389
      %s392 = sadd.s32 %s391, 1
      %p395 = scmp.eq.s32.totalorder %s53, 1
      %p396 = scmp.ne.s32.totalorder %s391, %s393
      %p397 = scmp.eq.s32.totalorder %s53, 0
      %p398 = por %p396, %p397
      %p399 = scmp.ne.s32.totalorder %s391, %s393
      %p400 = scmp.eq.s32.totalorder %s58, 1
      %p401 = por %p399, %p400
      %p402 = scmp.ne.s32.totalorder %s393, %s394
      %p403 = scmp.eq.s32.totalorder %s58, 0
      %p404 = por %p402, %p403
      %p405 = scmp.ne.s32.totalorder %s393, %s394
      %p406 = scmp.eq.s32.totalorder %s59, 1
      %p407 = por %p405, %p406
      %p409 = scmp.ne.s32.totalorder %s394, %s408
      %p410 = scmp.eq.s32.totalorder %s59, 0
      %p411 = por %p409, %p410
      %s413 = sadd.s32 %s412, 1
      %p416 = scmp.eq.s32.totalorder %s53, 1
      %p417 = scmp.ne.s32.totalorder %s412, %s414
      %p418 = scmp.eq.s32.totalorder %s53, 0
      %p419 = por %p417, %p418
      %p420 = scmp.ne.s32.totalorder %s412, %s414
      %p421 = scmp.eq.s32.totalorder %s58, 1
      %p422 = por %p420, %p421
      %p423 = scmp.ne.s32.totalorder %s414, %s415
      %p424 = scmp.eq.s32.totalorder %s58, 0
      %p425 = por %p423, %p424
      %p426 = scmp.ne.s32.totalorder %s414, %s415
      %p427 = scmp.eq.s32.totalorder %s59, 1
      %p428 = por %p426, %p427
      %p430 = scmp.ne.s32.totalorder %s415, %s429
      %p431 = scmp.eq.s32.totalorder %s59, 0
      %p432 = por %p430, %p431
      %s434 = sadd.s32 %s433, 1
      %p437 = scmp.eq.s32.totalorder %s53, 1
      %p438 = scmp.ne.s32.totalorder %s433, %s435
      %p439 = scmp.eq.s32.totalorder %s53, 0
      %p440 = por %p438, %p439
      %p441 = scmp.ne.s32.totalorder %s433, %s435
      %p442 = scmp.eq.s32.totalorder %s58, 1
      %p443 = por %p441, %p442
      %p444 = scmp.ne.s32.totalorder %s435, %s436
      %p445 = scmp.eq.s32.totalorder %s58, 0
      %p446 = por %p444, %p445
      %p447 = scmp.ne.s32.totalorder %s435, %s436
      %p448 = scmp.eq.s32.totalorder %s59, 1
      %p449 = por %p447, %p448
      %p451 = scmp.ne.s32.totalorder %s436, %s450
      %p452 = scmp.eq.s32.totalorder %s59, 0
      %p453 = por %p451, %p452
      %s455 = sadd.s32 %s454, 1
      %p458 = scmp.eq.s32.totalorder %s53, 1
      %p459 = scmp.ne.s32.totalorder %s454, %s456
      %p460 = scmp.eq.s32.totalorder %s53, 0
      %p461 = por %p459, %p460
      %p462 = scmp.ne.s32.totalorder %s454, %s456
      %p463 = scmp.eq.s32.totalorder %s58, 1
      %p464 = por %p462, %p463
      %p465 = scmp.ne.s32.totalorder %s456, %s457
      %p466 = scmp.eq.s32.totalorder %s58, 0
      %p467 = por %p465, %p466
      %p468 = scmp.ne.s32.totalorder %s456, %s457
      %p469 = scmp.eq.s32.totalorder %s59, 1
      %p470 = por %p468, %p469
      %p472 = scmp.ne.s32.totalorder %s457, %s471
      %p473 = scmp.eq.s32.totalorder %s59, 0
      %p474 = por %p472, %p473
      %s476 = sadd.s32 %s475, 1
      %p479 = scmp.eq.s32.totalorder %s53, 1
      %p480 = scmp.ne.s32.totalorder %s475, %s477
      %p481 = scmp.eq.s32.totalorder %s53, 0
      %p482 = por %p480, %p481
      %p483 = scmp.ne.s32.totalorder %s475, %s477
      %p484 = scmp.eq.s32.totalorder %s58, 1
      %p485 = por %p483, %p484
      %p486 = scmp.ne.s32.totalorder %s477, %s478
      %p487 = scmp.eq.s32.totalorder %s58, 0
      %p488 = por %p486, %p487
      %p489 = scmp.ne.s32.totalorder %s477, %s478
      %p490 = scmp.eq.s32.totalorder %s59, 1
      %p491 = por %p489, %p490
      %p493 = scmp.ne.s32.totalorder %s478, %s492
      %p494 = scmp.eq.s32.totalorder %s59, 0
      %p495 = por %p493, %p494
      %s497 = sadd.s32 %s496, 1
      %p500 = scmp.eq.s32.totalorder %s53, 1
      %p501 = scmp.ne.s32.totalorder %s496, %s498
      %p502 = scmp.eq.s32.totalorder %s53, 0
      %p503 = por %p501, %p502
      %p504 = scmp.ne.s32.totalorder %s496, %s498
      %p505 = scmp.eq.s32.totalorder %s58, 1
      %p506 = por %p504, %p505
      %p507 = scmp.ne.s32.totalorder %s498, %s499
      %p508 = scmp.eq.s32.totalorder %s58, 0
      %p509 = por %p507, %p508
      %p510 = scmp.ne.s32.totalorder %s498, %s499
      %p511 = scmp.eq.s32.totalorder %s59, 1
      %p512 = por %p510, %p511
      %p514 = scmp.ne.s32.totalorder %s499, %s513
      %p515 = scmp.eq.s32.totalorder %s59, 0
      %p516 = por %p514, %p515
      %s518 = sadd.s32 %s517, 1
      %p521 = scmp.eq.s32.totalorder %s53, 1
      %p522 = scmp.ne.s32.totalorder %s517, %s519
      %p523 = scmp.eq.s32.totalorder %s53, 0
      %p524 = por %p522, %p523
      %p525 = scmp.ne.s32.totalorder %s517, %s519
      %p526 = scmp.eq.s32.totalorder %s58, 1
      %p527 = por %p525, %p526
      %p528 = scmp.ne.s32.totalorder %s519, %s520
      %p529 = scmp.eq.s32.totalorder %s58, 0
      %p530 = por %p528, %p529
      %p531 = scmp.ne.s32.totalorder %s519, %s520
      %p532 = scmp.eq.s32.totalorder %s59, 1
      %p533 = por %p531, %p532
      %p535 = scmp.ne.s32.totalorder %s520, %s534
      %p536 = scmp.eq.s32.totalorder %s59, 0
      %p537 = por %p535, %p536
      %s539 = sadd.s32 %s538, 1
      %p542 = scmp.eq.s32.totalorder %s53, 1
      %p543 = scmp.ne.s32.totalorder %s538, %s540
      %p544 = scmp.eq.s32.totalorder %s53, 0
      %p545 = por %p543, %p544
      %p546 = scmp.ne.s32.totalorder %s538, %s540
      %p547 = scmp.eq.s32.totalorder %s58, 1
      %p548 = por %p546, %p547
      %p549 = scmp.ne.s32.totalorder %s540, %s541
      %p550 = scmp.eq.s32.totalorder %s58, 0
      %p551 = por %p549, %p550
      %p552 = scmp.ne.s32.totalorder %s540, %s541
      %p553 = scmp.eq.s32.totalorder %s59, 1
      %p554 = por %p552, %p553
      %p556 = scmp.ne.s32.totalorder %s541, %s555
      %p557 = scmp.eq.s32.totalorder %s59, 0
      %p558 = por %p556, %p557
      %s559 = ssub.s32 %s53, %s60
      %p560 = scmp.eq.s32.totalorder %s559, 0
      %s562 = sadd.s32 %s561, 1
      %s563 = scalar_select %p560, %s561, %s562
      %p566 = pneg %p560
      %p567 = scmp.eq.s32.totalorder %s53, 1
      %p568 = por %p566, %p567
      %p569 = scmp.ne.s32.totalorder %s561, %s564
      %p570 = scmp.eq.s32.totalorder %s53, 0
      %p571 = por %p569, %p570
      %p572 = scmp.ne.s32.totalorder %s561, %s564
      %p573 = scmp.eq.s32.totalorder %s58, 1
      %p574 = por %p572, %p573
      %p575 = scmp.ne.s32.totalorder %s564, %s565
      %p576 = scmp.eq.s32.totalorder %s58, 0
      %p577 = por %p575, %p576
      %p578 = scmp.ne.s32.totalorder %s564, %s565
      %p579 = scmp.eq.s32.totalorder %s59, 1
      %p580 = por %p578, %p579
      %p582 = scmp.ne.s32.totalorder %s565, %s581
      %p583 = scmp.eq.s32.totalorder %s59, 0
      %p584 = por %p582, %p583
      %p585 = scmp.le.s32.totalorder 1, %s53
      %p586 = scmp.lt.s32.totalorder %s53, 3
      %p587 = pnand %p585, %p586
      %p588 = pneg %p587
      // Predicated region
      $region9: #{knowformer_layer_forward.1} parent=5 // pred_check
        _
      $region10: #{knowformer_layer_forward.1} parent=5 // pred_check_branch
        %590 = sbr.rel (%p587) target = $region12
      $region11: #{knowformer_layer_forward.1} parent=5 // pred_region
        %s591 = ssub.s32 %s53, 1
        // Predicated region
        $region13: #{knowformer_layer_forward.1} parent=11 // pred_check
          %p592 = pneg %p74
        $region14: #{knowformer_layer_forward.1} parent=11 // pred_check_branch
          %594 = sbr.rel (%p592) target = $region16
        $region15: #{knowformer_layer_forward.1} parent=11 // pred_region
          _
        $region16: #{knowformer_layer_forward.1} parent=11 // pred_fallthru
          _
        // Predicated region
        $region17: #{knowformer_layer_forward.1} parent=11 // pred_check
          %p595 = pneg %p173
        $region18: #{knowformer_layer_forward.1} parent=11 // pred_check_branch
          %597 = sbr.rel (%p595) target = $region20
        $region19: #{knowformer_layer_forward.1} parent=11 // pred_region
          %s599 = ssub.s32 384, 384
          %600 = vsyncadd [#allocation6], %s599
          %s601 = sshll.u32 [#allocation5], 4
          %s602 = int_to_ptr.vmem [resolvable:$true] %s601
          %607 = dma.hbm_to_vmem [thread:$0]  %s6, 384, %s602, [#allocation6], 128, 128, 8
        $region20: #{knowformer_layer_forward.1} parent=11 // pred_fallthru
          _
        // Predicated region
        $region21: #{knowformer_layer_forward.1} parent=11 // pred_check
          %p608 = pneg %p194
        $region22: #{knowformer_layer_forward.1} parent=11 // pred_check_branch
          %610 = sbr.rel (%p608) target = $region24
        $region23: #{knowformer_layer_forward.1} parent=11 // pred_region
          %s612 = ssub.s32 512, 512
          %613 = vsyncadd [#allocation9], %s612
          %s614 = sshll.u32 [#allocation8], 4
          %s615 = int_to_ptr.vmem [resolvable:$true] %s614
          %620 = dma.hbm_to_vmem [thread:$0]  %s7, 512, %s615, [#allocation9], 128, 128, 8
        $region24: #{knowformer_layer_forward.1} parent=11 // pred_fallthru
          _
        // Predicated region
        $region25: #{knowformer_layer_forward.1} parent=11 // pred_check
          %p621 = pneg %p215
        $region26: #{knowformer_layer_forward.1} parent=11 // pred_check_branch
          %623 = sbr.rel (%p621) target = $region28
        $region27: #{knowformer_layer_forward.1} parent=11 // pred_region
          _
        $region28: #{knowformer_layer_forward.1} parent=11 // pred_fallthru
          _
        // Predicated region
        $region29: #{knowformer_layer_forward.1} parent=11 // pred_check
          %p624 = pneg %p236
        $region30: #{knowformer_layer_forward.1} parent=11 // pred_check_branch
          %626 = sbr.rel (%p624) target = $region32
        $region31: #{knowformer_layer_forward.1} parent=11 // pred_region
          _
        $region32: #{knowformer_layer_forward.1} parent=11 // pred_fallthru
          _
        // Predicated region
        $region33: #{knowformer_layer_forward.1} parent=11 // pred_check
          %p627 = pneg %p257
        $region34: #{knowformer_layer_forward.1} parent=11 // pred_check_branch
          %629 = sbr.rel (%p627) target = $region36
        $region35: #{knowformer_layer_forward.1} parent=11 // pred_region
          %s631 = ssub.s32 16, 16
          %632 = vsyncadd [#allocation9], %s631
          %s634 = sshll.u32 [#allocation10], 4
          %s635 = int_to_ptr.vmem [resolvable:$true] %s634
          %637 = dma.hbm_to_vmem [thread:$0]  %s10, 16, %s635, [#allocation9]
        $region36: #{knowformer_layer_forward.1} parent=11 // pred_fallthru
          _
        // Predicated region
        $region37: #{knowformer_layer_forward.1} parent=11 // pred_check
          %p638 = pneg %p278
        $region38: #{knowformer_layer_forward.1} parent=11 // pred_check_branch
          %640 = sbr.rel (%p638) target = $region40
        $region39: #{knowformer_layer_forward.1} parent=11 // pred_region
          %s642 = ssub.s32 512, 512
          %643 = vsyncadd [#allocation12], %s642
          %s644 = sshll.u32 [#allocation11], 4
          %s645 = int_to_ptr.vmem [resolvable:$true] %s644
          %650 = dma.hbm_to_vmem [thread:$0]  %s11, 512, %s645, [#allocation12], 128, 128, 8
        $region40: #{knowformer_layer_forward.1} parent=11 // pred_fallthru
          _
        // Predicated region
        $region41: #{knowformer_layer_forward.1} parent=11 // pred_check
          %p651 = pneg %p299
        $region42: #{knowformer_layer_forward.1} parent=11 // pred_check_branch
          %653 = sbr.rel (%p651) target = $region44
        $region43: #{knowformer_layer_forward.1} parent=11 // pred_region
          %s655 = ssub.s32 512, 512
          %656 = vsyncadd [#allocation12], %s655
          %s657 = sshll.u32 [#allocation13], 4
          %s658 = int_to_ptr.vmem [resolvable:$true] %s657
          %663 = dma.hbm_to_vmem [thread:$0]  %s12, 512, %s658, [#allocation12], 128, 128, 8
        $region44: #{knowformer_layer_forward.1} parent=11 // pred_fallthru
          _
        // Predicated region
        $region45: #{knowformer_layer_forward.1} parent=11 // pred_check
          %p664 = pneg %p320
        $region46: #{knowformer_layer_forward.1} parent=11 // pred_check_branch
          %666 = sbr.rel (%p664) target = $region48
        $region47: #{knowformer_layer_forward.1} parent=11 // pred_region
          %s668 = ssub.s32 512, 512
          %669 = vsyncadd [#allocation15], %s668
          %s670 = sshll.u32 [#allocation14], 4
          %s671 = int_to_ptr.vmem [resolvable:$true] %s670
          %676 = dma.hbm_to_vmem [thread:$0]  %s13, 512, %s671, [#allocation15], 128, 128, 8
        $region48: #{knowformer_layer_forward.1} parent=11 // pred_fallthru
          _
        // Predicated region
        $region49: #{knowformer_layer_forward.1} parent=11 // pred_check
          %p677 = pneg %p341
        $region50: #{knowformer_layer_forward.1} parent=11 // pred_check_branch
          %679 = sbr.rel (%p677) target = $region52
        $region51: #{knowformer_layer_forward.1} parent=11 // pred_region
          %s681 = ssub.s32 512, 512
          %682 = vsyncadd [#allocation15], %s681
          %s683 = sshll.u32 [#allocation16], 4
          %s684 = int_to_ptr.vmem [resolvable:$true] %s683
          %689 = dma.hbm_to_vmem [thread:$0]  %s14, 512, %s684, [#allocation15], 128, 128, 8
        $region52: #{knowformer_layer_forward.1} parent=11 // pred_fallthru
          _
        // Predicated region
        $region53: #{knowformer_layer_forward.1} parent=11 // pred_check
          %p690 = pneg %p362
        $region54: #{knowformer_layer_forward.1} parent=11 // pred_check_branch
          %692 = sbr.rel (%p690) target = $region56
        $region55: #{knowformer_layer_forward.1} parent=11 // pred_region
          %s694 = ssub.s32 512, 512
          %695 = vsyncadd [#allocation18], %s694
          %s696 = sshll.u32 [#allocation17], 4
          %s697 = int_to_ptr.vmem [resolvable:$true] %s696
          %702 = dma.hbm_to_vmem [thread:$0]  %s15, 512, %s697, [#allocation18], 128, 128, 8
        $region56: #{knowformer_layer_forward.1} parent=11 // pred_fallthru
          _
        // Predicated region
        $region57: #{knowformer_layer_forward.1} parent=11 // pred_check
          %p703 = pneg %p383
        $region58: #{knowformer_layer_forward.1} parent=11 // pred_check_branch
          %705 = sbr.rel (%p703) target = $region60
        $region59: #{knowformer_layer_forward.1} parent=11 // pred_region
          %s707 = ssub.s32 512, 512
          %708 = vsyncadd [#allocation18], %s707
          %s709 = sshll.u32 [#allocation19], 4
          %s710 = int_to_ptr.vmem [resolvable:$true] %s709
          %715 = dma.hbm_to_vmem [thread:$0]  %s16, 512, %s710, [#allocation18], 128, 128, 8
        $region60: #{knowformer_layer_forward.1} parent=11 // pred_fallthru
          _
        // Predicated region
        $region61: #{knowformer_layer_forward.1} parent=11 // pred_check
          %p716 = pneg %p404
        $region62: #{knowformer_layer_forward.1} parent=11 // pred_check_branch
          %718 = sbr.rel (%p716) target = $region64
        $region63: #{knowformer_layer_forward.1} parent=11 // pred_region
          %s720 = ssub.s32 512, 512
          %721 = vsyncadd [#allocation21], %s720
          %s722 = sshll.u32 [#allocation20], 4
          %s723 = int_to_ptr.vmem [resolvable:$true] %s722
          %728 = dma.hbm_to_vmem [thread:$0]  %s17, 512, %s723, [#allocation21], 128, 128, 8
        $region64: #{knowformer_layer_forward.1} parent=11 // pred_fallthru
          _
        // Predicated region
        $region65: #{knowformer_layer_forward.1} parent=11 // pred_check
          %p729 = pneg %p425
        $region66: #{knowformer_layer_forward.1} parent=11 // pred_check_branch
          %731 = sbr.rel (%p729) target = $region68
        $region67: #{knowformer_layer_forward.1} parent=11 // pred_region
          %s733 = ssub.s32 16, 16
          %734 = vsyncadd [#allocation21], %s733
          %s736 = sshll.u32 [#allocation22], 4
          %s737 = int_to_ptr.vmem [resolvable:$true] %s736
          %739 = dma.hbm_to_vmem [thread:$0]  %s18, 16, %s737, [#allocation21]
        $region68: #{knowformer_layer_forward.1} parent=11 // pred_fallthru
          _
        // Predicated region
        $region69: #{knowformer_layer_forward.1} parent=11 // pred_check
          %p740 = pneg %p446
        $region70: #{knowformer_layer_forward.1} parent=11 // pred_check_branch
          %742 = sbr.rel (%p740) target = $region72
        $region71: #{knowformer_layer_forward.1} parent=11 // pred_region
          %s744 = ssub.s32 512, 512
          %745 = vsyncadd [#allocation24], %s744
          %s746 = sshll.u32 [#allocation23], 4
          %s747 = int_to_ptr.vmem [resolvable:$true] %s746
          %752 = dma.hbm_to_vmem [thread:$0]  %s19, 512, %s747, [#allocation24], 128, 128, 8
        $region72: #{knowformer_layer_forward.1} parent=11 // pred_fallthru
          _
        // Predicated region
        $region73: #{knowformer_layer_forward.1} parent=11 // pred_check
          %p753 = pneg %p467
        $region74: #{knowformer_layer_forward.1} parent=11 // pred_check_branch
          %755 = sbr.rel (%p753) target = $region76
        $region75: #{knowformer_layer_forward.1} parent=11 // pred_region
          %s757 = ssub.s32 512, 512
          %758 = vsyncadd [#allocation24], %s757
          %s759 = sshll.u32 [#allocation25], 4
          %s760 = int_to_ptr.vmem [resolvable:$true] %s759
          %765 = dma.hbm_to_vmem [thread:$0]  %s20, 512, %s760, [#allocation24], 128, 128, 8
        $region76: #{knowformer_layer_forward.1} parent=11 // pred_fallthru
          _
        // Predicated region
        $region77: #{knowformer_layer_forward.1} parent=11 // pred_check
          %p766 = pneg %p488
        $region78: #{knowformer_layer_forward.1} parent=11 // pred_check_branch
          %768 = sbr.rel (%p766) target = $region80
        $region79: #{knowformer_layer_forward.1} parent=11 // pred_region
          %s770 = ssub.s32 512, 512
          %771 = vsyncadd [#allocation27], %s770
          %s772 = sshll.u32 [#allocation26], 4
          %s773 = int_to_ptr.vmem [resolvable:$true] %s772
          %778 = dma.hbm_to_vmem [thread:$0]  %s21, 512, %s773, [#allocation27], 128, 128, 8
        $region80: #{knowformer_layer_forward.1} parent=11 // pred_fallthru
          _
        // Predicated region
        $region81: #{knowformer_layer_forward.1} parent=11 // pred_check
          %p779 = pneg %p509
        $region82: #{knowformer_layer_forward.1} parent=11 // pred_check_branch
          %781 = sbr.rel (%p779) target = $region84
        $region83: #{knowformer_layer_forward.1} parent=11 // pred_region
          %s783 = ssub.s32 16, 16
          %784 = vsyncadd [#allocation27], %s783
          %s786 = sshll.u32 [#allocation28], 4
          %s787 = int_to_ptr.vmem [resolvable:$true] %s786
          %789 = dma.hbm_to_vmem [thread:$0]  %s22, 16, %s787, [#allocation27]
        $region84: #{knowformer_layer_forward.1} parent=11 // pred_fallthru
          _
        // Predicated region
        $region85: #{knowformer_layer_forward.1} parent=11 // pred_check
          %p790 = pneg %p530
        $region86: #{knowformer_layer_forward.1} parent=11 // pred_check_branch
          %792 = sbr.rel (%p790) target = $region88
        $region87: #{knowformer_layer_forward.1} parent=11 // pred_region
          %s794 = ssub.s32 512, 512
          %795 = vsyncadd [#allocation30], %s794
          %s796 = sshll.u32 [#allocation29], 4
          %s797 = int_to_ptr.vmem [resolvable:$true] %s796
          %802 = dma.hbm_to_vmem [thread:$0]  %s23, 512, %s797, [#allocation30], 128, 128, 8
        $region88: #{knowformer_layer_forward.1} parent=11 // pred_fallthru
          _
        // Predicated region
        $region89: #{knowformer_layer_forward.1} parent=11 // pred_check
          %p803 = pneg %p551
        $region90: #{knowformer_layer_forward.1} parent=11 // pred_check_branch
          %805 = sbr.rel (%p803) target = $region92
        $region91: #{knowformer_layer_forward.1} parent=11 // pred_region
          %s807 = ssub.s32 512, 512
          %808 = vsyncadd [#allocation30], %s807
          %s809 = sshll.u32 [#allocation31], 4
          %s810 = int_to_ptr.vmem [resolvable:$true] %s809
          %815 = dma.hbm_to_vmem [thread:$0]  %s24, 512, %s810, [#allocation30], 128, 128, 8
        $region92: #{knowformer_layer_forward.1} parent=11 // pred_fallthru
          _
      $region12: #{knowformer_layer_forward.1} parent=5 // pred_fallthru
        _
      %p816 = scmp.lt.s32.totalorder %s53, 2
      // Predicated region
      $region93: #{knowformer_layer_forward.1} parent=5 // pred_check
        %p817 = pneg %p816
      $region94: #{knowformer_layer_forward.1} parent=5 // pred_check_branch
        %819 = sbr.rel (%p817) target = $region96
      $region95: #{knowformer_layer_forward.1} parent=5 // pred_region
        // Predicated region
        $region97: #{knowformer_layer_forward.1} parent=95 // pred_check
          %p820 = pneg %p94
        $region98: #{knowformer_layer_forward.1} parent=95 // pred_check_branch
          %822 = sbr.rel (%p820) target = $region100
        $region99: #{knowformer_layer_forward.1} parent=95 // pred_region
          %p823 = scmp.lt.s32.totalorder %s53, 1
          %s824 = scalar_select %p823, %s53, 1
          %s825 = smul.addr %s824, 2
          %s826 = smul.addr %s825, 8
          %s827 = scalar_lea.vmem %s3, %s826
        $region100: #{knowformer_layer_forward.1} parent=95 // pred_fallthru
          _
        // Predicated region
        $region101: #{knowformer_layer_forward.1} parent=95 // pred_check
          %p828 = pneg %p120
        $region102: #{knowformer_layer_forward.1} parent=95 // pred_check_branch
          %830 = sbr.rel (%p828) target = $region104
        $region103: #{knowformer_layer_forward.1} parent=95 // pred_region
          %p831 = scmp.lt.s32.totalorder %s53, 1
          %s832 = scalar_select %p831, %s53, 1
          %s833 = scalar_lea.vmem %s4, %s832
        $region104: #{knowformer_layer_forward.1} parent=95 // pred_fallthru
          _
        // Predicated region
        $region105: #{knowformer_layer_forward.1} parent=95 // pred_check
          %p834 = pneg %p146
        $region106: #{knowformer_layer_forward.1} parent=95 // pred_check_branch
          %836 = sbr.rel (%p834) target = $region108
        $region107: #{knowformer_layer_forward.1} parent=95 // pred_region
          %p837 = scmp.lt.s32.totalorder %s53, 1
          %s838 = scalar_select %p837, %s53, 1
          %s839 = smul.addr %s838, 2
          %s840 = smul.addr %s839, 8
          %s841 = scalar_lea.vmem %s5, %s840
        $region108: #{knowformer_layer_forward.1} parent=95 // pred_fallthru
          _
      $region96: #{knowformer_layer_forward.1} parent=5 // pred_fallthru
        _
      %p842 = scmp.le.s32.totalorder 1, %s53
      %p843 = scmp.lt.s32.totalorder %s53, 3
      %p844 = pnand %p842, %p843
      %p845 = pneg %p844
      // Predicated region
      $region109: #{knowformer_layer_forward.1} parent=5 // pred_check
        _
      $region110: #{knowformer_layer_forward.1} parent=5 // pred_check_branch
        %847 = sbr.rel (%p844) target = $region112
      $region111: #{knowformer_layer_forward.1} parent=5 // pred_region
        %s848 = ssub.s32 %s53, 1
        // Predicated region
        $region113: #{knowformer_layer_forward.1} parent=111 // pred_check
          %p849 = pneg %p173
        $region114: #{knowformer_layer_forward.1} parent=111 // pred_check_branch
          %851 = sbr.rel (%p849) target = $region116
        $region115: #{knowformer_layer_forward.1} parent=111 // pred_region
          %852 = dma.done [#allocation6], 384
        $region116: #{knowformer_layer_forward.1} parent=111 // pred_fallthru
          _
        // Predicated region
        $region117: #{knowformer_layer_forward.1} parent=111 // pred_check
          %p853 = pneg %p194
        $region118: #{knowformer_layer_forward.1} parent=111 // pred_check_branch
          %855 = sbr.rel (%p853) target = $region120
        $region119: #{knowformer_layer_forward.1} parent=111 // pred_region
          %856 = dma.done [#allocation9], 512
        $region120: #{knowformer_layer_forward.1} parent=111 // pred_fallthru
          _
        // Predicated region
        $region121: #{knowformer_layer_forward.1} parent=111 // pred_check
          %p857 = pneg %p257
        $region122: #{knowformer_layer_forward.1} parent=111 // pred_check_branch
          %859 = sbr.rel (%p857) target = $region124
        $region123: #{knowformer_layer_forward.1} parent=111 // pred_region
          %860 = dma.done [#allocation9], 16
        $region124: #{knowformer_layer_forward.1} parent=111 // pred_fallthru
          _
        // Predicated region
        $region125: #{knowformer_layer_forward.1} parent=111 // pred_check
          %p861 = pneg %p278
        $region126: #{knowformer_layer_forward.1} parent=111 // pred_check_branch
          %863 = sbr.rel (%p861) target = $region128
        $region127: #{knowformer_layer_forward.1} parent=111 // pred_region
          %864 = dma.done [#allocation12], 512
        $region128: #{knowformer_layer_forward.1} parent=111 // pred_fallthru
          _
        // Predicated region
        $region129: #{knowformer_layer_forward.1} parent=111 // pred_check
          %p865 = pneg %p299
        $region130: #{knowformer_layer_forward.1} parent=111 // pred_check_branch
          %867 = sbr.rel (%p865) target = $region132
        $region131: #{knowformer_layer_forward.1} parent=111 // pred_region
          %868 = dma.done [#allocation12], 512
        $region132: #{knowformer_layer_forward.1} parent=111 // pred_fallthru
          _
        // Predicated region
        $region133: #{knowformer_layer_forward.1} parent=111 // pred_check
          %p869 = pneg %p320
        $region134: #{knowformer_layer_forward.1} parent=111 // pred_check_branch
          %871 = sbr.rel (%p869) target = $region136
        $region135: #{knowformer_layer_forward.1} parent=111 // pred_region
          %872 = dma.done [#allocation15], 512
        $region136: #{knowformer_layer_forward.1} parent=111 // pred_fallthru
          _
        // Predicated region
        $region137: #{knowformer_layer_forward.1} parent=111 // pred_check
          %p873 = pneg %p341
        $region138: #{knowformer_layer_forward.1} parent=111 // pred_check_branch
          %875 = sbr.rel (%p873) target = $region140
        $region139: #{knowformer_layer_forward.1} parent=111 // pred_region
          %876 = dma.done [#allocation15], 512
        $region140: #{knowformer_layer_forward.1} parent=111 // pred_fallthru
          _
        // Predicated region
        $region141: #{knowformer_layer_forward.1} parent=111 // pred_check
          %p877 = pneg %p362
        $region142: #{knowformer_layer_forward.1} parent=111 // pred_check_branch
          %879 = sbr.rel (%p877) target = $region144
        $region143: #{knowformer_layer_forward.1} parent=111 // pred_region
          %880 = dma.done [#allocation18], 512
        $region144: #{knowformer_layer_forward.1} parent=111 // pred_fallthru
          _
        // Predicated region
        $region145: #{knowformer_layer_forward.1} parent=111 // pred_check
          %p881 = pneg %p383
        $region146: #{knowformer_layer_forward.1} parent=111 // pred_check_branch
          %883 = sbr.rel (%p881) target = $region148
        $region147: #{knowformer_layer_forward.1} parent=111 // pred_region
          %884 = dma.done [#allocation18], 512
        $region148: #{knowformer_layer_forward.1} parent=111 // pred_fallthru
          _
        // Predicated region
        $region149: #{knowformer_layer_forward.1} parent=111 // pred_check
          %p885 = pneg %p404
        $region150: #{knowformer_layer_forward.1} parent=111 // pred_check_branch
          %887 = sbr.rel (%p885) target = $region152
        $region151: #{knowformer_layer_forward.1} parent=111 // pred_region
          %888 = dma.done [#allocation21], 512
        $region152: #{knowformer_layer_forward.1} parent=111 // pred_fallthru
          _
        // Predicated region
        $region153: #{knowformer_layer_forward.1} parent=111 // pred_check
          %p889 = pneg %p425
        $region154: #{knowformer_layer_forward.1} parent=111 // pred_check_branch
          %891 = sbr.rel (%p889) target = $region156
        $region155: #{knowformer_layer_forward.1} parent=111 // pred_region
          %892 = dma.done [#allocation21], 16
        $region156: #{knowformer_layer_forward.1} parent=111 // pred_fallthru
          _
        // Predicated region
        $region157: #{knowformer_layer_forward.1} parent=111 // pred_check
          %p893 = pneg %p446
        $region158: #{knowformer_layer_forward.1} parent=111 // pred_check_branch
          %895 = sbr.rel (%p893) target = $region160
        $region159: #{knowformer_layer_forward.1} parent=111 // pred_region
          %896 = dma.done [#allocation24], 512
        $region160: #{knowformer_layer_forward.1} parent=111 // pred_fallthru
          _
        // Predicated region
        $region161: #{knowformer_layer_forward.1} parent=111 // pred_check
          %p897 = pneg %p467
        $region162: #{knowformer_layer_forward.1} parent=111 // pred_check_branch
          %899 = sbr.rel (%p897) target = $region164
        $region163: #{knowformer_layer_forward.1} parent=111 // pred_region
          %900 = dma.done [#allocation24], 512
        $region164: #{knowformer_layer_forward.1} parent=111 // pred_fallthru
          _
        // Predicated region
        $region165: #{knowformer_layer_forward.1} parent=111 // pred_check
          %p901 = pneg %p488
        $region166: #{knowformer_layer_forward.1} parent=111 // pred_check_branch
          %903 = sbr.rel (%p901) target = $region168
        $region167: #{knowformer_layer_forward.1} parent=111 // pred_region
          %904 = dma.done [#allocation27], 512
        $region168: #{knowformer_layer_forward.1} parent=111 // pred_fallthru
          _
        // Predicated region
        $region169: #{knowformer_layer_forward.1} parent=111 // pred_check
          %p905 = pneg %p509
        $region170: #{knowformer_layer_forward.1} parent=111 // pred_check_branch
          %907 = sbr.rel (%p905) target = $region172
        $region171: #{knowformer_layer_forward.1} parent=111 // pred_region
          %908 = dma.done [#allocation27], 16
        $region172: #{knowformer_layer_forward.1} parent=111 // pred_fallthru
          _
        // Predicated region
        $region173: #{knowformer_layer_forward.1} parent=111 // pred_check
          %p909 = pneg %p530
        $region174: #{knowformer_layer_forward.1} parent=111 // pred_check_branch
          %911 = sbr.rel (%p909) target = $region176
        $region175: #{knowformer_layer_forward.1} parent=111 // pred_region
          %912 = dma.done [#allocation30], 512
        $region176: #{knowformer_layer_forward.1} parent=111 // pred_fallthru
          _
        // Predicated region
        $region177: #{knowformer_layer_forward.1} parent=111 // pred_check
          %p913 = pneg %p551
        $region178: #{knowformer_layer_forward.1} parent=111 // pred_check_branch
          %915 = sbr.rel (%p913) target = $region180
        $region179: #{knowformer_layer_forward.1} parent=111 // pred_region
          %916 = dma.done [#allocation30], 512
        $region180: #{knowformer_layer_forward.1} parent=111 // pred_fallthru
          _
        %p917 = pneg %p74
        %p918 = pneg %p71
        %p919 = scmp.lt.s32.totalorder %s58, 1
        %s920 = scalar_select %p919, %s58, 1
        %s921 = smul.addr %s920, 2
        %s922 = smul.addr %s921, 8
        %s923 = scalar_lea.vmem %s3, %s922
        %p924 = pneg %p100
        %p925 = pneg %p97
        %p926 = scmp.lt.s32.totalorder %s58, 1
        %s927 = scalar_select %p926, %s58, 1
        %s928 = scalar_lea.vmem %s4, %s927
        %p929 = pneg %p126
        %p930 = pneg %p123
        %p931 = scmp.lt.s32.totalorder %s58, 1
        %s932 = scalar_select %p931, %s58, 1
        %s933 = smul.addr %s932, 2
        %s934 = smul.addr %s933, 8
        %s935 = scalar_lea.vmem %s5, %s934
        %p936 = pneg %p152
        %p937 = pneg %p149
        %p938 = pneg %p173
        %p939 = pneg %p170
        %p940 = pneg %p194
        %p941 = pneg %p191
        %p942 = pneg %p215
        %p943 = pneg %p212
        %p944 = pneg %p236
        %p945 = pneg %p233
        %p946 = pneg %p257
        %p947 = pneg %p254
        %p948 = pneg %p278
        %p949 = pneg %p275
        %p950 = pneg %p299
        %p951 = pneg %p296
        %p952 = pneg %p320
        %p953 = pneg %p317
        %p954 = pneg %p341
        %p955 = pneg %p338
        %p956 = pneg %p362
        %p957 = pneg %p359
        %p958 = pneg %p383
        %p959 = pneg %p380
        %p960 = pneg %p404
        %p961 = pneg %p401
        %p962 = pneg %p425
        %p963 = pneg %p422
        %p964 = pneg %p446
        %p965 = pneg %p443
        %p966 = pneg %p467
        %p967 = pneg %p464
        %p968 = pneg %p488
        %p969 = pneg %p485
        %p970 = pneg %p509
        %p971 = pneg %p506
        %p972 = pneg %p530
        %p973 = pneg %p527
        %p974 = pneg %p551
        %p975 = pneg %p548
        %p976 = pneg %p577
        %p977 = pneg %p574
        %s978 = sand.u32 %s564, 1
        %s979 = scalar_lea.sflag [#allocation7], %s978
        %s980 = sand.u32 %s564, 1
        %s981 = smul.addr %s980, 16
        %s982 = scalar_lea.vmem [#allocation32], %s981
        %p983 = scmp.lt.s32.totalorder %s58, 1
        %s984 = scalar_select %p983, %s58, 1
        %s985 = smul.addr %s984, 2
        %s986 = smul.addr %s985, 8
        %s987 = scalar_lea.vmem %s3, %s986
        %p988 = scmp.lt.s32.totalorder %s58, 1
        %s989 = scalar_select %p988, %s58, 1
        %s990 = scalar_lea.vmem %s4, %s989
        %p991 = scmp.lt.s32.totalorder %s58, 1
        %s992 = scalar_select %p991, %s58, 1
        %s993 = smul.addr %s992, 2
        %s994 = smul.addr %s993, 8
        %s995 = scalar_lea.vmem %s5, %s994
        %s996 = sld [smem:[#allocation3 + %s58]]
        %s997 = sld [smem:[#allocation4 + %s58]]
        %p998 = scmp.eq.s32.totalorder %s997, 2
        %p999 = scmp.eq.s32.totalorder %s997, 3
        %p1000 = por %p998, %p999
        %s1001 = scalar_select %p1000, 0.333, 1.0
        %v1002 = vld [vmem:[%s2] sm:$0xff]
        %v1003 = vld [vmem:[%s2 + $0x8] sm:$0xff]
        %v1004 = vld [vmem:[%s2 + $0x10] sm:$0xff]
        %v1005 = vld [vmem:[%s2 + $0x18] sm:$0xff]
        %v1006 = vld [vmem:[%s2 + $0x20] sm:$0xff]
        %v1007 = vld [vmem:[%s2 + $0x28] sm:$0xff]
        %v1008 = vld [vmem:[%s2 + $0x30] sm:$0xff]
        %v1009 = vld [vmem:[%s2 + $0x38] sm:$0xff]
        %v1010 = vld [vmem:[%s987] sm:$0xff]
        %v1011 = vld [vmem:[%s987 + $0x8] sm:$0xff]
        %v1012 = vld [vmem:[%s990] sm:$0x1]
        %v1013 = vld [vmem:[%s995] sm:$0xff]
        %v1014 = vld [vmem:[%s995 + $0x8] sm:$0xff]
        %v1015 = vld [vmem:[#allocation5] sm:$0xff]
        %v1016 = vld [vmem:[#allocation5 + $0x8] sm:$0xff]
        %v1017 = vld [vmem:[#allocation5 + $0x10] sm:$0x3f]
        %v1018 = vld [vmem:[#allocation8] sm:$0xff]
        %v1019 = vld [vmem:[#allocation8 + $0x8] sm:$0xff]
        %v1020 = vld [vmem:[#allocation8 + $0x10] sm:$0xff]
        %v1021 = vld [vmem:[#allocation8 + $0x18] sm:$0xff]
        %v1022 = vld [vmem:[%s8] sm:$0xff]
        %v1023 = vld [vmem:[%s8 + $0x8] sm:$0xff]
        %v1024 = vld [vmem:[%s8 + $0x10] sm:$0xff]
        %v1025 = vld [vmem:[%s8 + $0x18] sm:$0xff]
        %v1026 = vld [vmem:[%s8 + $0x20] sm:$0xff]
        %v1027 = vld [vmem:[%s8 + $0x28] sm:$0xff]
        %v1028 = vld [vmem:[%s8 + $0x30] sm:$0xff]
        %v1029 = vld [vmem:[%s8 + $0x38] sm:$0xff]
        %v1030 = vld [vmem:[%s9] sm:$0xff]
        %v1031 = vld [vmem:[%s9 + $0x8] sm:$0xff]
        %v1032 = vld [vmem:[%s9 + $0x10] sm:$0xff]
        %v1033 = vld [vmem:[%s9 + $0x18] sm:$0xff]
        %v1034 = vld [vmem:[#allocation10] sm:$0x1]
        %vm1035 = vcmask 261120
        %v1037 = vsel %vm1035, %v1012, 0
        %1039 = vmatprep.subr.mxu0 0.0
        %1040 = vmatpush1.msra.mxu0 0.0
        %1041 = vmatprep.subr.mxu0 0.0
        %1042 = vmatpush1.msra.mxu0 0.0
        %1043 = vmatprep.subr.mxu0 0.0
        %1044 = vmatpush1.msra.mxu0 0.0
        %1045 = vmatprep.subr.mxu0 0.0
        %1046 = vmatpush1.msra.mxu0 0.0
        %1047 = vmatprep.subr.mxu0 0.0
        %1048 = vmatpush1.msra.mxu0 0.0
        %1049 = vmatprep.subr.mxu0 0.0
        %1050 = vmatpush1.msra.mxu0 0.0
        %1051 = vmatprep.subr.mxu0 0.0
        %1052 = vmatpush1.msra.mxu0 0.0
        %1053 = vmatprep.subr.mxu0 0.0
        %1054 = vmatpush1.msra.mxu0 0.0
        %1055 = vmatprep.subr.mxu0 0.0
        %1056 = vmatpush1.msra.mxu0 0.0
        %1057 = vmatprep.subr.mxu0 0.0
        %1058 = vmatpush1.msra.mxu0 0.0
        %1059 = vmatprep.subr.mxu0 0.0
        %1060 = vmatpush1.msra.mxu0 0.0
        %1061 = vmatprep.subr.mxu0 0.0
        %1062 = vmatpush1.msra.mxu0 0.0
        %1063 = vmatprep.subr.mxu0 0.0
        %1064 = vmatpush1.msra.mxu0 %v1033
        %1065 = vmatprep.subr.mxu0 0.0
        %1066 = vmatpush1.msra.mxu0 %v1032
        %1067 = vmatprep.subr.mxu0 0.0
        %1068 = vmatpush1.msra.mxu0 %v1031
        %1069 = vmatprep.subr.mxu0 0.0
        %1070 = vmatpush1.msra.mxu0 %v1030
        %1071 = vmatprep.subr.mxu0 0.0
        %1072 = vmatpush2.msra.mxu0 0.0
        %1073 = vmatprep.subr.mxu0 0.0
        %1074 = vmatpush2.msra.mxu0 0.0
        %1075 = vmatprep.subr.mxu0 0.0
        %1076 = vmatpush2.msra.mxu0 0.0
        %1077 = vmatprep.subr.mxu0 0.0
        %1078 = vmatpush2.msra.mxu0 0.0
        %1079 = vmatprep.subr.mxu0 0.0
        %1080 = vmatpush2.msra.mxu0 0.0
        %1081 = vmatprep.subr.mxu0 0.0
        %1082 = vmatpush2.msra.mxu0 0.0
        %1083 = vmatprep.subr.mxu0 0.0
        %1084 = vmatpush2.msra.mxu0 0.0
        %1085 = vmatprep.subr.mxu0 0.0
        %1086 = vmatpush2.msra.mxu0 0.0
        %1087 = vmatprep.subr.mxu0 0.0
        %1088 = vmatpush2.msra.mxu0 0.0
        %1089 = vmatprep.subr.mxu0 0.0
        %1090 = vmatpush2.msra.mxu0 0.0
        %1091 = vmatprep.subr.mxu0 0.0
        %1092 = vmatpush2.msra.mxu0 0.0
        %1093 = vmatprep.subr.mxu0 0.0
        %1094 = vmatpush2.msra.mxu0 0.0
        %1095 = vmatprep.subr.mxu0 0.0
        %1096 = vmatpush2.msra.mxu0 0.0
        %1097 = vmatprep.subr.mxu0 0.0
        %1098 = vmatpush2.msra.mxu0 0.0
        %1099 = vmatprep.subr.mxu0 0.0
        %1100 = vmatpush2.msra.mxu0 0.0
        %1101 = vmatprep.subr.mxu0 0.0
        %1102 = vmatpush2.msra.mxu0 0.0
        %1103 = vmatprep.mubr.f32.mxu0 0.0
        %1104 = vmatmul.mubr.f32.gmra.mxu0 %v1037
        %v1105 = vpop.f32.mrf.mxu0
        %v1106 = vadd.f32 %v1034, %v1105
        %v1107 = vpop.f32.mrf.mxu0
        %1108 = vdwg.mxu0
        %v1109 = vld [vmem:[#allocation11] sm:$0xff]
        %v1110 = vld [vmem:[#allocation11 + $0x8] sm:$0xff]
        %v1111 = vld [vmem:[#allocation11 + $0x10] sm:$0xff]
        %v1112 = vld [vmem:[#allocation11 + $0x18] sm:$0xff]
        %1114 = vset.pattern.permute.xlu0 0
        %1115 = vperm.xlu0 %1114, %v1013
        %v1116 = vpop.permute.xlu0 %1115
        %1119 = vset.pattern.permute.xlu0 0
        %1120 = vperm.xlu0 %1119, %v1014
        %v1121 = vpop.permute.xlu0 %1120
        %v1123 = vlaneseq
        %v1124 = vshrl.u32 %v1123, 7
        %v1125 = vsub.s32 0, %v1124
        %v1126 = vrot.slane %v1015, %v1125
        %v1127 = vmul.f32 %v1116, %v1126
        %v1128 = vmul.f32 %v1121, %v1126
        %v1130 = vsel %vm1035, %v1010, 0
        %v1133 = vsel %vm1035, %v1011, 0
        %1135 = vmatprep.subr.mxu0 0.0
        %1136 = vmatpush1.msra.mxu0 0.0
        %1137 = vmatprep.subr.mxu0 0.0
        %1138 = vmatpush1.msra.mxu0 0.0
        %1139 = vmatprep.subr.mxu0 0.0
        %1140 = vmatpush1.msra.mxu0 0.0
        %1141 = vmatprep.subr.mxu0 0.0
        %1142 = vmatpush1.msra.mxu0 0.0
        %1143 = vmatprep.subr.mxu0 0.0
        %1144 = vmatpush1.msra.mxu0 0.0
        %1145 = vmatprep.subr.mxu0 0.0
        %1146 = vmatpush1.msra.mxu0 0.0
        %1147 = vmatprep.subr.mxu0 0.0
        %1148 = vmatpush1.msra.mxu0 0.0
        %1149 = vmatprep.subr.mxu0 0.0
        %1150 = vmatpush1.msra.mxu0 0.0
        %1151 = vmatprep.subr.mxu0 0.0
        %1152 = vmatpush1.msra.mxu0 0.0
        %1153 = vmatprep.subr.mxu0 0.0
        %1154 = vmatpush1.msra.mxu0 0.0
        %1155 = vmatprep.subr.mxu0 0.0
        %1156 = vmatpush1.msra.mxu0 0.0
        %1157 = vmatprep.subr.mxu0 0.0
        %1158 = vmatpush1.msra.mxu0 0.0
        %1159 = vmatprep.subr.mxu0 0.0
        %1160 = vmatpush1.msra.mxu0 %v1112
        %1161 = vmatprep.subr.mxu0 0.0
        %1162 = vmatpush1.msra.mxu0 %v1111
        %1163 = vmatprep.subr.mxu0 0.0
        %1164 = vmatpush1.msra.mxu0 %v1110
        %1165 = vmatprep.subr.mxu0 0.0
        %1166 = vmatpush1.msra.mxu0 %v1109
        %1167 = vmatprep.subr.mxu0 0.0
        %1168 = vmatpush2.msra.mxu0 0.0
        %1169 = vmatprep.subr.mxu0 0.0
        %1170 = vmatpush2.msra.mxu0 0.0
        %1171 = vmatprep.subr.mxu0 0.0
        %1172 = vmatpush2.msra.mxu0 0.0
        %1173 = vmatprep.subr.mxu0 0.0
        %1174 = vmatpush2.msra.mxu0 0.0
        %1175 = vmatprep.subr.mxu0 0.0
        %1176 = vmatpush2.msra.mxu0 0.0
        %1177 = vmatprep.subr.mxu0 0.0
        %1178 = vmatpush2.msra.mxu0 0.0
        %1179 = vmatprep.subr.mxu0 0.0
        %1180 = vmatpush2.msra.mxu0 0.0
        %1181 = vmatprep.subr.mxu0 0.0
        %1182 = vmatpush2.msra.mxu0 0.0
        %1183 = vmatprep.subr.mxu0 0.0
        %1184 = vmatpush2.msra.mxu0 0.0
        %1185 = vmatprep.subr.mxu0 0.0
        %1186 = vmatpush2.msra.mxu0 0.0
        %1187 = vmatprep.subr.mxu0 0.0
        %1188 = vmatpush2.msra.mxu0 0.0
        %1189 = vmatprep.subr.mxu0 0.0
        %1190 = vmatpush2.msra.mxu0 0.0
        %1191 = vmatprep.subr.mxu0 0.0
        %1192 = vmatpush2.msra.mxu0 0.0
        %1193 = vmatprep.subr.mxu0 0.0
        %1194 = vmatpush2.msra.mxu0 0.0
        %1195 = vmatprep.subr.mxu0 0.0
        %1196 = vmatpush2.msra.mxu0 0.0
        %1197 = vmatprep.subr.mxu0 0.0
        %1198 = vmatpush2.msra.mxu0 0.0
        %1199 = vmatprep.mubr.f32.mxu0 0.0
        %1200 = vmatmul.mubr.f32.gmra.mxu0 %v1130
        %v1201 = vpop.f32.mrf.mxu0
        %v1202 = vadd.f32 %v1127, %v1201
        %v1203 = vpop.f32.mrf.mxu0
        %1204 = vmatprep.mubr.f32.mxu0 0.0
        %1205 = vmatmul.mubr.f32.gmra.mxu0 %v1133
        %v1206 = vpop.f32.mrf.mxu0
        %v1207 = vadd.f32 %v1128, %v1206
        %v1208 = vpop.f32.mrf.mxu0
        %1209 = vdwg.mxu0
        %v1210 = vlaneseq
        %v1211 = vshrl.u32 %v1210, 7
        %v1212 = vsub.s32 1, %v1211
        %v1213 = vrot.slane %v1015, %v1212
        %v1214 = vadd.f32 %v1202, %v1213
        %v1215 = vadd.f32 %v1207, %v1213
        %v1216 = vmax.f32 %v1214, 0.0
        %v1217 = vmax.f32 %v1215, 0.0
        %v1218 = vld [vmem:[#allocation13] sm:$0xff]
        %v1219 = vld [vmem:[#allocation13 + $0x8] sm:$0xff]
        %v1220 = vld [vmem:[#allocation13 + $0x10] sm:$0xff]
        %v1221 = vld [vmem:[#allocation13 + $0x18] sm:$0xff]
        %v1222 = vlaneseq
        %v1223 = vshrl.u32 %v1222, 7
        %v1224 = vsub.s32 2, %v1223
        %v1225 = vrot.slane %v1015, %v1224
        %v1227 = vsel %vm1035, %v1216, 0
        %v1230 = vsel %vm1035, %v1217, 0
        %1232 = vmatprep.subr.mxu0 0.0
        %1233 = vmatpush1.msra.mxu0 0.0
        %1234 = vmatprep.subr.mxu0 0.0
        %1235 = vmatpush1.msra.mxu0 0.0
        %1236 = vmatprep.subr.mxu0 0.0
        %1237 = vmatpush1.msra.mxu0 0.0
        %1238 = vmatprep.subr.mxu0 0.0
        %1239 = vmatpush1.msra.mxu0 0.0
        %1240 = vmatprep.subr.mxu0 0.0
        %1241 = vmatpush1.msra.mxu0 0.0
        %1242 = vmatprep.subr.mxu0 0.0
        %1243 = vmatpush1.msra.mxu0 0.0
        %1244 = vmatprep.subr.mxu0 0.0
        %1245 = vmatpush1.msra.mxu0 0.0
        %1246 = vmatprep.subr.mxu0 0.0
        %1247 = vmatpush1.msra.mxu0 0.0
        %1248 = vmatprep.subr.mxu0 0.0
        %1249 = vmatpush1.msra.mxu0 0.0
        %1250 = vmatprep.subr.mxu0 0.0
        %1251 = vmatpush1.msra.mxu0 0.0
        %1252 = vmatprep.subr.mxu0 0.0
        %1253 = vmatpush1.msra.mxu0 0.0
        %1254 = vmatprep.subr.mxu0 0.0
        %1255 = vmatpush1.msra.mxu0 0.0
        %1256 = vmatprep.subr.mxu0 0.0
        %1257 = vmatpush1.msra.mxu0 %v1221
        %1258 = vmatprep.subr.mxu0 0.0
        %1259 = vmatpush1.msra.mxu0 %v1220
        %1260 = vmatprep.subr.mxu0 0.0
        %1261 = vmatpush1.msra.mxu0 %v1219
        %1262 = vmatprep.subr.mxu0 0.0
        %1263 = vmatpush1.msra.mxu0 %v1218
        %1264 = vmatprep.subr.mxu0 0.0
        %1265 = vmatpush2.msra.mxu0 0.0
        %1266 = vmatprep.subr.mxu0 0.0
        %1267 = vmatpush2.msra.mxu0 0.0
        %1268 = vmatprep.subr.mxu0 0.0
        %1269 = vmatpush2.msra.mxu0 0.0
        %1270 = vmatprep.subr.mxu0 0.0
        %1271 = vmatpush2.msra.mxu0 0.0
        %1272 = vmatprep.subr.mxu0 0.0
        %1273 = vmatpush2.msra.mxu0 0.0
        %1274 = vmatprep.subr.mxu0 0.0
        %1275 = vmatpush2.msra.mxu0 0.0
        %1276 = vmatprep.subr.mxu0 0.0
        %1277 = vmatpush2.msra.mxu0 0.0
        %1278 = vmatprep.subr.mxu0 0.0
        %1279 = vmatpush2.msra.mxu0 0.0
        %1280 = vmatprep.subr.mxu0 0.0
        %1281 = vmatpush2.msra.mxu0 0.0
        %1282 = vmatprep.subr.mxu0 0.0
        %1283 = vmatpush2.msra.mxu0 0.0
        %1284 = vmatprep.subr.mxu0 0.0
        %1285 = vmatpush2.msra.mxu0 0.0
        %1286 = vmatprep.subr.mxu0 0.0
        %1287 = vmatpush2.msra.mxu0 0.0
        %1288 = vmatprep.subr.mxu0 0.0
        %1289 = vmatpush2.msra.mxu0 0.0
        %1290 = vmatprep.subr.mxu0 0.0
        %1291 = vmatpush2.msra.mxu0 0.0
        %1292 = vmatprep.subr.mxu0 0.0
        %1293 = vmatpush2.msra.mxu0 0.0
        %1294 = vmatprep.subr.mxu0 0.0
        %1295 = vmatpush2.msra.mxu0 0.0
        %1296 = vmatprep.mubr.f32.mxu0 0.0
        %1297 = vmatmul.mubr.f32.gmra.mxu0 %v1227
        %v1298 = vpop.f32.mrf.mxu0
        %v1299 = vadd.f32 %v1225, %v1298
        %v1300 = vpop.f32.mrf.mxu0
        %1301 = vmatprep.mubr.f32.mxu0 0.0
        %1302 = vmatmul.mubr.f32.gmra.mxu0 %v1230
        %v1303 = vpop.f32.mrf.mxu0
        %v1304 = vadd.f32 %v1225, %v1303
        %v1305 = vpop.f32.mrf.mxu0
        %1306 = vdwg.mxu0
        %vm1307 = vcmask 130048
        %v1309 = vsel %vm1307, %v1002, 0
        %v1312 = vsel %vm1307, %v1003, 0
        %v1315 = vsel %vm1307, %v1004, 0
        %v1318 = vsel %vm1307, %v1005, 0
        %v1321 = vsel %vm1307, %v1006, 0
        %v1324 = vsel %vm1307, %v1007, 0
        %v1327 = vsel %vm1307, %v1008, 0
        %v1330 = vsel %vm1307, %v1009, 0
        %1332 = vmatprep.subr.mxu0 0.0
        %1333 = vmatpush1.msra.mxu0 0.0
        %1334 = vmatprep.subr.mxu0 0.0
        %1335 = vmatpush1.msra.mxu0 0.0
        %1336 = vmatprep.subr.mxu0 0.0
        %1337 = vmatpush1.msra.mxu0 0.0
        %1338 = vmatprep.subr.mxu0 0.0
        %1339 = vmatpush1.msra.mxu0 0.0
        %1340 = vmatprep.subr.mxu0 0.0
        %1341 = vmatpush1.msra.mxu0 0.0
        %1342 = vmatprep.subr.mxu0 0.0
        %1343 = vmatpush1.msra.mxu0 0.0
        %1344 = vmatprep.subr.mxu0 0.0
        %1345 = vmatpush1.msra.mxu0 0.0
        %1346 = vmatprep.subr.mxu0 0.0
        %1347 = vmatpush1.msra.mxu0 0.0
        %1348 = vmatprep.subr.mxu0 0.0
        %1349 = vmatpush1.msra.mxu0 0.0
        %1350 = vmatprep.subr.mxu0 0.0
        %1351 = vmatpush1.msra.mxu0 0.0
        %1352 = vmatprep.subr.mxu0 0.0
        %1353 = vmatpush1.msra.mxu0 0.0
        %1354 = vmatprep.subr.mxu0 0.0
        %1355 = vmatpush1.msra.mxu0 0.0
        %1356 = vmatprep.subr.mxu0 0.0
        %1357 = vmatpush1.msra.mxu0 0.0
        %1358 = vmatprep.subr.mxu0 0.0
        %1359 = vmatpush1.msra.mxu0 0.0
        %1360 = vmatprep.subr.mxu0 0.0
        %1361 = vmatpush1.msra.mxu0 %v1304
        %1362 = vmatprep.subr.mxu0 0.0
        %1363 = vmatpush1.msra.mxu0 %v1299
        %1364 = vmatprep.subr.mxu0 0.0
        %1365 = vmatpush2.msra.mxu0 0.0
        %1366 = vmatprep.subr.mxu0 0.0
        %1367 = vmatpush2.msra.mxu0 0.0
        %1368 = vmatprep.subr.mxu0 0.0
        %1369 = vmatpush2.msra.mxu0 0.0
        %1370 = vmatprep.subr.mxu0 0.0
        %1371 = vmatpush2.msra.mxu0 0.0
        %1372 = vmatprep.subr.mxu0 0.0
        %1373 = vmatpush2.msra.mxu0 0.0
        %1374 = vmatprep.subr.mxu0 0.0
        %1375 = vmatpush2.msra.mxu0 0.0
        %1376 = vmatprep.subr.mxu0 0.0
        %1377 = vmatpush2.msra.mxu0 0.0
        %1378 = vmatprep.subr.mxu0 0.0
        %1379 = vmatpush2.msra.mxu0 0.0
        %1380 = vmatprep.subr.mxu0 0.0
        %1381 = vmatpush2.msra.mxu0 0.0
        %1382 = vmatprep.subr.mxu0 0.0
        %1383 = vmatpush2.msra.mxu0 0.0
        %1384 = vmatprep.subr.mxu0 0.0
        %1385 = vmatpush2.msra.mxu0 0.0
        %1386 = vmatprep.subr.mxu0 0.0
        %1387 = vmatpush2.msra.mxu0 0.0
        %1388 = vmatprep.subr.mxu0 0.0
        %1389 = vmatpush2.msra.mxu0 0.0
        %1390 = vmatprep.subr.mxu0 0.0
        %1391 = vmatpush2.msra.mxu0 0.0
        %1392 = vmatprep.subr.mxu0 0.0
        %1393 = vmatpush2.msra.mxu0 0.0
        %1394 = vmatprep.subr.mxu0 0.0
        %1395 = vmatpush2.msra.mxu0 0.0
        %1396 = vmatprep.mubr.f32.mxu0 0.0
        %1397 = vmatmul.mubr.f32.gmra.mxu0 %v1309
        %v1398 = vpop.f32.mrf.mxu0
        %v1399 = vadd.f32 0.0, %v1398
        %v1400 = vpop.f32.mrf.mxu0
        %1401 = vmatprep.mubr.f32.mxu0 0.0
        %1402 = vmatmul.mubr.f32.gmra.mxu0 %v1312
        %v1403 = vpop.f32.mrf.mxu0
        %v1404 = vadd.f32 0.0, %v1403
        %v1405 = vpop.f32.mrf.mxu0
        %1406 = vmatprep.mubr.f32.mxu0 0.0
        %1407 = vmatmul.mubr.f32.gmra.mxu0 %v1315
        %v1408 = vpop.f32.mrf.mxu0
        %v1409 = vadd.f32 0.0, %v1408
        %v1410 = vpop.f32.mrf.mxu0
        %1411 = vmatprep.mubr.f32.mxu0 0.0
        %1412 = vmatmul.mubr.f32.gmra.mxu0 %v1318
        %v1413 = vpop.f32.mrf.mxu0
        %v1414 = vadd.f32 0.0, %v1413
        %v1415 = vpop.f32.mrf.mxu0
        %1416 = vmatprep.mubr.f32.mxu0 0.0
        %1417 = vmatmul.mubr.f32.gmra.mxu0 %v1321
        %v1418 = vpop.f32.mrf.mxu0
        %v1419 = vadd.f32 0.0, %v1418
        %v1420 = vpop.f32.mrf.mxu0
        %1421 = vmatprep.mubr.f32.mxu0 0.0
        %1422 = vmatmul.mubr.f32.gmra.mxu0 %v1324
        %v1423 = vpop.f32.mrf.mxu0
        %v1424 = vadd.f32 0.0, %v1423
        %v1425 = vpop.f32.mrf.mxu0
        %1426 = vmatprep.mubr.f32.mxu0 0.0
        %1427 = vmatmul.mubr.f32.gmra.mxu0 %v1327
        %v1428 = vpop.f32.mrf.mxu0
        %v1429 = vadd.f32 0.0, %v1428
        %v1430 = vpop.f32.mrf.mxu0
        %1431 = vmatprep.mubr.f32.mxu0 0.0
        %1432 = vmatmul.mubr.f32.gmra.mxu0 %v1330
        %v1433 = vpop.f32.mrf.mxu0
        %v1434 = vadd.f32 0.0, %v1433
        %v1435 = vpop.f32.mrf.mxu0
        %1436 = vdwg.mxu0
        %v1437 = vlaneseq
        %v1438 = vshrl.u32 %v1437, 7
        %v1439 = vsub.s32 0, %v1438
        %v1440 = vrot.slane %v1106, %v1439
        %v1441 = vmul.f32 %v1399, %v1440
        %v1442 = vmul.f32 %v1404, %v1440
        %1444 = vrot.lane.b32.xlu0 %v1440, 96
        %v1445 = vpop.permute.xlu0 %1444
        %v1447 = vmul.f32 %v1409, %v1445
        %v1448 = vmul.f32 %v1414, %v1445
        %v1449 = vadd.f32 %v1441, %v1447
        %v1450 = vadd.f32 %v1442, %v1448
        %1451 = vrot.lane.b32.xlu0 %v1440, 64
        %v1452 = vpop.permute.xlu0 %1451
        %v1454 = vmul.f32 %v1419, %v1452
        %v1455 = vmul.f32 %v1424, %v1452
        %v1456 = vadd.f32 %v1449, %v1454
        %v1457 = vadd.f32 %v1450, %v1455
        %1458 = vrot.lane.b32.xlu0 %v1440, 32
        %v1459 = vpop.permute.xlu0 %1458
        %v1461 = vmul.f32 %v1429, %v1459
        %v1462 = vmul.f32 %v1434, %v1459
        %v1463 = vadd.f32 %v1456, %v1461
        %v1464 = vadd.f32 %v1457, %v1462
        %v1465 = vlaneseq
        %v1466 = vshrl.u32 %v1465, 7
        %v1467 = vsub.s32 6, %v1466
        %v1468 = vrot.slane %v1015, %v1467
        %v1469 = vmul.f32 %v1468, %v1299
        %v1470 = vmul.f32 %v1468, %v1304
        %v1471 = vadd.f32 %v1463, %v1469
        %v1472 = vadd.f32 %v1464, %v1470
        %v1473 = vld [vmem:[#allocation17] sm:$0xff]
        %v1474 = vld [vmem:[#allocation17 + $0x8] sm:$0xff]
        %v1475 = vld [vmem:[#allocation17 + $0x10] sm:$0xff]
        %v1476 = vld [vmem:[#allocation17 + $0x18] sm:$0xff]
        %v1477 = vld [vmem:[#allocation19] sm:$0xff]
        %v1478 = vld [vmem:[#allocation19 + $0x8] sm:$0xff]
        %v1479 = vld [vmem:[#allocation19 + $0x10] sm:$0xff]
        %v1480 = vld [vmem:[#allocation19 + $0x18] sm:$0xff]
        %v1481 = vlaneseq
        %v1482 = vshrl.u32 %v1481, 7
        %v1483 = vsub.s32 7, %v1482
        %v1484 = vrot.slane %v1015, %v1483
        %v1486 = vsel %vm1035, %v1471, 0
        %v1489 = vsel %vm1035, %v1472, 0
        %1491 = vmatprep.subr.mxu0 0.0
        %1492 = vmatpush1.msra.mxu0 0.0
        %1493 = vmatprep.subr.mxu0 0.0
        %1494 = vmatpush1.msra.mxu0 0.0
        %1495 = vmatprep.subr.mxu0 0.0
        %1496 = vmatpush1.msra.mxu0 0.0
        %1497 = vmatprep.subr.mxu0 0.0
        %1498 = vmatpush1.msra.mxu0 0.0
        %1499 = vmatprep.subr.mxu0 0.0
        %1500 = vmatpush1.msra.mxu0 0.0
        %1501 = vmatprep.subr.mxu0 0.0
        %1502 = vmatpush1.msra.mxu0 0.0
        %1503 = vmatprep.subr.mxu0 0.0
        %1504 = vmatpush1.msra.mxu0 0.0
        %1505 = vmatprep.subr.mxu0 0.0
        %1506 = vmatpush1.msra.mxu0 0.0
        %1507 = vmatprep.subr.mxu0 0.0
        %1508 = vmatpush1.msra.mxu0 0.0
        %1509 = vmatprep.subr.mxu0 0.0
        %1510 = vmatpush1.msra.mxu0 0.0
        %1511 = vmatprep.subr.mxu0 0.0
        %1512 = vmatpush1.msra.mxu0 0.0
        %1513 = vmatprep.subr.mxu0 0.0
        %1514 = vmatpush1.msra.mxu0 0.0
        %1515 = vmatprep.subr.mxu0 0.0
        %1516 = vmatpush1.msra.mxu0 %v1476
        %1517 = vmatprep.subr.mxu0 0.0
        %1518 = vmatpush1.msra.mxu0 %v1475
        %1519 = vmatprep.subr.mxu0 0.0
        %1520 = vmatpush1.msra.mxu0 %v1474
        %1521 = vmatprep.subr.mxu0 0.0
        %1522 = vmatpush1.msra.mxu0 %v1473
        %1523 = vmatprep.subr.mxu0 0.0
        %1524 = vmatpush2.msra.mxu0 0.0
        %1525 = vmatprep.subr.mxu0 0.0
        %1526 = vmatpush2.msra.mxu0 0.0
        %1527 = vmatprep.subr.mxu0 0.0
        %1528 = vmatpush2.msra.mxu0 0.0
        %1529 = vmatprep.subr.mxu0 0.0
        %1530 = vmatpush2.msra.mxu0 0.0
        %1531 = vmatprep.subr.mxu0 0.0
        %1532 = vmatpush2.msra.mxu0 0.0
        %1533 = vmatprep.subr.mxu0 0.0
        %1534 = vmatpush2.msra.mxu0 0.0
        %1535 = vmatprep.subr.mxu0 0.0
        %1536 = vmatpush2.msra.mxu0 0.0
        %1537 = vmatprep.subr.mxu0 0.0
        %1538 = vmatpush2.msra.mxu0 0.0
        %1539 = vmatprep.subr.mxu0 0.0
        %1540 = vmatpush2.msra.mxu0 0.0
        %1541 = vmatprep.subr.mxu0 0.0
        %1542 = vmatpush2.msra.mxu0 0.0
        %1543 = vmatprep.subr.mxu0 0.0
        %1544 = vmatpush2.msra.mxu0 0.0
        %1545 = vmatprep.subr.mxu0 0.0
        %1546 = vmatpush2.msra.mxu0 0.0
        %1547 = vmatprep.subr.mxu0 0.0
        %1548 = vmatpush2.msra.mxu0 0.0
        %1549 = vmatprep.subr.mxu0 0.0
        %1550 = vmatpush2.msra.mxu0 0.0
        %1551 = vmatprep.subr.mxu0 0.0
        %1552 = vmatpush2.msra.mxu0 0.0
        %1553 = vmatprep.subr.mxu0 0.0
        %1554 = vmatpush2.msra.mxu0 0.0
        %1555 = vmatprep.mubr.f32.mxu0 0.0
        %1556 = vmatmul.mubr.f32.gmra.mxu0 %v1486
        %v1557 = vpop.f32.mrf.mxu0
        %v1558 = vadd.f32 %v1484, %v1557
        %v1559 = vpop.f32.mrf.mxu0
        %1560 = vmatprep.mubr.f32.mxu0 0.0
        %1561 = vmatmul.mubr.f32.gmra.mxu0 %v1489
        %v1562 = vpop.f32.mrf.mxu0
        %v1563 = vadd.f32 %v1484, %v1562
        %v1564 = vpop.f32.mrf.mxu0
        %1565 = vdwg.mxu0
        %v1566 = vmax.f32 %v1558, 0.0
        %v1567 = vmax.f32 %v1563, 0.0
        %v1568 = vlaneseq
        %v1569 = vshrl.u32 %v1568, 7
        %v1570 = vsub.s32 0, %v1569
        %v1571 = vrot.slane %v1016, %v1570
        %v1573 = vsel %vm1035, %v1566, 0
        %v1576 = vsel %vm1035, %v1567, 0
        %1578 = vmatprep.subr.mxu0 0.0
        %1579 = vmatpush1.msra.mxu0 0.0
        %1580 = vmatprep.subr.mxu0 0.0
        %1581 = vmatpush1.msra.mxu0 0.0
        %1582 = vmatprep.subr.mxu0 0.0
        %1583 = vmatpush1.msra.mxu0 0.0
        %1584 = vmatprep.subr.mxu0 0.0
        %1585 = vmatpush1.msra.mxu0 0.0
        %1586 = vmatprep.subr.mxu0 0.0
        %1587 = vmatpush1.msra.mxu0 0.0
        %1588 = vmatprep.subr.mxu0 0.0
        %1589 = vmatpush1.msra.mxu0 0.0
        %1590 = vmatprep.subr.mxu0 0.0
        %1591 = vmatpush1.msra.mxu0 0.0
        %1592 = vmatprep.subr.mxu0 0.0
        %1593 = vmatpush1.msra.mxu0 0.0
        %1594 = vmatprep.subr.mxu0 0.0
        %1595 = vmatpush1.msra.mxu0 0.0
        %1596 = vmatprep.subr.mxu0 0.0
        %1597 = vmatpush1.msra.mxu0 0.0
        %1598 = vmatprep.subr.mxu0 0.0
        %1599 = vmatpush1.msra.mxu0 0.0
        %1600 = vmatprep.subr.mxu0 0.0
        %1601 = vmatpush1.msra.mxu0 0.0
        %1602 = vmatprep.subr.mxu0 0.0
        %1603 = vmatpush1.msra.mxu0 %v1480
        %1604 = vmatprep.subr.mxu0 0.0
        %1605 = vmatpush1.msra.mxu0 %v1479
        %1606 = vmatprep.subr.mxu0 0.0
        %1607 = vmatpush1.msra.mxu0 %v1478
        %1608 = vmatprep.subr.mxu0 0.0
        %1609 = vmatpush1.msra.mxu0 %v1477
        %1610 = vmatprep.subr.mxu0 0.0
        %1611 = vmatpush2.msra.mxu0 0.0
        %1612 = vmatprep.subr.mxu0 0.0
        %1613 = vmatpush2.msra.mxu0 0.0
        %1614 = vmatprep.subr.mxu0 0.0
        %1615 = vmatpush2.msra.mxu0 0.0
        %1616 = vmatprep.subr.mxu0 0.0
        %1617 = vmatpush2.msra.mxu0 0.0
        %1618 = vmatprep.subr.mxu0 0.0
        %1619 = vmatpush2.msra.mxu0 0.0
        %1620 = vmatprep.subr.mxu0 0.0
        %1621 = vmatpush2.msra.mxu0 0.0
        %1622 = vmatprep.subr.mxu0 0.0
        %1623 = vmatpush2.msra.mxu0 0.0
        %1624 = vmatprep.subr.mxu0 0.0
        %1625 = vmatpush2.msra.mxu0 0.0
        %1626 = vmatprep.subr.mxu0 0.0
        %1627 = vmatpush2.msra.mxu0 0.0
        %1628 = vmatprep.subr.mxu0 0.0
        %1629 = vmatpush2.msra.mxu0 0.0
        %1630 = vmatprep.subr.mxu0 0.0
        %1631 = vmatpush2.msra.mxu0 0.0
        %1632 = vmatprep.subr.mxu0 0.0
        %1633 = vmatpush2.msra.mxu0 0.0
        %1634 = vmatprep.subr.mxu0 0.0
        %1635 = vmatpush2.msra.mxu0 0.0
        %1636 = vmatprep.subr.mxu0 0.0
        %1637 = vmatpush2.msra.mxu0 0.0
        %1638 = vmatprep.subr.mxu0 0.0
        %1639 = vmatpush2.msra.mxu0 0.0
        %1640 = vmatprep.subr.mxu0 0.0
        %1641 = vmatpush2.msra.mxu0 0.0
        %1642 = vmatprep.mubr.f32.mxu0 0.0
        %1643 = vmatmul.mubr.f32.gmra.mxu0 %v1573
        %v1644 = vpop.f32.mrf.mxu0
        %v1645 = vadd.f32 %v1571, %v1644
        %v1646 = vpop.f32.mrf.mxu0
        %1647 = vmatprep.mubr.f32.mxu0 0.0
        %1648 = vmatmul.mubr.f32.gmra.mxu0 %v1576
        %v1649 = vpop.f32.mrf.mxu0
        %v1650 = vadd.f32 %v1571, %v1649
        %v1651 = vpop.f32.mrf.mxu0
        %1652 = vdwg.mxu0
        %v1653 = vsel %vm1035, %v1645, 0.0
        %1654 = vadd.xlane.f32.xlu0 %v1653
        %v1655 = vpop.xlane.xlu0 %1654
        %v1656 = vsel %vm1035, %v1650, 0.0
        %1657 = vadd.xlane.f32.xlu0 %v1656
        %v1658 = vpop.xlane.xlu0 %1657
        %v1659 = vrcp.pop 32.0
        %v1660 = vmul.f32 %v1655, %v1659
        %v1661 = vmul.f32 %v1658, %v1659
        %v1662 = vsub.f32 %v1645, %v1660
        %v1663 = vsub.f32 %v1650, %v1661
        %v1664 = vmul.f32 %v1662, %v1662
        %v1665 = vmul.f32 %v1663, %v1663
        %v1666 = vsel %vm1035, %v1664, 0.0
        %1667 = vadd.xlane.f32.xlu0 %v1666
        %v1668 = vpop.xlane.xlu0 %1667
        %v1669 = vsel %vm1035, %v1665, 0.0
        %1670 = vadd.xlane.f32.xlu0 %v1669
        %v1671 = vpop.xlane.xlu0 %1670
        %v1672 = vmul.f32 %v1668, %v1659
        %v1673 = vmul.f32 %v1671, %v1659
        %v1674 = vadd.f32 %v1672, 1e-05
        %v1675 = vadd.f32 %v1673, 1e-05
        %v1676 = vrsqrt.pop %v1674
        %v1677 = vrsqrt.pop %v1675
        %v1678 = vmul.f32 %v1662, %v1676
        %v1679 = vmul.f32 %v1663, %v1677
        %v1680 = vlaneseq
        %v1681 = vshrl.u32 %v1680, 7
        %v1682 = vsub.s32 1, %v1681
        %v1683 = vrot.slane %v1016, %v1682
        %v1684 = vmul.f32 %v1678, %v1683
        %v1685 = vmul.f32 %v1679, %v1683
        %v1686 = vlaneseq
        %v1687 = vshrl.u32 %v1686, 7
        %v1688 = vsub.s32 2, %v1687
        %v1689 = vrot.slane %v1016, %v1688
        %v1690 = vadd.f32 %v1684, %v1689
        %v1691 = vadd.f32 %v1685, %v1689
        %v1692 = vadd.f32 %v1690, %v1299
        %v1693 = vadd.f32 %v1691, %v1304
        %v1694 = vlaneseq
        %v1695 = vshrl.u32 %v1694, 7
        %v1696 = vadd.s32 %v1695, 8
        %v1697 = vstv %s996
        %vm1698 = vcmp.eq.s32.totalorder %v1695, %v1697
        %vm1699 = vcmp.eq.s32.totalorder %v1696, %v1697
        %v1700 = vsel %vm1698, 1, 0
        %v1701 = vsel %vm1699, 1, 0
        %v1702 = vcvt.s32.f32 %v1700
        %v1703 = vcvt.s32.f32 %v1701
        %v1704 = vld [vmem:[#allocation14] sm:$0xff]
        %v1705 = vld [vmem:[#allocation14 + $0x8] sm:$0xff]
        %v1706 = vld [vmem:[#allocation14 + $0x10] sm:$0xff]
        %v1707 = vld [vmem:[#allocation14 + $0x18] sm:$0xff]
        %v1708 = vlaneseq
        %v1709 = vshrl.u32 %v1708, 7
        %v1710 = vsub.s32 3, %v1709
        %v1711 = vrot.slane %v1015, %v1710
        %v1712 = vmul.f32 %v1702, %v1711
        %v1713 = vmul.f32 %v1703, %v1711
        %1714 = vmatprep.subr.mxu0 0.0
        %1715 = vmatpush1.msra.mxu0 0.0
        %1716 = vmatprep.subr.mxu0 0.0
        %1717 = vmatpush1.msra.mxu0 0.0
        %1718 = vmatprep.subr.mxu0 0.0
        %1719 = vmatpush1.msra.mxu0 0.0
        %1720 = vmatprep.subr.mxu0 0.0
        %1721 = vmatpush1.msra.mxu0 0.0
        %1722 = vmatprep.subr.mxu0 0.0
        %1723 = vmatpush1.msra.mxu0 0.0
        %1724 = vmatprep.subr.mxu0 0.0
        %1725 = vmatpush1.msra.mxu0 0.0
        %1726 = vmatprep.subr.mxu0 0.0
        %1727 = vmatpush1.msra.mxu0 0.0
        %1728 = vmatprep.subr.mxu0 0.0
        %1729 = vmatpush1.msra.mxu0 0.0
        %1730 = vmatprep.subr.mxu0 0.0
        %1731 = vmatpush1.msra.mxu0 0.0
        %1732 = vmatprep.subr.mxu0 0.0
        %1733 = vmatpush1.msra.mxu0 0.0
        %1734 = vmatprep.subr.mxu0 0.0
        %1735 = vmatpush1.msra.mxu0 0.0
        %1736 = vmatprep.subr.mxu0 0.0
        %1737 = vmatpush1.msra.mxu0 0.0
        %1738 = vmatprep.subr.mxu0 0.0
        %1739 = vmatpush1.msra.mxu0 %v1707
        %1740 = vmatprep.subr.mxu0 0.0
        %1741 = vmatpush1.msra.mxu0 %v1706
        %1742 = vmatprep.subr.mxu0 0.0
        %1743 = vmatpush1.msra.mxu0 %v1705
        %1744 = vmatprep.subr.mxu0 0.0
        %1745 = vmatpush1.msra.mxu0 %v1704
        %1746 = vmatprep.subr.mxu0 0.0
        %1747 = vmatpush2.msra.mxu0 0.0
        %1748 = vmatprep.subr.mxu0 0.0
        %1749 = vmatpush2.msra.mxu0 0.0
        %1750 = vmatprep.subr.mxu0 0.0
        %1751 = vmatpush2.msra.mxu0 0.0
        %1752 = vmatprep.subr.mxu0 0.0
        %1753 = vmatpush2.msra.mxu0 0.0
        %1754 = vmatprep.subr.mxu0 0.0
        %1755 = vmatpush2.msra.mxu0 0.0
        %1756 = vmatprep.subr.mxu0 0.0
        %1757 = vmatpush2.msra.mxu0 0.0
        %1758 = vmatprep.subr.mxu0 0.0
        %1759 = vmatpush2.msra.mxu0 0.0
        %1760 = vmatprep.subr.mxu0 0.0
        %1761 = vmatpush2.msra.mxu0 0.0
        %1762 = vmatprep.subr.mxu0 0.0
        %1763 = vmatpush2.msra.mxu0 0.0
        %1764 = vmatprep.subr.mxu0 0.0
        %1765 = vmatpush2.msra.mxu0 0.0
        %1766 = vmatprep.subr.mxu0 0.0
        %1767 = vmatpush2.msra.mxu0 0.0
        %1768 = vmatprep.subr.mxu0 0.0
        %1769 = vmatpush2.msra.mxu0 0.0
        %1770 = vmatprep.subr.mxu0 0.0
        %1771 = vmatpush2.msra.mxu0 0.0
        %1772 = vmatprep.subr.mxu0 0.0
        %1773 = vmatpush2.msra.mxu0 0.0
        %1774 = vmatprep.subr.mxu0 0.0
        %1775 = vmatpush2.msra.mxu0 0.0
        %1776 = vmatprep.subr.mxu0 0.0
        %1777 = vmatpush2.msra.mxu0 0.0
        %1778 = vmatprep.mubr.f32.mxu0 0.0
        %1779 = vmatmul.mubr.f32.gmra.mxu0 %v1130
        %v1780 = vpop.f32.mrf.mxu0
        %v1781 = vadd.f32 %v1712, %v1780
        %v1782 = vpop.f32.mrf.mxu0
        %1783 = vmatprep.mubr.f32.mxu0 0.0
        %1784 = vmatmul.mubr.f32.gmra.mxu0 %v1133
        %v1785 = vpop.f32.mrf.mxu0
        %v1786 = vadd.f32 %v1713, %v1785
        %v1787 = vpop.f32.mrf.mxu0
        %1788 = vdwg.mxu0
        %v1789 = vlaneseq
        %v1790 = vshrl.u32 %v1789, 7
        %v1791 = vsub.s32 4, %v1790
        %v1792 = vrot.slane %v1015, %v1791
        %v1793 = vadd.f32 %v1781, %v1792
        %v1794 = vadd.f32 %v1786, %v1792
        %v1795 = vmax.f32 %v1793, 0.0
        %v1796 = vmax.f32 %v1794, 0.0
        %v1797 = vld [vmem:[#allocation16] sm:$0xff]
        %v1798 = vld [vmem:[#allocation16 + $0x8] sm:$0xff]
        %v1799 = vld [vmem:[#allocation16 + $0x10] sm:$0xff]
        %v1800 = vld [vmem:[#allocation16 + $0x18] sm:$0xff]
        %v1801 = vlaneseq
        %v1802 = vshrl.u32 %v1801, 7
        %v1803 = vsub.s32 5, %v1802
        %v1804 = vrot.slane %v1015, %v1803
        %v1806 = vsel %vm1035, %v1795, 0
        %v1809 = vsel %vm1035, %v1796, 0
        %1811 = vmatprep.subr.mxu0 0.0
        %1812 = vmatpush1.msra.mxu0 0.0
        %1813 = vmatprep.subr.mxu0 0.0
        %1814 = vmatpush1.msra.mxu0 0.0
        %1815 = vmatprep.subr.mxu0 0.0
        %1816 = vmatpush1.msra.mxu0 0.0
        %1817 = vmatprep.subr.mxu0 0.0
        %1818 = vmatpush1.msra.mxu0 0.0
        %1819 = vmatprep.subr.mxu0 0.0
        %1820 = vmatpush1.msra.mxu0 0.0
        %1821 = vmatprep.subr.mxu0 0.0
        %1822 = vmatpush1.msra.mxu0 0.0
        %1823 = vmatprep.subr.mxu0 0.0
        %1824 = vmatpush1.msra.mxu0 0.0
        %1825 = vmatprep.subr.mxu0 0.0
        %1826 = vmatpush1.msra.mxu0 0.0
        %1827 = vmatprep.subr.mxu0 0.0
        %1828 = vmatpush1.msra.mxu0 0.0
        %1829 = vmatprep.subr.mxu0 0.0
        %1830 = vmatpush1.msra.mxu0 0.0
        %1831 = vmatprep.subr.mxu0 0.0
        %1832 = vmatpush1.msra.mxu0 0.0
        %1833 = vmatprep.subr.mxu0 0.0
        %1834 = vmatpush1.msra.mxu0 0.0
        %1835 = vmatprep.subr.mxu0 0.0
        %1836 = vmatpush1.msra.mxu0 %v1800
        %1837 = vmatprep.subr.mxu0 0.0
        %1838 = vmatpush1.msra.mxu0 %v1799
        %1839 = vmatprep.subr.mxu0 0.0
        %1840 = vmatpush1.msra.mxu0 %v1798
        %1841 = vmatprep.subr.mxu0 0.0
        %1842 = vmatpush1.msra.mxu0 %v1797
        %1843 = vmatprep.subr.mxu0 0.0
        %1844 = vmatpush2.msra.mxu0 0.0
        %1845 = vmatprep.subr.mxu0 0.0
        %1846 = vmatpush2.msra.mxu0 0.0
        %1847 = vmatprep.subr.mxu0 0.0
        %1848 = vmatpush2.msra.mxu0 0.0
        %1849 = vmatprep.subr.mxu0 0.0
        %1850 = vmatpush2.msra.mxu0 0.0
        %1851 = vmatprep.subr.mxu0 0.0
        %1852 = vmatpush2.msra.mxu0 0.0
        %1853 = vmatprep.subr.mxu0 0.0
        %1854 = vmatpush2.msra.mxu0 0.0
        %1855 = vmatprep.subr.mxu0 0.0
        %1856 = vmatpush2.msra.mxu0 0.0
        %1857 = vmatprep.subr.mxu0 0.0
        %1858 = vmatpush2.msra.mxu0 0.0
        %1859 = vmatprep.subr.mxu0 0.0
        %1860 = vmatpush2.msra.mxu0 0.0
        %1861 = vmatprep.subr.mxu0 0.0
        %1862 = vmatpush2.msra.mxu0 0.0
        %1863 = vmatprep.subr.mxu0 0.0
        %1864 = vmatpush2.msra.mxu0 0.0
        %1865 = vmatprep.subr.mxu0 0.0
        %1866 = vmatpush2.msra.mxu0 0.0
        %1867 = vmatprep.subr.mxu0 0.0
        %1868 = vmatpush2.msra.mxu0 0.0
        %1869 = vmatprep.subr.mxu0 0.0
        %1870 = vmatpush2.msra.mxu0 0.0
        %1871 = vmatprep.subr.mxu0 0.0
        %1872 = vmatpush2.msra.mxu0 0.0
        %1873 = vmatprep.subr.mxu0 0.0
        %1874 = vmatpush2.msra.mxu0 0.0
        %1875 = vmatprep.mubr.f32.mxu0 0.0
        %1876 = vmatmul.mubr.f32.gmra.mxu0 %v1806
        %v1877 = vpop.f32.mrf.mxu0
        %v1878 = vadd.f32 %v1804, %v1877
        %v1879 = vpop.f32.mrf.mxu0
        %1880 = vmatprep.mubr.f32.mxu0 0.0
        %1881 = vmatmul.mubr.f32.gmra.mxu0 %v1809
        %v1882 = vpop.f32.mrf.mxu0
        %v1883 = vadd.f32 %v1804, %v1882
        %v1884 = vpop.f32.mrf.mxu0
        %1885 = vdwg.mxu0
        %v1886 = vld [vmem:[#allocation20] sm:$0xff]
        %v1887 = vld [vmem:[#allocation20 + $0x8] sm:$0xff]
        %v1888 = vld [vmem:[#allocation20 + $0x10] sm:$0xff]
        %v1889 = vld [vmem:[#allocation20 + $0x18] sm:$0xff]
        %v1890 = vld [vmem:[#allocation22] sm:$0x1]
        %1891 = vmatprep.subr.mxu0 0.0
        %1892 = vmatpush1.msra.mxu0 0.0
        %1893 = vmatprep.subr.mxu0 0.0
        %1894 = vmatpush1.msra.mxu0 0.0
        %1895 = vmatprep.subr.mxu0 0.0
        %1896 = vmatpush1.msra.mxu0 0.0
        %1897 = vmatprep.subr.mxu0 0.0
        %1898 = vmatpush1.msra.mxu0 0.0
        %1899 = vmatprep.subr.mxu0 0.0
        %1900 = vmatpush1.msra.mxu0 0.0
        %1901 = vmatprep.subr.mxu0 0.0
        %1902 = vmatpush1.msra.mxu0 0.0
        %1903 = vmatprep.subr.mxu0 0.0
        %1904 = vmatpush1.msra.mxu0 0.0
        %1905 = vmatprep.subr.mxu0 0.0
        %1906 = vmatpush1.msra.mxu0 0.0
        %1907 = vmatprep.subr.mxu0 0.0
        %1908 = vmatpush1.msra.mxu0 0.0
        %1909 = vmatprep.subr.mxu0 0.0
        %1910 = vmatpush1.msra.mxu0 0.0
        %1911 = vmatprep.subr.mxu0 0.0
        %1912 = vmatpush1.msra.mxu0 0.0
        %1913 = vmatprep.subr.mxu0 0.0
        %1914 = vmatpush1.msra.mxu0 0.0
        %1915 = vmatprep.subr.mxu0 0.0
        %1916 = vmatpush1.msra.mxu0 %v1889
        %1917 = vmatprep.subr.mxu0 0.0
        %1918 = vmatpush1.msra.mxu0 %v1888
        %1919 = vmatprep.subr.mxu0 0.0
        %1920 = vmatpush1.msra.mxu0 %v1887
        %1921 = vmatprep.subr.mxu0 0.0
        %1922 = vmatpush1.msra.mxu0 %v1886
        %1923 = vmatprep.subr.mxu0 0.0
        %1924 = vmatpush2.msra.mxu0 0.0
        %1925 = vmatprep.subr.mxu0 0.0
        %1926 = vmatpush2.msra.mxu0 0.0
        %1927 = vmatprep.subr.mxu0 0.0
        %1928 = vmatpush2.msra.mxu0 0.0
        %1929 = vmatprep.subr.mxu0 0.0
        %1930 = vmatpush2.msra.mxu0 0.0
        %1931 = vmatprep.subr.mxu0 0.0
        %1932 = vmatpush2.msra.mxu0 0.0
        %1933 = vmatprep.subr.mxu0 0.0
        %1934 = vmatpush2.msra.mxu0 0.0
        %1935 = vmatprep.subr.mxu0 0.0
        %1936 = vmatpush2.msra.mxu0 0.0
        %1937 = vmatprep.subr.mxu0 0.0
        %1938 = vmatpush2.msra.mxu0 0.0
        %1939 = vmatprep.subr.mxu0 0.0
        %1940 = vmatpush2.msra.mxu0 0.0
        %1941 = vmatprep.subr.mxu0 0.0
        %1942 = vmatpush2.msra.mxu0 0.0
        %1943 = vmatprep.subr.mxu0 0.0
        %1944 = vmatpush2.msra.mxu0 0.0
        %1945 = vmatprep.subr.mxu0 0.0
        %1946 = vmatpush2.msra.mxu0 0.0
        %1947 = vmatprep.subr.mxu0 0.0
        %1948 = vmatpush2.msra.mxu0 0.0
        %1949 = vmatprep.subr.mxu0 0.0
        %1950 = vmatpush2.msra.mxu0 0.0
        %1951 = vmatprep.subr.mxu0 0.0
        %1952 = vmatpush2.msra.mxu0 0.0
        %1953 = vmatprep.subr.mxu0 0.0
        %1954 = vmatpush2.msra.mxu0 0.0
        %1955 = vmatprep.mubr.f32.mxu0 0.0
        %1956 = vmatmul.mubr.f32.gmra.mxu0 %v1037
        %v1957 = vpop.f32.mrf.mxu0
        %v1958 = vadd.f32 %v1890, %v1957
        %v1959 = vpop.f32.mrf.mxu0
        %1960 = vdwg.mxu0
        %1961 = vmatprep.subr.mxu0 0.0
        %1962 = vmatpush1.msra.mxu0 0.0
        %1963 = vmatprep.subr.mxu0 0.0
        %1964 = vmatpush1.msra.mxu0 0.0
        %1965 = vmatprep.subr.mxu0 0.0
        %1966 = vmatpush1.msra.mxu0 0.0
        %1967 = vmatprep.subr.mxu0 0.0
        %1968 = vmatpush1.msra.mxu0 0.0
        %1969 = vmatprep.subr.mxu0 0.0
        %1970 = vmatpush1.msra.mxu0 0.0
        %1971 = vmatprep.subr.mxu0 0.0
        %1972 = vmatpush1.msra.mxu0 0.0
        %1973 = vmatprep.subr.mxu0 0.0
        %1974 = vmatpush1.msra.mxu0 0.0
        %1975 = vmatprep.subr.mxu0 0.0
        %1976 = vmatpush1.msra.mxu0 0.0
        %1977 = vmatprep.subr.mxu0 0.0
        %1978 = vmatpush1.msra.mxu0 0.0
        %1979 = vmatprep.subr.mxu0 0.0
        %1980 = vmatpush1.msra.mxu0 0.0
        %1981 = vmatprep.subr.mxu0 0.0
        %1982 = vmatpush1.msra.mxu0 0.0
        %1983 = vmatprep.subr.mxu0 0.0
        %1984 = vmatpush1.msra.mxu0 0.0
        %1985 = vmatprep.subr.mxu0 0.0
        %1986 = vmatpush1.msra.mxu0 0.0
        %1987 = vmatprep.subr.mxu0 0.0
        %1988 = vmatpush1.msra.mxu0 0.0
        %1989 = vmatprep.subr.mxu0 0.0
        %1990 = vmatpush1.msra.mxu0 %v1883
        %1991 = vmatprep.subr.mxu0 0.0
        %1992 = vmatpush1.msra.mxu0 %v1878
        %1993 = vmatprep.subr.mxu0 0.0
        %1994 = vmatpush2.msra.mxu0 0.0
        %1995 = vmatprep.subr.mxu0 0.0
        %1996 = vmatpush2.msra.mxu0 0.0
        %1997 = vmatprep.subr.mxu0 0.0
        %1998 = vmatpush2.msra.mxu0 0.0
        %1999 = vmatprep.subr.mxu0 0.0
        %2000 = vmatpush2.msra.mxu0 0.0
        %2001 = vmatprep.subr.mxu0 0.0
        %2002 = vmatpush2.msra.mxu0 0.0
        %2003 = vmatprep.subr.mxu0 0.0
        %2004 = vmatpush2.msra.mxu0 0.0
        %2005 = vmatprep.subr.mxu0 0.0
        %2006 = vmatpush2.msra.mxu0 0.0
        %2007 = vmatprep.subr.mxu0 0.0
        %2008 = vmatpush2.msra.mxu0 0.0
        %2009 = vmatprep.subr.mxu0 0.0
        %2010 = vmatpush2.msra.mxu0 0.0
        %2011 = vmatprep.subr.mxu0 0.0
        %2012 = vmatpush2.msra.mxu0 0.0
        %2013 = vmatprep.subr.mxu0 0.0
        %2014 = vmatpush2.msra.mxu0 0.0
        %2015 = vmatprep.subr.mxu0 0.0
        %2016 = vmatpush2.msra.mxu0 0.0
        %2017 = vmatprep.subr.mxu0 0.0
        %2018 = vmatpush2.msra.mxu0 0.0
        %2019 = vmatprep.subr.mxu0 0.0
        %2020 = vmatpush2.msra.mxu0 0.0
        %2021 = vmatprep.subr.mxu0 0.0
        %2022 = vmatpush2.msra.mxu0 0.0
        %2023 = vmatprep.subr.mxu0 0.0
        %2024 = vmatpush2.msra.mxu0 0.0
        %2025 = vmatprep.mubr.f32.mxu0 0.0
        %2026 = vmatmul.mubr.f32.gmra.mxu0 %v1309
        %v2027 = vpop.f32.mrf.mxu0
        %v2028 = vadd.f32 0.0, %v2027
        %v2029 = vpop.f32.mrf.mxu0
        %2030 = vmatprep.mubr.f32.mxu0 0.0
        %2031 = vmatmul.mubr.f32.gmra.mxu0 %v1312
        %v2032 = vpop.f32.mrf.mxu0
        %v2033 = vadd.f32 0.0, %v2032
        %v2034 = vpop.f32.mrf.mxu0
        %2035 = vmatprep.mubr.f32.mxu0 0.0
        %2036 = vmatmul.mubr.f32.gmra.mxu0 %v1315
        %v2037 = vpop.f32.mrf.mxu0
        %v2038 = vadd.f32 0.0, %v2037
        %v2039 = vpop.f32.mrf.mxu0
        %2040 = vmatprep.mubr.f32.mxu0 0.0
        %2041 = vmatmul.mubr.f32.gmra.mxu0 %v1318
        %v2042 = vpop.f32.mrf.mxu0
        %v2043 = vadd.f32 0.0, %v2042
        %v2044 = vpop.f32.mrf.mxu0
        %2045 = vmatprep.mubr.f32.mxu0 0.0
        %2046 = vmatmul.mubr.f32.gmra.mxu0 %v1321
        %v2047 = vpop.f32.mrf.mxu0
        %v2048 = vadd.f32 0.0, %v2047
        %v2049 = vpop.f32.mrf.mxu0
        %2050 = vmatprep.mubr.f32.mxu0 0.0
        %2051 = vmatmul.mubr.f32.gmra.mxu0 %v1324
        %v2052 = vpop.f32.mrf.mxu0
        %v2053 = vadd.f32 0.0, %v2052
        %v2054 = vpop.f32.mrf.mxu0
        %2055 = vmatprep.mubr.f32.mxu0 0.0
        %2056 = vmatmul.mubr.f32.gmra.mxu0 %v1327
        %v2057 = vpop.f32.mrf.mxu0
        %v2058 = vadd.f32 0.0, %v2057
        %v2059 = vpop.f32.mrf.mxu0
        %2060 = vmatprep.mubr.f32.mxu0 0.0
        %2061 = vmatmul.mubr.f32.gmra.mxu0 %v1330
        %v2062 = vpop.f32.mrf.mxu0
        %v2063 = vadd.f32 0.0, %v2062
        %v2064 = vpop.f32.mrf.mxu0
        %2065 = vdwg.mxu0
        %v2066 = vlaneseq
        %v2067 = vshrl.u32 %v2066, 7
        %v2068 = vsub.s32 0, %v2067
        %v2069 = vrot.slane %v1958, %v2068
        %v2070 = vmul.f32 %v2028, %v2069
        %v2071 = vmul.f32 %v2033, %v2069
        %2073 = vrot.lane.b32.xlu0 %v2069, 96
        %v2074 = vpop.permute.xlu0 %2073
        %v2076 = vmul.f32 %v2038, %v2074
        %v2077 = vmul.f32 %v2043, %v2074
        %v2078 = vadd.f32 %v2070, %v2076
        %v2079 = vadd.f32 %v2071, %v2077
        %2080 = vrot.lane.b32.xlu0 %v2069, 64
        %v2081 = vpop.permute.xlu0 %2080
        %v2083 = vmul.f32 %v2048, %v2081
        %v2084 = vmul.f32 %v2053, %v2081
        %v2085 = vadd.f32 %v2078, %v2083
        %v2086 = vadd.f32 %v2079, %v2084
        %2087 = vrot.lane.b32.xlu0 %v2069, 32
        %v2088 = vpop.permute.xlu0 %2087
        %v2090 = vmul.f32 %v2058, %v2088
        %v2091 = vmul.f32 %v2063, %v2088
        %v2092 = vadd.f32 %v2085, %v2090
        %v2093 = vadd.f32 %v2086, %v2091
        %v2094 = vlaneseq
        %v2095 = vshrl.u32 %v2094, 7
        %v2096 = vsub.s32 3, %v2095
        %v2097 = vrot.slane %v1016, %v2096
        %v2098 = vmul.f32 %v2097, %v1878
        %v2099 = vmul.f32 %v2097, %v1883
        %v2100 = vadd.f32 %v2092, %v2098
        %v2101 = vadd.f32 %v2093, %v2099
        %v2102 = vld [vmem:[#allocation23] sm:$0xff]
        %v2103 = vld [vmem:[#allocation23 + $0x8] sm:$0xff]
        %v2104 = vld [vmem:[#allocation23 + $0x10] sm:$0xff]
        %v2105 = vld [vmem:[#allocation23 + $0x18] sm:$0xff]
        %v2106 = vld [vmem:[#allocation25] sm:$0xff]
        %v2107 = vld [vmem:[#allocation25 + $0x8] sm:$0xff]
        %v2108 = vld [vmem:[#allocation25 + $0x10] sm:$0xff]
        %v2109 = vld [vmem:[#allocation25 + $0x18] sm:$0xff]
        %v2110 = vlaneseq
        %v2111 = vshrl.u32 %v2110, 7
        %v2112 = vsub.s32 4, %v2111
        %v2113 = vrot.slane %v1016, %v2112
        %v2115 = vsel %vm1035, %v2100, 0
        %v2118 = vsel %vm1035, %v2101, 0
        %2120 = vmatprep.subr.mxu0 0.0
        %2121 = vmatpush1.msra.mxu0 0.0
        %2122 = vmatprep.subr.mxu0 0.0
        %2123 = vmatpush1.msra.mxu0 0.0
        %2124 = vmatprep.subr.mxu0 0.0
        %2125 = vmatpush1.msra.mxu0 0.0
        %2126 = vmatprep.subr.mxu0 0.0
        %2127 = vmatpush1.msra.mxu0 0.0
        %2128 = vmatprep.subr.mxu0 0.0
        %2129 = vmatpush1.msra.mxu0 0.0
        %2130 = vmatprep.subr.mxu0 0.0
        %2131 = vmatpush1.msra.mxu0 0.0
        %2132 = vmatprep.subr.mxu0 0.0
        %2133 = vmatpush1.msra.mxu0 0.0
        %2134 = vmatprep.subr.mxu0 0.0
        %2135 = vmatpush1.msra.mxu0 0.0
        %2136 = vmatprep.subr.mxu0 0.0
        %2137 = vmatpush1.msra.mxu0 0.0
        %2138 = vmatprep.subr.mxu0 0.0
        %2139 = vmatpush1.msra.mxu0 0.0
        %2140 = vmatprep.subr.mxu0 0.0
        %2141 = vmatpush1.msra.mxu0 0.0
        %2142 = vmatprep.subr.mxu0 0.0
        %2143 = vmatpush1.msra.mxu0 0.0
        %2144 = vmatprep.subr.mxu0 0.0
        %2145 = vmatpush1.msra.mxu0 %v2105
        %2146 = vmatprep.subr.mxu0 0.0
        %2147 = vmatpush1.msra.mxu0 %v2104
        %2148 = vmatprep.subr.mxu0 0.0
        %2149 = vmatpush1.msra.mxu0 %v2103
        %2150 = vmatprep.subr.mxu0 0.0
        %2151 = vmatpush1.msra.mxu0 %v2102
        %2152 = vmatprep.subr.mxu0 0.0
        %2153 = vmatpush2.msra.mxu0 0.0
        %2154 = vmatprep.subr.mxu0 0.0
        %2155 = vmatpush2.msra.mxu0 0.0
        %2156 = vmatprep.subr.mxu0 0.0
        %2157 = vmatpush2.msra.mxu0 0.0
        %2158 = vmatprep.subr.mxu0 0.0
        %2159 = vmatpush2.msra.mxu0 0.0
        %2160 = vmatprep.subr.mxu0 0.0
        %2161 = vmatpush2.msra.mxu0 0.0
        %2162 = vmatprep.subr.mxu0 0.0
        %2163 = vmatpush2.msra.mxu0 0.0
        %2164 = vmatprep.subr.mxu0 0.0
        %2165 = vmatpush2.msra.mxu0 0.0
        %2166 = vmatprep.subr.mxu0 0.0
        %2167 = vmatpush2.msra.mxu0 0.0
        %2168 = vmatprep.subr.mxu0 0.0
        %2169 = vmatpush2.msra.mxu0 0.0
        %2170 = vmatprep.subr.mxu0 0.0
        %2171 = vmatpush2.msra.mxu0 0.0
        %2172 = vmatprep.subr.mxu0 0.0
        %2173 = vmatpush2.msra.mxu0 0.0
        %2174 = vmatprep.subr.mxu0 0.0
        %2175 = vmatpush2.msra.mxu0 0.0
        %2176 = vmatprep.subr.mxu0 0.0
        %2177 = vmatpush2.msra.mxu0 0.0
        %2178 = vmatprep.subr.mxu0 0.0
        %2179 = vmatpush2.msra.mxu0 0.0
        %2180 = vmatprep.subr.mxu0 0.0
        %2181 = vmatpush2.msra.mxu0 0.0
        %2182 = vmatprep.subr.mxu0 0.0
        %2183 = vmatpush2.msra.mxu0 0.0
        %2184 = vmatprep.mubr.f32.mxu0 0.0
        %2185 = vmatmul.mubr.f32.gmra.mxu0 %v2115
        %v2186 = vpop.f32.mrf.mxu0
        %v2187 = vadd.f32 %v2113, %v2186
        %v2188 = vpop.f32.mrf.mxu0
        %2189 = vmatprep.mubr.f32.mxu0 0.0
        %2190 = vmatmul.mubr.f32.gmra.mxu0 %v2118
        %v2191 = vpop.f32.mrf.mxu0
        %v2192 = vadd.f32 %v2113, %v2191
        %v2193 = vpop.f32.mrf.mxu0
        %2194 = vdwg.mxu0
        %v2195 = vmax.f32 %v2187, 0.0
        %v2196 = vmax.f32 %v2192, 0.0
        %v2197 = vlaneseq
        %v2198 = vshrl.u32 %v2197, 7
        %v2199 = vsub.s32 5, %v2198
        %v2200 = vrot.slane %v1016, %v2199
        %v2202 = vsel %vm1035, %v2195, 0
        %v2205 = vsel %vm1035, %v2196, 0
        %2207 = vmatprep.subr.mxu0 0.0
        %2208 = vmatpush1.msra.mxu0 0.0
        %2209 = vmatprep.subr.mxu0 0.0
        %2210 = vmatpush1.msra.mxu0 0.0
        %2211 = vmatprep.subr.mxu0 0.0
        %2212 = vmatpush1.msra.mxu0 0.0
        %2213 = vmatprep.subr.mxu0 0.0
        %2214 = vmatpush1.msra.mxu0 0.0
        %2215 = vmatprep.subr.mxu0 0.0
        %2216 = vmatpush1.msra.mxu0 0.0
        %2217 = vmatprep.subr.mxu0 0.0
        %2218 = vmatpush1.msra.mxu0 0.0
        %2219 = vmatprep.subr.mxu0 0.0
        %2220 = vmatpush1.msra.mxu0 0.0
        %2221 = vmatprep.subr.mxu0 0.0
        %2222 = vmatpush1.msra.mxu0 0.0
        %2223 = vmatprep.subr.mxu0 0.0
        %2224 = vmatpush1.msra.mxu0 0.0
        %2225 = vmatprep.subr.mxu0 0.0
        %2226 = vmatpush1.msra.mxu0 0.0
        %2227 = vmatprep.subr.mxu0 0.0
        %2228 = vmatpush1.msra.mxu0 0.0
        %2229 = vmatprep.subr.mxu0 0.0
        %2230 = vmatpush1.msra.mxu0 0.0
        %2231 = vmatprep.subr.mxu0 0.0
        %2232 = vmatpush1.msra.mxu0 %v2109
        %2233 = vmatprep.subr.mxu0 0.0
        %2234 = vmatpush1.msra.mxu0 %v2108
        %2235 = vmatprep.subr.mxu0 0.0
        %2236 = vmatpush1.msra.mxu0 %v2107
        %2237 = vmatprep.subr.mxu0 0.0
        %2238 = vmatpush1.msra.mxu0 %v2106
        %2239 = vmatprep.subr.mxu0 0.0
        %2240 = vmatpush2.msra.mxu0 0.0
        %2241 = vmatprep.subr.mxu0 0.0
        %2242 = vmatpush2.msra.mxu0 0.0
        %2243 = vmatprep.subr.mxu0 0.0
        %2244 = vmatpush2.msra.mxu0 0.0
        %2245 = vmatprep.subr.mxu0 0.0
        %2246 = vmatpush2.msra.mxu0 0.0
        %2247 = vmatprep.subr.mxu0 0.0
        %2248 = vmatpush2.msra.mxu0 0.0
        %2249 = vmatprep.subr.mxu0 0.0
        %2250 = vmatpush2.msra.mxu0 0.0
        %2251 = vmatprep.subr.mxu0 0.0
        %2252 = vmatpush2.msra.mxu0 0.0
        %2253 = vmatprep.subr.mxu0 0.0
        %2254 = vmatpush2.msra.mxu0 0.0
        %2255 = vmatprep.subr.mxu0 0.0
        %2256 = vmatpush2.msra.mxu0 0.0
        %2257 = vmatprep.subr.mxu0 0.0
        %2258 = vmatpush2.msra.mxu0 0.0
        %2259 = vmatprep.subr.mxu0 0.0
        %2260 = vmatpush2.msra.mxu0 0.0
        %2261 = vmatprep.subr.mxu0 0.0
        %2262 = vmatpush2.msra.mxu0 0.0
        %2263 = vmatprep.subr.mxu0 0.0
        %2264 = vmatpush2.msra.mxu0 0.0
        %2265 = vmatprep.subr.mxu0 0.0
        %2266 = vmatpush2.msra.mxu0 0.0
        %2267 = vmatprep.subr.mxu0 0.0
        %2268 = vmatpush2.msra.mxu0 0.0
        %2269 = vmatprep.subr.mxu0 0.0
        %2270 = vmatpush2.msra.mxu0 0.0
        %2271 = vmatprep.mubr.f32.mxu0 0.0
        %2272 = vmatmul.mubr.f32.gmra.mxu0 %v2202
        %v2273 = vpop.f32.mrf.mxu0
        %v2274 = vadd.f32 %v2200, %v2273
        %v2275 = vpop.f32.mrf.mxu0
        %2276 = vmatprep.mubr.f32.mxu0 0.0
        %2277 = vmatmul.mubr.f32.gmra.mxu0 %v2205
        %v2278 = vpop.f32.mrf.mxu0
        %v2279 = vadd.f32 %v2200, %v2278
        %v2280 = vpop.f32.mrf.mxu0
        %2281 = vdwg.mxu0
        %v2282 = vsel %vm1035, %v2274, 0.0
        %2283 = vadd.xlane.f32.xlu0 %v2282
        %v2284 = vpop.xlane.xlu0 %2283
        %v2285 = vsel %vm1035, %v2279, 0.0
        %2286 = vadd.xlane.f32.xlu0 %v2285
        %v2287 = vpop.xlane.xlu0 %2286
        %v2288 = vmul.f32 %v2284, %v1659
        %v2289 = vmul.f32 %v2287, %v1659
        %v2290 = vsub.f32 %v2274, %v2288
        %v2291 = vsub.f32 %v2279, %v2289
        %v2292 = vmul.f32 %v2290, %v2290
        %v2293 = vmul.f32 %v2291, %v2291
        %v2294 = vsel %vm1035, %v2292, 0.0
        %2295 = vadd.xlane.f32.xlu0 %v2294
        %v2296 = vpop.xlane.xlu0 %2295
        %v2297 = vsel %vm1035, %v2293, 0.0
        %2298 = vadd.xlane.f32.xlu0 %v2297
        %v2299 = vpop.xlane.xlu0 %2298
        %v2300 = vmul.f32 %v2296, %v1659
        %v2301 = vmul.f32 %v2299, %v1659
        %v2302 = vadd.f32 %v2300, 1e-05
        %v2303 = vadd.f32 %v2301, 1e-05
        %v2304 = vrsqrt.pop %v2302
        %v2305 = vrsqrt.pop %v2303
        %v2306 = vmul.f32 %v2290, %v2304
        %v2307 = vmul.f32 %v2291, %v2305
        %v2308 = vlaneseq
        %v2309 = vshrl.u32 %v2308, 7
        %v2310 = vsub.s32 6, %v2309
        %v2311 = vrot.slane %v1016, %v2310
        %v2312 = vmul.f32 %v2306, %v2311
        %v2313 = vmul.f32 %v2307, %v2311
        %v2314 = vlaneseq
        %v2315 = vshrl.u32 %v2314, 7
        %v2316 = vsub.s32 7, %v2315
        %v2317 = vrot.slane %v1016, %v2316
        %v2318 = vadd.f32 %v2312, %v2317
        %v2319 = vadd.f32 %v2313, %v2317
        %v2320 = vadd.f32 %v2318, %v1878
        %v2321 = vadd.f32 %v2319, %v1883
        %v2322 = vld [vmem:[#allocation26] sm:$0xff]
        %v2323 = vld [vmem:[#allocation26 + $0x8] sm:$0xff]
        %v2324 = vld [vmem:[#allocation26 + $0x10] sm:$0xff]
        %v2325 = vld [vmem:[#allocation26 + $0x18] sm:$0xff]
        %v2326 = vld [vmem:[#allocation28] sm:$0x1]
        %v2328 = vlaneseq
        %v2329 = vshrl.u32 %v2328, 7
        %v2330 = vsub.s32 0, %v2329
        %v2331 = vrot.slane %v2326, %v2330
        %v2334 = vsel %vm1035, %v1692, 0
        %v2337 = vsel %vm1035, %v1693, 0
        %2339 = vmatprep.subr.mxu0 0.0
        %2340 = vmatpush1.msra.mxu0 0.0
        %2341 = vmatprep.subr.mxu0 0.0
        %2342 = vmatpush1.msra.mxu0 0.0
        %2343 = vmatprep.subr.mxu0 0.0
        %2344 = vmatpush1.msra.mxu0 0.0
        %2345 = vmatprep.subr.mxu0 0.0
        %2346 = vmatpush1.msra.mxu0 0.0
        %2347 = vmatprep.subr.mxu0 0.0
        %2348 = vmatpush1.msra.mxu0 0.0
        %2349 = vmatprep.subr.mxu0 0.0
        %2350 = vmatpush1.msra.mxu0 0.0
        %2351 = vmatprep.subr.mxu0 0.0
        %2352 = vmatpush1.msra.mxu0 0.0
        %2353 = vmatprep.subr.mxu0 0.0
        %2354 = vmatpush1.msra.mxu0 0.0
        %2355 = vmatprep.subr.mxu0 0.0
        %2356 = vmatpush1.msra.mxu0 0.0
        %2357 = vmatprep.subr.mxu0 0.0
        %2358 = vmatpush1.msra.mxu0 0.0
        %2359 = vmatprep.subr.mxu0 0.0
        %2360 = vmatpush1.msra.mxu0 0.0
        %2361 = vmatprep.subr.mxu0 0.0
        %2362 = vmatpush1.msra.mxu0 0.0
        %2363 = vmatprep.subr.mxu0 0.0
        %2364 = vmatpush1.msra.mxu0 %v2325
        %2365 = vmatprep.subr.mxu0 0.0
        %2366 = vmatpush1.msra.mxu0 %v2324
        %2367 = vmatprep.subr.mxu0 0.0
        %2368 = vmatpush1.msra.mxu0 %v2323
        %2369 = vmatprep.subr.mxu0 0.0
        %2370 = vmatpush1.msra.mxu0 %v2322
        %2371 = vmatprep.subr.mxu0 0.0
        %2372 = vmatpush2.msra.mxu0 0.0
        %2373 = vmatprep.subr.mxu0 0.0
        %2374 = vmatpush2.msra.mxu0 0.0
        %2375 = vmatprep.subr.mxu0 0.0
        %2376 = vmatpush2.msra.mxu0 0.0
        %2377 = vmatprep.subr.mxu0 0.0
        %2378 = vmatpush2.msra.mxu0 0.0
        %2379 = vmatprep.subr.mxu0 0.0
        %2380 = vmatpush2.msra.mxu0 0.0
        %2381 = vmatprep.subr.mxu0 0.0
        %2382 = vmatpush2.msra.mxu0 0.0
        %2383 = vmatprep.subr.mxu0 0.0
        %2384 = vmatpush2.msra.mxu0 0.0
        %2385 = vmatprep.subr.mxu0 0.0
        %2386 = vmatpush2.msra.mxu0 0.0
        %2387 = vmatprep.subr.mxu0 0.0
        %2388 = vmatpush2.msra.mxu0 0.0
        %2389 = vmatprep.subr.mxu0 0.0
        %2390 = vmatpush2.msra.mxu0 0.0
        %2391 = vmatprep.subr.mxu0 0.0
        %2392 = vmatpush2.msra.mxu0 0.0
        %2393 = vmatprep.subr.mxu0 0.0
        %2394 = vmatpush2.msra.mxu0 0.0
        %2395 = vmatprep.subr.mxu0 0.0
        %2396 = vmatpush2.msra.mxu0 0.0
        %2397 = vmatprep.subr.mxu0 0.0
        %2398 = vmatpush2.msra.mxu0 0.0
        %2399 = vmatprep.subr.mxu0 0.0
        %2400 = vmatpush2.msra.mxu0 0.0
        %2401 = vmatprep.subr.mxu0 0.0
        %2402 = vmatpush2.msra.mxu0 0.0
        %2403 = vmatprep.mubr.f32.mxu0 0.0
        %2404 = vmatmul.mubr.f32.gmra.mxu0 %v2334
        %v2405 = vpop.f32.mrf.mxu0
        %v2406 = vadd.f32 %v2331, %v2405
        %v2407 = vpop.f32.mrf.mxu0
        %2408 = vmatprep.mubr.f32.mxu0 0.0
        %2409 = vmatmul.mubr.f32.gmra.mxu0 %v2337
        %v2410 = vpop.f32.mrf.mxu0
        %v2411 = vadd.f32 %v2331, %v2410
        %v2412 = vpop.f32.mrf.mxu0
        %2413 = vdwg.mxu0
        %v2414 = vmul.f32 %v2406, %v2406
        %v2415 = vmul.f32 %v2411, %v2411
        %vm2416 = vcmask 523264
        %v2418 = vsel %vm2416, %v2414, 0
        %v2421 = vsel %vm2416, %v2415, 0
        %2423 = vmatprep.subr.mxu0 0.0
        %2424 = vmatpush1.msra.mxu0 0.0
        %2425 = vmatprep.subr.mxu0 0.0
        %2426 = vmatpush1.msra.mxu0 0.0
        %2427 = vmatprep.subr.mxu0 0.0
        %2428 = vmatpush1.msra.mxu0 0.0
        %2429 = vmatprep.subr.mxu0 0.0
        %2430 = vmatpush1.msra.mxu0 0.0
        %2431 = vmatprep.subr.mxu0 0.0
        %2432 = vmatpush1.msra.mxu0 0.0
        %2433 = vmatprep.subr.mxu0 0.0
        %2434 = vmatpush1.msra.mxu0 0.0
        %2435 = vmatprep.subr.mxu0 0.0
        %2436 = vmatpush1.msra.mxu0 0.0
        %2437 = vmatprep.subr.mxu0 0.0
        %2438 = vmatpush1.msra.mxu0 0.0
        %2439 = vmatprep.subr.mxu0 0.0
        %2440 = vmatpush1.msra.mxu0 %v1029
        %2441 = vmatprep.subr.mxu0 0.0
        %2442 = vmatpush1.msra.mxu0 %v1028
        %2443 = vmatprep.subr.mxu0 0.0
        %2444 = vmatpush1.msra.mxu0 %v1027
        %2445 = vmatprep.subr.mxu0 0.0
        %2446 = vmatpush1.msra.mxu0 %v1026
        %2447 = vmatprep.subr.mxu0 0.0
        %2448 = vmatpush1.msra.mxu0 %v1025
        %2449 = vmatprep.subr.mxu0 0.0
        %2450 = vmatpush1.msra.mxu0 %v1024
        %2451 = vmatprep.subr.mxu0 0.0
        %2452 = vmatpush1.msra.mxu0 %v1023
        %2453 = vmatprep.subr.mxu0 0.0
        %2454 = vmatpush1.msra.mxu0 %v1022
        %2455 = vmatprep.subr.mxu0 0.0
        %2456 = vmatpush2.msra.mxu0 0.0
        %2457 = vmatprep.subr.mxu0 0.0
        %2458 = vmatpush2.msra.mxu0 0.0
        %2459 = vmatprep.subr.mxu0 0.0
        %2460 = vmatpush2.msra.mxu0 0.0
        %2461 = vmatprep.subr.mxu0 0.0
        %2462 = vmatpush2.msra.mxu0 0.0
        %2463 = vmatprep.subr.mxu0 0.0
        %2464 = vmatpush2.msra.mxu0 0.0
        %2465 = vmatprep.subr.mxu0 0.0
        %2466 = vmatpush2.msra.mxu0 0.0
        %2467 = vmatprep.subr.mxu0 0.0
        %2468 = vmatpush2.msra.mxu0 0.0
        %2469 = vmatprep.subr.mxu0 0.0
        %2470 = vmatpush2.msra.mxu0 0.0
        %2471 = vmatprep.subr.mxu0 0.0
        %2472 = vmatpush2.msra.mxu0 0.0
        %2473 = vmatprep.subr.mxu0 0.0
        %2474 = vmatpush2.msra.mxu0 0.0
        %2475 = vmatprep.subr.mxu0 0.0
        %2476 = vmatpush2.msra.mxu0 0.0
        %2477 = vmatprep.subr.mxu0 0.0
        %2478 = vmatpush2.msra.mxu0 0.0
        %2479 = vmatprep.subr.mxu0 0.0
        %2480 = vmatpush2.msra.mxu0 0.0
        %2481 = vmatprep.subr.mxu0 0.0
        %2482 = vmatpush2.msra.mxu0 0.0
        %2483 = vmatprep.subr.mxu0 0.0
        %2484 = vmatpush2.msra.mxu0 0.0
        %2485 = vmatprep.subr.mxu0 0.0
        %2486 = vmatpush2.msra.mxu0 0.0
        %2487 = vmatprep.mubr.f32.mxu0 0.0
        %2488 = vmatmul.mubr.f32.gmra.mxu0 %v2418
        %v2489 = vpop.f32.mrf.mxu0
        %v2490 = vadd.f32 0.0, %v2489
        %v2491 = vpop.f32.mrf.mxu0
        %2492 = vmatprep.mubr.f32.mxu0 0.0
        %2493 = vmatmul.mubr.f32.gmra.mxu0 %v2421
        %v2494 = vpop.f32.mrf.mxu0
        %v2495 = vadd.f32 0.0, %v2494
        %v2496 = vpop.f32.mrf.mxu0
        %2497 = vdwg.mxu0
        %v2498 = vrsqrt.pop %v2490
        %v2499 = vmul.f32 %v2490, %v2498
        %vm2500 = vcmp.eq.f32.partialorder %v2490, inf
        %v2501 = vsel %vm2500, %v2490, %v2499
        %vm2502 = vcmp.eq.f32.partialorder %v2490, 0.0
        %v2503 = vand.u32 %v2490, 2147483648
        %v2504 = vsel %vm2502, %v2503, %v2501
        %v2505 = vrsqrt.pop %v2495
        %v2506 = vmul.f32 %v2495, %v2505
        %vm2507 = vcmp.eq.f32.partialorder %v2495, inf
        %v2508 = vsel %vm2507, %v2495, %v2506
        %vm2509 = vcmp.eq.f32.partialorder %v2495, 0.0
        %v2510 = vand.u32 %v2495, 2147483648
        %v2511 = vsel %vm2509, %v2510, %v2508
        %v2512 = vmax.f32 %v2504, 1e-12
        %v2513 = vmax.f32 %v2511, 1e-12
        %v2514 = vrcp.pop %v2512
        %v2515 = vmul.f32 %v2406, %v2514
        %v2516 = vrcp.pop %v2513
        %v2517 = vmul.f32 %v2411, %v2516
        %v2518 = vstv %s1001
        %v2519 = vmul.f32 %v2515, %v2518
        %v2520 = vmul.f32 %v2517, %v2518
        %v2521 = vsel %vm1035, %v2320, 1.0
        %v2522 = vsel %vm1035, %v2321, 1.0
        %2525 = vrot.lane.b32.xlu0 %v2519, 96
        %v2526 = vpop.permute.xlu0 %2525
        %2527 = vrot.lane.b32.xlu0 %v2520, 96
        %v2528 = vpop.permute.xlu0 %2527
        %2531 = vxpose.xlu0.b32.start [1/16] %v2526, 128
        %2532 = vxpose.xlu0.b32.cont [2/16] %v2528, 128
        %2533 = vxpose.xlu0.b32.cont [3/16] 0.0, 128
        %2534 = vxpose.xlu0.b32.cont [4/16] 0.0, 128
        %2535 = vxpose.xlu0.b32.cont [5/16] 0.0, 128
        %2536 = vxpose.xlu0.b32.cont [6/16] 0.0, 128
        %2537 = vxpose.xlu0.b32.cont [7/16] 0.0, 128
        %2538 = vxpose.xlu0.b32.cont [8/16] 0.0, 128
        %2539 = vxpose.xlu0.b32.cont [9/16] 0.0, 128
        %2540 = vxpose.xlu0.b32.cont [10/16] 0.0, 128
        %2541 = vxpose.xlu0.b32.cont [11/16] 0.0, 128
        %2542 = vxpose.xlu0.b32.cont [12/16] 0.0, 128
        %2543 = vxpose.xlu0.b32.cont [13/16] 0.0, 128
        %2544 = vxpose.xlu0.b32.cont [14/16] 0.0, 128
        %2545 = vxpose.xlu0.b32.cont [15/16] 0.0, 128
        %2546 = vxpose.xlu0.b32.end [16/16] 0.0, 128
        %v2547 = vpop.trf.xlu0
        %v2548 = vpop.trf.xlu0
        %v2549 = vpop.trf.xlu0
        %v2550 = vpop.trf.xlu0
        %v2551 = vpop.trf.xlu0
        %v2552 = vpop.trf.xlu0
        %v2553 = vpop.trf.xlu0
        %v2554 = vpop.trf.xlu0
        %v2555 = vpop.trf.xlu0
        %v2556 = vpop.trf.xlu0
        %v2557 = vpop.trf.xlu0
        %v2558 = vpop.trf.xlu0
        %v2559 = vpop.trf.xlu0
        %v2560 = vpop.trf.xlu0
        %v2561 = vpop.trf.xlu0
        %v2562 = vpop.trf.xlu0
        %v2564 = vsel %vm1307, %v2547, 0
        %v2567 = vsel %vm1307, %v2548, 0
        %v2570 = vsel %vm1307, %v2549, 0
        %v2573 = vsel %vm1307, %v2550, 0
        %2575 = vmatprep.subr.mxu0 0.0
        %2576 = vmatpush1.msra.mxu0 0.0
        %2577 = vmatprep.subr.mxu0 0.0
        %2578 = vmatpush1.msra.mxu0 0.0
        %2579 = vmatprep.subr.mxu0 0.0
        %2580 = vmatpush1.msra.mxu0 0.0
        %2581 = vmatprep.subr.mxu0 0.0
        %2582 = vmatpush1.msra.mxu0 0.0
        %2583 = vmatprep.subr.mxu0 0.0
        %2584 = vmatpush1.msra.mxu0 0.0
        %2585 = vmatprep.subr.mxu0 0.0
        %2586 = vmatpush1.msra.mxu0 0.0
        %2587 = vmatprep.subr.mxu0 0.0
        %2588 = vmatpush1.msra.mxu0 0.0
        %2589 = vmatprep.subr.mxu0 0.0
        %2590 = vmatpush1.msra.mxu0 0.0
        %2591 = vmatprep.subr.mxu0 0.0
        %2592 = vmatpush1.msra.mxu0 0.0
        %2593 = vmatprep.subr.mxu0 0.0
        %2594 = vmatpush1.msra.mxu0 0.0
        %2595 = vmatprep.subr.mxu0 0.0
        %2596 = vmatpush1.msra.mxu0 0.0
        %2597 = vmatprep.subr.mxu0 0.0
        %2598 = vmatpush1.msra.mxu0 0.0
        %2599 = vmatprep.subr.mxu0 0.0
        %2600 = vmatpush1.msra.mxu0 0.0
        %2601 = vmatprep.subr.mxu0 0.0
        %2602 = vmatpush1.msra.mxu0 0.0
        %2603 = vmatprep.subr.mxu0 0.0
        %2604 = vmatpush1.msra.mxu0 %v2522
        %2605 = vmatprep.subr.mxu0 0.0
        %2606 = vmatpush1.msra.mxu0 %v2521
        %2607 = vmatprep.subr.mxu0 0.0
        %2608 = vmatpush2.msra.mxu0 0.0
        %2609 = vmatprep.subr.mxu0 0.0
        %2610 = vmatpush2.msra.mxu0 0.0
        %2611 = vmatprep.subr.mxu0 0.0
        %2612 = vmatpush2.msra.mxu0 0.0
        %2613 = vmatprep.subr.mxu0 0.0
        %2614 = vmatpush2.msra.mxu0 0.0
        %2615 = vmatprep.subr.mxu0 0.0
        %2616 = vmatpush2.msra.mxu0 0.0
        %2617 = vmatprep.subr.mxu0 0.0
        %2618 = vmatpush2.msra.mxu0 0.0
        %2619 = vmatprep.subr.mxu0 0.0
        %2620 = vmatpush2.msra.mxu0 0.0
        %2621 = vmatprep.subr.mxu0 0.0
        %2622 = vmatpush2.msra.mxu0 0.0
        %2623 = vmatprep.subr.mxu0 0.0
        %2624 = vmatpush2.msra.mxu0 0.0
        %2625 = vmatprep.subr.mxu0 0.0
        %2626 = vmatpush2.msra.mxu0 0.0
        %2627 = vmatprep.subr.mxu0 0.0
        %2628 = vmatpush2.msra.mxu0 0.0
        %2629 = vmatprep.subr.mxu0 0.0
        %2630 = vmatpush2.msra.mxu0 0.0
        %2631 = vmatprep.subr.mxu0 0.0
        %2632 = vmatpush2.msra.mxu0 0.0
        %2633 = vmatprep.subr.mxu0 0.0
        %2634 = vmatpush2.msra.mxu0 0.0
        %2635 = vmatprep.subr.mxu0 0.0
        %2636 = vmatpush2.msra.mxu0 0.0
        %2637 = vmatprep.subr.mxu0 0.0
        %2638 = vmatpush2.msra.mxu0 0.0
        %2639 = vmatprep.mubr.f32.mxu0 0.0
        %2640 = vmatmul.mubr.f32.gmra.mxu0 %v2564
        %v2641 = vpop.f32.mrf.mxu0
        %v2642 = vadd.f32 0.0, %v2641
        %v2643 = vpop.f32.mrf.mxu0
        %2644 = vmatprep.mubr.f32.mxu0 0.0
        %2645 = vmatmul.mubr.f32.gmra.mxu0 %v2567
        %v2646 = vpop.f32.mrf.mxu0
        %v2647 = vadd.f32 0.0, %v2646
        %v2648 = vpop.f32.mrf.mxu0
        %2649 = vmatprep.mubr.f32.mxu0 0.0
        %2650 = vmatmul.mubr.f32.gmra.mxu0 %v2570
        %v2651 = vpop.f32.mrf.mxu0
        %v2652 = vadd.f32 0.0, %v2651
        %v2653 = vpop.f32.mrf.mxu0
        %2654 = vmatprep.mubr.f32.mxu0 0.0
        %2655 = vmatmul.mubr.f32.gmra.mxu0 %v2573
        %v2656 = vpop.f32.mrf.mxu0
        %v2657 = vadd.f32 0.0, %v2656
        %v2658 = vpop.f32.mrf.mxu0
        %2659 = vdwg.mxu0
        %v2660 = vmul.f32 %v2642, %v1018
        %v2661 = vmul.f32 %v2647, %v1019
        %v2662 = vmul.f32 %v2652, %v1020
        %v2663 = vmul.f32 %v2657, %v1021
        %2665 = vset.pattern.permute.xlu0 32
        %2666 = vperm.xlu0 %2665, %v2642
        %v2667 = vpop.permute.xlu0 %2666
        %2670 = vset.pattern.permute.xlu0 32
        %2671 = vperm.xlu0 %2670, %v2647
        %v2672 = vpop.permute.xlu0 %2671
        %2675 = vset.pattern.permute.xlu0 32
        %2676 = vperm.xlu0 %2675, %v2652
        %v2677 = vpop.permute.xlu0 %2676
        %2680 = vset.pattern.permute.xlu0 32
        %2681 = vperm.xlu0 %2680, %v2657
        %v2682 = vpop.permute.xlu0 %2681
        %v2684 = vmul.f32 %v1018, %v2667
        %v2685 = vmul.f32 %v1019, %v2672
        %v2686 = vmul.f32 %v1020, %v2677
        %v2687 = vmul.f32 %v1021, %v2682
        %2692 = vrot.lane.b32.xlu0 %v2684, 32
        %v2693 = vpop.permute.xlu0 %2692
        %2694 = vrot.lane.b32.xlu0 %v2685, 32
        %v2695 = vpop.permute.xlu0 %2694
        %2696 = vrot.lane.b32.xlu0 %v2686, 32
        %v2697 = vpop.permute.xlu0 %2696
        %2698 = vrot.lane.b32.xlu0 %v2687, 32
        %v2699 = vpop.permute.xlu0 %2698
        %v2704 = vsel %vm1035, %v2660, %v2693
        %v2705 = vsel %vm1035, %v2661, %v2695
        %v2706 = vsel %vm1035, %v2662, %v2697
        %v2707 = vsel %vm1035, %v2663, %v2699
        %v2709 = vsel %vm1035, %v2515, 0
        %v2712 = vsel %vm1035, %v2517, 0
        %2714 = vmatprep.subr.mxu0 0.0
        %2715 = vmatpush1.msra.mxu0 0.0
        %2716 = vmatprep.subr.mxu0 0.0
        %2717 = vmatpush1.msra.mxu0 0.0
        %2718 = vmatprep.subr.mxu0 0.0
        %2719 = vmatpush1.msra.mxu0 0.0
        %2720 = vmatprep.subr.mxu0 0.0
        %2721 = vmatpush1.msra.mxu0 0.0
        %2722 = vmatprep.subr.mxu0 0.0
        %2723 = vmatpush1.msra.mxu0 0.0
        %2724 = vmatprep.subr.mxu0 0.0
        %2725 = vmatpush1.msra.mxu0 0.0
        %2726 = vmatprep.subr.mxu0 0.0
        %2727 = vmatpush1.msra.mxu0 0.0
        %2728 = vmatprep.subr.mxu0 0.0
        %2729 = vmatpush1.msra.mxu0 0.0
        %2730 = vmatprep.subr.mxu0 0.0
        %2731 = vmatpush1.msra.mxu0 0.0
        %2732 = vmatprep.subr.mxu0 0.0
        %2733 = vmatpush1.msra.mxu0 0.0
        %2734 = vmatprep.subr.mxu0 0.0
        %2735 = vmatpush1.msra.mxu0 0.0
        %2736 = vmatprep.subr.mxu0 0.0
        %2737 = vmatpush1.msra.mxu0 0.0
        %2738 = vmatprep.subr.mxu0 0.0
        %2739 = vmatpush1.msra.mxu0 %v2707
        %2740 = vmatprep.subr.mxu0 0.0
        %2741 = vmatpush1.msra.mxu0 %v2706
        %2742 = vmatprep.subr.mxu0 0.0
        %2743 = vmatpush1.msra.mxu0 %v2705
        %2744 = vmatprep.subr.mxu0 0.0
        %2745 = vmatpush1.msra.mxu0 %v2704
        %2746 = vmatprep.subr.mxu0 0.0
        %2747 = vmatpush2.msra.mxu0 0.0
        %2748 = vmatprep.subr.mxu0 0.0
        %2749 = vmatpush2.msra.mxu0 0.0
        %2750 = vmatprep.subr.mxu0 0.0
        %2751 = vmatpush2.msra.mxu0 0.0
        %2752 = vmatprep.subr.mxu0 0.0
        %2753 = vmatpush2.msra.mxu0 0.0
        %2754 = vmatprep.subr.mxu0 0.0
        %2755 = vmatpush2.msra.mxu0 0.0
        %2756 = vmatprep.subr.mxu0 0.0
        %2757 = vmatpush2.msra.mxu0 0.0
        %2758 = vmatprep.subr.mxu0 0.0
        %2759 = vmatpush2.msra.mxu0 0.0
        %2760 = vmatprep.subr.mxu0 0.0
        %2761 = vmatpush2.msra.mxu0 0.0
        %2762 = vmatprep.subr.mxu0 0.0
        %2763 = vmatpush2.msra.mxu0 0.0
        %2764 = vmatprep.subr.mxu0 0.0
        %2765 = vmatpush2.msra.mxu0 0.0
        %2766 = vmatprep.subr.mxu0 0.0
        %2767 = vmatpush2.msra.mxu0 0.0
        %2768 = vmatprep.subr.mxu0 0.0
        %2769 = vmatpush2.msra.mxu0 0.0
        %2770 = vmatprep.subr.mxu0 0.0
        %2771 = vmatpush2.msra.mxu0 0.0
        %2772 = vmatprep.subr.mxu0 0.0
        %2773 = vmatpush2.msra.mxu0 0.0
        %2774 = vmatprep.subr.mxu0 0.0
        %2775 = vmatpush2.msra.mxu0 0.0
        %2776 = vmatprep.subr.mxu0 0.0
        %2777 = vmatpush2.msra.mxu0 0.0
        %2778 = vmatprep.mubr.f32.mxu0 0.0
        %2779 = vmatmul.mubr.f32.gmra.mxu0 %v2709
        %v2780 = vpop.f32.mrf.mxu0
        %v2781 = vadd.f32 0.0, %v2780
        %v2782 = vpop.f32.mrf.mxu0
        %2783 = vmatprep.mubr.f32.mxu0 0.0
        %2784 = vmatmul.mubr.f32.gmra.mxu0 %v2712
        %v2785 = vpop.f32.mrf.mxu0
        %v2786 = vadd.f32 0.0, %v2785
        %v2787 = vpop.f32.mrf.mxu0
        %2788 = vdwg.mxu0
        %v2789 = vsel %vm1035, %v2320, 0.0
        %v2790 = vsel %vm1035, %v2321, 0.0
        %v2791 = vadd.f32 %v2789, %v2790
        %v2792 = vrot.slane %v2791, 4
        %v2793 = vadd.f32 %v2791, %v2792
        %v2794 = vrot.slane %v2793, 2
        %v2795 = vadd.f32 %v2793, %v2794
        %v2796 = vrot.slane %v2795, 1
        %v2797 = vadd.f32 %v2795, %v2796
        %v2798 = vadd.f32 %v2781, %v2797
        %v2799 = vadd.f32 %v2786, %v2797
        %v2800 = vmul.f32 %v2320, 16.0
        %v2801 = vmul.f32 %v2321, 16.0
        %v2802 = vadd.f32 %v2798, %v2800
        %v2803 = vadd.f32 %v2799, %v2801
        %v2804 = vadd.f32 %v2781, 32.0
        %v2805 = vadd.f32 %v2786, 32.0
        %v2806 = vrcp.pop %v2804
        %v2807 = vrcp.pop %v2805
        %2810 = vrot.lane.b32.xlu0 %v2806, 96
        %v2811 = vpop.permute.xlu0 %2810
        %2812 = vrot.lane.b32.xlu0 %v2807, 96
        %v2813 = vpop.permute.xlu0 %2812
        %v2816 = vmul.f32 %v2802, %v2811
        %v2817 = vmul.f32 %v2803, %v2813
        %v2818 = vadd.f32 %v1010, %v2816
        %v2819 = vadd.f32 %v1011, %v2817
        %v2820 = vsel %vm1035, %v2818, 0.0
        %2821 = vadd.xlane.f32.xlu0 %v2820
        %v2822 = vpop.xlane.xlu0 %2821
        %v2823 = vsel %vm1035, %v2819, 0.0
        %2824 = vadd.xlane.f32.xlu0 %v2823
        %v2825 = vpop.xlane.xlu0 %2824
        %v2826 = vmul.f32 %v2822, %v1659
        %v2827 = vmul.f32 %v2825, %v1659
        %v2828 = vsub.f32 %v2818, %v2826
        %v2829 = vsub.f32 %v2819, %v2827
        %v2830 = vmul.f32 %v2828, %v2828
        %v2831 = vmul.f32 %v2829, %v2829
        %v2832 = vsel %vm1035, %v2830, 0.0
        %2833 = vadd.xlane.f32.xlu0 %v2832
        %v2834 = vpop.xlane.xlu0 %2833
        %v2835 = vsel %vm1035, %v2831, 0.0
        %2836 = vadd.xlane.f32.xlu0 %v2835
        %v2837 = vpop.xlane.xlu0 %2836
        %v2838 = vmul.f32 %v2834, %v1659
        %v2839 = vmul.f32 %v2837, %v1659
        %v2840 = vadd.f32 %v2838, 1e-05
        %v2841 = vadd.f32 %v2839, 1e-05
        %v2842 = vrsqrt.pop %v2840
        %v2843 = vrsqrt.pop %v2841
        %v2844 = vmul.f32 %v2828, %v2842
        %v2845 = vmul.f32 %v2829, %v2843
        %v2846 = vlaneseq
        %v2847 = vshrl.u32 %v2846, 7
        %v2848 = vsub.s32 2, %v2847
        %v2849 = vrot.slane %v1017, %v2848
        %v2850 = vmul.f32 %v2844, %v2849
        %v2851 = vmul.f32 %v2845, %v2849
        %v2852 = vlaneseq
        %v2853 = vshrl.u32 %v2852, 7
        %v2854 = vsub.s32 3, %v2853
        %v2855 = vrot.slane %v1017, %v2854
        %v2856 = vadd.f32 %v2850, %v2855
        %v2857 = vadd.f32 %v2851, %v2855
        %v2858 = vld [vmem:[#allocation29] sm:$0xff]
        %v2859 = vld [vmem:[#allocation29 + $0x8] sm:$0xff]
        %v2860 = vld [vmem:[#allocation29 + $0x10] sm:$0xff]
        %v2861 = vld [vmem:[#allocation29 + $0x18] sm:$0xff]
        %v2862 = vld [vmem:[#allocation31] sm:$0xff]
        %v2863 = vld [vmem:[#allocation31 + $0x8] sm:$0xff]
        %v2864 = vld [vmem:[#allocation31 + $0x10] sm:$0xff]
        %v2865 = vld [vmem:[#allocation31 + $0x18] sm:$0xff]
        %v2866 = vlaneseq
        %v2867 = vshrl.u32 %v2866, 7
        %v2868 = vsub.s32 0, %v2867
        %v2869 = vrot.slane %v1017, %v2868
        %v2871 = vsel %vm1035, %v2856, 0
        %v2874 = vsel %vm1035, %v2857, 0
        %2876 = vmatprep.subr.mxu0 0.0
        %2877 = vmatpush1.msra.mxu0 0.0
        %2878 = vmatprep.subr.mxu0 0.0
        %2879 = vmatpush1.msra.mxu0 0.0
        %2880 = vmatprep.subr.mxu0 0.0
        %2881 = vmatpush1.msra.mxu0 0.0
        %2882 = vmatprep.subr.mxu0 0.0
        %2883 = vmatpush1.msra.mxu0 0.0
        %2884 = vmatprep.subr.mxu0 0.0
        %2885 = vmatpush1.msra.mxu0 0.0
        %2886 = vmatprep.subr.mxu0 0.0
        %2887 = vmatpush1.msra.mxu0 0.0
        %2888 = vmatprep.subr.mxu0 0.0
        %2889 = vmatpush1.msra.mxu0 0.0
        %2890 = vmatprep.subr.mxu0 0.0
        %2891 = vmatpush1.msra.mxu0 0.0
        %2892 = vmatprep.subr.mxu0 0.0
        %2893 = vmatpush1.msra.mxu0 0.0
        %2894 = vmatprep.subr.mxu0 0.0
        %2895 = vmatpush1.msra.mxu0 0.0
        %2896 = vmatprep.subr.mxu0 0.0
        %2897 = vmatpush1.msra.mxu0 0.0
        %2898 = vmatprep.subr.mxu0 0.0
        %2899 = vmatpush1.msra.mxu0 0.0
        %2900 = vmatprep.subr.mxu0 0.0
        %2901 = vmatpush1.msra.mxu0 %v2861
        %2902 = vmatprep.subr.mxu0 0.0
        %2903 = vmatpush1.msra.mxu0 %v2860
        %2904 = vmatprep.subr.mxu0 0.0
        %2905 = vmatpush1.msra.mxu0 %v2859
        %2906 = vmatprep.subr.mxu0 0.0
        %2907 = vmatpush1.msra.mxu0 %v2858
        %2908 = vmatprep.subr.mxu0 0.0
        %2909 = vmatpush2.msra.mxu0 0.0
        %2910 = vmatprep.subr.mxu0 0.0
        %2911 = vmatpush2.msra.mxu0 0.0
        %2912 = vmatprep.subr.mxu0 0.0
        %2913 = vmatpush2.msra.mxu0 0.0
        %2914 = vmatprep.subr.mxu0 0.0
        %2915 = vmatpush2.msra.mxu0 0.0
        %2916 = vmatprep.subr.mxu0 0.0
        %2917 = vmatpush2.msra.mxu0 0.0
        %2918 = vmatprep.subr.mxu0 0.0
        %2919 = vmatpush2.msra.mxu0 0.0
        %2920 = vmatprep.subr.mxu0 0.0
        %2921 = vmatpush2.msra.mxu0 0.0
        %2922 = vmatprep.subr.mxu0 0.0
        %2923 = vmatpush2.msra.mxu0 0.0
        %2924 = vmatprep.subr.mxu0 0.0
        %2925 = vmatpush2.msra.mxu0 0.0
        %2926 = vmatprep.subr.mxu0 0.0
        %2927 = vmatpush2.msra.mxu0 0.0
        %2928 = vmatprep.subr.mxu0 0.0
        %2929 = vmatpush2.msra.mxu0 0.0
        %2930 = vmatprep.subr.mxu0 0.0
        %2931 = vmatpush2.msra.mxu0 0.0
        %2932 = vmatprep.subr.mxu0 0.0
        %2933 = vmatpush2.msra.mxu0 0.0
        %2934 = vmatprep.subr.mxu0 0.0
        %2935 = vmatpush2.msra.mxu0 0.0
        %2936 = vmatprep.subr.mxu0 0.0
        %2937 = vmatpush2.msra.mxu0 0.0
        %2938 = vmatprep.subr.mxu0 0.0
        %2939 = vmatpush2.msra.mxu0 0.0
        %2940 = vmatprep.mubr.f32.mxu0 0.0
        %2941 = vmatmul.mubr.f32.gmra.mxu0 %v2871
        %v2942 = vpop.f32.mrf.mxu0
        %v2943 = vadd.f32 %v2869, %v2942
        %v2944 = vpop.f32.mrf.mxu0
        %2945 = vmatprep.mubr.f32.mxu0 0.0
        %2946 = vmatmul.mubr.f32.gmra.mxu0 %v2874
        %v2947 = vpop.f32.mrf.mxu0
        %v2948 = vadd.f32 %v2869, %v2947
        %v2949 = vpop.f32.mrf.mxu0
        %2950 = vdwg.mxu0
        %v2951 = vmax.f32 %v2943, 0.0
        %v2952 = vmax.f32 %v2948, 0.0
        %v2953 = vlaneseq
        %v2954 = vshrl.u32 %v2953, 7
        %v2955 = vsub.s32 1, %v2954
        %v2956 = vrot.slane %v1017, %v2955
        %v2958 = vsel %vm1035, %v2951, 0
        %v2961 = vsel %vm1035, %v2952, 0
        %2963 = vmatprep.subr.mxu0 0.0
        %2964 = vmatpush1.msra.mxu0 0.0
        %2965 = vmatprep.subr.mxu0 0.0
        %2966 = vmatpush1.msra.mxu0 0.0
        %2967 = vmatprep.subr.mxu0 0.0
        %2968 = vmatpush1.msra.mxu0 0.0
        %2969 = vmatprep.subr.mxu0 0.0
        %2970 = vmatpush1.msra.mxu0 0.0
        %2971 = vmatprep.subr.mxu0 0.0
        %2972 = vmatpush1.msra.mxu0 0.0
        %2973 = vmatprep.subr.mxu0 0.0
        %2974 = vmatpush1.msra.mxu0 0.0
        %2975 = vmatprep.subr.mxu0 0.0
        %2976 = vmatpush1.msra.mxu0 0.0
        %2977 = vmatprep.subr.mxu0 0.0
        %2978 = vmatpush1.msra.mxu0 0.0
        %2979 = vmatprep.subr.mxu0 0.0
        %2980 = vmatpush1.msra.mxu0 0.0
        %2981 = vmatprep.subr.mxu0 0.0
        %2982 = vmatpush1.msra.mxu0 0.0
        %2983 = vmatprep.subr.mxu0 0.0
        %2984 = vmatpush1.msra.mxu0 0.0
        %2985 = vmatprep.subr.mxu0 0.0
        %2986 = vmatpush1.msra.mxu0 0.0
        %2987 = vmatprep.subr.mxu0 0.0
        %2988 = vmatpush1.msra.mxu0 %v2865
        %2989 = vmatprep.subr.mxu0 0.0
        %2990 = vmatpush1.msra.mxu0 %v2864
        %2991 = vmatprep.subr.mxu0 0.0
        %2992 = vmatpush1.msra.mxu0 %v2863
        %2993 = vmatprep.subr.mxu0 0.0
        %2994 = vmatpush1.msra.mxu0 %v2862
        %2995 = vmatprep.subr.mxu0 0.0
        %2996 = vmatpush2.msra.mxu0 0.0
        %2997 = vmatprep.subr.mxu0 0.0
        %2998 = vmatpush2.msra.mxu0 0.0
        %2999 = vmatprep.subr.mxu0 0.0
        %3000 = vmatpush2.msra.mxu0 0.0
        %3001 = vmatprep.subr.mxu0 0.0
        %3002 = vmatpush2.msra.mxu0 0.0
        %3003 = vmatprep.subr.mxu0 0.0
        %3004 = vmatpush2.msra.mxu0 0.0
        %3005 = vmatprep.subr.mxu0 0.0
        %3006 = vmatpush2.msra.mxu0 0.0
        %3007 = vmatprep.subr.mxu0 0.0
        %3008 = vmatpush2.msra.mxu0 0.0
        %3009 = vmatprep.subr.mxu0 0.0
        %3010 = vmatpush2.msra.mxu0 0.0
        %3011 = vmatprep.subr.mxu0 0.0
        %3012 = vmatpush2.msra.mxu0 0.0
        %3013 = vmatprep.subr.mxu0 0.0
        %3014 = vmatpush2.msra.mxu0 0.0
        %3015 = vmatprep.subr.mxu0 0.0
        %3016 = vmatpush2.msra.mxu0 0.0
        %3017 = vmatprep.subr.mxu0 0.0
        %3018 = vmatpush2.msra.mxu0 0.0
        %3019 = vmatprep.subr.mxu0 0.0
        %3020 = vmatpush2.msra.mxu0 0.0
        %3021 = vmatprep.subr.mxu0 0.0
        %3022 = vmatpush2.msra.mxu0 0.0
        %3023 = vmatprep.subr.mxu0 0.0
        %3024 = vmatpush2.msra.mxu0 0.0
        %3025 = vmatprep.subr.mxu0 0.0
        %3026 = vmatpush2.msra.mxu0 0.0
        %3027 = vmatprep.mubr.f32.mxu0 0.0
        %3028 = vmatmul.mubr.f32.gmra.mxu0 %v2958
        %v3029 = vpop.f32.mrf.mxu0
        %v3030 = vadd.f32 %v2956, %v3029
        %v3031 = vpop.f32.mrf.mxu0
        %3032 = vmatprep.mubr.f32.mxu0 0.0
        %3033 = vmatmul.mubr.f32.gmra.mxu0 %v2961
        %v3034 = vpop.f32.mrf.mxu0
        %v3035 = vadd.f32 %v2956, %v3034
        %v3036 = vpop.f32.mrf.mxu0
        %3037 = vdwg.mxu0
        %v3038 = vadd.f32 %v2856, %v3030
        %v3039 = vadd.f32 %v2857, %v3035
        %v3040 = vsel %vm1035, %v3038, 0.0
        %3041 = vadd.xlane.f32.xlu0 %v3040
        %v3042 = vpop.xlane.xlu0 %3041
        %v3043 = vsel %vm1035, %v3039, 0.0
        %3044 = vadd.xlane.f32.xlu0 %v3043
        %v3045 = vpop.xlane.xlu0 %3044
        %v3046 = vmul.f32 %v3042, %v1659
        %v3047 = vmul.f32 %v3045, %v1659
        %v3048 = vsub.f32 %v3038, %v3046
        %v3049 = vsub.f32 %v3039, %v3047
        %v3050 = vmul.f32 %v3048, %v3048
        %v3051 = vmul.f32 %v3049, %v3049
        %v3052 = vsel %vm1035, %v3050, 0.0
        %3053 = vadd.xlane.f32.xlu0 %v3052
        %v3054 = vpop.xlane.xlu0 %3053
        %v3055 = vsel %vm1035, %v3051, 0.0
        %3056 = vadd.xlane.f32.xlu0 %v3055
        %v3057 = vpop.xlane.xlu0 %3056
        %v3058 = vmul.f32 %v3054, %v1659
        %v3059 = vmul.f32 %v3057, %v1659
        %v3060 = vadd.f32 %v3058, 1e-05
        %v3061 = vadd.f32 %v3059, 1e-05
        %v3062 = vrsqrt.pop %v3060
        %v3063 = vrsqrt.pop %v3061
        %v3064 = vmul.f32 %v3048, %v3062
        %v3065 = vmul.f32 %v3049, %v3063
        %v3066 = vlaneseq
        %v3067 = vshrl.u32 %v3066, 7
        %v3068 = vsub.s32 4, %v3067
        %v3069 = vrot.slane %v1017, %v3068
        %v3070 = vmul.f32 %v3064, %v3069
        %v3071 = vmul.f32 %v3065, %v3069
        %v3072 = vlaneseq
        %v3073 = vshrl.u32 %v3072, 7
        %v3074 = vsub.s32 5, %v3073
        %v3075 = vrot.slane %v1017, %v3074
        %v3076 = vadd.f32 %v3070, %v3075
        %v3077 = vadd.f32 %v3071, %v3075
        %3078 = vst.msk [vmem:[%s982] sm:$0xff] %vm1035, %v3076
        %3079 = vst.msk [vmem:[%s982 + $0x8] sm:$0xff] %vm1035, %v3077
        %s3080 = sand.u32 %s564, 1
        %s3081 = scalar_lea.sflag [#allocation7], %s3080
        %s3082 = sand.u32 %s564, 1
        %s3083 = smul.addr %s3082, 16
        %s3084 = scalar_lea.vmem [#allocation32], %s3083
        // Predicated region
        $region181: #{knowformer_layer_forward.1} parent=111 // pred_check
          %p3085 = pneg %p574
        $region182: #{knowformer_layer_forward.1} parent=111 // pred_check_branch
          %3087 = sbr.rel (%p3085) target = $region184
        $region183: #{knowformer_layer_forward.1} parent=111 // pred_region
          %s3089 = ssub.s32 256, 256
          %3090 = vsyncadd %s3081, %s3089
          %s3091 = smul.addr %s58, 2
          %s3092 = smul.addr %s3091, 128
          %s3093 = scalar_lea.hbm %s25, %s3092
          %s3094 = sshll.u32 %s3084, 4
          %s3095 = int_to_ptr.vmem [resolvable:$true] %s3094
          %3100 = dma.vmem_to_hbm [thread:$0]  %s3095, 256, %s3093, %s3081, 128, 128, 8
        $region184: #{knowformer_layer_forward.1} parent=111 // pred_fallthru
          _
      $region112: #{knowformer_layer_forward.1} parent=5 // pred_fallthru
        _
      %p3101 = scmp.le.s32.totalorder 2, %s53
      // Predicated region
      $region185: #{knowformer_layer_forward.1} parent=5 // pred_check
        %p3102 = pneg %p3101
      $region186: #{knowformer_layer_forward.1} parent=5 // pred_check_branch
        %3104 = sbr.rel (%p3102) target = $region188
      $region187: #{knowformer_layer_forward.1} parent=5 // pred_region
        %s3105 = ssub.s32 %s53, 2
        // Predicated region
        $region189: #{knowformer_layer_forward.1} parent=187 // pred_check
          %p3106 = pneg %p580
        $region190: #{knowformer_layer_forward.1} parent=187 // pred_check_branch
          %3108 = sbr.rel (%p3106) target = $region192
        $region191: #{knowformer_layer_forward.1} parent=187 // pred_region
          %s3109 = sand.u32 %s565, 1
          %s3110 = scalar_lea.sflag [#allocation7], %s3109
          %s3111 = sand.u32 %s565, 1
          %s3112 = smul.addr %s3111, 16
          %s3113 = scalar_lea.vmem [#allocation32], %s3112
          %3114 = dma.done %s3110, 256
        $region192: #{knowformer_layer_forward.1} parent=187 // pred_fallthru
          _
      $region188: #{knowformer_layer_forward.1} parent=5 // pred_fallthru
        _
    $region6: #{knowformer_layer_forward.1} parent=1 // loop_footer
      %s57 = sadd.s32 1, %s53
    $region7: #{knowformer_layer_forward.1} parent=1 // loop_footer_branch
      %52 = sbr.rel target = $region3
    $region8: #{knowformer_layer_forward.1} parent=1 // loop_exit
      _
    %3115 = vsyncpa [#allocation6], 1
    %s3116 = scalar_lea.sflag [#allocation6], 1
    %3117 = vsyncpa %s3116, 1
    %3118 = vsyncpa [#allocation9], 1
    %3119 = vsyncpa [#allocation12], 1
    %3120 = vsyncpa [#allocation15], 1
    %3121 = vsyncpa [#allocation18], 1
    %3122 = vsyncpa [#allocation21], 1
    %3123 = vsyncpa [#allocation24], 1
    %3124 = vsyncpa [#allocation27], 1
    %3125 = vsyncpa [#allocation30], 1
    %3126 = vsyncpa [#allocation7], 1
    %s3127 = scalar_lea.sflag [#allocation7], 1
    %3128 = vsyncpa %s3127, 1

// kernel: knowformer_layer_forward.1
$region0: #{knowformer_layer_forward.1}
  #allocation0 [shape = 'u32[]', space=smem, size = 0x4, offset = 0x4, fixed_abs, tag = 'smem constant byte address 0x4 - core index']
  #allocation1 [shape = 'u32[144,128]{1,0:T(1,128)}', space=vmem, size = 0x12000, scoped, tag = 'internal scratch']
  #allocation2 [shape = 's32[1]{0}', space=sflag, size = 0x4, scoped, tag = 'scoped memory for knowformer_layer_forward.1']
  #allocation3 [shape = 'u8[512]{0}', space=smem, size = 0x200, scoped, tag = 'prefetched SMEM operand 0']
  #allocation4 [shape = 'u8[512]{0}', space=smem, size = 0x200, scoped, tag = 'prefetched SMEM operand 1']
  %s0 = inlined_call_operand.vmem [shape: s32[2], index: 0, kind: input, shape index: {}]
  %s1 = inlined_call_operand.vmem [shape: s32[2], index: 1, kind: input, shape index: {}]
  %s2 = inlined_call_operand.vmem [shape: f32[64,16], index: 2, kind: input, shape index: {}]
  %s3 = inlined_call_operand.vmem [shape: f32[2,16,32], index: 3, kind: input, shape index: {}]
  %s4 = inlined_call_operand.vmem [shape: f32[2,1,32], index: 4, kind: input, shape index: {}]
  %s5 = inlined_call_operand.vmem [shape: f32[2,16,1], index: 5, kind: input, shape index: {}]
  %s6 = inlined_call_operand.hbm [shape: f32[22,32], index: 6, kind: input, shape index: {}]
  %s7 = inlined_call_operand.hbm [shape: f32[32,32], index: 7, kind: input, shape index: {}]
  %s8 = inlined_call_operand.vmem [shape: f32[64,64], index: 8, kind: input, shape index: {}]
  %s9 = inlined_call_operand.vmem [shape: f32[32,128], index: 9, kind: input, shape index: {}]
  %s10 = inlined_call_operand.hbm [shape: f32[1,128], index: 10, kind: input, shape index: {}]
  %s11 = inlined_call_operand.hbm [shape: f32[32,32], index: 11, kind: input, shape index: {}]
  %s12 = inlined_call_operand.hbm [shape: f32[32,32], index: 12, kind: input, shape index: {}]
  %s13 = inlined_call_operand.hbm [shape: f32[32,32], index: 13, kind: input, shape index: {}]
  %s14 = inlined_call_operand.hbm [shape: f32[32,32], index: 14, kind: input, shape index: {}]
  %s15 = inlined_call_operand.hbm [shape: f32[1,32,32], index: 15, kind: input, shape index: {}]
  %s16 = inlined_call_operand.hbm [shape: f32[1,32,32], index: 16, kind: input, shape index: {}]
  %s17 = inlined_call_operand.hbm [shape: f32[1,32,128], index: 17, kind: input, shape index: {}]
  %s18 = inlined_call_operand.hbm [shape: f32[1,1,128], index: 18, kind: input, shape index: {}]
  %s19 = inlined_call_operand.hbm [shape: f32[1,32,32], index: 19, kind: input, shape index: {}]
  %s20 = inlined_call_operand.hbm [shape: f32[1,32,32], index: 20, kind: input, shape index: {}]
  %s21 = inlined_call_operand.hbm [shape: f32[32,64], index: 21, kind: input, shape index: {}]
  %s22 = inlined_call_operand.hbm [shape: f32[1,64], index: 22, kind: input, shape index: {}]
  %s23 = inlined_call_operand.hbm [shape: f32[32,32], index: 23, kind: input, shape index: {}]
  %s24 = inlined_call_operand.hbm [shape: f32[32,32], index: 24, kind: input, shape index: {}]
  %s25 = inlined_call_operand.hbm [shape: f32[2,16,32], index: 25, kind: output, shape index: {}]
  %s26 = sld [smem:[#allocation0]]
  $region193: #{knowformer_layer_forward.1} parent=0
    _
  %s28 = ssub.s32 1, %s26
  %s29 = scalar_select 0, %s28, %s26
  %s30 = sshll.u32 %s0, 4
  %s31 = int_to_ptr.vmem [resolvable:$true] %s30
  %33 = dma.vmem_to_smem %s31, 16, [#allocation3], [#allocation2]
  %s34 = sshll.u32 %s1, 4
  %s35 = int_to_ptr.vmem [resolvable:$true] %s34
  %37 = dma.vmem_to_smem %s35, 16, [#allocation4], [#allocation2]
  %38 = dma.done [#allocation2], 32
  %39 = sfence
  $region1: #{knowformer_layer_forward.1} parent=0
    #allocation5 [shape = 'u8[12288]{0}', space=vmem, size = 0x3000, scoped, tag = 'input window, operand 6, single buffered']
    #allocation6 [shape = 's32[2]{0}', space=sflag, size = 0x8, scoped, tag = 'scoped memory for knowformer_layer_forward.1']
    #allocation7 [shape = 's32[2]{0}', space=sflag, size = 0x8, scoped, tag = 'scoped memory for knowformer_layer_forward.1']
    #allocation8 [shape = 'u8[16384]{0}', space=vmem, size = 0x4000, scoped, tag = 'input window, operand 7, single buffered']
    #allocation9 [shape = 's32[1]{0}', space=sflag, size = 0x4, scoped, tag = 'scoped memory for knowformer_layer_forward.1']
    #allocation10 [shape = 'u8[512]{0}', space=vmem, size = 0x400, scoped, tag = 'input window, operand 10, single buffered']
    #allocation11 [shape = 'u8[16384]{0}', space=vmem, size = 0x4000, scoped, tag = 'input window, operand 11, single buffered']
    #allocation12 [shape = 's32[1]{0}', space=sflag, size = 0x4, scoped, tag = 'scoped memory for knowformer_layer_forward.1']
    #allocation13 [shape = 'u8[16384]{0}', space=vmem, size = 0x4000, scoped, tag = 'input window, operand 12, single buffered']
    #allocation14 [shape = 'u8[16384]{0}', space=vmem, size = 0x4000, scoped, tag = 'input window, operand 13, single buffered']
    #allocation15 [shape = 's32[1]{0}', space=sflag, size = 0x4, scoped, tag = 'scoped memory for knowformer_layer_forward.1']
    #allocation16 [shape = 'u8[16384]{0}', space=vmem, size = 0x4000, scoped, tag = 'input window, operand 14, single buffered']
    #allocation17 [shape = 'u8[16384]{0}', space=vmem, size = 0x4000, scoped, tag = 'input window, operand 15, single buffered']
    #allocation18 [shape = 's32[1]{0}', space=sflag, size = 0x4, scoped, tag = 'scoped memory for knowformer_layer_forward.1']
    #allocation19 [shape = 'u8[16384]{0}', space=vmem, size = 0x4000, scoped, tag = 'input window, operand 16, single buffered']
    #allocation20 [shape = 'u8[16384]{0}', space=vmem, size = 0x4000, scoped, tag = 'input window, operand 17, single buffered']
    #allocation21 [shape = 's32[1]{0}', space=sflag, size = 0x4, scoped, tag = 'scoped memory for knowformer_layer_forward.1']
    #allocation22 [shape = 'u8[512]{0}', space=vmem, size = 0x400, scoped, tag = 'input window, operand 18, single buffered']
    #allocation23 [shape = 'u8[16384]{0}', space=vmem, size = 0x4000, scoped, tag = 'input window, operand 19, single buffered']
    #allocation24 [shape = 's32[1]{0}', space=sflag, size = 0x4, scoped, tag = 'scoped memory for knowformer_layer_forward.1']
    #allocation25 [shape = 'u8[16384]{0}', space=vmem, size = 0x4000, scoped, tag = 'input window, operand 20, single buffered']
    #allocation26 [shape = 'u8[16384]{0}', space=vmem, size = 0x4000, scoped, tag = 'input window, operand 21, single buffered']
    #allocation27 [shape = 's32[1]{0}', space=sflag, size = 0x4, scoped, tag = 'scoped memory for knowformer_layer_forward.1']
    #allocation28 [shape = 'u8[512]{0}', space=vmem, size = 0x400, scoped, tag = 'input window, operand 22, single buffered']
    #allocation29 [shape = 'u8[16384]{0}', space=vmem, size = 0x4000, scoped, tag = 'input window, operand 23, single buffered']
    #allocation30 [shape = 's32[1]{0}', space=sflag, size = 0x4, scoped, tag = 'scoped memory for knowformer_layer_forward.1']
    #allocation31 [shape = 'u8[16384]{0}', space=vmem, size = 0x4000, scoped, tag = 'input window, operand 24, single buffered']
    #allocation32 [shape = 'u8[16384]{0}', space=vmem, size = 0x4000, scoped, tag = 'output window, operand 0']
    %40 = vsyncpa [#allocation6], 0
    %41 = vsyncpa [#allocation9], 0
    %42 = vsyncpa [#allocation12], 0
    %43 = vsyncpa [#allocation15], 0
    %44 = vsyncpa [#allocation18], 0
    %45 = vsyncpa [#allocation21], 0
    %46 = vsyncpa [#allocation24], 0
    %47 = vsyncpa [#allocation27], 0
    %48 = vsyncpa [#allocation30], 0
    %49 = vsyncpa [#allocation7], 0
    %s50 = scalar_lea.sflag [#allocation7], 1
    %51 = vsyncpa %s50, 0
    loop: start=0, step=1, limit=4
    $region2: #{knowformer_layer_forward.1} parent=1 // loop_pre_header
      _
    $region3: #{knowformer_layer_forward.1} parent=1 // loop_header
      %s53 = sphi 0, %s57
      %p54 = scmp.ge.s32.totalorder %s53, 4
      %s61 = sphi 0, %s61
      %s63 = sphi 0, %s61
      %s64 = sphi 0, %s63
      %s78 = sphi 0, %s64
      %s84 = sphi 0, %s86
      %s87 = sphi 0, %s84
      %s88 = sphi 0, %s87
      %s104 = sphi 0, %s88
      %s110 = sphi 0, %s112
      %s113 = sphi 0, %s110
      %s114 = sphi 0, %s113
      %s130 = sphi 0, %s114
      %s136 = sphi 0, %s138
      %s139 = sphi 0, %s136
      %s140 = sphi 0, %s139
      %s156 = sphi 0, %s140
      %s160 = sphi 0, %s160
      %s162 = sphi 0, %s160
      %s163 = sphi 0, %s162
      %s177 = sphi 0, %s163
      %s181 = sphi 0, %s181
      %s183 = sphi 0, %s181
      %s184 = sphi 0, %s183
      %s198 = sphi 0, %s184
      %s202 = sphi 0, %s202
      %s204 = sphi 0, %s202
      %s205 = sphi 0, %s204
      %s219 = sphi 0, %s205
      %s223 = sphi 0, %s223
      %s225 = sphi 0, %s223
      %s226 = sphi 0, %s225
      %s240 = sphi 0, %s226
      %s244 = sphi 0, %s244
      %s246 = sphi 0, %s244
      %s247 = sphi 0, %s246
      %s261 = sphi 0, %s247
      %s265 = sphi 0, %s265
      %s267 = sphi 0, %s265
      %s268 = sphi 0, %s267
      %s282 = sphi 0, %s268
      %s286 = sphi 0, %s286
      %s288 = sphi 0, %s286
      %s289 = sphi 0, %s288
      %s303 = sphi 0, %s289
      %s307 = sphi 0, %s307
      %s309 = sphi 0, %s307
      %s310 = sphi 0, %s309
      %s324 = sphi 0, %s310
      %s328 = sphi 0, %s328
      %s330 = sphi 0, %s328
      %s331 = sphi 0, %s330
      %s345 = sphi 0, %s331
      %s349 = sphi 0, %s349
      %s351 = sphi 0, %s349
      %s352 = sphi 0, %s351
      %s366 = sphi 0, %s352
      %s370 = sphi 0, %s370
      %s372 = sphi 0, %s370
      %s373 = sphi 0, %s372
      %s387 = sphi 0, %s373
      %s391 = sphi 0, %s391
      %s393 = sphi 0, %s391
      %s394 = sphi 0, %s393
      %s408 = sphi 0, %s394
      %s412 = sphi 0, %s412
      %s414 = sphi 0, %s412
      %s415 = sphi 0, %s414
      %s429 = sphi 0, %s415
      %s433 = sphi 0, %s433
      %s435 = sphi 0, %s433
      %s436 = sphi 0, %s435
      %s450 = sphi 0, %s436
      %s454 = sphi 0, %s454
      %s456 = sphi 0, %s454
      %s457 = sphi 0, %s456
      %s471 = sphi 0, %s457
      %s475 = sphi 0, %s475
      %s477 = sphi 0, %s475
      %s478 = sphi 0, %s477
      %s492 = sphi 0, %s478
      %s496 = sphi 0, %s496
      %s498 = sphi 0, %s496
      %s499 = sphi 0, %s498
      %s513 = sphi 0, %s499
      %s517 = sphi 0, %s517
      %s519 = sphi 0, %s517
      %s520 = sphi 0, %s519
      %s534 = sphi 0, %s520
      %s538 = sphi 0, %s538
      %s540 = sphi 0, %s538
      %s541 = sphi 0, %s540
      %s555 = sphi 0, %s541
      %s561 = sphi 0, %s563
      %s564 = sphi 0, %s561
      %s565 = sphi 0, %s564
      %s581 = sphi 0, %s565
    $region4: #{knowformer_layer_forward.1} parent=1 // loop_header_branch
      %56 = sbr.rel (%p54) target = $region8
    $region5: #{knowformer_layer_forward.1} parent=1 // loop_body
      %s58 = ssub.s32 %s53, 1
      %s59 = ssub.s32 %s53, 2
      %s60 = sadd.s32 %s53, 1
      %s62 = sadd.s32 %s61, 1
      %p65 = scmp.eq.s32.totalorder %s53, 1
      %p66 = scmp.ne.s32.totalorder %s61, %s63
      %p67 = scmp.eq.s32.totalorder %s53, 0
      %p68 = por %p66, %p67
      %p69 = scmp.ne.s32.totalorder %s61, %s63
      %p70 = scmp.eq.s32.totalorder %s58, 1
      %p71 = por %p69, %p70
      %p72 = scmp.ne.s32.totalorder %s63, %s64
      %p73 = scmp.eq.s32.totalorder %s58, 0
      %p74 = por %p72, %p73
      %p75 = scmp.ne.s32.totalorder %s63, %s64
      %p76 = scmp.eq.s32.totalorder %s59, 1
      %p77 = por %p75, %p76
      %p79 = scmp.ne.s32.totalorder %s64, %s78
      %p80 = scmp.eq.s32.totalorder %s59, 0
      %p81 = por %p79, %p80
      %s82 = ssub.s32 %s53, %s60
      %p83 = scmp.eq.s32.totalorder %s82, 0
      %s85 = sadd.s32 %s84, 1
      %s86 = scalar_select %p83, %s84, %s85
      %p89 = pneg %p83
      %p90 = scmp.eq.s32.totalorder %s53, 1
      %p91 = por %p89, %p90
      %p92 = scmp.ne.s32.totalorder %s84, %s87
      %p93 = scmp.eq.s32.totalorder %s53, 0
      %p94 = por %p92, %p93
      %p95 = scmp.ne.s32.totalorder %s84, %s87
      %p96 = scmp.eq.s32.totalorder %s58, 1
      %p97 = por %p95, %p96
      %p98 = scmp.ne.s32.totalorder %s87, %s88
      %p99 = scmp.eq.s32.totalorder %s58, 0
      %p100 = por %p98, %p99
      %p101 = scmp.ne.s32.totalorder %s87, %s88
      %p102 = scmp.eq.s32.totalorder %s59, 1
      %p103 = por %p101, %p102
      %p105 = scmp.ne.s32.totalorder %s88, %s104
      %p106 = scmp.eq.s32.totalorder %s59, 0
      %p107 = por %p105, %p106
      %s108 = ssub.s32 %s53, %s60
      %p109 = scmp.eq.s32.totalorder %s108, 0
      %s111 = sadd.s32 %s110, 1
      %s112 = scalar_select %p109, %s110, %s111
      %p115 = pneg %p109
      %p116 = scmp.eq.s32.totalorder %s53, 1
      %p117 = por %p115, %p116
      %p118 = scmp.ne.s32.totalorder %s110, %s113
      %p119 = scmp.eq.s32.totalorder %s53, 0
      %p120 = por %p118, %p119
      %p121 = scmp.ne.s32.totalorder %s110, %s113
      %p122 = scmp.eq.s32.totalorder %s58, 1
      %p123 = por %p121, %p122
      %p124 = scmp.ne.s32.totalorder %s113, %s114
      %p125 = scmp.eq.s32.totalorder %s58, 0
      %p126 = por %p124, %p125
      %p127 = scmp.ne.s32.totalorder %s113, %s114
      %p128 = scmp.eq.s32.totalorder %s59, 1
      %p129 = por %p127, %p128
      %p131 = scmp.ne.s32.totalorder %s114, %s130
      %p132 = scmp.eq.s32.totalorder %s59, 0
      %p133 = por %p131, %p132
      %s134 = ssub.s32 %s53, %s60
      %p135 = scmp.eq.s32.totalorder %s134, 0
      %s137 = sadd.s32 %s136, 1
      %s138 = scalar_select %p135, %s136, %s137
      %p141 = pneg %p135
      %p142 = scmp.eq.s32.totalorder %s53, 1
      %p143 = por %p141, %p142
      %p144 = scmp.ne.s32.totalorder %s136, %s139
      %p145 = scmp.eq.s32.totalorder %s53, 0
      %p146 = por %p144, %p145
      %p147 = scmp.ne.s32.totalorder %s136, %s139
      %p148 = scmp.eq.s32.totalorder %s58, 1
      %p149 = por %p147, %p148
      %p150 = scmp.ne.s32.totalorder %s139, %s140
      %p151 = scmp.eq.s32.totalorder %s58, 0
      %p152 = por %p150, %p151
      %p153 = scmp.ne.s32.totalorder %s139, %s140
      %p154 = scmp.eq.s32.totalorder %s59, 1
      %p155 = por %p153, %p154
      %p157 = scmp.ne.s32.totalorder %s140, %s156
      %p158 = scmp.eq.s32.totalorder %s59, 0
      %p159 = por %p157, %p158
      %s161 = sadd.s32 %s160, 1
      %p164 = scmp.eq.s32.totalorder %s53, 1
      %p165 = scmp.ne.s32.totalorder %s160, %s162
      %p166 = scmp.eq.s32.totalorder %s53, 0
      %p167 = por %p165, %p166
      %p168 = scmp.ne.s32.totalorder %s160, %s162
      %p169 = scmp.eq.s32.totalorder %s58, 1
      %p170 = por %p168, %p169
      %p171 = scmp.ne.s32.totalorder %s162, %s163
      %p172 = scmp.eq.s32.totalorder %s58, 0
      %p173 = por %p171, %p172
      %p174 = scmp.ne.s32.totalorder %s162, %s163
      %p175 = scmp.eq.s32.totalorder %s59, 1
      %p176 = por %p174, %p175
      %p178 = scmp.ne.s32.totalorder %s163, %s177
      %p179 = scmp.eq.s32.totalorder %s59, 0
      %p180 = por %p178, %p179
      %s182 = sadd.s32 %s181, 1
      %p185 = scmp.eq.s32.totalorder %s53, 1
      %p186 = scmp.ne.s32.totalorder %s181, %s183
      %p187 = scmp.eq.s32.totalorder %s53, 0
      %p188 = por %p186, %p187
      %p189 = scmp.ne.s32.totalorder %s181, %s183
      %p190 = scmp.eq.s32.totalorder %s58, 1
      %p191 = por %p189, %p190
      %p192 = scmp.ne.s32.totalorder %s183, %s184
      %p193 = scmp.eq.s32.totalorder %s58, 0
      %p194 = por %p192, %p193
      %p195 = scmp.ne.s32.totalorder %s183, %s184
      %p196 = scmp.eq.s32.totalorder %s59, 1
      %p197 = por %p195, %p196
      %p199 = scmp.ne.s32.totalorder %s184, %s198
      %p200 = scmp.eq.s32.totalorder %s59, 0
      %p201 = por %p199, %p200
      %s203 = sadd.s32 %s202, 1
      %p206 = scmp.eq.s32.totalorder %s53, 1
      %p207 = scmp.ne.s32.totalorder %s202, %s204
      %p208 = scmp.eq.s32.totalorder %s53, 0
      %p209 = por %p207, %p208
      %p210 = scmp.ne.s32.totalorder %s202, %s204
      %p211 = scmp.eq.s32.totalorder %s58, 1
      %p212 = por %p210, %p211
      %p213 = scmp.ne.s32.totalorder %s204, %s205
      %p214 = scmp.eq.s32.totalorder %s58, 0
      %p215 = por %p213, %p214
      %p216 = scmp.ne.s32.totalorder %s204, %s205
      %p217 = scmp.eq.s32.totalorder %s59, 1
      %p218 = por %p216, %p217
      %p220 = scmp.ne.s32.totalorder %s205, %s219
      %p221 = scmp.eq.s32.totalorder %s59, 0
      %p222 = por %p220, %p221
      %s224 = sadd.s32 %s223, 1
      %p227 = scmp.eq.s32.totalorder %s53, 1
      %p228 = scmp.ne.s32.totalorder %s223, %s225
      %p229 = scmp.eq.s32.totalorder %s53, 0
      %p230 = por %p228, %p229
      %p231 = scmp.ne.s32.totalorder %s223, %s225
      %p232 = scmp.eq.s32.totalorder %s58, 1
      %p233 = por %p231, %p232
      %p234 = scmp.ne.s32.totalorder %s225, %s226
      %p235 = scmp.eq.s32.totalorder %s58, 0
      %p236 = por %p234, %p235
      %p237 = scmp.ne.s32.totalorder %s225, %s226
      %p238 = scmp.eq.s32.totalorder %s59, 1
      %p239 = por %p237, %p238
      %p241 = scmp.ne.s32.totalorder %s226, %s240
      %p242 = scmp.eq.s32.totalorder %s59, 0
      %p243 = por %p241, %p242
      %s245 = sadd.s32 %s244, 1
      %p248 = scmp.eq.s32.totalorder %s53, 1
      %p249 = scmp.ne.s32.totalorder %s244, %s246
      %p250 = scmp.eq.s32.totalorder %s53, 0
      %p251 = por %p249, %p250
      %p252 = scmp.ne.s32.totalorder %s244, %s246
      %p253 = scmp.eq.s32.totalorder %s58, 1
      %p254 = por %p252, %p253
      %p255 = scmp.ne.s32.totalorder %s246, %s247
      %p256 = scmp.eq.s32.totalorder %s58, 0
      %p257 = por %p255, %p256
      %p258 = scmp.ne.s32.totalorder %s246, %s247
      %p259 = scmp.eq.s32.totalorder %s59, 1
      %p260 = por %p258, %p259
      %p262 = scmp.ne.s32.totalorder %s247, %s261
      %p263 = scmp.eq.s32.totalorder %s59, 0
      %p264 = por %p262, %p263
      %s266 = sadd.s32 %s265, 1
      %p269 = scmp.eq.s32.totalorder %s53, 1
      %p270 = scmp.ne.s32.totalorder %s265, %s267
      %p271 = scmp.eq.s32.totalorder %s53, 0
      %p272 = por %p270, %p271
      %p273 = scmp.ne.s32.totalorder %s265, %s267
      %p274 = scmp.eq.s32.totalorder %s58, 1
      %p275 = por %p273, %p274
      %p276 = scmp.ne.s32.totalorder %s267, %s268
      %p277 = scmp.eq.s32.totalorder %s58, 0
      %p278 = por %p276, %p277
      %p279 = scmp.ne.s32.totalorder %s267, %s268
      %p280 = scmp.eq.s32.totalorder %s59, 1
      %p281 = por %p279, %p280
      %p283 = scmp.ne.s32.totalorder %s268, %s282
      %p284 = scmp.eq.s32.totalorder %s59, 0
      %p285 = por %p283, %p284
      %s287 = sadd.s32 %s286, 1
      %p290 = scmp.eq.s32.totalorder %s53, 1
      %p291 = scmp.ne.s32.totalorder %s286, %s288
      %p292 = scmp.eq.s32.totalorder %s53, 0
      %p293 = por %p291, %p292
      %p294 = scmp.ne.s32.totalorder %s286, %s288
      %p295 = scmp.eq.s32.totalorder %s58, 1
      %p296 = por %p294, %p295
      %p297 = scmp.ne.s32.totalorder %s288, %s289
      %p298 = scmp.eq.s32.totalorder %s58, 0
      %p299 = por %p297, %p298
      %p300 = scmp.ne.s32.totalorder %s288, %s289
      %p301 = scmp.eq.s32.totalorder %s59, 1
      %p302 = por %p300, %p301
      %p304 = scmp.ne.s32.totalorder %s289, %s303
      %p305 = scmp.eq.s32.totalorder %s59, 0
      %p306 = por %p304, %p305
      %s308 = sadd.s32 %s307, 1
      %p311 = scmp.eq.s32.totalorder %s53, 1
      %p312 = scmp.ne.s32.totalorder %s307, %s309
      %p313 = scmp.eq.s32.totalorder %s53, 0
      %p314 = por %p312, %p313
      %p315 = scmp.ne.s32.totalorder %s307, %s309
      %p316 = scmp.eq.s32.totalorder %s58, 1
      %p317 = por %p315, %p316
      %p318 = scmp.ne.s32.totalorder %s309, %s310
      %p319 = scmp.eq.s32.totalorder %s58, 0
      %p320 = por %p318, %p319
      %p321 = scmp.ne.s32.totalorder %s309, %s310
      %p322 = scmp.eq.s32.totalorder %s59, 1
      %p323 = por %p321, %p322
      %p325 = scmp.ne.s32.totalorder %s310, %s324
      %p326 = scmp.eq.s32.totalorder %s59, 0
      %p327 = por %p325, %p326
      %s329 = sadd.s32 %s328, 1
      %p332 = scmp.eq.s32.totalorder %s53, 1
      %p333 = scmp.ne.s32.totalorder %s328, %s330
      %p334 = scmp.eq.s32.totalorder %s53, 0
      %p335 = por %p333, %p334
      %p336 = scmp.ne.s32.totalorder %s328, %s330
      %p337 = scmp.eq.s32.totalorder %s58, 1
      %p338 = por %p336, %p337
      %p339 = scmp.ne.s32.totalorder %s330, %s331
      %p340 = scmp.eq.s32.totalorder %s58, 0
      %p341 = por %p339, %p340
      %p342 = scmp.ne.s32.totalorder %s330, %s331
      %p343 = scmp.eq.s32.totalorder %s59, 1
      %p344 = por %p342, %p343
      %p346 = scmp.ne.s32.totalorder %s331, %s345
      %p347 = scmp.eq.s32.totalorder %s59, 0
      %p348 = por %p346, %p347
      %s350 = sadd.s32 %s349, 1
      %p353 = scmp.eq.s32.totalorder %s53, 1
      %p354 = scmp.ne.s32.totalorder %s349, %s351
      %p355 = scmp.eq.s32.totalorder %s53, 0
      %p356 = por %p354, %p355
      %p357 = scmp.ne.s32.totalorder %s349, %s351
      %p358 = scmp.eq.s32.totalorder %s58, 1
      %p359 = por %p357, %p358
      %p360 = scmp.ne.s32.totalorder %s351, %s352
      %p361 = scmp.eq.s32.totalorder %s58, 0
      %p362 = por %p360, %p361
      %p363 = scmp.ne.s32.totalorder %s351, %s352
      %p364 = scmp.eq.s32.totalorder %s59, 1
      %p365 = por %p363, %p364
      %p367 = scmp.ne.s32.totalorder %s352, %s366
      %p368 = scmp.eq.s32.totalorder %s59, 0
      %p369 = por %p367, %p368
      %s371 = sadd.s32 %s370, 1
      %p374 = scmp.eq.s32.totalorder %s53, 1
      %p375 = scmp.ne.s32.totalorder %s370, %s372
      %p376 = scmp.eq.s32.totalorder %s53, 0
      %p377 = por %p375, %p376
      %p378 = scmp.ne.s32.totalorder %s370, %s372
      %p379 = scmp.eq.s32.totalorder %s58, 1
      %p380 = por %p378, %p379
      %p381 = scmp.ne.s32.totalorder %s372, %s373
      %p382 = scmp.eq.s32.totalorder %s58, 0
      %p383 = por %p381, %p382
      %p384 = scmp.ne.s32.totalorder %s372, %s373
      %p385 = scmp.eq.s32.totalorder %s59, 1
      %p386 = por %p384, %p385
      %p388 = scmp.ne.s32.totalorder %s373, %s387
      %p389 = scmp.eq.s32.totalorder %s59, 0
      %p390 = por %p388, %p389
      %s392 = sadd.s32 %s391, 1
      %p395 = scmp.eq.s32.totalorder %s53, 1
      %p396 = scmp.ne.s32.totalorder %s391, %s393
      %p397 = scmp.eq.s32.totalorder %s53, 0
      %p398 = por %p396, %p397
      %p399 = scmp.ne.s32.totalorder %s391, %s393
      %p400 = scmp.eq.s32.totalorder %s58, 1
      %p401 = por %p399, %p400
      %p402 = scmp.ne.s32.totalorder %s393, %s394
      %p403 = scmp.eq.s32.totalorder %s58, 0
      %p404 = por %p402, %p403
      %p405 = scmp.ne.s32.totalorder %s393, %s394
      %p406 = scmp.eq.s32.totalorder %s59, 1
      %p407 = por %p405, %p406
      %p409 = scmp.ne.s32.totalorder %s394, %s408
      %p410 = scmp.eq.s32.totalorder %s59, 0
      %p411 = por %p409, %p410
      %s413 = sadd.s32 %s412, 1
      %p416 = scmp.eq.s32.totalorder %s53, 1
      %p417 = scmp.ne.s32.totalorder %s412, %s414
      %p418 = scmp.eq.s32.totalorder %s53, 0
      %p419 = por %p417, %p418
      %p420 = scmp.ne.s32.totalorder %s412, %s414
      %p421 = scmp.eq.s32.totalorder %s58, 1
      %p422 = por %p420, %p421
      %p423 = scmp.ne.s32.totalorder %s414, %s415
      %p424 = scmp.eq.s32.totalorder %s58, 0
      %p425 = por %p423, %p424
      %p426 = scmp.ne.s32.totalorder %s414, %s415
      %p427 = scmp.eq.s32.totalorder %s59, 1
      %p428 = por %p426, %p427
      %p430 = scmp.ne.s32.totalorder %s415, %s429
      %p431 = scmp.eq.s32.totalorder %s59, 0
      %p432 = por %p430, %p431
      %s434 = sadd.s32 %s433, 1
      %p437 = scmp.eq.s32.totalorder %s53, 1
      %p438 = scmp.ne.s32.totalorder %s433, %s435
      %p439 = scmp.eq.s32.totalorder %s53, 0
      %p440 = por %p438, %p439
      %p441 = scmp.ne.s32.totalorder %s433, %s435
      %p442 = scmp.eq.s32.totalorder %s58, 1
      %p443 = por %p441, %p442
      %p444 = scmp.ne.s32.totalorder %s435, %s436
      %p445 = scmp.eq.s32.totalorder %s58, 0
      %p446 = por %p444, %p445
      %p447 = scmp.ne.s32.totalorder %s435, %s436
      %p448 = scmp.eq.s32.totalorder %s59, 1
      %p449 = por %p447, %p448
      %p451 = scmp.ne.s32.totalorder %s436, %s450
      %p452 = scmp.eq.s32.totalorder %s59, 0
      %p453 = por %p451, %p452
      %s455 = sadd.s32 %s454, 1
      %p458 = scmp.eq.s32.totalorder %s53, 1
      %p459 = scmp.ne.s32.totalorder %s454, %s456
      %p460 = scmp.eq.s32.totalorder %s53, 0
      %p461 = por %p459, %p460
      %p462 = scmp.ne.s32.totalorder %s454, %s456
      %p463 = scmp.eq.s32.totalorder %s58, 1
      %p464 = por %p462, %p463
      %p465 = scmp.ne.s32.totalorder %s456, %s457
      %p466 = scmp.eq.s32.totalorder %s58, 0
      %p467 = por %p465, %p466
      %p468 = scmp.ne.s32.totalorder %s456, %s457
      %p469 = scmp.eq.s32.totalorder %s59, 1
      %p470 = por %p468, %p469
      %p472 = scmp.ne.s32.totalorder %s457, %s471
      %p473 = scmp.eq.s32.totalorder %s59, 0
      %p474 = por %p472, %p473
      %s476 = sadd.s32 %s475, 1
      %p479 = scmp.eq.s32.totalorder %s53, 1
      %p480 = scmp.ne.s32.totalorder %s475, %s477
      %p481 = scmp.eq.s32.totalorder %s53, 0
      %p482 = por %p480, %p481
      %p483 = scmp.ne.s32.totalorder %s475, %s477
      %p484 = scmp.eq.s32.totalorder %s58, 1
      %p485 = por %p483, %p484
      %p486 = scmp.ne.s32.totalorder %s477, %s478
      %p487 = scmp.eq.s32.totalorder %s58, 0
      %p488 = por %p486, %p487
      %p489 = scmp.ne.s32.totalorder %s477, %s478
      %p490 = scmp.eq.s32.totalorder %s59, 1
      %p491 = por %p489, %p490
      %p493 = scmp.ne.s32.totalorder %s478, %s492
      %p494 = scmp.eq.s32.totalorder %s59, 0
      %p495 = por %p493, %p494
      %s497 = sadd.s32 %s496, 1
      %p500 = scmp.eq.s32.totalorder %s53, 1
      %p501 = scmp.ne.s32.totalorder %s496, %s498
      %p502 = scmp.eq.s32.totalorder %s53, 0
      %p503 = por %p501, %p502
      %p504 = scmp.ne.s32.totalorder %s496, %s498
      %p505 = scmp.eq.s32.totalorder %s58, 1
      %p506 = por %p504, %p505
      %p507 = scmp.ne.s32.totalorder %s498, %s499
      %p508 = scmp.eq.s32.totalorder %s58, 0
      %p509 = por %p507, %p508
      %p510 = scmp.ne.s32.totalorder %s498, %s499
      %p511 = scmp.eq.s32.totalorder %s59, 1
      %p512 = por %p510, %p511
      %p514 = scmp.ne.s32.totalorder %s499, %s513
      %p515 = scmp.eq.s32.totalorder %s59, 0
      %p516 = por %p514, %p515
      %s518 = sadd.s32 %s517, 1
      %p521 = scmp.eq.s32.totalorder %s53, 1
      %p522 = scmp.ne.s32.totalorder %s517, %s519
      %p523 = scmp.eq.s32.totalorder %s53, 0
      %p524 = por %p522, %p523
      %p525 = scmp.ne.s32.totalorder %s517, %s519
      %p526 = scmp.eq.s32.totalorder %s58, 1
      %p527 = por %p525, %p526
      %p528 = scmp.ne.s32.totalorder %s519, %s520
      %p529 = scmp.eq.s32.totalorder %s58, 0
      %p530 = por %p528, %p529
      %p531 = scmp.ne.s32.totalorder %s519, %s520
      %p532 = scmp.eq.s32.totalorder %s59, 1
      %p533 = por %p531, %p532
      %p535 = scmp.ne.s32.totalorder %s520, %s534
      %p536 = scmp.eq.s32.totalorder %s59, 0
      %p537 = por %p535, %p536
      %s539 = sadd.s32 %s538, 1
      %p542 = scmp.eq.s32.totalorder %s53, 1
      %p543 = scmp.ne.s32.totalorder %s538, %s540
      %p544 = scmp.eq.s32.totalorder %s53, 0
      %p545 = por %p543, %p544
      %p546 = scmp.ne.s32.totalorder %s538, %s540
      %p547 = scmp.eq.s32.totalorder %s58, 1
      %p548 = por %p546, %p547
      %p549 = scmp.ne.s32.totalorder %s540, %s541
      %p550 = scmp.eq.s32.totalorder %s58, 0
      %p551 = por %p549, %p550
      %p552 = scmp.ne.s32.totalorder %s540, %s541
      %p553 = scmp.eq.s32.totalorder %s59, 1
      %p554 = por %p552, %p553
      %p556 = scmp.ne.s32.totalorder %s541, %s555
      %p557 = scmp.eq.s32.totalorder %s59, 0
      %p558 = por %p556, %p557
      %s559 = ssub.s32 %s53, %s60
      %p560 = scmp.eq.s32.totalorder %s559, 0
      %s562 = sadd.s32 %s561, 1
      %s563 = scalar_select %p560, %s561, %s562
      %p566 = pneg %p560
      %p567 = scmp.eq.s32.totalorder %s53, 1
      %p568 = por %p566, %p567
      %p569 = scmp.ne.s32.totalorder %s561, %s564
      %p570 = scmp.eq.s32.totalorder %s53, 0
      %p571 = por %p569, %p570
      %p572 = scmp.ne.s32.totalorder %s561, %s564
      %p573 = scmp.eq.s32.totalorder %s58, 1
      %p574 = por %p572, %p573
      %p575 = scmp.ne.s32.totalorder %s564, %s565
      %p576 = scmp.eq.s32.totalorder %s58, 0
      %p577 = por %p575, %p576
      %p578 = scmp.ne.s32.totalorder %s564, %s565
      %p579 = scmp.eq.s32.totalorder %s59, 1
      %p580 = por %p578, %p579
      %p582 = scmp.ne.s32.totalorder %s565, %s581
      %p583 = scmp.eq.s32.totalorder %s59, 0
      %p584 = por %p582, %p583
      %p585 = scmp.le.s32.totalorder 1, %s53
      %p586 = scmp.lt.s32.totalorder %s53, 3
      %p587 = pnand %p585, %p586
      %p588 = pneg %p587
      // Predicated region
      $region9: #{knowformer_layer_forward.1} parent=5 // pred_check
        _
      $region10: #{knowformer_layer_forward.1} parent=5 // pred_check_branch
        %590 = sbr.rel (%p587) target = $region12
      $region11: #{knowformer_layer_forward.1} parent=5 // pred_region
        %s591 = ssub.s32 %s53, 1
        // Predicated region
        $region13: #{knowformer_layer_forward.1} parent=11 // pred_check
          %p592 = pneg %p74
        $region14: #{knowformer_layer_forward.1} parent=11 // pred_check_branch
          %594 = sbr.rel (%p592) target = $region16
        $region15: #{knowformer_layer_forward.1} parent=11 // pred_region
          _
        $region16: #{knowformer_layer_forward.1} parent=11 // pred_fallthru
          _
        // Predicated region
        $region17: #{knowformer_layer_forward.1} parent=11 // pred_check
          %p595 = pneg %p173
        $region18: #{knowformer_layer_forward.1} parent=11 // pred_check_branch
          %597 = sbr.rel (%p595) target = $region20
        $region19: #{knowformer_layer_forward.1} parent=11 // pred_region
          %s599 = ssub.s32 384, 384
          %600 = vsyncadd [#allocation6], %s599
          %s601 = sshll.u32 [#allocation5], 4
          %s602 = int_to_ptr.vmem [resolvable:$true] %s601
          %607 = dma.hbm_to_vmem [thread:$0]  %s6, 384, %s602, [#allocation6], 128, 128, 8
        $region20: #{knowformer_layer_forward.1} parent=11 // pred_fallthru
          _
        // Predicated region
        $region21: #{knowformer_layer_forward.1} parent=11 // pred_check
          %p608 = pneg %p194
        $region22: #{knowformer_layer_forward.1} parent=11 // pred_check_branch
          %610 = sbr.rel (%p608) target = $region24
        $region23: #{knowformer_layer_forward.1} parent=11 // pred_region
          %s612 = ssub.s32 512, 512
          %613 = vsyncadd [#allocation9], %s612
          %s614 = sshll.u32 [#allocation8], 4
          %s615 = int_to_ptr.vmem [resolvable:$true] %s614
          %620 = dma.hbm_to_vmem [thread:$0]  %s7, 512, %s615, [#allocation9], 128, 128, 8
        $region24: #{knowformer_layer_forward.1} parent=11 // pred_fallthru
          _
        // Predicated region
        $region25: #{knowformer_layer_forward.1} parent=11 // pred_check
          %p621 = pneg %p215
        $region26: #{knowformer_layer_forward.1} parent=11 // pred_check_branch
          %623 = sbr.rel (%p621) target = $region28
        $region27: #{knowformer_layer_forward.1} parent=11 // pred_region
          _
        $region28: #{knowformer_layer_forward.1} parent=11 // pred_fallthru
          _
        // Predicated region
        $region29: #{knowformer_layer_forward.1} parent=11 // pred_check
          %p624 = pneg %p236
        $region30: #{knowformer_layer_forward.1} parent=11 // pred_check_branch
          %626 = sbr.rel (%p624) target = $region32
        $region31: #{knowformer_layer_forward.1} parent=11 // pred_region
          _
        $region32: #{knowformer_layer_forward.1} parent=11 // pred_fallthru
          _
        // Predicated region
        $region33: #{knowformer_layer_forward.1} parent=11 // pred_check
          %p627 = pneg %p257
        $region34: #{knowformer_layer_forward.1} parent=11 // pred_check_branch
          %629 = sbr.rel (%p627) target = $region36
        $region35: #{knowformer_layer_forward.1} parent=11 // pred_region
          %s631 = ssub.s32 16, 16
          %632 = vsyncadd [#allocation9], %s631
          %s634 = sshll.u32 [#allocation10], 4
          %s635 = int_to_ptr.vmem [resolvable:$true] %s634
          %637 = dma.hbm_to_vmem [thread:$0]  %s10, 16, %s635, [#allocation9]
        $region36: #{knowformer_layer_forward.1} parent=11 // pred_fallthru
          _
        // Predicated region
        $region37: #{knowformer_layer_forward.1} parent=11 // pred_check
          %p638 = pneg %p278
        $region38: #{knowformer_layer_forward.1} parent=11 // pred_check_branch
          %640 = sbr.rel (%p638) target = $region40
        $region39: #{knowformer_layer_forward.1} parent=11 // pred_region
          %s642 = ssub.s32 512, 512
          %643 = vsyncadd [#allocation12], %s642
          %s644 = sshll.u32 [#allocation11], 4
          %s645 = int_to_ptr.vmem [resolvable:$true] %s644
          %650 = dma.hbm_to_vmem [thread:$0]  %s11, 512, %s645, [#allocation12], 128, 128, 8
        $region40: #{knowformer_layer_forward.1} parent=11 // pred_fallthru
          _
        // Predicated region
        $region41: #{knowformer_layer_forward.1} parent=11 // pred_check
          %p651 = pneg %p299
        $region42: #{knowformer_layer_forward.1} parent=11 // pred_check_branch
          %653 = sbr.rel (%p651) target = $region44
        $region43: #{knowformer_layer_forward.1} parent=11 // pred_region
          %s655 = ssub.s32 512, 512
          %656 = vsyncadd [#allocation12], %s655
          %s657 = sshll.u32 [#allocation13], 4
          %s658 = int_to_ptr.vmem [resolvable:$true] %s657
          %663 = dma.hbm_to_vmem [thread:$0]  %s12, 512, %s658, [#allocation12], 128, 128, 8
        $region44: #{knowformer_layer_forward.1} parent=11 // pred_fallthru
          _
        // Predicated region
        $region45: #{knowformer_layer_forward.1} parent=11 // pred_check
          %p664 = pneg %p320
        $region46: #{knowformer_layer_forward.1} parent=11 // pred_check_branch
          %666 = sbr.rel (%p664) target = $region48
        $region47: #{knowformer_layer_forward.1} parent=11 // pred_region
          %s668 = ssub.s32 512, 512
          %669 = vsyncadd [#allocation15], %s668
          %s670 = sshll.u32 [#allocation14], 4
          %s671 = int_to_ptr.vmem [resolvable:$true] %s670
          %676 = dma.hbm_to_vmem [thread:$0]  %s13, 512, %s671, [#allocation15], 128, 128, 8
        $region48: #{knowformer_layer_forward.1} parent=11 // pred_fallthru
          _
        // Predicated region
        $region49: #{knowformer_layer_forward.1} parent=11 // pred_check
          %p677 = pneg %p341
        $region50: #{knowformer_layer_forward.1} parent=11 // pred_check_branch
          %679 = sbr.rel (%p677) target = $region52
        $region51: #{knowformer_layer_forward.1} parent=11 // pred_region
          %s681 = ssub.s32 512, 512
          %682 = vsyncadd [#allocation15], %s681
          %s683 = sshll.u32 [#allocation16], 4
          %s684 = int_to_ptr.vmem [resolvable:$true] %s683
          %689 = dma.hbm_to_vmem [thread:$0]  %s14, 512, %s684, [#allocation15], 128, 128, 8
        $region52: #{knowformer_layer_forward.1} parent=11 // pred_fallthru
          _
        // Predicated region
        $region53: #{knowformer_layer_forward.1} parent=11 // pred_check
          %p690 = pneg %p362
        $region54: #{knowformer_layer_forward.1} parent=11 // pred_check_branch
          %692 = sbr.rel (%p690) target = $region56
        $region55: #{knowformer_layer_forward.1} parent=11 // pred_region
          %s694 = ssub.s32 512, 512
          %695 = vsyncadd [#allocation18], %s694
          %s696 = sshll.u32 [#allocation17], 4
          %s697 = int_to_ptr.vmem [resolvable:$true] %s696
          %702 = dma.hbm_to_vmem [thread:$0]  %s15, 512, %s697, [#allocation18], 128, 128, 8
        $region56: #{knowformer_layer_forward.1} parent=11 // pred_fallthru
          _
        // Predicated region
        $region57: #{knowformer_layer_forward.1} parent=11 // pred_check
          %p703 = pneg %p383
        $region58: #{knowformer_layer_forward.1} parent=11 // pred_check_branch
          %705 = sbr.rel (%p703) target = $region60
        $region59: #{knowformer_layer_forward.1} parent=11 // pred_region
          %s707 = ssub.s32 512, 512
          %708 = vsyncadd [#allocation18], %s707
          %s709 = sshll.u32 [#allocation19], 4
          %s710 = int_to_ptr.vmem [resolvable:$true] %s709
          %715 = dma.hbm_to_vmem [thread:$0]  %s16, 512, %s710, [#allocation18], 128, 128, 8
        $region60: #{knowformer_layer_forward.1} parent=11 // pred_fallthru
          _
        // Predicated region
        $region61: #{knowformer_layer_forward.1} parent=11 // pred_check
          %p716 = pneg %p404
        $region62: #{knowformer_layer_forward.1} parent=11 // pred_check_branch
          %718 = sbr.rel (%p716) target = $region64
        $region63: #{knowformer_layer_forward.1} parent=11 // pred_region
          %s720 = ssub.s32 512, 512
          %721 = vsyncadd [#allocation21], %s720
          %s722 = sshll.u32 [#allocation20], 4
          %s723 = int_to_ptr.vmem [resolvable:$true] %s722
          %728 = dma.hbm_to_vmem [thread:$0]  %s17, 512, %s723, [#allocation21], 128, 128, 8
        $region64: #{knowformer_layer_forward.1} parent=11 // pred_fallthru
          _
        // Predicated region
        $region65: #{knowformer_layer_forward.1} parent=11 // pred_check
          %p729 = pneg %p425
        $region66: #{knowformer_layer_forward.1} parent=11 // pred_check_branch
          %731 = sbr.rel (%p729) target = $region68
        $region67: #{knowformer_layer_forward.1} parent=11 // pred_region
          %s733 = ssub.s32 16, 16
          %734 = vsyncadd [#allocation21], %s733
          %s736 = sshll.u32 [#allocation22], 4
          %s737 = int_to_ptr.vmem [resolvable:$true] %s736
          %739 = dma.hbm_to_vmem [thread:$0]  %s18, 16, %s737, [#allocation21]
        $region68: #{knowformer_layer_forward.1} parent=11 // pred_fallthru
          _
        // Predicated region
        $region69: #{knowformer_layer_forward.1} parent=11 // pred_check
          %p740 = pneg %p446
        $region70: #{knowformer_layer_forward.1} parent=11 // pred_check_branch
          %742 = sbr.rel (%p740) target = $region72
        $region71: #{knowformer_layer_forward.1} parent=11 // pred_region
          %s744 = ssub.s32 512, 512
          %745 = vsyncadd [#allocation24], %s744
          %s746 = sshll.u32 [#allocation23], 4
          %s747 = int_to_ptr.vmem [resolvable:$true] %s746
          %752 = dma.hbm_to_vmem [thread:$0]  %s19, 512, %s747, [#allocation24], 128, 128, 8
        $region72: #{knowformer_layer_forward.1} parent=11 // pred_fallthru
          _
        // Predicated region
        $region73: #{knowformer_layer_forward.1} parent=11 // pred_check
          %p753 = pneg %p467
        $region74: #{knowformer_layer_forward.1} parent=11 // pred_check_branch
          %755 = sbr.rel (%p753) target = $region76
        $region75: #{knowformer_layer_forward.1} parent=11 // pred_region
          %s757 = ssub.s32 512, 512
          %758 = vsyncadd [#allocation24], %s757
          %s759 = sshll.u32 [#allocation25], 4
          %s760 = int_to_ptr.vmem [resolvable:$true] %s759
          %765 = dma.hbm_to_vmem [thread:$0]  %s20, 512, %s760, [#allocation24], 128, 128, 8
        $region76: #{knowformer_layer_forward.1} parent=11 // pred_fallthru
          _
        // Predicated region
        $region77: #{knowformer_layer_forward.1} parent=11 // pred_check
          %p766 = pneg %p488
        $region78: #{knowformer_layer_forward.1} parent=11 // pred_check_branch
          %768 = sbr.rel (%p766) target = $region80
        $region79: #{knowformer_layer_forward.1} parent=11 // pred_region
          %s770 = ssub.s32 512, 512
          %771 = vsyncadd [#allocation27], %s770
          %s772 = sshll.u32 [#allocation26], 4
          %s773 = int_to_ptr.vmem [resolvable:$true] %s772
          %778 = dma.hbm_to_vmem [thread:$0]  %s21, 512, %s773, [#allocation27], 128, 128, 8
        $region80: #{knowformer_layer_forward.1} parent=11 // pred_fallthru
          _
        // Predicated region
        $region81: #{knowformer_layer_forward.1} parent=11 // pred_check
          %p779 = pneg %p509
        $region82: #{knowformer_layer_forward.1} parent=11 // pred_check_branch
          %781 = sbr.rel (%p779) target = $region84
        $region83: #{knowformer_layer_forward.1} parent=11 // pred_region
          %s783 = ssub.s32 16, 16
          %784 = vsyncadd [#allocation27], %s783
          %s786 = sshll.u32 [#allocation28], 4
          %s787 = int_to_ptr.vmem [resolvable:$true] %s786
          %789 = dma.hbm_to_vmem [thread:$0]  %s22, 16, %s787, [#allocation27]
        $region84: #{knowformer_layer_forward.1} parent=11 // pred_fallthru
          _
        // Predicated region
        $region85: #{knowformer_layer_forward.1} parent=11 // pred_check
          %p790 = pneg %p530
        $region86: #{knowformer_layer_forward.1} parent=11 // pred_check_branch
          %792 = sbr.rel (%p790) target = $region88
        $region87: #{knowformer_layer_forward.1} parent=11 // pred_region
          %s794 = ssub.s32 512, 512
          %795 = vsyncadd [#allocation30], %s794
          %s796 = sshll.u32 [#allocation29], 4
          %s797 = int_to_ptr.vmem [resolvable:$true] %s796
          %802 = dma.hbm_to_vmem [thread:$0]  %s23, 512, %s797, [#allocation30], 128, 128, 8
        $region88: #{knowformer_layer_forward.1} parent=11 // pred_fallthru
          _
        // Predicated region
        $region89: #{knowformer_layer_forward.1} parent=11 // pred_check
          %p803 = pneg %p551
        $region90: #{knowformer_layer_forward.1} parent=11 // pred_check_branch
          %805 = sbr.rel (%p803) target = $region92
        $region91: #{knowformer_layer_forward.1} parent=11 // pred_region
          %s807 = ssub.s32 512, 512
          %808 = vsyncadd [#allocation30], %s807
          %s809 = sshll.u32 [#allocation31], 4
          %s810 = int_to_ptr.vmem [resolvable:$true] %s809
          %815 = dma.hbm_to_vmem [thread:$0]  %s24, 512, %s810, [#allocation30], 128, 128, 8
        $region92: #{knowformer_layer_forward.1} parent=11 // pred_fallthru
          _
      $region12: #{knowformer_layer_forward.1} parent=5 // pred_fallthru
        _
      %p816 = scmp.lt.s32.totalorder %s53, 2
      // Predicated region
      $region93: #{knowformer_layer_forward.1} parent=5 // pred_check
        %p817 = pneg %p816
      $region94: #{knowformer_layer_forward.1} parent=5 // pred_check_branch
        %819 = sbr.rel (%p817) target = $region96
      $region95: #{knowformer_layer_forward.1} parent=5 // pred_region
        // Predicated region
        $region97: #{knowformer_layer_forward.1} parent=95 // pred_check
          %p820 = pneg %p94
        $region98: #{knowformer_layer_forward.1} parent=95 // pred_check_branch
          %822 = sbr.rel (%p820) target = $region100
        $region99: #{knowformer_layer_forward.1} parent=95 // pred_region
          %p823 = scmp.lt.s32.totalorder %s53, 1
          %s824 = scalar_select %p823, %s53, 1
          %s825 = smul.addr %s824, 2
          %s826 = smul.addr %s825, 8
          %s827 = scalar_lea.vmem %s3, %s826
        $region100: #{knowformer_layer_forward.1} parent=95 // pred_fallthru
          _
        // Predicated region
        $region101: #{knowformer_layer_forward.1} parent=95 // pred_check
          %p828 = pneg %p120
        $region102: #{knowformer_layer_forward.1} parent=95 // pred_check_branch
          %830 = sbr.rel (%p828) target = $region104
        $region103: #{knowformer_layer_forward.1} parent=95 // pred_region
          %p831 = scmp.lt.s32.totalorder %s53, 1
          %s832 = scalar_select %p831, %s53, 1
          %s833 = scalar_lea.vmem %s4, %s832
        $region104: #{knowformer_layer_forward.1} parent=95 // pred_fallthru
          _
        // Predicated region
        $region105: #{knowformer_layer_forward.1} parent=95 // pred_check
          %p834 = pneg %p146
        $region106: #{knowformer_layer_forward.1} parent=95 // pred_check_branch
          %836 = sbr.rel (%p834) target = $region108
        $region107: #{knowformer_layer_forward.1} parent=95 // pred_region
          %p837 = scmp.lt.s32.totalorder %s53, 1
          %s838 = scalar_select %p837, %s53, 1
          %s839 = smul.addr %s838, 2
          %s840 = smul.addr %s839, 8
          %s841 = scalar_lea.vmem %s5, %s840
        $region108: #{knowformer_layer_forward.1} parent=95 // pred_fallthru
          _
      $region96: #{knowformer_layer_forward.1} parent=5 // pred_fallthru
        _
      %p842 = scmp.le.s32.totalorder 1, %s53
      %p843 = scmp.lt.s32.totalorder %s53, 3
      %p844 = pnand %p842, %p843
      %p845 = pneg %p844
      // Predicated region
      $region109: #{knowformer_layer_forward.1} parent=5 // pred_check
        _
      $region110: #{knowformer_layer_forward.1} parent=5 // pred_check_branch
        %847 = sbr.rel (%p844) target = $region112
      $region111: #{knowformer_layer_forward.1} parent=5 // pred_region
        %s848 = ssub.s32 %s53, 1
        // Predicated region
        $region113: #{knowformer_layer_forward.1} parent=111 // pred_check
          %p849 = pneg %p173
        $region114: #{knowformer_layer_forward.1} parent=111 // pred_check_branch
          %851 = sbr.rel (%p849) target = $region116
        $region115: #{knowformer_layer_forward.1} parent=111 // pred_region
          %852 = dma.done [#allocation6], 384
        $region116: #{knowformer_layer_forward.1} parent=111 // pred_fallthru
          _
        // Predicated region
        $region117: #{knowformer_layer_forward.1} parent=111 // pred_check
          %p853 = pneg %p194
        $region118: #{knowformer_layer_forward.1} parent=111 // pred_check_branch
          %855 = sbr.rel (%p853) target = $region120
        $region119: #{knowformer_layer_forward.1} parent=111 // pred_region
          %856 = dma.done [#allocation9], 512
        $region120: #{knowformer_layer_forward.1} parent=111 // pred_fallthru
          _
        // Predicated region
        $region121: #{knowformer_layer_forward.1} parent=111 // pred_check
          %p857 = pneg %p257
        $region122: #{knowformer_layer_forward.1} parent=111 // pred_check_branch
          %859 = sbr.rel (%p857) target = $region124
        $region123: #{knowformer_layer_forward.1} parent=111 // pred_region
          %860 = dma.done [#allocation9], 16
        $region124: #{knowformer_layer_forward.1} parent=111 // pred_fallthru
          _
        // Predicated region
        $region125: #{knowformer_layer_forward.1} parent=111 // pred_check
          %p861 = pneg %p278
        $region126: #{knowformer_layer_forward.1} parent=111 // pred_check_branch
          %863 = sbr.rel (%p861) target = $region128
        $region127: #{knowformer_layer_forward.1} parent=111 // pred_region
          %864 = dma.done [#allocation12], 512
        $region128: #{knowformer_layer_forward.1} parent=111 // pred_fallthru
          _
        // Predicated region
        $region129: #{knowformer_layer_forward.1} parent=111 // pred_check
          %p865 = pneg %p299
        $region130: #{knowformer_layer_forward.1} parent=111 // pred_check_branch
          %867 = sbr.rel (%p865) target = $region132
        $region131: #{knowformer_layer_forward.1} parent=111 // pred_region
          %868 = dma.done [#allocation12], 512
        $region132: #{knowformer_layer_forward.1} parent=111 // pred_fallthru
          _
        // Predicated region
        $region133: #{knowformer_layer_forward.1} parent=111 // pred_check
          %p869 = pneg %p320
        $region134: #{knowformer_layer_forward.1} parent=111 // pred_check_branch
          %871 = sbr.rel (%p869) target = $region136
        $region135: #{knowformer_layer_forward.1} parent=111 // pred_region
          %872 = dma.done [#allocation15], 512
        $region136: #{knowformer_layer_forward.1} parent=111 // pred_fallthru
          _
        // Predicated region
        $region137: #{knowformer_layer_forward.1} parent=111 // pred_check
          %p873 = pneg %p341
        $region138: #{knowformer_layer_forward.1} parent=111 // pred_check_branch
          %875 = sbr.rel (%p873) target = $region140
        $region139: #{knowformer_layer_forward.1} parent=111 // pred_region
          %876 = dma.done [#allocation15], 512
        $region140: #{knowformer_layer_forward.1} parent=111 // pred_fallthru
          _
        // Predicated region
        $region141: #{knowformer_layer_forward.1} parent=111 // pred_check
          %p877 = pneg %p362
        $region142: #{knowformer_layer_forward.1} parent=111 // pred_check_branch
          %879 = sbr.rel (%p877) target = $region144
        $region143: #{knowformer_layer_forward.1} parent=111 // pred_region
          %880 = dma.done [#allocation18], 512
        $region144: #{knowformer_layer_forward.1} parent=111 // pred_fallthru
          _
        // Predicated region
        $region145: #{knowformer_layer_forward.1} parent=111 // pred_check
          %p881 = pneg %p383
        $region146: #{knowformer_layer_forward.1} parent=111 // pred_check_branch
          %883 = sbr.rel (%p881) target = $region148
        $region147: #{knowformer_layer_forward.1} parent=111 // pred_region
          %884 = dma.done [#allocation18], 512
        $region148: #{knowformer_layer_forward.1} parent=111 // pred_fallthru
          _
        // Predicated region
        $region149: #{knowformer_layer_forward.1} parent=111 // pred_check
          %p885 = pneg %p404
        $region150: #{knowformer_layer_forward.1} parent=111 // pred_check_branch
          %887 = sbr.rel (%p885) target = $region152
        $region151: #{knowformer_layer_forward.1} parent=111 // pred_region
          %888 = dma.done [#allocation21], 512
        $region152: #{knowformer_layer_forward.1} parent=111 // pred_fallthru
          _
        // Predicated region
        $region153: #{knowformer_layer_forward.1} parent=111 // pred_check
          %p889 = pneg %p425
        $region154: #{knowformer_layer_forward.1} parent=111 // pred_check_branch
          %891 = sbr.rel (%p889) target = $region156
        $region155: #{knowformer_layer_forward.1} parent=111 // pred_region
          %892 = dma.done [#allocation21], 16
        $region156: #{knowformer_layer_forward.1} parent=111 // pred_fallthru
          _
        // Predicated region
        $region157: #{knowformer_layer_forward.1} parent=111 // pred_check
          %p893 = pneg %p446
        $region158: #{knowformer_layer_forward.1} parent=111 // pred_check_branch
          %895 = sbr.rel (%p893) target = $region160
        $region159: #{knowformer_layer_forward.1} parent=111 // pred_region
          %896 = dma.done [#allocation24], 512
        $region160: #{knowformer_layer_forward.1} parent=111 // pred_fallthru
          _
        // Predicated region
        $region161: #{knowformer_layer_forward.1} parent=111 // pred_check
          %p897 = pneg %p467
        $region162: #{knowformer_layer_forward.1} parent=111 // pred_check_branch
          %899 = sbr.rel (%p897) target = $region164
        $region163: #{knowformer_layer_forward.1} parent=111 // pred_region
          %900 = dma.done [#allocation24], 512
        $region164: #{knowformer_layer_forward.1} parent=111 // pred_fallthru
          _
        // Predicated region
        $region165: #{knowformer_layer_forward.1} parent=111 // pred_check
          %p901 = pneg %p488
        $region166: #{knowformer_layer_forward.1} parent=111 // pred_check_branch
          %903 = sbr.rel (%p901) target = $region168
        $region167: #{knowformer_layer_forward.1} parent=111 // pred_region
          %904 = dma.done [#allocation27], 512
        $region168: #{knowformer_layer_forward.1} parent=111 // pred_fallthru
          _
        // Predicated region
        $region169: #{knowformer_layer_forward.1} parent=111 // pred_check
          %p905 = pneg %p509
        $region170: #{knowformer_layer_forward.1} parent=111 // pred_check_branch
          %907 = sbr.rel (%p905) target = $region172
        $region171: #{knowformer_layer_forward.1} parent=111 // pred_region
          %908 = dma.done [#allocation27], 16
        $region172: #{knowformer_layer_forward.1} parent=111 // pred_fallthru
          _
        // Predicated region
        $region173: #{knowformer_layer_forward.1} parent=111 // pred_check
          %p909 = pneg %p530
        $region174: #{knowformer_layer_forward.1} parent=111 // pred_check_branch
          %911 = sbr.rel (%p909) target = $region176
        $region175: #{knowformer_layer_forward.1} parent=111 // pred_region
          %912 = dma.done [#allocation30], 512
        $region176: #{knowformer_layer_forward.1} parent=111 // pred_fallthru
          _
        // Predicated region
        $region177: #{knowformer_layer_forward.1} parent=111 // pred_check
          %p913 = pneg %p551
        $region178: #{knowformer_layer_forward.1} parent=111 // pred_check_branch
          %915 = sbr.rel (%p913) target = $region180
        $region179: #{knowformer_layer_forward.1} parent=111 // pred_region
          %916 = dma.done [#allocation30], 512
        $region180: #{knowformer_layer_forward.1} parent=111 // pred_fallthru
          _
        %p917 = pneg %p74
        %p918 = pneg %p71
        %p919 = scmp.lt.s32.totalorder %s58, 1
        %s920 = scalar_select %p919, %s58, 1
        %s921 = smul.addr %s920, 2
        %s922 = smul.addr %s921, 8
        %s923 = scalar_lea.vmem %s3, %s922
        %p924 = pneg %p100
        %p925 = pneg %p97
        %p926 = scmp.lt.s32.totalorder %s58, 1
        %s927 = scalar_select %p926, %s58, 1
        %s928 = scalar_lea.vmem %s4, %s927
        %p929 = pneg %p126
        %p930 = pneg %p123
        %p931 = scmp.lt.s32.totalorder %s58, 1
        %s932 = scalar_select %p931, %s58, 1
        %s933 = smul.addr %s932, 2
        %s934 = smul.addr %s933, 8
        %s935 = scalar_lea.vmem %s5, %s934
        %p936 = pneg %p152
        %p937 = pneg %p149
        %p938 = pneg %p173
        %p939 = pneg %p170
        %p940 = pneg %p194
        %p941 = pneg %p191
        %p942 = pneg %p215
        %p943 = pneg %p212
        %p944 = pneg %p236
        %p945 = pneg %p233
        %p946 = pneg %p257
        %p947 = pneg %p254
        %p948 = pneg %p278
        %p949 = pneg %p275
        %p950 = pneg %p299
        %p951 = pneg %p296
        %p952 = pneg %p320
        %p953 = pneg %p317
        %p954 = pneg %p341
        %p955 = pneg %p338
        %p956 = pneg %p362
        %p957 = pneg %p359
        %p958 = pneg %p383
        %p959 = pneg %p380
        %p960 = pneg %p404
        %p961 = pneg %p401
        %p962 = pneg %p425
        %p963 = pneg %p422
        %p964 = pneg %p446
        %p965 = pneg %p443
        %p966 = pneg %p467
        %p967 = pneg %p464
        %p968 = pneg %p488
        %p969 = pneg %p485
        %p970 = pneg %p509
        %p971 = pneg %p506
        %p972 = pneg %p530
        %p973 = pneg %p527
        %p974 = pneg %p551
        %p975 = pneg %p548
        %p976 = pneg %p577
        %p977 = pneg %p574
        %s978 = sand.u32 %s564, 1
        %s979 = scalar_lea.sflag [#allocation7], %s978
        %s980 = sand.u32 %s564, 1
        %s981 = smul.addr %s980, 16
        %s982 = scalar_lea.vmem [#allocation32], %s981
        %p983 = scmp.lt.s32.totalorder %s58, 1
        %s984 = scalar_select %p983, %s58, 1
        %s985 = smul.addr %s984, 2
        %s986 = smul.addr %s985, 8
        %s987 = scalar_lea.vmem %s3, %s986
        %p988 = scmp.lt.s32.totalorder %s58, 1
        %s989 = scalar_select %p988, %s58, 1
        %s990 = scalar_lea.vmem %s4, %s989
        %p991 = scmp.lt.s32.totalorder %s58, 1
        %s992 = scalar_select %p991, %s58, 1
        %s993 = smul.addr %s992, 2
        %s994 = smul.addr %s993, 8
        %s995 = scalar_lea.vmem %s5, %s994
        %s996 = sld [smem:[#allocation3 + %s58]]
        %s997 = sld [smem:[#allocation4 + %s58]]
        %p998 = scmp.eq.s32.totalorder %s997, 2
        %p999 = scmp.eq.s32.totalorder %s997, 3
        %p1000 = por %p998, %p999
        %s1001 = scalar_select %p1000, 0.333, 1.0
        %v1002 = vld [vmem:[%s2] sm:$0xff]
        %v1003 = vld [vmem:[%s2 + $0x8] sm:$0xff]
        %v1004 = vld [vmem:[%s2 + $0x10] sm:$0xff]
        %v1005 = vld [vmem:[%s2 + $0x18] sm:$0xff]
        %v1006 = vld [vmem:[%s2 + $0x20] sm:$0xff]
        %v1007 = vld [vmem:[%s2 + $0x28] sm:$0xff]
        %v1008 = vld [vmem:[%s2 + $0x30] sm:$0xff]
        %v1009 = vld [vmem:[%s2 + $0x38] sm:$0xff]
        %v1010 = vld [vmem:[%s987] sm:$0xff]
        %v1011 = vld [vmem:[%s987 + $0x8] sm:$0xff]
        %v1012 = vld [vmem:[%s990] sm:$0x1]
        %v1013 = vld [vmem:[%s995] sm:$0xff]
        %v1014 = vld [vmem:[%s995 + $0x8] sm:$0xff]
        %v1015 = vld [vmem:[#allocation5] sm:$0xff]
        %v1016 = vld [vmem:[#allocation5 + $0x8] sm:$0xff]
        %v1017 = vld [vmem:[#allocation5 + $0x10] sm:$0x3f]
        %v1018 = vld [vmem:[#allocation8] sm:$0xff]
        %v1019 = vld [vmem:[#allocation8 + $0x8] sm:$0xff]
        %v1020 = vld [vmem:[#allocation8 + $0x10] sm:$0xff]
        %v1021 = vld [vmem:[#allocation8 + $0x18] sm:$0xff]
        %v1022 = vld [vmem:[%s8] sm:$0xff]
        %v1023 = vld [vmem:[%s8 + $0x8] sm:$0xff]
        %v1024 = vld [vmem:[%s8 + $0x10] sm:$0xff]
        %v1025 = vld [vmem:[%s8 + $0x18] sm:$0xff]
        %v1026 = vld [vmem:[%s8 + $0x20] sm:$0xff]
        %v1027 = vld [vmem:[%s8 + $0x28] sm:$0xff]
        %v1028 = vld [vmem:[%s8 + $0x30] sm:$0xff]
        %v1029 = vld [vmem:[%s8 + $0x38] sm:$0xff]
        %v1030 = vld [vmem:[%s9] sm:$0xff]
        %v1031 = vld [vmem:[%s9 + $0x8] sm:$0xff]
        %v1032 = vld [vmem:[%s9 + $0x10] sm:$0xff]
        %v1033 = vld [vmem:[%s9 + $0x18] sm:$0xff]
        %v1034 = vld [vmem:[#allocation10] sm:$0x1]
        %vm1035 = vcmask 261120
        %v1037 = vsel %vm1035, %v1012, 0
        %1039 = vmatprep.subr.mxu0 0.0
        %1040 = vmatpush1.msra.mxu0 0.0
        %1041 = vmatprep.subr.mxu0 0.0
        %1042 = vmatpush1.msra.mxu0 0.0
        %1043 = vmatprep.subr.mxu0 0.0
        %1044 = vmatpush1.msra.mxu0 0.0
        %1045 = vmatprep.subr.mxu0 0.0
        %1046 = vmatpush1.msra.mxu0 0.0
        %1047 = vmatprep.subr.mxu0 0.0
        %1048 = vmatpush1.msra.mxu0 0.0
        %1049 = vmatprep.subr.mxu0 0.0
        %1050 = vmatpush1.msra.mxu0 0.0
        %1051 = vmatprep.subr.mxu0 0.0
        %1052 = vmatpush1.msra.mxu0 0.0
        %1053 = vmatprep.subr.mxu0 0.0
        %1054 = vmatpush1.msra.mxu0 0.0
        %1055 = vmatprep.subr.mxu0 0.0
        %1056 = vmatpush1.msra.mxu0 0.0
        %1057 = vmatprep.subr.mxu0 0.0
        %1058 = vmatpush1.msra.mxu0 0.0
        %1059 = vmatprep.subr.mxu0 0.0
        %1060 = vmatpush1.msra.mxu0 0.0
        %1061 = vmatprep.subr.mxu0 0.0
        %1062 = vmatpush1.msra.mxu0 0.0
        %1063 = vmatprep.subr.mxu0 0.0
        %1064 = vmatpush1.msra.mxu0 %v1033
        %1065 = vmatprep.subr.mxu0 0.0
        %1066 = vmatpush1.msra.mxu0 %v1032
        %1067 = vmatprep.subr.mxu0 0.0
        %1068 = vmatpush1.msra.mxu0 %v1031
        %1069 = vmatprep.subr.mxu0 0.0
        %1070 = vmatpush1.msra.mxu0 %v1030
        %1071 = vmatprep.subr.mxu0 0.0
        %1072 = vmatpush2.msra.mxu0 0.0
        %1073 = vmatprep.subr.mxu0 0.0
        %1074 = vmatpush2.msra.mxu0 0.0
        %1075 = vmatprep.subr.mxu0 0.0
        %1076 = vmatpush2.msra.mxu0 0.0
        %1077 = vmatprep.subr.mxu0 0.0
        %1078 = vmatpush2.msra.mxu0 0.0
        %1079 = vmatprep.subr.mxu0 0.0
        %1080 = vmatpush2.msra.mxu0 0.0
        %1081 = vmatprep.subr.mxu0 0.0
        %1082 = vmatpush2.msra.mxu0 0.0
        %1083 = vmatprep.subr.mxu0 0.0
        %1084 = vmatpush2.msra.mxu0 0.0
        %1085 = vmatprep.subr.mxu0 0.0
        %1086 = vmatpush2.msra.mxu0 0.0
        %1087 = vmatprep.subr.mxu0 0.0
        %1088 = vmatpush2.msra.mxu0 0.0
        %1089 = vmatprep.subr.mxu0 0.0
        %1090 = vmatpush2.msra.mxu0 0.0
        %1091 = vmatprep.subr.mxu0 0.0
        %1092 = vmatpush2.msra.mxu0 0.0
        %1093 = vmatprep.subr.mxu0 0.0
        %1094 = vmatpush2.msra.mxu0 0.0
        %1095 = vmatprep.subr.mxu0 0.0
        %1096 = vmatpush2.msra.mxu0 0.0
        %1097 = vmatprep.subr.mxu0 0.0
        %1098 = vmatpush2.msra.mxu0 0.0
        %1099 = vmatprep.subr.mxu0 0.0
        %1100 = vmatpush2.msra.mxu0 0.0
        %1101 = vmatprep.subr.mxu0 0.0
        %1102 = vmatpush2.msra.mxu0 0.0
        %1103 = vmatprep.mubr.f32.mxu0 0.0
        %1104 = vmatmul.mubr.f32.gmra.mxu0 %v1037
        %v1105 = vpop.f32.mrf.mxu0
        %v1106 = vadd.f32 %v1034, %v1105
        %v1107 = vpop.f32.mrf.mxu0
        %1108 = vdwg.mxu0
        %v1109 = vld [vmem:[#allocation11] sm:$0xff]
        %v1110 = vld [vmem:[#allocation11 + $0x8] sm:$0xff]
        %v1111 = vld [vmem:[#allocation11 + $0x10] sm:$0xff]
        %v1112 = vld [vmem:[#allocation11 + $0x18] sm:$0xff]
        %1114 = vset.pattern.permute.xlu0 0
        %1115 = vperm.xlu0 %1114, %v1013
        %v1116 = vpop.permute.xlu0 %1115
        %1119 = vset.pattern.permute.xlu0 0
        %1120 = vperm.xlu0 %1119, %v1014
        %v1121 = vpop.permute.xlu0 %1120
        %v1123 = vlaneseq
        %v1124 = vshrl.u32 %v1123, 7
        %v1125 = vsub.s32 0, %v1124
        %v1126 = vrot.slane %v1015, %v1125
        %v1127 = vmul.f32 %v1116, %v1126
        %v1128 = vmul.f32 %v1121, %v1126
        %v1130 = vsel %vm1035, %v1010, 0
        %v1133 = vsel %vm1035, %v1011, 0
        %1135 = vmatprep.subr.mxu0 0.0
        %1136 = vmatpush1.msra.mxu0 0.0
        %1137 = vmatprep.subr.mxu0 0.0
        %1138 = vmatpush1.msra.mxu0 0.0
        %1139 = vmatprep.subr.mxu0 0.0
        %1140 = vmatpush1.msra.mxu0 0.0
        %1141 = vmatprep.subr.mxu0 0.0
        %1142 = vmatpush1.msra.mxu0 0.0
        %1143 = vmatprep.subr.mxu0 0.0
        %1144 = vmatpush1.msra.mxu0 0.0
        %1145 = vmatprep.subr.mxu0 0.0
        %1146 = vmatpush1.msra.mxu0 0.0
        %1147 = vmatprep.subr.mxu0 0.0
        %1148 = vmatpush1.msra.mxu0 0.0
        %1149 = vmatprep.subr.mxu0 0.0
        %1150 = vmatpush1.msra.mxu0 0.0
        %1151 = vmatprep.subr.mxu0 0.0
        %1152 = vmatpush1.msra.mxu0 0.0
        %1153 = vmatprep.subr.mxu0 0.0
        %1154 = vmatpush1.msra.mxu0 0.0
        %1155 = vmatprep.subr.mxu0 0.0
        %1156 = vmatpush1.msra.mxu0 0.0
        %1157 = vmatprep.subr.mxu0 0.0
        %1158 = vmatpush1.msra.mxu0 0.0
        %1159 = vmatprep.subr.mxu0 0.0
        %1160 = vmatpush1.msra.mxu0 %v1112
        %1161 = vmatprep.subr.mxu0 0.0
        %1162 = vmatpush1.msra.mxu0 %v1111
        %1163 = vmatprep.subr.mxu0 0.0
        %1164 = vmatpush1.msra.mxu0 %v1110
        %1165 = vmatprep.subr.mxu0 0.0
        %1166 = vmatpush1.msra.mxu0 %v1109
        %1167 = vmatprep.subr.mxu0 0.0
        %1168 = vmatpush2.msra.mxu0 0.0
        %1169 = vmatprep.subr.mxu0 0.0
        %1170 = vmatpush2.msra.mxu0 0.0
        %1171 = vmatprep.subr.mxu0 0.0
        %1172 = vmatpush2.msra.mxu0 0.0
        %1173 = vmatprep.subr.mxu0 0.0
        %1174 = vmatpush2.msra.mxu0 0.0
        %1175 = vmatprep.subr.mxu0 0.0
        %1176 = vmatpush2.msra.mxu0 0.0
        %1177 = vmatprep.subr.mxu0 0.0
        %1178 = vmatpush2.msra.mxu0 0.0
        %1179 = vmatprep.subr.mxu0 0.0
        %1180 = vmatpush2.msra.mxu0 0.0
        %1181 = vmatprep.subr.mxu0 0.0
        %1182 = vmatpush2.msra.mxu0 0.0
        %1183 = vmatprep.subr.mxu0 0.0
        %1184 = vmatpush2.msra.mxu0 0.0
        %1185 = vmatprep.subr.mxu0 0.0
        %1186 = vmatpush2.msra.mxu0 0.0
        %1187 = vmatprep.subr.mxu0 0.0
        %1188 = vmatpush2.msra.mxu0 0.0
        %1189 = vmatprep.subr.mxu0 0.0
        %1190 = vmatpush2.msra.mxu0 0.0
        %1191 = vmatprep.subr.mxu0 0.0
        %1192 = vmatpush2.msra.mxu0 0.0
        %1193 = vmatprep.subr.mxu0 0.0
        %1194 = vmatpush2.msra.mxu0 0.0
        %1195 = vmatprep.subr.mxu0 0.0
        %1196 = vmatpush2.msra.mxu0 0.0
        %1197 = vmatprep.subr.mxu0 0.0
        %1198 = vmatpush2.msra.mxu0 0.0
        %1199 = vmatprep.mubr.f32.mxu0 0.0
        %1200 = vmatmul.mubr.f32.gmra.mxu0 %v1130
        %v1201 = vpop.f32.mrf.mxu0
        %v1202 = vadd.f32 %v1127, %v1201
        %v1203 = vpop.f32.mrf.mxu0
        %1204 = vmatprep.mubr.f32.mxu0 0.0
        %1205 = vmatmul.mubr.f32.gmra.mxu0 %v1133
        %v1206 = vpop.f32.mrf.mxu0
        %v1207 = vadd.f32 %v1128, %v1206
        %v1208 = vpop.f32.mrf.mxu0
        %1209 = vdwg.mxu0
        %v1210 = vlaneseq
        %v1211 = vshrl.u32 %v1210, 7
        %v1212 = vsub.s32 1, %v1211
        %v1213 = vrot.slane %v1015, %v1212
        %v1214 = vadd.f32 %v1202, %v1213
        %v1215 = vadd.f32 %v1207, %v1213
        %v1216 = vmax.f32 %v1214, 0.0
        %v1217 = vmax.f32 %v1215, 0.0
        %v1218 = vld [vmem:[#allocation13] sm:$0xff]
        %v1219 = vld [vmem:[#allocation13 + $0x8] sm:$0xff]
        %v1220 = vld [vmem:[#allocation13 + $0x10] sm:$0xff]
        %v1221 = vld [vmem:[#allocation13 + $0x18] sm:$0xff]
        %v1222 = vlaneseq
        %v1223 = vshrl.u32 %v1222, 7
        %v1224 = vsub.s32 2, %v1223
        %v1225 = vrot.slane %v1015, %v1224
        %v1227 = vsel %vm1035, %v1216, 0
        %v1230 = vsel %vm1035, %v1217, 0
        %1232 = vmatprep.subr.mxu0 0.0
        %1233 = vmatpush1.msra.mxu0 0.0
        %1234 = vmatprep.subr.mxu0 0.0
        %1235 = vmatpush1.msra.mxu0 0.0
        %1236 = vmatprep.subr.mxu0 0.0
        %1237 = vmatpush1.msra.mxu0 0.0
        %1238 = vmatprep.subr.mxu0 0.0
        %1239 = vmatpush1.msra.mxu0 0.0
        %1240 = vmatprep.subr.mxu0 0.0
        %1241 = vmatpush1.msra.mxu0 0.0
        %1242 = vmatprep.subr.mxu0 0.0
        %1243 = vmatpush1.msra.mxu0 0.0
        %1244 = vmatprep.subr.mxu0 0.0
        %1245 = vmatpush1.msra.mxu0 0.0
        %1246 = vmatprep.subr.mxu0 0.0
        %1247 = vmatpush1.msra.mxu0 0.0
        %1248 = vmatprep.subr.mxu0 0.0
        %1249 = vmatpush1.msra.mxu0 0.0
        %1250 = vmatprep.subr.mxu0 0.0
        %1251 = vmatpush1.msra.mxu0 0.0
        %1252 = vmatprep.subr.mxu0 0.0
        %1253 = vmatpush1.msra.mxu0 0.0
        %1254 = vmatprep.subr.mxu0 0.0
        %1255 = vmatpush1.msra.mxu0 0.0
        %1256 = vmatprep.subr.mxu0 0.0
        %1257 = vmatpush1.msra.mxu0 %v1221
        %1258 = vmatprep.subr.mxu0 0.0
        %1259 = vmatpush1.msra.mxu0 %v1220
        %1260 = vmatprep.subr.mxu0 0.0
        %1261 = vmatpush1.msra.mxu0 %v1219
        %1262 = vmatprep.subr.mxu0 0.0
        %1263 = vmatpush1.msra.mxu0 %v1218
        %1264 = vmatprep.subr.mxu0 0.0
        %1265 = vmatpush2.msra.mxu0 0.0
        %1266 = vmatprep.subr.mxu0 0.0
        %1267 = vmatpush2.msra.mxu0 0.0
        %1268 = vmatprep.subr.mxu0 0.0
        %1269 = vmatpush2.msra.mxu0 0.0
        %1270 = vmatprep.subr.mxu0 0.0
        %1271 = vmatpush2.msra.mxu0 0.0
        %1272 = vmatprep.subr.mxu0 0.0
        %1273 = vmatpush2.msra.mxu0 0.0
        %1274 = vmatprep.subr.mxu0 0.0
        %1275 = vmatpush2.msra.mxu0 0.0
        %1276 = vmatprep.subr.mxu0 0.0
        %1277 = vmatpush2.msra.mxu0 0.0
        %1278 = vmatprep.subr.mxu0 0.0
        %1279 = vmatpush2.msra.mxu0 0.0
        %1280 = vmatprep.subr.mxu0 0.0
        %1281 = vmatpush2.msra.mxu0 0.0
        %1282 = vmatprep.subr.mxu0 0.0
        %1283 = vmatpush2.msra.mxu0 0.0
        %1284 = vmatprep.subr.mxu0 0.0
        %1285 = vmatpush2.msra.mxu0 0.0
        %1286 = vmatprep.subr.mxu0 0.0
        %1287 = vmatpush2.msra.mxu0 0.0
        %1288 = vmatprep.subr.mxu0 0.0
        %1289 = vmatpush2.msra.mxu0 0.0
        %1290 = vmatprep.subr.mxu0 0.0
        %1291 = vmatpush2.msra.mxu0 0.0
        %1292 = vmatprep.subr.mxu0 0.0
        %1293 = vmatpush2.msra.mxu0 0.0
        %1294 = vmatprep.subr.mxu0 0.0
        %1295 = vmatpush2.msra.mxu0 0.0
        %1296 = vmatprep.mubr.f32.mxu0 0.0
        %1297 = vmatmul.mubr.f32.gmra.mxu0 %v1227
        %v1298 = vpop.f32.mrf.mxu0
        %v1299 = vadd.f32 %v1225, %v1298
        %v1300 = vpop.f32.mrf.mxu0
        %1301 = vmatprep.mubr.f32.mxu0 0.0
        %1302 = vmatmul.mubr.f32.gmra.mxu0 %v1230
        %v1303 = vpop.f32.mrf.mxu0
        %v1304 = vadd.f32 %v1225, %v1303
        %v1305 = vpop.f32.mrf.mxu0
        %1306 = vdwg.mxu0
        %vm1307 = vcmask 130048
        %v1309 = vsel %vm1307, %v1002, 0
        %v1312 = vsel %vm1307, %v1003, 0
        %v1315 = vsel %vm1307, %v1004, 0
        %v1318 = vsel %vm1307, %v1005, 0
        %v1321 = vsel %vm1307, %v1006, 0
        %v1324 = vsel %vm1307, %v1007, 0
        %v1327 = vsel %vm1307, %v1008, 0
        %v1330 = vsel %vm1307, %v1009, 0
        %1332 = vmatprep.subr.mxu0 0.0
        %1333 = vmatpush1.msra.mxu0 0.0
        %1334 = vmatprep.subr.mxu0 0.0
        %1335 = vmatpush1.msra.mxu0 0.0
        %1336 = vmatprep.subr.mxu0 0.0
        %1337 = vmatpush1.msra.mxu0 0.0
        %1338 = vmatprep.subr.mxu0 0.0
        %1339 = vmatpush1.msra.mxu0 0.0
        %1340 = vmatprep.subr.mxu0 0.0
        %1341 = vmatpush1.msra.mxu0 0.0
        %1342 = vmatprep.subr.mxu0 0.0
        %1343 = vmatpush1.msra.mxu0 0.0
        %1344 = vmatprep.subr.mxu0 0.0
        %1345 = vmatpush1.msra.mxu0 0.0
        %1346 = vmatprep.subr.mxu0 0.0
        %1347 = vmatpush1.msra.mxu0 0.0
        %1348 = vmatprep.subr.mxu0 0.0
        %1349 = vmatpush1.msra.mxu0 0.0
        %1350 = vmatprep.subr.mxu0 0.0
        %1351 = vmatpush1.msra.mxu0 0.0
        %1352 = vmatprep.subr.mxu0 0.0
        %1353 = vmatpush1.msra.mxu0 0.0
        %1354 = vmatprep.subr.mxu0 0.0
        %1355 = vmatpush1.msra.mxu0 0.0
        %1356 = vmatprep.subr.mxu0 0.0
        %1357 = vmatpush1.msra.mxu0 0.0
        %1358 = vmatprep.subr.mxu0 0.0
        %1359 = vmatpush1.msra.mxu0 0.0
        %1360 = vmatprep.subr.mxu0 0.0
        %1361 = vmatpush1.msra.mxu0 %v1304
        %1362 = vmatprep.subr.mxu0 0.0
        %1363 = vmatpush1.msra.mxu0 %v1299
        %1364 = vmatprep.subr.mxu0 0.0
        %1365 = vmatpush2.msra.mxu0 0.0
        %1366 = vmatprep.subr.mxu0 0.0
        %1367 = vmatpush2.msra.mxu0 0.0
        %1368 = vmatprep.subr.mxu0 0.0
        %1369 = vmatpush2.msra.mxu0 0.0
        %1370 = vmatprep.subr.mxu0 0.0
        %1371 = vmatpush2.msra.mxu0 0.0
        %1372 = vmatprep.subr.mxu0 0.0
        %1373 = vmatpush2.msra.mxu0 0.0
        %1374 = vmatprep.subr.mxu0 0.0
        %1375 = vmatpush2.msra.mxu0 0.0
        %1376 = vmatprep.subr.mxu0 0.0
        %1377 = vmatpush2.msra.mxu0 0.0
        %1378 = vmatprep.subr.mxu0 0.0
        %1379 = vmatpush2.msra.mxu0 0.0
        %1380 = vmatprep.subr.mxu0 0.0
        %1381 = vmatpush2.msra.mxu0 0.0
        %1382 = vmatprep.subr.mxu0 0.0
        %1383 = vmatpush2.msra.mxu0 0.0
        %1384 = vmatprep.subr.mxu0 0.0
        %1385 = vmatpush2.msra.mxu0 0.0
        %1386 = vmatprep.subr.mxu0 0.0
        %1387 = vmatpush2.msra.mxu0 0.0
        %1388 = vmatprep.subr.mxu0 0.0
        %1389 = vmatpush2.msra.mxu0 0.0
        %1390 = vmatprep.subr.mxu0 0.0
        %1391 = vmatpush2.msra.mxu0 0.0
        %1392 = vmatprep.subr.mxu0 0.0
        %1393 = vmatpush2.msra.mxu0 0.0
        %1394 = vmatprep.subr.mxu0 0.0
        %1395 = vmatpush2.msra.mxu0 0.0
        %1396 = vmatprep.mubr.f32.mxu0 0.0
        %1397 = vmatmul.mubr.f32.gmra.mxu0 %v1309
        %v1398 = vpop.f32.mrf.mxu0
        %v1399 = vadd.f32 0.0, %v1398
        %v1400 = vpop.f32.mrf.mxu0
        %1401 = vmatprep.mubr.f32.mxu0 0.0
        %1402 = vmatmul.mubr.f32.gmra.mxu0 %v1312
        %v1403 = vpop.f32.mrf.mxu0
        %v1404 = vadd.f32 0.0, %v1403
        %v1405 = vpop.f32.mrf.mxu0
        %1406 = vmatprep.mubr.f32.mxu0 0.0
        %1407 = vmatmul.mubr.f32.gmra.mxu0 %v1315
        %v1408 = vpop.f32.mrf.mxu0
        %v1409 = vadd.f32 0.0, %v1408
        %v1410 = vpop.f32.mrf.mxu0
        %1411 = vmatprep.mubr.f32.mxu0 0.0
        %1412 = vmatmul.mubr.f32.gmra.mxu0 %v1318
        %v1413 = vpop.f32.mrf.mxu0
        %v1414 = vadd.f32 0.0, %v1413
        %v1415 = vpop.f32.mrf.mxu0
        %1416 = vmatprep.mubr.f32.mxu0 0.0
        %1417 = vmatmul.mubr.f32.gmra.mxu0 %v1321
        %v1418 = vpop.f32.mrf.mxu0
        %v1419 = vadd.f32 0.0, %v1418
        %v1420 = vpop.f32.mrf.mxu0
        %1421 = vmatprep.mubr.f32.mxu0 0.0
        %1422 = vmatmul.mubr.f32.gmra.mxu0 %v1324
        %v1423 = vpop.f32.mrf.mxu0
        %v1424 = vadd.f32 0.0, %v1423
        %v1425 = vpop.f32.mrf.mxu0
        %1426 = vmatprep.mubr.f32.mxu0 0.0
        %1427 = vmatmul.mubr.f32.gmra.mxu0 %v1327
        %v1428 = vpop.f32.mrf.mxu0
        %v1429 = vadd.f32 0.0, %v1428
        %v1430 = vpop.f32.mrf.mxu0
        %1431 = vmatprep.mubr.f32.mxu0 0.0
        %1432 = vmatmul.mubr.f32.gmra.mxu0 %v1330
        %v1433 = vpop.f32.mrf.mxu0
        %v1434 = vadd.f32 0.0, %v1433
        %v1435 = vpop.f32.mrf.mxu0
        %1436 = vdwg.mxu0
        %v1437 = vlaneseq
        %v1438 = vshrl.u32 %v1437, 7
        %v1439 = vsub.s32 0, %v1438
        %v1440 = vrot.slane %v1106, %v1439
        %v1441 = vmul.f32 %v1399, %v1440
        %v1442 = vmul.f32 %v1404, %v1440
        %1444 = vrot.lane.b32.xlu0 %v1440, 96
        %v1445 = vpop.permute.xlu0 %1444
        %v1447 = vmul.f32 %v1409, %v1445
        %v1448 = vmul.f32 %v1414, %v1445
        %v1449 = vadd.f32 %v1441, %v1447
        %v1450 = vadd.f32 %v1442, %v1448
        %1451 = vrot.lane.b32.xlu0 %v1440, 64
        %v1452 = vpop.permute.xlu0 %1451
        %v1454 = vmul.f32 %v1419, %v1452
        %v1455 = vmul.f32 %v1424, %v1452
        %v1456 = vadd.f32 %v1449, %v1454
        %v1457 = vadd.f32 %v1450, %v1455
        %1458 = vrot.lane.b32.xlu0 %v1440, 32
        %v1459 = vpop.permute.xlu0 %1458
        %v1461 = vmul.f32 %v1429, %v1459
        %v1462 = vmul.f32 %v1434, %v1459
        %v1463 = vadd.f32 %v1456, %v1461
        %v1464 = vadd.f32 %v1457, %v1462
        %v1465 = vlaneseq
        %v1466 = vshrl.u32 %v1465, 7
        %v1467 = vsub.s32 6, %v1466
        %v1468 = vrot.slane %v1015, %v1467
        %v1469 = vmul.f32 %v1468, %v1299
        %v1470 = vmul.f32 %v1468, %v1304
        %v1471 = vadd.f32 %v1463, %v1469
        %v1472 = vadd.f32 %v1464, %v1470
        %v1473 = vld [vmem:[#allocation17] sm:$0xff]
        %v1474 = vld [vmem:[#allocation17 + $0x8] sm:$0xff]
        %v1475 = vld [vmem:[#allocation17 + $0x10] sm:$0xff]
        %v1476 = vld [vmem:[#allocation17 + $0x18] sm:$0xff]
        %v1477 = vld [vmem:[#allocation19] sm:$0xff]
        %v1478 = vld [vmem:[#allocation19 + $0x8] sm:$0xff]
        %v1479 = vld [vmem:[#allocation19 + $0x10] sm:$0xff]
        %v1480 = vld [vmem:[#allocation19 + $0x18] sm:$0xff]
        %v1481 = vlaneseq
        %v1482 = vshrl.u32 %v1481, 7
        %v1483 = vsub.s32 7, %v1482
        %v1484 = vrot.slane %v1015, %v1483
        %v1486 = vsel %vm1035, %v1471, 0
        %v1489 = vsel %vm1035, %v1472, 0
        %1491 = vmatprep.subr.mxu0 0.0
        %1492 = vmatpush1.msra.mxu0 0.0
        %1493 = vmatprep.subr.mxu0 0.0
        %1494 = vmatpush1.msra.mxu0 0.0
        %1495 = vmatprep.subr.mxu0 0.0
        %1496 = vmatpush1.msra.mxu0 0.0
        %1497 = vmatprep.subr.mxu0 0.0
        %1498 = vmatpush1.msra.mxu0 0.0
        %1499 = vmatprep.subr.mxu0 0.0
        %1500 = vmatpush1.msra.mxu0 0.0
        %1501 = vmatprep.subr.mxu0 0.0
        %1502 = vmatpush1.msra.mxu0 0.0
        %1503 = vmatprep.subr.mxu0 0.0
        %1504 = vmatpush1.msra.mxu0 0.0
        %1505 = vmatprep.subr.mxu0 0.0
        %1506 = vmatpush1.msra.mxu0 0.0
        %1507 = vmatprep.subr.mxu0 0.0
        %1508 = vmatpush1.msra.mxu0 0.0
        %1509 = vmatprep.subr.mxu0 0.0
        %1510 = vmatpush1.msra.mxu0 0.0
        %1511 = vmatprep.subr.mxu0 0.0
        %1512 = vmatpush1.msra.mxu0 0.0
        %1513 = vmatprep.subr.mxu0 0.0
        %1514 = vmatpush1.msra.mxu0 0.0
        %1515 = vmatprep.subr.mxu0 0.0
        %1516 = vmatpush1.msra.mxu0 %v1476
        %1517 = vmatprep.subr.mxu0 0.0
        %1518 = vmatpush1.msra.mxu0 %v1475
        %1519 = vmatprep.subr.mxu0 0.0
        %1520 = vmatpush1.msra.mxu0 %v1474
        %1521 = vmatprep.subr.mxu0 0.0
        %1522 = vmatpush1.msra.mxu0 %v1473
        %1523 = vmatprep.subr.mxu0 0.0
        %1524 = vmatpush2.msra.mxu0 0.0
        %1525 = vmatprep.subr.mxu0 0.0
        %1526 = vmatpush2.msra.mxu0 0.0
        %1527 = vmatprep.subr.mxu0 0.0
        %1528 = vmatpush2.msra.mxu0 0.0
        %1529 = vmatprep.subr.mxu0 0.0
        %1530 = vmatpush2.msra.mxu0 0.0
        %1531 = vmatprep.subr.mxu0 0.0
        %1532 = vmatpush2.msra.mxu0 0.0
        %1533 = vmatprep.subr.mxu0 0.0
        %1534 = vmatpush2.msra.mxu0 0.0
        %1535 = vmatprep.subr.mxu0 0.0
        %1536 = vmatpush2.msra.mxu0 0.0
        %1537 = vmatprep.subr.mxu0 0.0
        %1538 = vmatpush2.msra.mxu0 0.0
        %1539 = vmatprep.subr.mxu0 0.0
        %1540 = vmatpush2.msra.mxu0 0.0
        %1541 = vmatprep.subr.mxu0 0.0
        %1542 = vmatpush2.msra.mxu0 0.0
        %1543 = vmatprep.subr.mxu0 0.0
        %1544 = vmatpush2.msra.mxu0 0.0
        %1545 = vmatprep.subr.mxu0 0.0
        %1546 = vmatpush2.msra.mxu0 0.0
        %1547 = vmatprep.subr.mxu0 0.0
        %1548 = vmatpush2.msra.mxu0 0.0
        %1549 = vmatprep.subr.mxu0 0.0
        %1550 = vmatpush2.msra.mxu0 0.0
        %1551 = vmatprep.subr.mxu0 0.0
        %1552 = vmatpush2.msra.mxu0 0.0
        %1553 = vmatprep.subr.mxu0 0.0
        %1554 = vmatpush2.msra.mxu0 0.0
        %1555 = vmatprep.mubr.f32.mxu0 0.0
        %1556 = vmatmul.mubr.f32.gmra.mxu0 %v1486
        %v1557 = vpop.f32.mrf.mxu0
        %v1558 = vadd.f32 %v1484, %v1557
        %v1559 = vpop.f32.mrf.mxu0
        %1560 = vmatprep.mubr.f32.mxu0 0.0
        %1561 = vmatmul.mubr.f32.gmra.mxu0 %v1489
        %v1562 = vpop.f32.mrf.mxu0
        %v1563 = vadd.f32 %v1484, %v1562
        %v1564 = vpop.f32.mrf.mxu0
        %1565 = vdwg.mxu0
        %v1566 = vmax.f32 %v1558, 0.0
        %v1567 = vmax.f32 %v1563, 0.0
        %v1568 = vlaneseq
        %v1569 = vshrl.u32 %v1568, 7
        %v1570 = vsub.s32 0, %v1569
        %v1571 = vrot.slane %v1016, %v1570
        %v1573 = vsel %vm1035, %v1566, 0
        %v1576 = vsel %vm1035, %v1567, 0
        %1578 = vmatprep.subr.mxu0 0.0
        %1579 = vmatpush1.msra.mxu0 0.0
        %1580 = vmatprep.subr.mxu0 0.0
        %1581 = vmatpush1.msra.mxu0 0.0
        %1582 = vmatprep.subr.mxu0 0.0
        %1583 = vmatpush1.msra.mxu0 0.0
        %1584 = vmatprep.subr.mxu0 0.0
        %1585 = vmatpush1.msra.mxu0 0.0
        %1586 = vmatprep.subr.mxu0 0.0
        %1587 = vmatpush1.msra.mxu0 0.0
        %1588 = vmatprep.subr.mxu0 0.0
        %1589 = vmatpush1.msra.mxu0 0.0
        %1590 = vmatprep.subr.mxu0 0.0
        %1591 = vmatpush1.msra.mxu0 0.0
        %1592 = vmatprep.subr.mxu0 0.0
        %1593 = vmatpush1.msra.mxu0 0.0
        %1594 = vmatprep.subr.mxu0 0.0
        %1595 = vmatpush1.msra.mxu0 0.0
        %1596 = vmatprep.subr.mxu0 0.0
        %1597 = vmatpush1.msra.mxu0 0.0
        %1598 = vmatprep.subr.mxu0 0.0
        %1599 = vmatpush1.msra.mxu0 0.0
        %1600 = vmatprep.subr.mxu0 0.0
        %1601 = vmatpush1.msra.mxu0 0.0
        %1602 = vmatprep.subr.mxu0 0.0
        %1603 = vmatpush1.msra.mxu0 %v1480
        %1604 = vmatprep.subr.mxu0 0.0
        %1605 = vmatpush1.msra.mxu0 %v1479
        %1606 = vmatprep.subr.mxu0 0.0
        %1607 = vmatpush1.msra.mxu0 %v1478
        %1608 = vmatprep.subr.mxu0 0.0
        %1609 = vmatpush1.msra.mxu0 %v1477
        %1610 = vmatprep.subr.mxu0 0.0
        %1611 = vmatpush2.msra.mxu0 0.0
        %1612 = vmatprep.subr.mxu0 0.0
        %1613 = vmatpush2.msra.mxu0 0.0
        %1614 = vmatprep.subr.mxu0 0.0
        %1615 = vmatpush2.msra.mxu0 0.0
        %1616 = vmatprep.subr.mxu0 0.0
        %1617 = vmatpush2.msra.mxu0 0.0
        %1618 = vmatprep.subr.mxu0 0.0
        %1619 = vmatpush2.msra.mxu0 0.0
        %1620 = vmatprep.subr.mxu0 0.0
        %1621 = vmatpush2.msra.mxu0 0.0
        %1622 = vmatprep.subr.mxu0 0.0
        %1623 = vmatpush2.msra.mxu0 0.0
        %1624 = vmatprep.subr.mxu0 0.0
        %1625 = vmatpush2.msra.mxu0 0.0
        %1626 = vmatprep.subr.mxu0 0.0
        %1627 = vmatpush2.msra.mxu0 0.0
        %1628 = vmatprep.subr.mxu0 0.0
        %1629 = vmatpush2.msra.mxu0 0.0
        %1630 = vmatprep.subr.mxu0 0.0
        %1631 = vmatpush2.msra.mxu0 0.0
        %1632 = vmatprep.subr.mxu0 0.0
        %1633 = vmatpush2.msra.mxu0 0.0
        %1634 = vmatprep.subr.mxu0 0.0
        %1635 = vmatpush2.msra.mxu0 0.0
        %1636 = vmatprep.subr.mxu0 0.0
        %1637 = vmatpush2.msra.mxu0 0.0
        %1638 = vmatprep.subr.mxu0 0.0
        %1639 = vmatpush2.msra.mxu0 0.0
        %1640 = vmatprep.subr.mxu0 0.0
        %1641 = vmatpush2.msra.mxu0 0.0
        %1642 = vmatprep.mubr.f32.mxu0 0.0
        %1643 = vmatmul.mubr.f32.gmra.mxu0 %v1573
        %v1644 = vpop.f32.mrf.mxu0
        %v1645 = vadd.f32 %v1571, %v1644
        %v1646 = vpop.f32.mrf.mxu0
        %1647 = vmatprep.mubr.f32.mxu0 0.0
        %1648 = vmatmul.mubr.f32.gmra.mxu0 %v1576
        %v1649 = vpop.f32.mrf.mxu0
        %v1650 = vadd.f32 %v1571, %v1649
        %v1651 = vpop.f32.mrf.mxu0
        %1652 = vdwg.mxu0
        %v1653 = vsel %vm1035, %v1645, 0.0
        %1654 = vadd.xlane.f32.xlu0 %v1653
        %v1655 = vpop.xlane.xlu0 %1654
        %v1656 = vsel %vm1035, %v1650, 0.0
        %1657 = vadd.xlane.f32.xlu0 %v1656
        %v1658 = vpop.xlane.xlu0 %1657
        %v1659 = vrcp.pop 32.0
        %v1660 = vmul.f32 %v1655, %v1659
        %v1661 = vmul.f32 %v1658, %v1659
        %v1662 = vsub.f32 %v1645, %v1660
        %v1663 = vsub.f32 %v1650, %v1661
        %v1664 = vmul.f32 %v1662, %v1662
        %v1665 = vmul.f32 %v1663, %v1663
        %v1666 = vsel %vm1035, %v1664, 0.0
        %1667 = vadd.xlane.f32.xlu0 %v1666
        %v1668 = vpop.xlane.xlu0 %1667
        %v1669 = vsel %vm1035, %v1665, 0.0
        %1670 = vadd.xlane.f32.xlu0 %v1669
        %v1671 = vpop.xlane.xlu0 %1670
        %v1672 = vmul.f32 %v1668, %v1659
        %v1673 = vmul.f32 %v1671, %v1659
        %v1674 = vadd.f32 %v1672, 1e-05
        %v1675 = vadd.f32 %v1673, 1e-05
        %v1676 = vrsqrt.pop %v1674
        %v1677 = vrsqrt.pop %v1675
        %v1678 = vmul.f32 %v1662, %v1676
        %v1679 = vmul.f32 %v1663, %v1677
        %v1680 = vlaneseq
        %v1681 = vshrl.u32 %v1680, 7
        %v1682 = vsub.s32 1, %v1681
        %v1683 = vrot.slane %v1016, %v1682
        %v1684 = vmul.f32 %v1678, %v1683
        %v1685 = vmul.f32 %v1679, %v1683
        %v1686 = vlaneseq
        %v1687 = vshrl.u32 %v1686, 7
        %v1688 = vsub.s32 2, %v1687
        %v1689 = vrot.slane %v1016, %v1688
        %v1690 = vadd.f32 %v1684, %v1689
        %v1691 = vadd.f32 %v1685, %v1689
        %v1692 = vadd.f32 %v1690, %v1299
        %v1693 = vadd.f32 %v1691, %v1304
        %v1694 = vlaneseq
        %v1695 = vshrl.u32 %v1694, 7
        %v1696 = vadd.s32 %v1695, 8
        %v1697 = vstv %s996
        %vm1698 = vcmp.eq.s32.totalorder %v1695, %v1697
        %vm1699 = vcmp.eq.s32.totalorder %v1696, %v1697
        %v1700 = vsel %vm1698, 1, 0
        %v1701 = vsel %vm1699, 1, 0
        %v1702 = vcvt.s32.f32 %v1700
        %v1703 = vcvt.s32.f32 %v1701
        %v1704 = vld [vmem:[#allocation14] sm:$0xff]
        %v1705 = vld [vmem:[#allocation14 + $0x8] sm:$0xff]
        %v1706 = vld [vmem:[#allocation14 + $0x10] sm:$0xff]
        %v1707 = vld [vmem:[#allocation14 + $0x18] sm:$0xff]
        %v1708 = vlaneseq
        %v1709 = vshrl.u32 %v1708, 7
        %v1710 = vsub.s32 3, %v1709
        %v1711 = vrot.slane %v1015, %v1710
        %v1712 = vmul.f32 %v1702, %v1711
        %v1713 = vmul.f32 %v1703, %v1711
        %1714 = vmatprep.subr.mxu0 0.0
        %1715 = vmatpush1.msra.mxu0 0.0
        %1716 = vmatprep.subr.mxu0 0.0
        %1717 = vmatpush1.msra.mxu0 0.0
        %1718 = vmatprep.subr.mxu0 0.0
        %1719 = vmatpush1.msra.mxu0 0.0
        %1720 = vmatprep.subr.mxu0 0.0
        %1721 = vmatpush1.msra.mxu0 0.0
        %1722 = vmatprep.subr.mxu0 0.0
        %1723 = vmatpush1.msra.mxu0 0.0
        %1724 = vmatprep.subr.mxu0 0.0
        %1725 = vmatpush1.msra.mxu0 0.0
        %1726 = vmatprep.subr.mxu0 0.0
        %1727 = vmatpush1.msra.mxu0 0.0
        %1728 = vmatprep.subr.mxu0 0.0
        %1729 = vmatpush1.msra.mxu0 0.0
        %1730 = vmatprep.subr.mxu0 0.0
        %1731 = vmatpush1.msra.mxu0 0.0
        %1732 = vmatprep.subr.mxu0 0.0
        %1733 = vmatpush1.msra.mxu0 0.0
        %1734 = vmatprep.subr.mxu0 0.0
        %1735 = vmatpush1.msra.mxu0 0.0
        %1736 = vmatprep.subr.mxu0 0.0
        %1737 = vmatpush1.msra.mxu0 0.0
        %1738 = vmatprep.subr.mxu0 0.0
        %1739 = vmatpush1.msra.mxu0 %v1707
        %1740 = vmatprep.subr.mxu0 0.0
        %1741 = vmatpush1.msra.mxu0 %v1706
        %1742 = vmatprep.subr.mxu0 0.0
        %1743 = vmatpush1.msra.mxu0 %v1705
        %1744 = vmatprep.subr.mxu0 0.0
        %1745 = vmatpush1.msra.mxu0 %v1704
        %1746 = vmatprep.subr.mxu0 0.0
        %1747 = vmatpush2.msra.mxu0 0.0
        %1748 = vmatprep.subr.mxu0 0.0
        %1749 = vmatpush2.msra.mxu0 0.0
        %1750 = vmatprep.subr.mxu0 0.0
        %1751 = vmatpush2.msra.mxu0 0.0
        %1752 = vmatprep.subr.mxu0 0.0
        %1753 = vmatpush2.msra.mxu0 0.0
        %1754 = vmatprep.subr.mxu0 0.0
        %1755 = vmatpush2.msra.mxu0 0.0
        %1756 = vmatprep.subr.mxu0 0.0
        %1757 = vmatpush2.msra.mxu0 0.0
        %1758 = vmatprep.subr.mxu0 0.0
        %1759 = vmatpush2.msra.mxu0 0.0
        %1760 = vmatprep.subr.mxu0 0.0
        %1761 = vmatpush2.msra.mxu0 0.0
        %1762 = vmatprep.subr.mxu0 0.0
        %1763 = vmatpush2.msra.mxu0 0.0
        %1764 = vmatprep.subr.mxu0 0.0
        %1765 = vmatpush2.msra.mxu0 0.0
        %1766 = vmatprep.subr.mxu0 0.0
        %1767 = vmatpush2.msra.mxu0 0.0
        %1768 = vmatprep.subr.mxu0 0.0
        %1769 = vmatpush2.msra.mxu0 0.0
        %1770 = vmatprep.subr.mxu0 0.0
        %1771 = vmatpush2.msra.mxu0 0.0
        %1772 = vmatprep.subr.mxu0 0.0
        %1773 = vmatpush2.msra.mxu0 0.0
        %1774 = vmatprep.subr.mxu0 0.0
        %1775 = vmatpush2.msra.mxu0 0.0
        %1776 = vmatprep.subr.mxu0 0.0
        %1777 = vmatpush2.msra.mxu0 0.0
        %1778 = vmatprep.mubr.f32.mxu0 0.0
        %1779 = vmatmul.mubr.f32.gmra.mxu0 %v1130
        %v1780 = vpop.f32.mrf.mxu0
        %v1781 = vadd.f32 %v1712, %v1780
        %v1782 = vpop.f32.mrf.mxu0
        %1783 = vmatprep.mubr.f32.mxu0 0.0
        %1784 = vmatmul.mubr.f32.gmra.mxu0 %v1133
        %v1785 = vpop.f32.mrf.mxu0
        %v1786 = vadd.f32 %v1713, %v1785
        %v1787 = vpop.f32.mrf.mxu0
        %1788 = vdwg.mxu0
        %v1789 = vlaneseq
        %v1790 = vshrl.u32 %v1789, 7
        %v1791 = vsub.s32 4, %v1790
        %v1792 = vrot.slane %v1015, %v1791
        %v1793 = vadd.f32 %v1781, %v1792
        %v1794 = vadd.f32 %v1786, %v1792
        %v1795 = vmax.f32 %v1793, 0.0
        %v1796 = vmax.f32 %v1794, 0.0
        %v1797 = vld [vmem:[#allocation16] sm:$0xff]
        %v1798 = vld [vmem:[#allocation16 + $0x8] sm:$0xff]
        %v1799 = vld [vmem:[#allocation16 + $0x10] sm:$0xff]
        %v1800 = vld [vmem:[#allocation16 + $0x18] sm:$0xff]
        %v1801 = vlaneseq
        %v1802 = vshrl.u32 %v1801, 7
        %v1803 = vsub.s32 5, %v1802
        %v1804 = vrot.slane %v1015, %v1803
        %v1806 = vsel %vm1035, %v1795, 0
        %v1809 = vsel %vm1035, %v1796, 0
        %1811 = vmatprep.subr.mxu0 0.0
        %1812 = vmatpush1.msra.mxu0 0.0
        %1813 = vmatprep.subr.mxu0 0.0
        %1814 = vmatpush1.msra.mxu0 0.0
        %1815 = vmatprep.subr.mxu0 0.0
        %1816 = vmatpush1.msra.mxu0 0.0
        %1817 = vmatprep.subr.mxu0 0.0
        %1818 = vmatpush1.msra.mxu0 0.0
        %1819 = vmatprep.subr.mxu0 0.0
        %1820 = vmatpush1.msra.mxu0 0.0
        %1821 = vmatprep.subr.mxu0 0.0
        %1822 = vmatpush1.msra.mxu0 0.0
        %1823 = vmatprep.subr.mxu0 0.0
        %1824 = vmatpush1.msra.mxu0 0.0
        %1825 = vmatprep.subr.mxu0 0.0
        %1826 = vmatpush1.msra.mxu0 0.0
        %1827 = vmatprep.subr.mxu0 0.0
        %1828 = vmatpush1.msra.mxu0 0.0
        %1829 = vmatprep.subr.mxu0 0.0
        %1830 = vmatpush1.msra.mxu0 0.0
        %1831 = vmatprep.subr.mxu0 0.0
        %1832 = vmatpush1.msra.mxu0 0.0
        %1833 = vmatprep.subr.mxu0 0.0
        %1834 = vmatpush1.msra.mxu0 0.0
        %1835 = vmatprep.subr.mxu0 0.0
        %1836 = vmatpush1.msra.mxu0 %v1800
        %1837 = vmatprep.subr.mxu0 0.0
        %1838 = vmatpush1.msra.mxu0 %v1799
        %1839 = vmatprep.subr.mxu0 0.0
        %1840 = vmatpush1.msra.mxu0 %v1798
        %1841 = vmatprep.subr.mxu0 0.0
        %1842 = vmatpush1.msra.mxu0 %v1797
        %1843 = vmatprep.subr.mxu0 0.0
        %1844 = vmatpush2.msra.mxu0 0.0
        %1845 = vmatprep.subr.mxu0 0.0
        %1846 = vmatpush2.msra.mxu0 0.0
        %1847 = vmatprep.subr.mxu0 0.0
        %1848 = vmatpush2.msra.mxu0 0.0
        %1849 = vmatprep.subr.mxu0 0.0
        %1850 = vmatpush2.msra.mxu0 0.0
        %1851 = vmatprep.subr.mxu0 0.0
        %1852 = vmatpush2.msra.mxu0 0.0
        %1853 = vmatprep.subr.mxu0 0.0
        %1854 = vmatpush2.msra.mxu0 0.0
        %1855 = vmatprep.subr.mxu0 0.0
        %1856 = vmatpush2.msra.mxu0 0.0
        %1857 = vmatprep.subr.mxu0 0.0
        %1858 = vmatpush2.msra.mxu0 0.0
        %1859 = vmatprep.subr.mxu0 0.0
        %1860 = vmatpush2.msra.mxu0 0.0
        %1861 = vmatprep.subr.mxu0 0.0
        %1862 = vmatpush2.msra.mxu0 0.0
        %1863 = vmatprep.subr.mxu0 0.0
        %1864 = vmatpush2.msra.mxu0 0.0
        %1865 = vmatprep.subr.mxu0 0.0
        %1866 = vmatpush2.msra.mxu0 0.0
        %1867 = vmatprep.subr.mxu0 0.0
        %1868 = vmatpush2.msra.mxu0 0.0
        %1869 = vmatprep.subr.mxu0 0.0
        %1870 = vmatpush2.msra.mxu0 0.0
        %1871 = vmatprep.subr.mxu0 0.0
        %1872 = vmatpush2.msra.mxu0 0.0
        %1873 = vmatprep.subr.mxu0 0.0
        %1874 = vmatpush2.msra.mxu0 0.0
        %1875 = vmatprep.mubr.f32.mxu0 0.0
        %1876 = vmatmul.mubr.f32.gmra.mxu0 %v1806
        %v1877 = vpop.f32.mrf.mxu0
        %v1878 = vadd.f32 %v1804, %v1877
        %v1879 = vpop.f32.mrf.mxu0
        %1880 = vmatprep.mubr.f32.mxu0 0.0
        %1881 = vmatmul.mubr.f32.gmra.mxu0 %v1809
        %v1882 = vpop.f32.mrf.mxu0
        %v1883 = vadd.f32 %v1804, %v1882
        %v1884 = vpop.f32.mrf.mxu0
        %1885 = vdwg.mxu0
        %v1886 = vld [vmem:[#allocation20] sm:$0xff]
        %v1887 = vld [vmem:[#allocation20 + $0x8] sm:$0xff]
        %v1888 = vld [vmem:[#allocation20 + $0x10] sm:$0xff]
        %v1889 = vld [vmem:[#allocation20 + $0x18] sm:$0xff]
        %v1890 = vld [vmem:[#allocation22] sm:$0x1]
        %1891 = vmatprep.subr.mxu0 0.0
        %1892 = vmatpush1.msra.mxu0 0.0
        %1893 = vmatprep.subr.mxu0 0.0
        %1894 = vmatpush1.msra.mxu0 0.0
        %1895 = vmatprep.subr.mxu0 0.0
        %1896 = vmatpush1.msra.mxu0 0.0
        %1897 = vmatprep.subr.mxu0 0.0
        %1898 = vmatpush1.msra.mxu0 0.0
        %1899 = vmatprep.subr.mxu0 0.0
        %1900 = vmatpush1.msra.mxu0 0.0
        %1901 = vmatprep.subr.mxu0 0.0
        %1902 = vmatpush1.msra.mxu0 0.0
        %1903 = vmatprep.subr.mxu0 0.0
        %1904 = vmatpush1.msra.mxu0 0.0
        %1905 = vmatprep.subr.mxu0 0.0
        %1906 = vmatpush1.msra.mxu0 0.0
        %1907 = vmatprep.subr.mxu0 0.0
        %1908 = vmatpush1.msra.mxu0 0.0
        %1909 = vmatprep.subr.mxu0 0.0
        %1910 = vmatpush1.msra.mxu0 0.0
        %1911 = vmatprep.subr.mxu0 0.0
        %1912 = vmatpush1.msra.mxu0 0.0
        %1913 = vmatprep.subr.mxu0 0.0
        %1914 = vmatpush1.msra.mxu0 0.0
        %1915 = vmatprep.subr.mxu0 0.0
        %1916 = vmatpush1.msra.mxu0 %v1889
        %1917 = vmatprep.subr.mxu0 0.0
        %1918 = vmatpush1.msra.mxu0 %v1888
        %1919 = vmatprep.subr.mxu0 0.0
        %1920 = vmatpush1.msra.mxu0 %v1887
        %1921 = vmatprep.subr.mxu0 0.0
        %1922 = vmatpush1.msra.mxu0 %v1886
        %1923 = vmatprep.subr.mxu0 0.0
        %1924 = vmatpush2.msra.mxu0 0.0
        %1925 = vmatprep.subr.mxu0 0.0
        %1926 = vmatpush2.msra.mxu0 0.0
        %1927 = vmatprep.subr.mxu0 0.0
        %1928 = vmatpush2.msra.mxu0 0.0
        %1929 = vmatprep.subr.mxu0 0.0
        %1930 = vmatpush2.msra.mxu0 0.0
        %1931 = vmatprep.subr.mxu0 0.0
        %1932 = vmatpush2.msra.mxu0 0.0
        %1933 = vmatprep.subr.mxu0 0.0
        %1934 = vmatpush2.msra.mxu0 0.0
        %1935 = vmatprep.subr.mxu0 0.0
        %1936 = vmatpush2.msra.mxu0 0.0
        %1937 = vmatprep.subr.mxu0 0.0
        %1938 = vmatpush2.msra.mxu0 0.0
        %1939 = vmatprep.subr.mxu0 0.0
        %1940 = vmatpush2.msra.mxu0 0.0
        %1941 = vmatprep.subr.mxu0 0.0
        %1942 = vmatpush2.msra.mxu0 0.0
        %1943 = vmatprep.subr.mxu0 0.0
        %1944 = vmatpush2.msra.mxu0 0.0
        %1945 = vmatprep.subr.mxu0 0.0
        %1946 = vmatpush2.msra.mxu0 0.0
        %1947 = vmatprep.subr.mxu0 0.0
        %1948 = vmatpush2.msra.mxu0 0.0
        %1949 = vmatprep.subr.mxu0 0.0
        %1950 = vmatpush2.msra.mxu0 0.0
        %1951 = vmatprep.subr.mxu0 0.0
        %1952 = vmatpush2.msra.mxu0 0.0
        %1953 = vmatprep.subr.mxu0 0.0
        %1954 = vmatpush2.msra.mxu0 0.0
        %1955 = vmatprep.mubr.f32.mxu0 0.0
        %1956 = vmatmul.mubr.f32.gmra.mxu0 %v1037
        %v1957 = vpop.f32.mrf.mxu0
        %v1958 = vadd.f32 %v1890, %v1957
        %v1959 = vpop.f32.mrf.mxu0
        %1960 = vdwg.mxu0
        %1961 = vmatprep.subr.mxu0 0.0
        %1962 = vmatpush1.msra.mxu0 0.0
        %1963 = vmatprep.subr.mxu0 0.0
        %1964 = vmatpush1.msra.mxu0 0.0
        %1965 = vmatprep.subr.mxu0 0.0
        %1966 = vmatpush1.msra.mxu0 0.0
        %1967 = vmatprep.subr.mxu0 0.0
        %1968 = vmatpush1.msra.mxu0 0.0
        %1969 = vmatprep.subr.mxu0 0.0
        %1970 = vmatpush1.msra.mxu0 0.0
        %1971 = vmatprep.subr.mxu0 0.0
        %1972 = vmatpush1.msra.mxu0 0.0
        %1973 = vmatprep.subr.mxu0 0.0
        %1974 = vmatpush1.msra.mxu0 0.0
        %1975 = vmatprep.subr.mxu0 0.0
        %1976 = vmatpush1.msra.mxu0 0.0
        %1977 = vmatprep.subr.mxu0 0.0
        %1978 = vmatpush1.msra.mxu0 0.0
        %1979 = vmatprep.subr.mxu0 0.0
        %1980 = vmatpush1.msra.mxu0 0.0
        %1981 = vmatprep.subr.mxu0 0.0
        %1982 = vmatpush1.msra.mxu0 0.0
        %1983 = vmatprep.subr.mxu0 0.0
        %1984 = vmatpush1.msra.mxu0 0.0
        %1985 = vmatprep.subr.mxu0 0.0
        %1986 = vmatpush1.msra.mxu0 0.0
        %1987 = vmatprep.subr.mxu0 0.0
        %1988 = vmatpush1.msra.mxu0 0.0
        %1989 = vmatprep.subr.mxu0 0.0
        %1990 = vmatpush1.msra.mxu0 %v1883
        %1991 = vmatprep.subr.mxu0 0.0
        %1992 = vmatpush1.msra.mxu0 %v1878
        %1993 = vmatprep.subr.mxu0 0.0
        %1994 = vmatpush2.msra.mxu0 0.0
        %1995 = vmatprep.subr.mxu0 0.0
        %1996 = vmatpush2.msra.mxu0 0.0
        %1997 = vmatprep.subr.mxu0 0.0
        %1998 = vmatpush2.msra.mxu0 0.0
        %1999 = vmatprep.subr.mxu0 0.0
        %2000 = vmatpush2.msra.mxu0 0.0
        %2001 = vmatprep.subr.mxu0 0.0
        %2002 = vmatpush2.msra.mxu0 0.0
        %2003 = vmatprep.subr.mxu0 0.0
        %2004 = vmatpush2.msra.mxu0 0.0
        %2005 = vmatprep.subr.mxu0 0.0
        %2006 = vmatpush2.msra.mxu0 0.0
        %2007 = vmatprep.subr.mxu0 0.0
        %2008 = vmatpush2.msra.mxu0 0.0
        %2009 = vmatprep.subr.mxu0 0.0
        %2010 = vmatpush2.msra.mxu0 0.0
        %2011 = vmatprep.subr.mxu0 0.0
        %2012 = vmatpush2.msra.mxu0 0.0
        %2013 = vmatprep.subr.mxu0 0.0
        %2014 = vmatpush2.msra.mxu0 0.0
        %2015 = vmatprep.subr.mxu0 0.0
        %2016 = vmatpush2.msra.mxu0 0.0
        %2017 = vmatprep.subr.mxu0 0.0
        %2018 = vmatpush2.msra.mxu0 0.0
        %2019 = vmatprep.subr.mxu0 0.0
        %2020 = vmatpush2.msra.mxu0 0.0
        %2021 = vmatprep.subr.mxu0 0.0
        %2022 = vmatpush2.msra.mxu0 0.0
        %2023 = vmatprep.subr.mxu0 0.0
        %2024 = vmatpush2.msra.mxu0 0.0
        %2025 = vmatprep.mubr.f32.mxu0 0.0
        %2026 = vmatmul.mubr.f32.gmra.mxu0 %v1309
        %v2027 = vpop.f32.mrf.mxu0
        %v2028 = vadd.f32 0.0, %v2027
        %v2029 = vpop.f32.mrf.mxu0
        %2030 = vmatprep.mubr.f32.mxu0 0.0
        %2031 = vmatmul.mubr.f32.gmra.mxu0 %v1312
        %v2032 = vpop.f32.mrf.mxu0
        %v2033 = vadd.f32 0.0, %v2032
        %v2034 = vpop.f32.mrf.mxu0
        %2035 = vmatprep.mubr.f32.mxu0 0.0
        %2036 = vmatmul.mubr.f32.gmra.mxu0 %v1315
        %v2037 = vpop.f32.mrf.mxu0
        %v2038 = vadd.f32 0.0, %v2037
        %v2039 = vpop.f32.mrf.mxu0
        %2040 = vmatprep.mubr.f32.mxu0 0.0
        %2041 = vmatmul.mubr.f32.gmra.mxu0 %v1318
        %v2042 = vpop.f32.mrf.mxu0
        %v2043 = vadd.f32 0.0, %v2042
        %v2044 = vpop.f32.mrf.mxu0
        %2045 = vmatprep.mubr.f32.mxu0 0.0
        %2046 = vmatmul.mubr.f32.gmra.mxu0 %v1321
        %v2047 = vpop.f32.mrf.mxu0
        %v2048 = vadd.f32 0.0, %v2047
        %v2049 = vpop.f32.mrf.mxu0
        %2050 = vmatprep.mubr.f32.mxu0 0.0
        %2051 = vmatmul.mubr.f32.gmra.mxu0 %v1324
        %v2052 = vpop.f32.mrf.mxu0
        %v2053 = vadd.f32 0.0, %v2052
        %v2054 = vpop.f32.mrf.mxu0
        %2055 = vmatprep.mubr.f32.mxu0 0.0
        %2056 = vmatmul.mubr.f32.gmra.mxu0 %v1327
        %v2057 = vpop.f32.mrf.mxu0
        %v2058 = vadd.f32 0.0, %v2057
        %v2059 = vpop.f32.mrf.mxu0
        %2060 = vmatprep.mubr.f32.mxu0 0.0
        %2061 = vmatmul.mubr.f32.gmra.mxu0 %v1330
        %v2062 = vpop.f32.mrf.mxu0
        %v2063 = vadd.f32 0.0, %v2062
        %v2064 = vpop.f32.mrf.mxu0
        %2065 = vdwg.mxu0
        %v2066 = vlaneseq
        %v2067 = vshrl.u32 %v2066, 7
        %v2068 = vsub.s32 0, %v2067
        %v2069 = vrot.slane %v1958, %v2068
        %v2070 = vmul.f32 %v2028, %v2069
        %v2071 = vmul.f32 %v2033, %v2069
        %2073 = vrot.lane.b32.xlu0 %v2069, 96
        %v2074 = vpop.permute.xlu0 %2073
        %v2076 = vmul.f32 %v2038, %v2074
        %v2077 = vmul.f32 %v2043, %v2074
        %v2078 = vadd.f32 %v2070, %v2076
        %v2079 = vadd.f32 %v2071, %v2077
        %2080 = vrot.lane.b32.xlu0 %v2069, 64
        %v2081 = vpop.permute.xlu0 %2080
        %v2083 = vmul.f32 %v2048, %v2081
        %v2084 = vmul.f32 %v2053, %v2081
        %v2085 = vadd.f32 %v2078, %v2083
        %v2086 = vadd.f32 %v2079, %v2084
        %2087 = vrot.lane.b32.xlu0 %v2069, 32
        %v2088 = vpop.permute.xlu0 %2087
        %v2090 = vmul.f32 %v2058, %v2088
        %v2091 = vmul.f32 %v2063, %v2088
        %v2092 = vadd.f32 %v2085, %v2090
        %v2093 = vadd.f32 %v2086, %v2091
        %v2094 = vlaneseq
        %v2095 = vshrl.u32 %v2094, 7
        %v2096 = vsub.s32 3, %v2095
        %v2097 = vrot.slane %v1016, %v2096
        %v2098 = vmul.f32 %v2097, %v1878
        %v2099 = vmul.f32 %v2097, %v1883
        %v2100 = vadd.f32 %v2092, %v2098
        %v2101 = vadd.f32 %v2093, %v2099
        %v2102 = vld [vmem:[#allocation23] sm:$0xff]
        %v2103 = vld [vmem:[#allocation23 + $0x8] sm:$0xff]
        %v2104 = vld [vmem:[#allocation23 + $0x10] sm:$0xff]
        %v2105 = vld [vmem:[#allocation23 + $0x18] sm:$0xff]
        %v2106 = vld [vmem:[#allocation25] sm:$0xff]
        %v2107 = vld [vmem:[#allocation25 + $0x8] sm:$0xff]
        %v2108 = vld [vmem:[#allocation25 + $0x10] sm:$0xff]
        %v2109 = vld [vmem:[#allocation25 + $0x18] sm:$0xff]
        %v2110 = vlaneseq
        %v2111 = vshrl.u32 %v2110, 7
        %v2112 = vsub.s32 4, %v2111
        %v2113 = vrot.slane %v1016, %v2112
        %v2115 = vsel %vm1035, %v2100, 0
        %v2118 = vsel %vm1035, %v2101, 0
        %2120 = vmatprep.subr.mxu0 0.0
        %2121 = vmatpush1.msra.mxu0 0.0
        %2122 = vmatprep.subr.mxu0 0.0
        %2123 = vmatpush1.msra.mxu0 0.0
        %2124 = vmatprep.subr.mxu0 0.0
        %2125 = vmatpush1.msra.mxu0 0.0
        %2126 = vmatprep.subr.mxu0 0.0
        %2127 = vmatpush1.msra.mxu0 0.0
        %2128 = vmatprep.subr.mxu0 0.0
        %2129 = vmatpush1.msra.mxu0 0.0
        %2130 = vmatprep.subr.mxu0 0.0
        %2131 = vmatpush1.msra.mxu0 0.0
        %2132 = vmatprep.subr.mxu0 0.0
        %2133 = vmatpush1.msra.mxu0 0.0
        %2134 = vmatprep.subr.mxu0 0.0
        %2135 = vmatpush1.msra.mxu0 0.0
        %2136 = vmatprep.subr.mxu0 0.0
        %2137 = vmatpush1.msra.mxu0 0.0
        %2138 = vmatprep.subr.mxu0 0.0
        %2139 = vmatpush1.msra.mxu0 0.0
        %2140 = vmatprep.subr.mxu0 0.0
        %2141 = vmatpush1.msra.mxu0 0.0
        %2142 = vmatprep.subr.mxu0 0.0
        %2143 = vmatpush1.msra.mxu0 0.0
        %2144 = vmatprep.subr.mxu0 0.0
        %2145 = vmatpush1.msra.mxu0 %v2105
        %2146 = vmatprep.subr.mxu0 0.0
        %2147 = vmatpush1.msra.mxu0 %v2104
        %2148 = vmatprep.subr.mxu0 0.0
        %2149 = vmatpush1.msra.mxu0 %v2103
        %2150 = vmatprep.subr.mxu0 0.0
        %2151 = vmatpush1.msra.mxu0 %v2102
        %2152 = vmatprep.subr.mxu0 0.0
        %2153 = vmatpush2.msra.mxu0 0.0
        %2154 = vmatprep.subr.mxu0 0.0
        %2155 = vmatpush2.msra.mxu0 0.0
        %2156 = vmatprep.subr.mxu0 0.0
        %2157 = vmatpush2.msra.mxu0 0.0
        %2158 = vmatprep.subr.mxu0 0.0
        %2159 = vmatpush2.msra.mxu0 0.0
        %2160 = vmatprep.subr.mxu0 0.0
        %2161 = vmatpush2.msra.mxu0 0.0
        %2162 = vmatprep.subr.mxu0 0.0
        %2163 = vmatpush2.msra.mxu0 0.0
        %2164 = vmatprep.subr.mxu0 0.0
        %2165 = vmatpush2.msra.mxu0 0.0
        %2166 = vmatprep.subr.mxu0 0.0
        %2167 = vmatpush2.msra.mxu0 0.0
        %2168 = vmatprep.subr.mxu0 0.0
        %2169 = vmatpush2.msra.mxu0 0.0
        %2170 = vmatprep.subr.mxu0 0.0
        %2171 = vmatpush2.msra.mxu0 0.0
        %2172 = vmatprep.subr.mxu0 0.0
        %2173 = vmatpush2.msra.mxu0 0.0
        %2174 = vmatprep.subr.mxu0 0.0
        %2175 = vmatpush2.msra.mxu0 0.0
        %2176 = vmatprep.subr.mxu0 0.0
        %2177 = vmatpush2.msra.mxu0 0.0
        %2178 = vmatprep.subr.mxu0 0.0
        %2179 = vmatpush2.msra.mxu0 0.0
        %2180 = vmatprep.subr.mxu0 0.0
        %2181 = vmatpush2.msra.mxu0 0.0
        %2182 = vmatprep.subr.mxu0 0.0
        %2183 = vmatpush2.msra.mxu0 0.0
        %2184 = vmatprep.mubr.f32.mxu0 0.0
        %2185 = vmatmul.mubr.f32.gmra.mxu0 %v2115
        %v2186 = vpop.f32.mrf.mxu0
        %v2187 = vadd.f32 %v2113, %v2186
        %v2188 = vpop.f32.mrf.mxu0
        %2189 = vmatprep.mubr.f32.mxu0 0.0
        %2190 = vmatmul.mubr.f32.gmra.mxu0 %v2118
        %v2191 = vpop.f32.mrf.mxu0
        %v2192 = vadd.f32 %v2113, %v2191
        %v2193 = vpop.f32.mrf.mxu0
        %2194 = vdwg.mxu0
        %v2195 = vmax.f32 %v2187, 0.0
        %v2196 = vmax.f32 %v2192, 0.0
        %v2197 = vlaneseq
        %v2198 = vshrl.u32 %v2197, 7
        %v2199 = vsub.s32 5, %v2198
        %v2200 = vrot.slane %v1016, %v2199
        %v2202 = vsel %vm1035, %v2195, 0
        %v2205 = vsel %vm1035, %v2196, 0
        %2207 = vmatprep.subr.mxu0 0.0
        %2208 = vmatpush1.msra.mxu0 0.0
        %2209 = vmatprep.subr.mxu0 0.0
        %2210 = vmatpush1.msra.mxu0 0.0
        %2211 = vmatprep.subr.mxu0 0.0
        %2212 = vmatpush1.msra.mxu0 0.0
        %2213 = vmatprep.subr.mxu0 0.0
        %2214 = vmatpush1.msra.mxu0 0.0
        %2215 = vmatprep.subr.mxu0 0.0
        %2216 = vmatpush1.msra.mxu0 0.0
        %2217 = vmatprep.subr.mxu0 0.0
        %2218 = vmatpush1.msra.mxu0 0.0
        %2219 = vmatprep.subr.mxu0 0.0
        %2220 = vmatpush1.msra.mxu0 0.0
        %2221 = vmatprep.subr.mxu0 0.0
        %2222 = vmatpush1.msra.mxu0 0.0
        %2223 = vmatprep.subr.mxu0 0.0
        %2224 = vmatpush1.msra.mxu0 0.0
        %2225 = vmatprep.subr.mxu0 0.0
        %2226 = vmatpush1.msra.mxu0 0.0
        %2227 = vmatprep.subr.mxu0 0.0
        %2228 = vmatpush1.msra.mxu0 0.0
        %2229 = vmatprep.subr.mxu0 0.0
        %2230 = vmatpush1.msra.mxu0 0.0
        %2231 = vmatprep.subr.mxu0 0.0
        %2232 = vmatpush1.msra.mxu0 %v2109
        %2233 = vmatprep.subr.mxu0 0.0
        %2234 = vmatpush1.msra.mxu0 %v2108
        %2235 = vmatprep.subr.mxu0 0.0
        %2236 = vmatpush1.msra.mxu0 %v2107
        %2237 = vmatprep.subr.mxu0 0.0
        %2238 = vmatpush1.msra.mxu0 %v2106
        %2239 = vmatprep.subr.mxu0 0.0
        %2240 = vmatpush2.msra.mxu0 0.0
        %2241 = vmatprep.subr.mxu0 0.0
        %2242 = vmatpush2.msra.mxu0 0.0
        %2243 = vmatprep.subr.mxu0 0.0
        %2244 = vmatpush2.msra.mxu0 0.0
        %2245 = vmatprep.subr.mxu0 0.0
        %2246 = vmatpush2.msra.mxu0 0.0
        %2247 = vmatprep.subr.mxu0 0.0
        %2248 = vmatpush2.msra.mxu0 0.0
        %2249 = vmatprep.subr.mxu0 0.0
        %2250 = vmatpush2.msra.mxu0 0.0
        %2251 = vmatprep.subr.mxu0 0.0
        %2252 = vmatpush2.msra.mxu0 0.0
        %2253 = vmatprep.subr.mxu0 0.0
        %2254 = vmatpush2.msra.mxu0 0.0
        %2255 = vmatprep.subr.mxu0 0.0
        %2256 = vmatpush2.msra.mxu0 0.0
        %2257 = vmatprep.subr.mxu0 0.0
        %2258 = vmatpush2.msra.mxu0 0.0
        %2259 = vmatprep.subr.mxu0 0.0
        %2260 = vmatpush2.msra.mxu0 0.0
        %2261 = vmatprep.subr.mxu0 0.0
        %2262 = vmatpush2.msra.mxu0 0.0
        %2263 = vmatprep.subr.mxu0 0.0
        %2264 = vmatpush2.msra.mxu0 0.0
        %2265 = vmatprep.subr.mxu0 0.0
        %2266 = vmatpush2.msra.mxu0 0.0
        %2267 = vmatprep.subr.mxu0 0.0
        %2268 = vmatpush2.msra.mxu0 0.0
        %2269 = vmatprep.subr.mxu0 0.0
        %2270 = vmatpush2.msra.mxu0 0.0
        %2271 = vmatprep.mubr.f32.mxu0 0.0
        %2272 = vmatmul.mubr.f32.gmra.mxu0 %v2202
        %v2273 = vpop.f32.mrf.mxu0
        %v2274 = vadd.f32 %v2200, %v2273
        %v2275 = vpop.f32.mrf.mxu0
        %2276 = vmatprep.mubr.f32.mxu0 0.0
        %2277 = vmatmul.mubr.f32.gmra.mxu0 %v2205
        %v2278 = vpop.f32.mrf.mxu0
        %v2279 = vadd.f32 %v2200, %v2278
        %v2280 = vpop.f32.mrf.mxu0
        %2281 = vdwg.mxu0
        %v2282 = vsel %vm1035, %v2274, 0.0
        %2283 = vadd.xlane.f32.xlu0 %v2282
        %v2284 = vpop.xlane.xlu0 %2283
        %v2285 = vsel %vm1035, %v2279, 0.0
        %2286 = vadd.xlane.f32.xlu0 %v2285
        %v2287 = vpop.xlane.xlu0 %2286
        %v2288 = vmul.f32 %v2284, %v1659
        %v2289 = vmul.f32 %v2287, %v1659
        %v2290 = vsub.f32 %v2274, %v2288
        %v2291 = vsub.f32 %v2279, %v2289
        %v2292 = vmul.f32 %v2290, %v2290
        %v2293 = vmul.f32 %v2291, %v2291
        %v2294 = vsel %vm1035, %v2292, 0.0
        %2295 = vadd.xlane.f32.xlu0 %v2294
        %v2296 = vpop.xlane.xlu0 %2295
        %v2297 = vsel %vm1035, %v2293, 0.0
        %2298 = vadd.xlane.f32.xlu0 %v2297
        %v2299 = vpop.xlane.xlu0 %2298
        %v2300 = vmul.f32 %v2296, %v1659
        %v2301 = vmul.f32 %v2299, %v1659
        %v2302 = vadd.f32 %v2300, 1e-05
        %v2303 = vadd.f32 %v2301, 1e-05
        %v2304 = vrsqrt.pop %v2302
        %v2305 = vrsqrt.pop %v2303
        %v2306 = vmul.f32 %v2290, %v2304
        %v2307 = vmul.f32 %v2291, %v2305
        %v2308 = vlaneseq
        %v2309 = vshrl.u32 %v2308, 7
        %v2310 = vsub.s32 6, %v2309
        %v2311 = vrot.slane %v1016, %v2310
        %v2312 = vmul.f32 %v2306, %v2311
        %v2313 = vmul.f32 %v2307, %v2311
        %v2314 = vlaneseq
        %v2315 = vshrl.u32 %v2314, 7
        %v2316 = vsub.s32 7, %v2315
        %v2317 = vrot.slane %v1016, %v2316
        %v2318 = vadd.f32 %v2312, %v2317
        %v2319 = vadd.f32 %v2313, %v2317
        %v2320 = vadd.f32 %v2318, %v1878
        %v2321 = vadd.f32 %v2319, %v1883
        %v2322 = vld [vmem:[#allocation26] sm:$0xff]
        %v2323 = vld [vmem:[#allocation26 + $0x8] sm:$0xff]
        %v2324 = vld [vmem:[#allocation26 + $0x10] sm:$0xff]
        %v2325 = vld [vmem:[#allocation26 + $0x18] sm:$0xff]
        %v2326 = vld [vmem:[#allocation28] sm:$0x1]
        %v2328 = vlaneseq
        %v2329 = vshrl.u32 %v2328, 7
        %v2330 = vsub.s32 0, %v2329
        %v2331 = vrot.slane %v2326, %v2330
        %v2334 = vsel %vm1035, %v1692, 0
        %v2337 = vsel %vm1035, %v1693, 0
        %2339 = vmatprep.subr.mxu0 0.0
        %2340 = vmatpush1.msra.mxu0 0.0
        %2341 = vmatprep.subr.mxu0 0.0
        %2342 = vmatpush1.msra.mxu0 0.0
        %2343 = vmatprep.subr.mxu0 0.0
        %2344 = vmatpush1.msra.mxu0 0.0
        %2345 = vmatprep.subr.mxu0 0.0
        %2346 = vmatpush1.msra.mxu0 0.0
        %2347 = vmatprep.subr.mxu0 0.0
        %2348 = vmatpush1.msra.mxu0 0.0
        %2349 = vmatprep.subr.mxu0 0.0
        %2350 = vmatpush1.msra.mxu0 0.0
        %2351 = vmatprep.subr.mxu0 0.0
        %2352 = vmatpush1.msra.mxu0 0.0
        %2353 = vmatprep.subr.mxu0 0.0
        %2354 = vmatpush1.msra.mxu0 0.0
        %2355 = vmatprep.subr.mxu0 0.0
        %2356 = vmatpush1.msra.mxu0 0.0
        %2357 = vmatprep.subr.mxu0 0.0
        %2358 = vmatpush1.msra.mxu0 0.0
        %2359 = vmatprep.subr.mxu0 0.0
        %2360 = vmatpush1.msra.mxu0 0.0
        %2361 = vmatprep.subr.mxu0 0.0
        %2362 = vmatpush1.msra.mxu0 0.0
        %2363 = vmatprep.subr.mxu0 0.0
        %2364 = vmatpush1.msra.mxu0 %v2325
        %2365 = vmatprep.subr.mxu0 0.0
        %2366 = vmatpush1.msra.mxu0 %v2324
        %2367 = vmatprep.subr.mxu0 0.0
        %2368 = vmatpush1.msra.mxu0 %v2323
        %2369 = vmatprep.subr.mxu0 0.0
        %2370 = vmatpush1.msra.mxu0 %v2322
        %2371 = vmatprep.subr.mxu0 0.0
        %2372 = vmatpush2.msra.mxu0 0.0
        %2373 = vmatprep.subr.mxu0 0.0
        %2374 = vmatpush2.msra.mxu0 0.0
        %2375 = vmatprep.subr.mxu0 0.0
        %2376 = vmatpush2.msra.mxu0 0.0
        %2377 = vmatprep.subr.mxu0 0.0
        %2378 = vmatpush2.msra.mxu0 0.0
        %2379 = vmatprep.subr.mxu0 0.0
        %2380 = vmatpush2.msra.mxu0 0.0
        %2381 = vmatprep.subr.mxu0 0.0
        %2382 = vmatpush2.msra.mxu0 0.0
        %2383 = vmatprep.subr.mxu0 0.0
        %2384 = vmatpush2.msra.mxu0 0.0
        %2385 = vmatprep.subr.mxu0 0.0
        %2386 = vmatpush2.msra.mxu0 0.0
        %2387 = vmatprep.subr.mxu0 0.0
        %2388 = vmatpush2.msra.mxu0 0.0
        %2389 = vmatprep.subr.mxu0 0.0
        %2390 = vmatpush2.msra.mxu0 0.0
        %2391 = vmatprep.subr.mxu0 0.0
        %2392 = vmatpush2.msra.mxu0 0.0
        %2393 = vmatprep.subr.mxu0 0.0
        %2394 = vmatpush2.msra.mxu0 0.0
        %2395 = vmatprep.subr.mxu0 0.0
        %2396 = vmatpush2.msra.mxu0 0.0
        %2397 = vmatprep.subr.mxu0 0.0
        %2398 = vmatpush2.msra.mxu0 0.0
        %2399 = vmatprep.subr.mxu0 0.0
        %2400 = vmatpush2.msra.mxu0 0.0
        %2401 = vmatprep.subr.mxu0 0.0
        %2402 = vmatpush2.msra.mxu0 0.0
        %2403 = vmatprep.mubr.f32.mxu0 0.0
        %2404 = vmatmul.mubr.f32.gmra.mxu0 %v2334
        %v2405 = vpop.f32.mrf.mxu0
        %v2406 = vadd.f32 %v2331, %v2405
        %v2407 = vpop.f32.mrf.mxu0
        %2408 = vmatprep.mubr.f32.mxu0 0.0
        %2409 = vmatmul.mubr.f32.gmra.mxu0 %v2337
        %v2410 = vpop.f32.mrf.mxu0
        %v2411 = vadd.f32 %v2331, %v2410
        %v2412 = vpop.f32.mrf.mxu0
        %2413 = vdwg.mxu0
        %v2414 = vmul.f32 %v2406, %v2406
        %v2415 = vmul.f32 %v2411, %v2411
        %vm2416 = vcmask 523264
        %v2418 = vsel %vm2416, %v2414, 0
        %v2421 = vsel %vm2416, %v2415, 0
        %2423 = vmatprep.subr.mxu0 0.0
        %2424 = vmatpush1.msra.mxu0 0.0
        %2425 = vmatprep.subr.mxu0 0.0
        %2426 = vmatpush1.msra.mxu0 0.0
        %2427 = vmatprep.subr.mxu0 0.0
        %2428 = vmatpush1.msra.mxu0 0.0
        %2429 = vmatprep.subr.mxu0 0.0
        %2430 = vmatpush1.msra.mxu0 0.0
        %2431 = vmatprep.subr.mxu0 0.0
        %2432 = vmatpush1.msra.mxu0 0.0
        %2433 = vmatprep.subr.mxu0 0.0
        %2434 = vmatpush1.msra.mxu0 0.0
        %2435 = vmatprep.subr.mxu0 0.0
        %2436 = vmatpush1.msra.mxu0 0.0
        %2437 = vmatprep.subr.mxu0 0.0
        %2438 = vmatpush1.msra.mxu0 0.0
        %2439 = vmatprep.subr.mxu0 0.0
        %2440 = vmatpush1.msra.mxu0 %v1029
        %2441 = vmatprep.subr.mxu0 0.0
        %2442 = vmatpush1.msra.mxu0 %v1028
        %2443 = vmatprep.subr.mxu0 0.0
        %2444 = vmatpush1.msra.mxu0 %v1027
        %2445 = vmatprep.subr.mxu0 0.0
        %2446 = vmatpush1.msra.mxu0 %v1026
        %2447 = vmatprep.subr.mxu0 0.0
        %2448 = vmatpush1.msra.mxu0 %v1025
        %2449 = vmatprep.subr.mxu0 0.0
        %2450 = vmatpush1.msra.mxu0 %v1024
        %2451 = vmatprep.subr.mxu0 0.0
        %2452 = vmatpush1.msra.mxu0 %v1023
        %2453 = vmatprep.subr.mxu0 0.0
        %2454 = vmatpush1.msra.mxu0 %v1022
        %2455 = vmatprep.subr.mxu0 0.0
        %2456 = vmatpush2.msra.mxu0 0.0
        %2457 = vmatprep.subr.mxu0 0.0
        %2458 = vmatpush2.msra.mxu0 0.0
        %2459 = vmatprep.subr.mxu0 0.0
        %2460 = vmatpush2.msra.mxu0 0.0
        %2461 = vmatprep.subr.mxu0 0.0
        %2462 = vmatpush2.msra.mxu0 0.0
        %2463 = vmatprep.subr.mxu0 0.0
        %2464 = vmatpush2.msra.mxu0 0.0
        %2465 = vmatprep.subr.mxu0 0.0
        %2466 = vmatpush2.msra.mxu0 0.0
        %2467 = vmatprep.subr.mxu0 0.0
        %2468 = vmatpush2.msra.mxu0 0.0
        %2469 = vmatprep.subr.mxu0 0.0
        %2470 = vmatpush2.msra.mxu0 0.0
        %2471 = vmatprep.subr.mxu0 0.0
        %2472 = vmatpush2.msra.mxu0 0.0
        %2473 = vmatprep.subr.mxu0 0.0
        %2474 = vmatpush2.msra.mxu0 0.0
        %2475 = vmatprep.subr.mxu0 0.0
        %2476 = vmatpush2.msra.mxu0 0.0
        %2477 = vmatprep.subr.mxu0 0.0
        %2478 = vmatpush2.msra.mxu0 0.0
        %2479 = vmatprep.subr.mxu0 0.0
        %2480 = vmatpush2.msra.mxu0 0.0
        %2481 = vmatprep.subr.mxu0 0.0
        %2482 = vmatpush2.msra.mxu0 0.0
        %2483 = vmatprep.subr.mxu0 0.0
        %2484 = vmatpush2.msra.mxu0 0.0
        %2485 = vmatprep.subr.mxu0 0.0
        %2486 = vmatpush2.msra.mxu0 0.0
        %2487 = vmatprep.mubr.f32.mxu0 0.0
        %2488 = vmatmul.mubr.f32.gmra.mxu0 %v2418
        %v2489 = vpop.f32.mrf.mxu0
        %v2490 = vadd.f32 0.0, %v2489
        %v2491 = vpop.f32.mrf.mxu0
        %2492 = vmatprep.mubr.f32.mxu0 0.0
        %2493 = vmatmul.mubr.f32.gmra.mxu0 %v2421
        %v2494 = vpop.f32.mrf.mxu0
        %v2495 = vadd.f32 0.0, %v2494
        %v2496 = vpop.f32.mrf.mxu0
        %2497 = vdwg.mxu0
        %v2498 = vrsqrt.pop %v2490
        %v2499 = vmul.f32 %v2490, %v2498
        %vm2500 = vcmp.eq.f32.partialorder %v2490, inf
        %v2501 = vsel %vm2500, %v2490, %v2499
        %vm2502 = vcmp.eq.f32.partialorder %v2490, 0.0
        %v2503 = vand.u32 %v2490, 2147483648
        %v2504 = vsel %vm2502, %v2503, %v2501
        %v2505 = vrsqrt.pop %v2495
        %v2506 = vmul.f32 %v2495, %v2505
        %vm2507 = vcmp.eq.f32.partialorder %v2495, inf
        %v2508 = vsel %vm2507, %v2495, %v2506
        %vm2509 = vcmp.eq.f32.partialorder %v2495, 0.0
        %v2510 = vand.u32 %v2495, 2147483648
        %v2511 = vsel %vm2509, %v2510, %v2508
        %v2512 = vmax.f32 %v2504, 1e-12
        %v2513 = vmax.f32 %v2511, 1e-12
        %v2514 = vrcp.pop %v2512
        %v2515 = vmul.f32 %v2406, %v2514
        %v2516 = vrcp.pop %v2513
        %v2517 = vmul.f32 %v2411, %v2516
        %v2518 = vstv %s1001
        %v2519 = vmul.f32 %v2515, %v2518
        %v2520 = vmul.f32 %v2517, %v2518
        %v2521 = vsel %vm1035, %v2320, 1.0
        %v2522 = vsel %vm1035, %v2321, 1.0
        %2525 = vrot.lane.b32.xlu0 %v2519, 96
        %v2526 = vpop.permute.xlu0 %2525
        %2527 = vrot.lane.b32.xlu0 %v2520, 96
        %v2528 = vpop.permute.xlu0 %2527
        %2531 = vxpose.xlu0.b32.start [1/16] %v2526, 128
        %2532 = vxpose.xlu0.b32.cont [2/16] %v2528, 128
        %2533 = vxpose.xlu0.b32.cont [3/16] 0.0, 128
        %2534 = vxpose.xlu0.b32.cont [4/16] 0.0, 128
        %2535 = vxpose.xlu0.b32.cont [5/16] 0.0, 128
        %2536 = vxpose.xlu0.b32.cont [6/16] 0.0, 128
        %2537 = vxpose.xlu0.b32.cont [7/16] 0.0, 128
        %2538 = vxpose.xlu0.b32.cont [8/16] 0.0, 128
        %2539 = vxpose.xlu0.b32.cont [9/16] 0.0, 128
        %2540 = vxpose.xlu0.b32.cont [10/16] 0.0, 128
        %2541 = vxpose.xlu0.b32.cont [11/16] 0.0, 128
        %2542 = vxpose.xlu0.b32.cont [12/16] 0.0, 128
        %2543 = vxpose.xlu0.b32.cont [13/16] 0.0, 128
        %2544 = vxpose.xlu0.b32.cont [14/16] 0.0, 128
        %2545 = vxpose.xlu0.b32.cont [15/16] 0.0, 128
        %2546 = vxpose.xlu0.b32.end [16/16] 0.0, 128
        %v2547 = vpop.trf.xlu0
        %v2548 = vpop.trf.xlu0
        %v2549 = vpop.trf.xlu0
        %v2550 = vpop.trf.xlu0
        %v2551 = vpop.trf.xlu0
        %v2552 = vpop.trf.xlu0
        %v2553 = vpop.trf.xlu0
        %v2554 = vpop.trf.xlu0
        %v2555 = vpop.trf.xlu0
        %v2556 = vpop.trf.xlu0
        %v2557 = vpop.trf.xlu0
        %v2558 = vpop.trf.xlu0
        %v2559 = vpop.trf.xlu0
        %v2560 = vpop.trf.xlu0
        %v2561 = vpop.trf.xlu0
        %v2562 = vpop.trf.xlu0
        %v2564 = vsel %vm1307, %v2547, 0
        %v2567 = vsel %vm1307, %v2548, 0
        %v2570 = vsel %vm1307, %v2549, 0
        %v2573 = vsel %vm1307, %v2550, 0
        %2575 = vmatprep.subr.mxu0 0.0
        %2576 = vmatpush1.msra.mxu0 0.0
        %2577 = vmatprep.subr.mxu0 0.0
        %2578 = vmatpush1.msra.mxu0 0.0
        %2579 = vmatprep.subr.mxu0 0.0
        %2580 = vmatpush1.msra.mxu0 0.0
        %2581 = vmatprep.subr.mxu0 0.0
        %2582 = vmatpush1.msra.mxu0 0.0
        %2583 = vmatprep.subr.mxu0 0.0
        %2584 = vmatpush1.msra.mxu0 0.0
        %2585 = vmatprep.subr.mxu0 0.0
        %2586 = vmatpush1.msra.mxu0 0.0
        %2587 = vmatprep.subr.mxu0 0.0
        %2588 = vmatpush1.msra.mxu0 0.0
        %2589 = vmatprep.subr.mxu0 0.0
        %2590 = vmatpush1.msra.mxu0 0.0
        %2591 = vmatprep.subr.mxu0 0.0
        %2592 = vmatpush1.msra.mxu0 0.0
        %2593 = vmatprep.subr.mxu0 0.0
        %2594 = vmatpush1.msra.mxu0 0.0
        %2595 = vmatprep.subr.mxu0 0.0
        %2596 = vmatpush1.msra.mxu0 0.0
        %2597 = vmatprep.subr.mxu0 0.0
        %2598 = vmatpush1.msra.mxu0 0.0
        %2599 = vmatprep.subr.mxu0 0.0
        %2600 = vmatpush1.msra.mxu0 0.0
        %2601 = vmatprep.subr.mxu0 0.0
        %2602 = vmatpush1.msra.mxu0 0.0
        %2603 = vmatprep.subr.mxu0 0.0
        %2604 = vmatpush1.msra.mxu0 %v2522
        %2605 = vmatprep.subr.mxu0 0.0
        %2606 = vmatpush1.msra.mxu0 %v2521
        %2607 = vmatprep.subr.mxu0 0.0
        %2608 = vmatpush2.msra.mxu0 0.0
        %2609 = vmatprep.subr.mxu0 0.0
        %2610 = vmatpush2.msra.mxu0 0.0
        %2611 = vmatprep.subr.mxu0 0.0
        %2612 = vmatpush2.msra.mxu0 0.0
        %2613 = vmatprep.subr.mxu0 0.0
        %2614 = vmatpush2.msra.mxu0 0.0
        %2615 = vmatprep.subr.mxu0 0.0
        %2616 = vmatpush2.msra.mxu0 0.0
        %2617 = vmatprep.subr.mxu0 0.0
        %2618 = vmatpush2.msra.mxu0 0.0
        %2619 = vmatprep.subr.mxu0 0.0
        %2620 = vmatpush2.msra.mxu0 0.0
        %2621 = vmatprep.subr.mxu0 0.0
        %2622 = vmatpush2.msra.mxu0 0.0
        %2623 = vmatprep.subr.mxu0 0.0
        %2624 = vmatpush2.msra.mxu0 0.0
        %2625 = vmatprep.subr.mxu0 0.0
        %2626 = vmatpush2.msra.mxu0 0.0
        %2627 = vmatprep.subr.mxu0 0.0
        %2628 = vmatpush2.msra.mxu0 0.0
        %2629 = vmatprep.subr.mxu0 0.0
        %2630 = vmatpush2.msra.mxu0 0.0
        %2631 = vmatprep.subr.mxu0 0.0
        %2632 = vmatpush2.msra.mxu0 0.0
        %2633 = vmatprep.subr.mxu0 0.0
        %2634 = vmatpush2.msra.mxu0 0.0
        %2635 = vmatprep.subr.mxu0 0.0
        %2636 = vmatpush2.msra.mxu0 0.0
        %2637 = vmatprep.subr.mxu0 0.0
        %2638 = vmatpush2.msra.mxu0 0.0
        %2639 = vmatprep.mubr.f32.mxu0 0.0
        %2640 = vmatmul.mubr.f32.gmra.mxu0 %v2564
        %v2641 = vpop.f32.mrf.mxu0
        %v2642 = vadd.f32 0.0, %v2641
        %v2643 = vpop.f32.mrf.mxu0
        %2644 = vmatprep.mubr.f32.mxu0 0.0
        %2645 = vmatmul.mubr.f32.gmra.mxu0 %v2567
        %v2646 = vpop.f32.mrf.mxu0
        %v2647 = vadd.f32 0.0, %v2646
        %v2648 = vpop.f32.mrf.mxu0
        %2649 = vmatprep.mubr.f32.mxu0 0.0
        %2650 = vmatmul.mubr.f32.gmra.mxu0 %v2570
        %v2651 = vpop.f32.mrf.mxu0
        %v2652 = vadd.f32 0.0, %v2651
        %v2653 = vpop.f32.mrf.mxu0
        %2654 = vmatprep.mubr.f32.mxu0 0.0
        %2655 = vmatmul.mubr.f32.gmra.mxu0 %v2573
        %v2656 = vpop.f32.mrf.mxu0
        %v2657 = vadd.f32 0.0, %v2656
        %v2658 = vpop.f32.mrf.mxu0
        %2659 = vdwg.mxu0
        %v2660 = vmul.f32 %v2642, %v1018
        %v2661 = vmul.f32 %v2647, %v1019
        %v2662 = vmul.f32 %v2652, %v1020
        %v2663 = vmul.f32 %v2657, %v1021
        %2665 = vset.pattern.permute.xlu0 32
        %2666 = vperm.xlu0 %2665, %v2642
        %v2667 = vpop.permute.xlu0 %2666
        %2670 = vset.pattern.permute.xlu0 32
        %2671 = vperm.xlu0 %2670, %v2647
        %v2672 = vpop.permute.xlu0 %2671
        %2675 = vset.pattern.permute.xlu0 32
        %2676 = vperm.xlu0 %2675, %v2652
        %v2677 = vpop.permute.xlu0 %2676
        %2680 = vset.pattern.permute.xlu0 32
        %2681 = vperm.xlu0 %2680, %v2657
        %v2682 = vpop.permute.xlu0 %2681
        %v2684 = vmul.f32 %v1018, %v2667
        %v2685 = vmul.f32 %v1019, %v2672
        %v2686 = vmul.f32 %v1020, %v2677
        %v2687 = vmul.f32 %v1021, %v2682
        %2692 = vrot.lane.b32.xlu0 %v2684, 32
        %v2693 = vpop.permute.xlu0 %2692
        %2694 = vrot.lane.b32.xlu0 %v2685, 32
        %v2695 = vpop.permute.xlu0 %2694
        %2696 = vrot.lane.b32.xlu0 %v2686, 32
        %v2697 = vpop.permute.xlu0 %2696
        %2698 = vrot.lane.b32.xlu0 %v2687, 32
        %v2699 = vpop.permute.xlu0 %2698
        %v2704 = vsel %vm1035, %v2660, %v2693
        %v2705 = vsel %vm1035, %v2661, %v2695
        %v2706 = vsel %vm1035, %v2662, %v2697
        %v2707 = vsel %vm1035, %v2663, %v2699
        %v2709 = vsel %vm1035, %v2515, 0
        %v2712 = vsel %vm1035, %v2517, 0
        %2714 = vmatprep.subr.mxu0 0.0
        %2715 = vmatpush1.msra.mxu0 0.0
        %2716 = vmatprep.subr.mxu0 0.0
        %2717 = vmatpush1.msra.mxu0 0.0
        %2718 = vmatprep.subr.mxu0 0.0
        %2719 = vmatpush1.msra.mxu0 0.0
        %2720 = vmatprep.subr.mxu0 0.0
        %2721 = vmatpush1.msra.mxu0 0.0
        %2722 = vmatprep.subr.mxu0 0.0
        %2723 = vmatpush1.msra.mxu0 0.0
        %2724 = vmatprep.subr.mxu0 0.0
        %2725 = vmatpush1.msra.mxu0 0.0
        %2726 = vmatprep.subr.mxu0 0.0
        %2727 = vmatpush1.msra.mxu0 0.0
        %2728 = vmatprep.subr.mxu0 0.0
        %2729 = vmatpush1.msra.mxu0 0.0
        %2730 = vmatprep.subr.mxu0 0.0
        %2731 = vmatpush1.msra.mxu0 0.0
        %2732 = vmatprep.subr.mxu0 0.0
        %2733 = vmatpush1.msra.mxu0 0.0
        %2734 = vmatprep.subr.mxu0 0.0
        %2735 = vmatpush1.msra.mxu0 0.0
        %2736 = vmatprep.subr.mxu0 0.0
        %2737 = vmatpush1.msra.mxu0 0.0
        %2738 = vmatprep.subr.mxu0 0.0
        %2739 = vmatpush1.msra.mxu0 %v2707
        %2740 = vmatprep.subr.mxu0 0.0
        %2741 = vmatpush1.msra.mxu0 %v2706
        %2742 = vmatprep.subr.mxu0 0.0
        %2743 = vmatpush1.msra.mxu0 %v2705
        %2744 = vmatprep.subr.mxu0 0.0
        %2745 = vmatpush1.msra.mxu0 %v2704
        %2746 = vmatprep.subr.mxu0 0.0
        %2747 = vmatpush2.msra.mxu0 0.0
        %2748 = vmatprep.subr.mxu0 0.0
        %2749 = vmatpush2.msra.mxu0 0.0
        %2750 = vmatprep.subr.mxu0 0.0
        %2751 = vmatpush2.msra.mxu0 0.0
        %2752 = vmatprep.subr.mxu0 0.0
        %2753 = vmatpush2.msra.mxu0 0.0
        %2754 = vmatprep.subr.mxu0 0.0
        %2755 = vmatpush2.msra.mxu0 0.0
        %2756 = vmatprep.subr.mxu0 0.0
        %2757 = vmatpush2.msra.mxu0 0.0
        %2758 = vmatprep.subr.mxu0 0.0
        %2759 = vmatpush2.msra.mxu0 0.0
        %2760 = vmatprep.subr.mxu0 0.0
        %2761 = vmatpush2.msra.mxu0 0.0
        %2762 = vmatprep.subr.mxu0 0.0
        %2763 = vmatpush2.msra.mxu0 0.0
        %2764 = vmatprep.subr.mxu0 0.0
        %2765 = vmatpush2.msra.mxu0 0.0
        %2766 = vmatprep.subr.mxu0 0.0
        %2767 = vmatpush2.msra.mxu0 0.0
        %2768 = vmatprep.subr.mxu0 0.0
        %2769 = vmatpush2.msra.mxu0 0.0
        %2770 = vmatprep.subr.mxu0 0.0
        %2771 = vmatpush2.msra.mxu0 0.0
        %2772 = vmatprep.subr.mxu0 0.0
        %2773 = vmatpush2.msra.mxu0 0.0
        %2774 = vmatprep.subr.mxu0 0.0
        %2775 = vmatpush2.msra.mxu0 0.0
        %2776 = vmatprep.subr.mxu0 0.0
        %2777 = vmatpush2.msra.mxu0 0.0
        %2778 = vmatprep.mubr.f32.mxu0 0.0
        %2779 = vmatmul.mubr.f32.gmra.mxu0 %v2709
        %v2780 = vpop.f32.mrf.mxu0
        %v2781 = vadd.f32 0.0, %v2780
        %v2782 = vpop.f32.mrf.mxu0
        %2783 = vmatprep.mubr.f32.mxu0 0.0
        %2784 = vmatmul.mubr.f32.gmra.mxu0 %v2712
        %v2785 = vpop.f32.mrf.mxu0
        %v2786 = vadd.f32 0.0, %v2785
        %v2787 = vpop.f32.mrf.mxu0
        %2788 = vdwg.mxu0
        %v2789 = vsel %vm1035, %v2320, 0.0
        %v2790 = vsel %vm1035, %v2321, 0.0
        %v2791 = vadd.f32 %v2789, %v2790
        %v2792 = vrot.slane %v2791, 4
        %v2793 = vadd.f32 %v2791, %v2792
        %v2794 = vrot.slane %v2793, 2
        %v2795 = vadd.f32 %v2793, %v2794
        %v2796 = vrot.slane %v2795, 1
        %v2797 = vadd.f32 %v2795, %v2796
        %v2798 = vadd.f32 %v2781, %v2797
        %v2799 = vadd.f32 %v2786, %v2797
        %v2800 = vmul.f32 %v2320, 16.0
        %v2801 = vmul.f32 %v2321, 16.0
        %v2802 = vadd.f32 %v2798, %v2800
        %v2803 = vadd.f32 %v2799, %v2801
        %v2804 = vadd.f32 %v2781, 32.0
        %v2805 = vadd.f32 %v2786, 32.0
        %v2806 = vrcp.pop %v2804
        %v2807 = vrcp.pop %v2805
        %2810 = vrot.lane.b32.xlu0 %v2806, 96
        %v2811 = vpop.permute.xlu0 %2810
        %2812 = vrot.lane.b32.xlu0 %v2807, 96
        %v2813 = vpop.permute.xlu0 %2812
        %v2816 = vmul.f32 %v2802, %v2811
        %v2817 = vmul.f32 %v2803, %v2813
        %v2818 = vadd.f32 %v1010, %v2816
        %v2819 = vadd.f32 %v1011, %v2817
        %v2820 = vsel %vm1035, %v2818, 0.0
        %2821 = vadd.xlane.f32.xlu0 %v2820
        %v2822 = vpop.xlane.xlu0 %2821
        %v2823 = vsel %vm1035, %v2819, 0.0
        %2824 = vadd.xlane.f32.xlu0 %v2823
        %v2825 = vpop.xlane.xlu0 %2824
        %v2826 = vmul.f32 %v2822, %v1659
        %v2827 = vmul.f32 %v2825, %v1659
        %v2828 = vsub.f32 %v2818, %v2826
        %v2829 = vsub.f32 %v2819, %v2827
        %v2830 = vmul.f32 %v2828, %v2828
        %v2831 = vmul.f32 %v2829, %v2829
        %v2832 = vsel %vm1035, %v2830, 0.0
        %2833 = vadd.xlane.f32.xlu0 %v2832
        %v2834 = vpop.xlane.xlu0 %2833
        %v2835 = vsel %vm1035, %v2831, 0.0
        %2836 = vadd.xlane.f32.xlu0 %v2835
        %v2837 = vpop.xlane.xlu0 %2836
        %v2838 = vmul.f32 %v2834, %v1659
        %v2839 = vmul.f32 %v2837, %v1659
        %v2840 = vadd.f32 %v2838, 1e-05
        %v2841 = vadd.f32 %v2839, 1e-05
        %v2842 = vrsqrt.pop %v2840
        %v2843 = vrsqrt.pop %v2841
        %v2844 = vmul.f32 %v2828, %v2842
        %v2845 = vmul.f32 %v2829, %v2843
        %v2846 = vlaneseq
        %v2847 = vshrl.u32 %v2846, 7
        %v2848 = vsub.s32 2, %v2847
        %v2849 = vrot.slane %v1017, %v2848
        %v2850 = vmul.f32 %v2844, %v2849
        %v2851 = vmul.f32 %v2845, %v2849
        %v2852 = vlaneseq
        %v2853 = vshrl.u32 %v2852, 7
        %v2854 = vsub.s32 3, %v2853
        %v2855 = vrot.slane %v1017, %v2854
        %v2856 = vadd.f32 %v2850, %v2855
        %v2857 = vadd.f32 %v2851, %v2855
        %v2858 = vld [vmem:[#allocation29] sm:$0xff]
        %v2859 = vld [vmem:[#allocation29 + $0x8] sm:$0xff]
        %v2860 = vld [vmem:[#allocation29 + $0x10] sm:$0xff]
        %v2861 = vld [vmem:[#allocation29 + $0x18] sm:$0xff]
        %v2862 = vld [vmem:[#allocation31] sm:$0xff]
        %v2863 = vld [vmem:[#allocation31 + $0x8] sm:$0xff]
        %v2864 = vld [vmem:[#allocation31 + $0x10] sm:$0xff]
        %v2865 = vld [vmem:[#allocation31 + $0x18] sm:$0xff]
        %v2866 = vlaneseq
        %v2867 = vshrl.u32 %v2866, 7
        %v2868 = vsub.s32 0, %v2867
        %v2869 = vrot.slane %v1017, %v2868
        %v2871 = vsel %vm1035, %v2856, 0
        %v2874 = vsel %vm1035, %v2857, 0
        %2876 = vmatprep.subr.mxu0 0.0
        %2877 = vmatpush1.msra.mxu0 0.0
        %2878 = vmatprep.subr.mxu0 0.0
        %2879 = vmatpush1.msra.mxu0 0.0
        %2880 = vmatprep.subr.mxu0 0.0
        %2881 = vmatpush1.msra.mxu0 0.0
        %2882 = vmatprep.subr.mxu0 0.0
        %2883 = vmatpush1.msra.mxu0 0.0
        %2884 = vmatprep.subr.mxu0 0.0
        %2885 = vmatpush1.msra.mxu0 0.0
        %2886 = vmatprep.subr.mxu0 0.0
        %2887 = vmatpush1.msra.mxu0 0.0
        %2888 = vmatprep.subr.mxu0 0.0
        %2889 = vmatpush1.msra.mxu0 0.0
        %2890 = vmatprep.subr.mxu0 0.0
        %2891 = vmatpush1.msra.mxu0 0.0
        %2892 = vmatprep.subr.mxu0 0.0
        %2893 = vmatpush1.msra.mxu0 0.0
        %2894 = vmatprep.subr.mxu0 0.0
        %2895 = vmatpush1.msra.mxu0 0.0
        %2896 = vmatprep.subr.mxu0 0.0
        %2897 = vmatpush1.msra.mxu0 0.0
        %2898 = vmatprep.subr.mxu0 0.0
        %2899 = vmatpush1.msra.mxu0 0.0
        %2900 = vmatprep.subr.mxu0 0.0
        %2901 = vmatpush1.msra.mxu0 %v2861
        %2902 = vmatprep.subr.mxu0 0.0
        %2903 = vmatpush1.msra.mxu0 %v2860
        %2904 = vmatprep.subr.mxu0 0.0
        %2905 = vmatpush1.msra.mxu0 %v2859
        %2906 = vmatprep.subr.mxu0 0.0
        %2907 = vmatpush1.msra.mxu0 %v2858
        %2908 = vmatprep.subr.mxu0 0.0
        %2909 = vmatpush2.msra.mxu0 0.0
        %2910 = vmatprep.subr.mxu0 0.0
        %2911 = vmatpush2.msra.mxu0 0.0
        %2912 = vmatprep.subr.mxu0 0.0
        %2913 = vmatpush2.msra.mxu0 0.0
        %2914 = vmatprep.subr.mxu0 0.0
        %2915 = vmatpush2.msra.mxu0 0.0
        %2916 = vmatprep.subr.mxu0 0.0
        %2917 = vmatpush2.msra.mxu0 0.0
        %2918 = vmatprep.subr.mxu0 0.0
        %2919 = vmatpush2.msra.mxu0 0.0
        %2920 = vmatprep.subr.mxu0 0.0
        %2921 = vmatpush2.msra.mxu0 0.0
        %2922 = vmatprep.subr.mxu0 0.0
        %2923 = vmatpush2.msra.mxu0 0.0
        %2924 = vmatprep.subr.mxu0 0.0
        %2925 = vmatpush2.msra.mxu0 0.0
        %2926 = vmatprep.subr.mxu0 0.0
        %2927 = vmatpush2.msra.mxu0 0.0
        %2928 = vmatprep.subr.mxu0 0.0
        %2929 = vmatpush2.msra.mxu0 0.0
        %2930 = vmatprep.subr.mxu0 0.0
        %2931 = vmatpush2.msra.mxu0 0.0
        %2932 = vmatprep.subr.mxu0 0.0
        %2933 = vmatpush2.msra.mxu0 0.0
        %2934 = vmatprep.subr.mxu0 0.0
        %2935 = vmatpush2.msra.mxu0 0.0
        %2936 = vmatprep.subr.mxu0 0.0
        %2937 = vmatpush2.msra.mxu0 0.0
        %2938 = vmatprep.subr.mxu0 0.0
        %2939 = vmatpush2.msra.mxu0 0.0
        %2940 = vmatprep.mubr.f32.mxu0 0.0
        %2941 = vmatmul.mubr.f32.gmra.mxu0 %v2871
        %v2942 = vpop.f32.mrf.mxu0
        %v2943 = vadd.f32 %v2869, %v2942
        %v2944 = vpop.f32.mrf.mxu0
        %2945 = vmatprep.mubr.f32.mxu0 0.0
        %2946 = vmatmul.mubr.f32.gmra.mxu0 %v2874
        %v2947 = vpop.f32.mrf.mxu0
        %v2948 = vadd.f32 %v2869, %v2947
        %v2949 = vpop.f32.mrf.mxu0
        %2950 = vdwg.mxu0
        %v2951 = vmax.f32 %v2943, 0.0
        %v2952 = vmax.f32 %v2948, 0.0
        %v2953 = vlaneseq
        %v2954 = vshrl.u32 %v2953, 7
        %v2955 = vsub.s32 1, %v2954
        %v2956 = vrot.slane %v1017, %v2955
        %v2958 = vsel %vm1035, %v2951, 0
        %v2961 = vsel %vm1035, %v2952, 0
        %2963 = vmatprep.subr.mxu0 0.0
        %2964 = vmatpush1.msra.mxu0 0.0
        %2965 = vmatprep.subr.mxu0 0.0
        %2966 = vmatpush1.msra.mxu0 0.0
        %2967 = vmatprep.subr.mxu0 0.0
        %2968 = vmatpush1.msra.mxu0 0.0
        %2969 = vmatprep.subr.mxu0 0.0
        %2970 = vmatpush1.msra.mxu0 0.0
        %2971 = vmatprep.subr.mxu0 0.0
        %2972 = vmatpush1.msra.mxu0 0.0
        %2973 = vmatprep.subr.mxu0 0.0
        %2974 = vmatpush1.msra.mxu0 0.0
        %2975 = vmatprep.subr.mxu0 0.0
        %2976 = vmatpush1.msra.mxu0 0.0
        %2977 = vmatprep.subr.mxu0 0.0
        %2978 = vmatpush1.msra.mxu0 0.0
        %2979 = vmatprep.subr.mxu0 0.0
        %2980 = vmatpush1.msra.mxu0 0.0
        %2981 = vmatprep.subr.mxu0 0.0
        %2982 = vmatpush1.msra.mxu0 0.0
        %2983 = vmatprep.subr.mxu0 0.0
        %2984 = vmatpush1.msra.mxu0 0.0
        %2985 = vmatprep.subr.mxu0 0.0
        %2986 = vmatpush1.msra.mxu0 0.0
        %2987 = vmatprep.subr.mxu0 0.0
        %2988 = vmatpush1.msra.mxu0 %v2865
        %2989 = vmatprep.subr.mxu0 0.0
        %2990 = vmatpush1.msra.mxu0 %v2864
        %2991 = vmatprep.subr.mxu0 0.0
        %2992 = vmatpush1.msra.mxu0 %v2863
        %2993 = vmatprep.subr.mxu0 0.0
        %2994 = vmatpush1.msra.mxu0 %v2862
        %2995 = vmatprep.subr.mxu0 0.0
        %2996 = vmatpush2.msra.mxu0 0.0
        %2997 = vmatprep.subr.mxu0 0.0
        %2998 = vmatpush2.msra.mxu0 0.0
        %2999 = vmatprep.subr.mxu0 0.0
        %3000 = vmatpush2.msra.mxu0 0.0
        %3001 = vmatprep.subr.mxu0 0.0
        %3002 = vmatpush2.msra.mxu0 0.0
        %3003 = vmatprep.subr.mxu0 0.0
        %3004 = vmatpush2.msra.mxu0 0.0
        %3005 = vmatprep.subr.mxu0 0.0
        %3006 = vmatpush2.msra.mxu0 0.0
        %3007 = vmatprep.subr.mxu0 0.0
        %3008 = vmatpush2.msra.mxu0 0.0
        %3009 = vmatprep.subr.mxu0 0.0
        %3010 = vmatpush2.msra.mxu0 0.0
        %3011 = vmatprep.subr.mxu0 0.0
        %3012 = vmatpush2.msra.mxu0 0.0
        %3013 = vmatprep.subr.mxu0 0.0
        %3014 = vmatpush2.msra.mxu0 0.0
        %3015 = vmatprep.subr.mxu0 0.0
        %3016 = vmatpush2.msra.mxu0 0.0
        %3017 = vmatprep.subr.mxu0 0.0
        %3018 = vmatpush2.msra.mxu0 0.0
        %3019 = vmatprep.subr.mxu0 0.0
        %3020 = vmatpush2.msra.mxu0 0.0
        %3021 = vmatprep.subr.mxu0 0.0
        %3022 = vmatpush2.msra.mxu0 0.0
        %3023 = vmatprep.subr.mxu0 0.0
        %3024 = vmatpush2.msra.mxu0 0.0
        %3025 = vmatprep.subr.mxu0 0.0
        %3026 = vmatpush2.msra.mxu0 0.0
        %3027 = vmatprep.mubr.f32.mxu0 0.0
        %3028 = vmatmul.mubr.f32.gmra.mxu0 %v2958
        %v3029 = vpop.f32.mrf.mxu0
        %v3030 = vadd.f32 %v2956, %v3029
        %v3031 = vpop.f32.mrf.mxu0
        %3032 = vmatprep.mubr.f32.mxu0 0.0
        %3033 = vmatmul.mubr.f32.gmra.mxu0 %v2961
        %v3034 = vpop.f32.mrf.mxu0
        %v3035 = vadd.f32 %v2956, %v3034
        %v3036 = vpop.f32.mrf.mxu0
        %3037 = vdwg.mxu0
        %v3038 = vadd.f32 %v2856, %v3030
        %v3039 = vadd.f32 %v2857, %v3035
        %v3040 = vsel %vm1035, %v3038, 0.0
        %3041 = vadd.xlane.f32.xlu0 %v3040
        %v3042 = vpop.xlane.xlu0 %3041
        %v3043 = vsel %vm1035, %v3039, 0.0
        %3044 = vadd.xlane.f32.xlu0 %v3043
        %v3045 = vpop.xlane.xlu0 %3044
        %v3046 = vmul.f32 %v3042, %v1659
        %v3047 = vmul.f32 %v3045, %v1659
        %v3048 = vsub.f32 %v3038, %v3046
        %v3049 = vsub.f32 %v3039, %v3047
        %v3050 = vmul.f32 %v3048, %v3048
        %v3051 = vmul.f32 %v3049, %v3049
        %v3052 = vsel %vm1035, %v3050, 0.0
        %3053 = vadd.xlane.f32.xlu0 %v3052
        %v3054 = vpop.xlane.xlu0 %3053
        %v3055 = vsel %vm1035, %v3051, 0.0
        %3056 = vadd.xlane.f32.xlu0 %v3055
        %v3057 = vpop.xlane.xlu0 %3056
        %v3058 = vmul.f32 %v3054, %v1659
        %v3059 = vmul.f32 %v3057, %v1659
        %v3060 = vadd.f32 %v3058, 1e-05
        %v3061 = vadd.f32 %v3059, 1e-05
        %v3062 = vrsqrt.pop %v3060
        %v3063 = vrsqrt.pop %v3061
        %v3064 = vmul.f32 %v3048, %v3062
        %v3065 = vmul.f32 %v3049, %v3063
        %v3066 = vlaneseq
        %v3067 = vshrl.u32 %v3066, 7
        %v3068 = vsub.s32 4, %v3067
        %v3069 = vrot.slane %v1017, %v3068
        %v3070 = vmul.f32 %v3064, %v3069
        %v3071 = vmul.f32 %v3065, %v3069
        %v3072 = vlaneseq
        %v3073 = vshrl.u32 %v3072, 7
        %v3074 = vsub.s32 5, %v3073
        %v3075 = vrot.slane %v1017, %v3074
        %v3076 = vadd.f32 %v3070, %v3075
        %v3077 = vadd.f32 %v3071, %v3075
        %3078 = vst.msk [vmem:[%s982] sm:$0xff] %vm1035, %v3076
        %3079 = vst.msk [vmem:[%s982 + $0x8] sm:$0xff] %vm1035, %v3077
        %s3080 = sand.u32 %s564, 1
        %s3081 = scalar_lea.sflag [#allocation7], %s3080
        %s3082 = sand.u32 %s564, 1
        %s3083 = smul.addr %s3082, 16
        %s3084 = scalar_lea.vmem [#allocation32], %s3083
        // Predicated region
        $region181: #{knowformer_layer_forward.1} parent=111 // pred_check
          %p3085 = pneg %p574
        $region182: #{knowformer_layer_forward.1} parent=111 // pred_check_branch
          %3087 = sbr.rel (%p3085) target = $region184
        $region183: #{knowformer_layer_forward.1} parent=111 // pred_region
          %s3089 = ssub.s32 256, 256
          %3090 = vsyncadd %s3081, %s3089
          %s3091 = smul.addr %s58, 2
          %s3092 = smul.addr %s3091, 128
          %s3093 = scalar_lea.hbm %s25, %s3092
          %s3094 = sshll.u32 %s3084, 4
          %s3095 = int_to_ptr.vmem [resolvable:$true] %s3094
          %3100 = dma.vmem_to_hbm [thread:$0]  %s3095, 256, %s3093, %s3081, 128, 128, 8
        $region184: #{knowformer_layer_forward.1} parent=111 // pred_fallthru
          _
      $region112: #{knowformer_layer_forward.1} parent=5 // pred_fallthru
        _
      %p3101 = scmp.le.s32.totalorder 2, %s53
      // Predicated region
      $region185: #{knowformer_layer_forward.1} parent=5 // pred_check
        %p3102 = pneg %p3101
      $region186: #{knowformer_layer_forward.1} parent=5 // pred_check_branch
        %3104 = sbr.rel (%p3102) target = $region188
      $region187: #{knowformer_layer_forward.1} parent=5 // pred_region
        %s3105 = ssub.s32 %s53, 2
        // Predicated region
        $region189: #{knowformer_layer_forward.1} parent=187 // pred_check
          %p3106 = pneg %p580
        $region190: #{knowformer_layer_forward.1} parent=187 // pred_check_branch
          %3108 = sbr.rel (%p3106) target = $region192
        $region191: #{knowformer_layer_forward.1} parent=187 // pred_region
          %s3109 = sand.u32 %s565, 1
          %s3110 = scalar_lea.sflag [#allocation7], %s3109
          %s3111 = sand.u32 %s565, 1
          %s3112 = smul.addr %s3111, 16
          %s3113 = scalar_lea.vmem [#allocation32], %s3112
          %3114 = dma.done %s3110, 256
        $region192: #{knowformer_layer_forward.1} parent=187 // pred_fallthru
          _
      $region188: #{knowformer_layer_forward.1} parent=5 // pred_fallthru
        _
    $region6: #{knowformer_layer_forward.1} parent=1 // loop_footer
      %s57 = sadd.s32 1, %s53
    $region7: #{knowformer_layer_forward.1} parent=1 // loop_footer_branch
      %52 = sbr.rel target = $region3
    $region8: #{knowformer_layer_forward.1} parent=1 // loop_exit
      _
    %3115 = vsyncpa [#allocation6], 1
    %s3116 = scalar_lea.sflag [#allocation6], 1
    %3117 = vsyncpa %s3116, 1
    %3118 = vsyncpa [#allocation9], 1
    %3119 = vsyncpa [#allocation12], 1
    %3120 = vsyncpa [#allocation15], 1
    %3121 = vsyncpa [#allocation18], 1
    %3122 = vsyncpa [#allocation21], 1
    %3123 = vsyncpa [#allocation24], 1
    %3124 = vsyncpa [#allocation27], 1
    %3125 = vsyncpa [#allocation30], 1
    %3126 = vsyncpa [#allocation7], 1
    %s3127 = scalar_lea.sflag [#allocation7], 1
    %3128 = vsyncpa %s3127, 1

</llo_original>
